<compile_context>
chip_gen: v5e
topology: v5e:2x2
jax: 0.10.0
libtpu: 0.0.40
codegen_flags: <defaults>
</compile_context>

<pallas_src>
import functools
from itertools import product

import jax
import jax.numpy as jnp
from jax import lax
from jax.experimental import pallas as pl
from jax.experimental.pallas import tpu as pltpu

NEG_SLOPE = 0.01   # nn.LeakyReLU default negative_slope
BN_EPS = 1e-5      # nn.BatchNorm1d default eps


# --------------------------------------------------------------------------- #
# Kernel bodies (one D-plane per grid step).
# --------------------------------------------------------------------------- #
def _make_kernels(D, H, W, mm_dtype):
  HW = H * W

  def leaky(y):
    return jnp.where(y > 0, y, NEG_SLOPE * y)

  def make_tap(mask_ref):
    mw_m = mask_ref[0:1, :]   # w >= 1      (valid for c = -1 taps)
    mw_p = mask_ref[1:2, :]   # w <= W - 2  (valid for c = +1 taps)
    mh_m = mask_ref[2:3, :]   # h >= 1
    mh_p = mask_ref[3:4, :]   # h <= H - 2

    def tap(x, b, c):
      # Neighbour (h+b, w+c) brought into lane (h, w) by an in-plane lane roll;
      # every out-of-plane neighbour (incl. every roll wrap) is zeroed by the
      # edge masks, so wraps never leak across rows/planes/batches.
      shift = (-(b * W + c)) % HW
      t = pltpu.roll(x, shift=shift, axis=1) if shift else x
      m = None
      if b == -1:
        m = mh_m
      elif b == 1:
        m = mh_p
      if c == -1:
        m = mw_m if m is None else m * mw_m
      elif c == 1:
        m = mw_p if m is None else m * mw_p
      return t if m is None else t * m

    return tap

  def conv_1x3x3(xc, w_ref, tap):
    # kernel (1,3,3), pad (0,1,1): all 9 taps live in the centre plane.
    acc = None
    t_i = 0
    for b in (-1, 0, 1):
      for c in (-1, 0, 1):
        v = tap(xc, b, c).astype(mm_dtype)
        y = jnp.dot(w_ref[t_i], v, preferred_element_type=jnp.float32)
        acc = y if acc is None else acc + y
        t_i += 1
    return acc

  def conv_3x1x3(xp, xc, xn, w_ref, tap):
    # kernel (3,1,3), pad (1,0,1): taps come from prev / centre / next D-plane.
    planes = (xp, xc, xn)
    acc = None
    t_i = 0
    for a in (-1, 0, 1):
      x = planes[a + 1]
      for c in (-1, 0, 1):
        v = tap(x, 0, c).astype(mm_dtype)
        y = jnp.dot(w_ref[t_i], v, preferred_element_type=jnp.float32)
        acc = y if acc is None else acc + y
        t_i += 1
    return acc

  def d_boundary():
    # {0,1} scalars: does the prev / next D-plane exist inside this sample?
    d = pl.program_id(0) % D
    return (d > 0).astype(jnp.float32), (d < D - 1).astype(jnp.float32)

  def store_partials(part_ref, a, b):
    part_ref[0, 0, :] = jnp.sum(a, axis=1)
    part_ref[0, 1, :] = jnp.sum(a * a, axis=1)
    part_ref[0, 2, :] = jnp.sum(b, axis=1)
    part_ref[0, 3, :] = jnp.sum(b * b, axis=1)

  # ---- pass 1: y1 = act(conv1(x)), y3 = act(conv2(x))  + BN partials -------
  def pass1(xp_ref, xc_ref, xn_ref, mask_ref, w1_ref, w3_ref,
            y1_ref, y3_ref, part_ref):
    tap = make_tap(mask_ref)
    prev_ok, next_ok = d_boundary()
    xc = xc_ref[0]
    xp = xp_ref[0] * prev_ok                 # zero padding across D/batch edge
    xn = xn_ref[0] * next_ok
    y1 = leaky(conv_1x3x3(xc, w1_ref, tap))
    y3 = leaky(conv_3x1x3(xp, xc, xn, w3_ref, tap))
    y1_ref[0] = y1
    y3_ref[0] = y3
    store_partials(part_ref, y1, y3)

  # ---- pass 2: sc = act(conv1_2(bn0(y1))), ra = act(conv3(bn1(y3))) --------
  def pass2(y1p_ref, y1c_ref, y1n_ref, y3c_ref, mask_ref, w2_ref, w4_ref,
            so_ref, sc_ref, ra_ref, part_ref):
    tap = make_tap(mask_ref)
    prev_ok, next_ok = d_boundary()
    s0, o0, s1, o1 = so_ref[0], so_ref[1], so_ref[2], so_ref[3]   # (Cout, 1)
    # Previous stage's BN is fused into the tap build: normalize first, THEN
    # zero the out-of-sample planes (zero padding applies to normalized feats).
    y1c = y1c_ref[0] * s0 + o0
    y1p = (y1p_ref[0] * s0 + o0) * prev_ok
    y1n = (y1n_ref[0] * s0 + o0) * next_ok
    y3c = y3c_ref[0] * s1 + o1
    sc = leaky(conv_3x1x3(y1p, y1c, y1n, w2_ref, tap))
    ra = leaky(conv_1x3x3(y3c, w4_ref, tap))
    sc_ref[0] = sc
    ra_ref[0] = ra
    store_partials(part_ref, sc, ra)

  # ---- pass 3: out = bn2(ra) + bn0_2(sc)  (pure per-channel FMA + add) -----
  def pass3(sc_ref, ra_ref, so_ref, o_ref):
    s2, o2, s4, o4 = so_ref[0], so_ref[1], so_ref[2], so_ref[3]
    o_ref[0] = ra_ref[0] * s4 + sc_ref[0] * s2 + (o2 + o4)

  return pass1, pass2, pass3


# --------------------------------------------------------------------------- #
# Wrapper.
# --------------------------------------------------------------------------- #
def _fold_weight(w, dtype):
  """(kd, kh, kw, Cin, Cout) -> (kd*kh*kw, Cout, Cin), PyTorch tap order."""
  kd, kh, kw, ci, co = w.shape
  return jnp.transpose(w.reshape(kd * kh * kw, ci, co), (0, 2, 1)).astype(dtype)


def _edge_masks(H, W):
  """Constant within-plane {0,1} masks, rows = [w>=1, w<=W-2, h>=1, h<=H-2]."""
  idx = jnp.arange(H * W, dtype=jnp.int32)
  h = idx // W
  w = idx % W
  return jnp.stack([w >= 1, w <= W - 2, h >= 1, h <= H - 2]).astype(jnp.float32)


def _bn_scale_offset(s, q, gamma, beta, n):
  """Fold train-mode BatchNorm1d batch stats into per-channel scale/offset."""
  mean = s / n
  var = jnp.maximum(q / n - mean * mean, 0.0)   # clamp: one-pass cancellation
  scale = gamma * lax.rsqrt(var + BN_EPS)
  return scale, beta - mean * scale


@functools.partial(jax.jit, static_argnames=("matmul_dtype",))
def res_context_block_forward(x, params, matmul_dtype=jnp.bfloat16):
  """x: (B, D, Cin, H, W) dense voxel grid — channels ahead of the (H, W)
  plane so the kernel's lane axis (H*W) needs no transpose (producers should
  supply this layout).  Returns (B, D, Cout, H, W)."""
  B, D, Cin, H, W = x.shape
  Cout = params["conv1_w"].shape[-1]
  HW = H * W
  P = B * D                     # number of (H*W) D-planes == grid size
  N = float(P * HW)             # BN population size (all voxels)

  xf = x.reshape(P, Cin, HW)    # pure reshape, no layout pass

  w1 = _fold_weight(params["conv1_w"], matmul_dtype)     # conv1   (1,3,3)
  w2 = _fold_weight(params["conv1_2_w"], matmul_dtype)   # conv1_2 (3,1,3)
  w3 = _fold_weight(params["conv2_w"], matmul_dtype)     # conv2   (3,1,3)
  w4 = _fold_weight(params["conv3_w"], matmul_dtype)     # conv3   (1,3,3)
  masks = _edge_masks(H, W)                               # (4, HW)

  pass1, pass2, pass3 = _make_kernels(D, H, W, matmul_dtype)

  def plane_spec(c, delta):
    # One (H*W) D-plane per grid step; delta = -1/0/+1 selects the halo plane
    # (clamped at the array edge; the kernel zeroes out-of-sample planes).
    if delta == 0:
      return pl.BlockSpec((1, c, HW), lambda i: (i, 0, 0))
    if delta < 0:
      return pl.BlockSpec((1, c, HW), lambda i: (jnp.maximum(i - 1, 0), 0, 0))
    return pl.BlockSpec((1, c, HW), lambda i: (jnp.minimum(i + 1, P - 1), 0, 0))

  def full_spec(shape):
    return pl.BlockSpec(shape, lambda i: (0,) * len(shape))

  part_spec = pl.BlockSpec((1, 4, Cout), lambda i: (i, 0, 0))
  act_shape = jax.ShapeDtypeStruct((P, Cout, HW), jnp.float32)
  part_shape = jax.ShapeDtypeStruct((P, 4, Cout), jnp.float32)
  cparams = pltpu.CompilerParams(
      dimension_semantics=("parallel",),           # megacore-shardable (v7x)
      vmem_limit_bytes=48 * 1024 * 1024)           # fits v7x's 64 MiB VMEM

  # ---- pass 1: conv1 / conv2 + LeakyReLU, per-tile BN partials -------------
  y1, y3, part1 = pl.pallas_call(
      pass1, grid=(P,),
      in_specs=[plane_spec(Cin, -1), plane_spec(Cin, 0), plane_spec(Cin, +1),
                full_spec(masks.shape), full_spec(w1.shape), full_spec(w3.shape)],
      out_specs=[plane_spec(Cout, 0), plane_spec(Cout, 0), part_spec],
      out_shape=[act_shape, act_shape, part_shape],
      compiler_params=cparams,
  )(xf, xf, xf, masks, w1, w3)

  # Tiny global combine: fold bn0 (for y1) and bn1 (for y3) into scale/offset.
  p1 = jnp.sum(part1, axis=0)                                  # (4, Cout)
  s0, o0 = _bn_scale_offset(p1[0], p1[1], params["bn0_gamma"], params["bn0_beta"], N)
  s1, o1 = _bn_scale_offset(p1[2], p1[3], params["bn1_gamma"], params["bn1_beta"], N)
  so01 = jnp.stack([s0, o0, s1, o1]).reshape(4, Cout, 1)

  # ---- pass 2: BN fused into tap build, conv1_2 / conv3 + LeakyReLU --------
  sc, ra, part2 = pl.pallas_call(
      pass2, grid=(P,),
      in_specs=[plane_spec(Cout, -1), plane_spec(Cout, 0), plane_spec(Cout, +1),
                plane_spec(Cout, 0), full_spec(masks.shape),
                full_spec(w2.shape), full_spec(w4.shape), full_spec(so01.shape)],
      out_specs=[plane_spec(Cout, 0), plane_spec(Cout, 0), part_spec],
      out_shape=[act_shape, act_shape, part_shape],
      compiler_params=cparams,
  )(y1, y1, y1, y3, masks, w2, w4, so01)

  p2 = jnp.sum(part2, axis=0)
  s2, o2 = _bn_scale_offset(p2[0], p2[1], params["bn0_2_gamma"], params["bn0_2_beta"], N)
  s4, o4 = _bn_scale_offset(p2[2], p2[3], params["bn2_gamma"], params["bn2_beta"], N)
  so23 = jnp.stack([s2, o2, s4, o4]).reshape(4, Cout, 1)

  # ---- pass 3: final per-channel normalize + residual add ------------------
  out = pl.pallas_call(
      pass3, grid=(P,),
      in_specs=[plane_spec(Cout, 0), plane_spec(Cout, 0), full_spec(so23.shape)],
      out_specs=plane_spec(Cout, 0),
      out_shape=act_shape,
      compiler_params=cparams,
  )(sc, ra, so23)

  return out.reshape(B, D, Cout, H, W)


# --------------------------------------------------------------------------- #
# Parameters and pure-JAX reference.
# --------------------------------------------------------------------------- #
def init_params(key, in_filters, out_filters):
  ks = jax.random.split(key, 4)

  def w(k, shape):
    fan_in = shape[0] * shape[1] * shape[2] * shape[3]
    return jax.random.normal(k, shape, jnp.float32) / jnp.sqrt(float(fan_in))

  params = {
      # weights stored as (kd, kh, kw, Cin, Cout)
      "conv1_w": w(ks[0], (1, 3, 3, in_filters, out_filters)),     # conv1x3
      "conv1_2_w": w(ks[1], (3, 1, 3, out_filters, out_filters)),  # conv3x1
      "conv2_w": w(ks[2], (3, 1, 3, in_filters, out_filters)),     # conv3x1
      "conv3_w": w(ks[3], (1, 3, 3, out_filters, out_filters)),    # conv1x3
  }
  for name in ("bn0", "bn0_2", "bn1", "bn2"):  # weight_initialization(): g=1, b=0
    params[name + "_gamma"] = jnp.ones((out_filters,), jnp.float32)
    params[name + "_beta"] = jnp.zeros((out_filters,), jnp.float32)
  return params


def _reference_forward(x_bdchw, params, matmul_dtype=jnp.bfloat16):
  """Pure-JAX reference (test-only layout transposes): pad + im2col matmul,
  two-pass BN statistics — independent of the kernel's masked-roll / tiled
  partial-sum formulation."""
  B, D, Cin, H, W = x_bdchw.shape
  x = jnp.transpose(x_bdchw, (0, 1, 3, 4, 2))            # (B, D, H, W, C)

  def stage(inp, w, gamma, beta, pad):
    kd, kh, kw, ci, co = w.shape
    pd, ph, pw = pad
    xp = jnp.pad(inp, ((0, 0), (pd, pd), (ph, ph), (pw, pw), (0, 0)))
    cols = []
    for a, b, c in product(range(kd), range(kh), range(kw)):
      cols.append(xp[:, a:a + D, b:b + H, c:c + W, :].reshape(B * D * H * W, ci))
    xcol = jnp.concatenate(cols, axis=-1)                 # (N, K*ci)
    wf = w.reshape(kd * kh * kw * ci, co)
    y = jnp.dot(xcol.astype(matmul_dtype), wf.astype(matmul_dtype),
                preferred_element_type=jnp.float32)
    y = jnp.where(y > 0, y, NEG_SLOPE * y)
    mean = jnp.mean(y, 0, keepdims=True)
    var = jnp.mean((y - mean) ** 2, 0, keepdims=True)
    y = (y - mean) / jnp.sqrt(var + BN_EPS) * gamma + beta
    return y.reshape(B, D, H, W, co)

  sc = stage(x, params["conv1_w"], params["bn0_gamma"], params["bn0_beta"], (0, 1, 1))
  sc = stage(sc, params["conv1_2_w"], params["bn0_2_gamma"], params["bn0_2_beta"], (1, 0, 1))
  rA = stage(x, params["conv2_w"], params["bn1_gamma"], params["bn1_beta"], (1, 0, 1))
  rA = stage(rA, params["conv3_w"], params["bn2_gamma"], params["bn2_beta"], (0, 1, 1))
  out = rA + sc
  return jnp.transpose(out, (0, 1, 4, 2, 3))              # (B, D, Cout, H, W)


if __name__ == "__main__":
  key = jax.random.PRNGKey(0)
  kx, kp = jax.random.split(key)

  # Dense voxel grid in the kernel's lane-dense layout (B, D, Cin, H, W).
  # Each (H*W)=512-lane plane keeps every vector store unmasked and >=512
  # lanes per grid step; P = B*D = 8 planes -> 8 pipelined grid steps per pass.
  B, D, H, W = 2, 4, 16, 32
  Cin, Cout = 16, 32            # Cylinder3D's first ResContextBlock(16, 32)

  x = jax.random.normal(kx, (B, D, Cin, H, W), jnp.float32)
  params = init_params(kp, Cin, Cout)

  out = jax.block_until_ready(res_context_block_forward(x, params))
  assert out.shape == (B, D, Cout, H, W)
  assert bool(jnp.all(jnp.isfinite(out)))

  ref = _reference_forward(x, params)
  err = float(jnp.max(jnp.abs(out - ref)))
  # Both sides use bf16 MXU operands with exact f32 accumulation; differences
  # are f32 accumulation order plus isolated one-ulp bf16 re-roundings of
  # slightly different intermediates cascading through the four stages.
  assert jnp.allclose(out, ref, atol=2e-2, rtol=2e-2), err

  print("KERNEL_OK")
</pallas_src>

<mosaic_0001>
module attributes {stable_mosaic.version = 11 : i64} {
  func.func @pass1(%arg0: i32, %arg1: memref<1x16x512xf32, #tpu.memory_space<vmem>>, %arg2: memref<1x16x512xf32, #tpu.memory_space<vmem>>, %arg3: memref<1x16x512xf32, #tpu.memory_space<vmem>>, %arg4: memref<4x512xf32, #tpu.memory_space<vmem>>, %arg5: memref<9x32x16xbf16, #tpu.memory_space<vmem>>, %arg6: memref<9x32x16xbf16, #tpu.memory_space<vmem>>, %arg7: memref<1x32x512xf32, #tpu.memory_space<vmem>>, %arg8: memref<1x32x512xf32, #tpu.memory_space<vmem>>, %arg9: memref<1x4x32xf32, #tpu.memory_space<vmem>>) attributes {dimension_semantics = [#tpu.dimension_semantics<parallel>], iteration_bounds = array<i64: 8>, scalar_prefetch = 0 : i64, scratch_operands = 0 : i64, tpu.core_type = #tpu.core_type<tc>, window_params = [{transform_indices = @transform_0, window_bounds = array<i64: 1, 16, 512>}, {transform_indices = @transform_1, window_bounds = array<i64: 1, 16, 512>}, {transform_indices = @transform_2, window_bounds = array<i64: 1, 16, 512>}, {pipeline_mode = #tpu.pipeline_mode<synchronous>, transform_indices = @transform_3, window_bounds = array<i64: 4, 512>}, {pipeline_mode = #tpu.pipeline_mode<synchronous>, transform_indices = @transform_4, window_bounds = array<i64: 9, 32, 16>}, {pipeline_mode = #tpu.pipeline_mode<synchronous>, transform_indices = @transform_5, window_bounds = array<i64: 9, 32, 16>}, {transform_indices = @transform_6, window_bounds = array<i64: 1, 32, 512>}, {transform_indices = @transform_7, window_bounds = array<i64: 1, 32, 512>}, {transform_indices = @transform_8, window_bounds = array<i64: 1, 4, 32>}]} {
    %c0 = arith.constant 0 : index
    %c0_0 = arith.constant 0 : index
    %0 = vector.load %arg4[%c0, %c0_0] : memref<4x512xf32, #tpu.memory_space<vmem>>, vector<1x512xf32>
    %c1 = arith.constant 1 : index
    %c0_1 = arith.constant 0 : index
    %1 = vector.load %arg4[%c1, %c0_1] : memref<4x512xf32, #tpu.memory_space<vmem>>, vector<1x512xf32>
    %c2 = arith.constant 2 : index
    %c0_2 = arith.constant 0 : index
    %2 = vector.load %arg4[%c2, %c0_2] : memref<4x512xf32, #tpu.memory_space<vmem>>, vector<1x512xf32>
    %c3 = arith.constant 3 : index
    %c0_3 = arith.constant 0 : index
    %3 = vector.load %arg4[%c3, %c0_3] : memref<4x512xf32, #tpu.memory_space<vmem>>, vector<1x512xf32>
    %c4_i32 = arith.constant 4 : i32
    %c0_i32 = arith.constant 0 : i32
    %4 = arith.cmpi eq, %c4_i32, %c0_i32 : i32
    %c1_i32 = arith.constant 1 : i32
    %5 = arith.select %4, %c1_i32, %c4_i32 : i32
    %6 = arith.remsi %arg0, %5 : i32
    %c0_i32_4 = arith.constant 0 : i32
    %7 = arith.cmpi ne, %6, %c0_i32_4 : i32
    %c0_i32_5 = arith.constant 0 : i32
    %8 = arith.cmpi slt, %6, %c0_i32_5 : i32
    %c0_i32_6 = arith.constant 0 : i32
    %9 = arith.cmpi slt, %5, %c0_i32_6 : i32
    %10 = arith.xori %8, %9 : i1
    %11 = arith.andi %10, %7 : i1
    %12 = arith.addi %6, %5 : i32
    %13 = arith.select %11, %12, %6 : i32
    %c0_i32_7 = arith.constant 0 : i32
    %14 = arith.cmpi sgt, %13, %c0_i32_7 : i32
    %15 = arith.extui %14 : i1 to i32
    %16 = arith.sitofp %15 : i32 to f32
    %c3_i32 = arith.constant 3 : i32
    %17 = arith.cmpi slt, %13, %c3_i32 : i32
    %18 = arith.extui %17 : i1 to i32
    %19 = arith.sitofp %18 : i32 to f32
    %c0_8 = arith.constant 0 : index
    %c0_9 = arith.constant 0 : index
    %c0_10 = arith.constant 0 : index
    %20 = vector.load %arg2[%c0_8, %c0_9, %c0_10] : memref<1x16x512xf32, #tpu.memory_space<vmem>>, vector<1x16x512xf32>
    %21 = vector.shape_cast %20 : vector<1x16x512xf32> to vector<16x512xf32>
    %c0_11 = arith.constant 0 : index
    %c0_12 = arith.constant 0 : index
    %c0_13 = arith.constant 0 : index
    %22 = vector.load %arg1[%c0_11, %c0_12, %c0_13] : memref<1x16x512xf32, #tpu.memory_space<vmem>>, vector<1x16x512xf32>
    %23 = vector.shape_cast %22 : vector<1x16x512xf32> to vector<16x512xf32>
    %24 = vector.broadcast %16 : f32 to vector<16x512xf32>
    %25 = arith.mulf %23, %24 : vector<16x512xf32>
    %c0_14 = arith.constant 0 : index
    %c0_15 = arith.constant 0 : index
    %c0_16 = arith.constant 0 : index
    %26 = vector.load %arg3[%c0_14, %c0_15, %c0_16] : memref<1x16x512xf32, #tpu.memory_space<vmem>>, vector<1x16x512xf32>
    %27 = vector.shape_cast %26 : vector<1x16x512xf32> to vector<16x512xf32>
    %28 = vector.broadcast %19 : f32 to vector<16x512xf32>
    %29 = arith.mulf %27, %28 : vector<16x512xf32>
    %c33_i32 = arith.constant 33 : i32
    %30 = tpu.dynamic_rotate %21 by %c33_i32 dim 1 : vector<16x512xf32>, i32 -> vector<16x512xf32>
    %31 = arith.mulf %2, %0 : vector<1x512xf32>
    %32 = vector.broadcast %31 : vector<1x512xf32> to vector<16x512xf32>
    %33 = arith.mulf %30, %32 : vector<16x512xf32>
    %34 = arith.truncf %33 : vector<16x512xf32> to vector<16x512xbf16>
    %c0_17 = arith.constant 0 : index
    %c0_18 = arith.constant 0 : index
    %c0_19 = arith.constant 0 : index
    %35 = vector.load %arg5[%c0_17, %c0_18, %c0_19] : memref<9x32x16xbf16, #tpu.memory_space<vmem>>, vector<1x32x16xbf16>
    %36 = vector.shape_cast %35 : vector<1x32x16xbf16> to vector<32x16xbf16>
    %cst = arith.constant dense<0.000000e+00> : vector<32x512xf32>
    %37 = tpu.matmul %36, %34, %cst {dimension_numbers = #tpu.dot_dimension_numbers<[1], [0], [0], [1], [0, 0, 1, 1], [], []>} : vector<32x16xbf16>, vector<16x512xbf16>, vector<32x512xf32> -> vector<32x512xf32>
    %c32_i32 = arith.constant 32 : i32
    %38 = tpu.dynamic_rotate %21 by %c32_i32 dim 1 : vector<16x512xf32>, i32 -> vector<16x512xf32>
    %39 = vector.broadcast %2 : vector<1x512xf32> to vector<16x512xf32>
    %40 = arith.mulf %38, %39 : vector<16x512xf32>
    %41 = arith.truncf %40 : vector<16x512xf32> to vector<16x512xbf16>
    %c1_20 = arith.constant 1 : index
    %c0_21 = arith.constant 0 : index
    %c0_22 = arith.constant 0 : index
    %42 = vector.load %arg5[%c1_20, %c0_21, %c0_22] : memref<9x32x16xbf16, #tpu.memory_space<vmem>>, vector<1x32x16xbf16>
    %43 = vector.shape_cast %42 : vector<1x32x16xbf16> to vector<32x16xbf16>
    %cst_23 = arith.constant dense<0.000000e+00> : vector<32x512xf32>
    %44 = tpu.matmul %43, %41, %cst_23 {dimension_numbers = #tpu.dot_dimension_numbers<[1], [0], [0], [1], [0, 0, 1, 1], [], []>} : vector<32x16xbf16>, vector<16x512xbf16>, vector<32x512xf32> -> vector<32x512xf32>
    %45 = arith.addf %37, %44 : vector<32x512xf32>
    %c31_i32 = arith.constant 31 : i32
    %46 = tpu.dynamic_rotate %21 by %c31_i32 dim 1 : vector<16x512xf32>, i32 -> vector<16x512xf32>
    %47 = arith.mulf %2, %1 : vector<1x512xf32>
    %48 = vector.broadcast %47 : vector<1x512xf32> to vector<16x512xf32>
    %49 = arith.mulf %46, %48 : vector<16x512xf32>
    %50 = arith.truncf %49 : vector<16x512xf32> to vector<16x512xbf16>
    %c2_24 = arith.constant 2 : index
    %c0_25 = arith.constant 0 : index
    %c0_26 = arith.constant 0 : index
    %51 = vector.load %arg5[%c2_24, %c0_25, %c0_26] : memref<9x32x16xbf16, #tpu.memory_space<vmem>>, vector<1x32x16xbf16>
    %52 = vector.shape_cast %51 : vector<1x32x16xbf16> to vector<32x16xbf16>
    %cst_27 = arith.constant dense<0.000000e+00> : vector<32x512xf32>
    %53 = tpu.matmul %52, %50, %cst_27 {dimension_numbers = #tpu.dot_dimension_numbers<[1], [0], [0], [1], [0, 0, 1, 1], [], []>} : vector<32x16xbf16>, vector<16x512xbf16>, vector<32x512xf32> -> vector<32x512xf32>
    %54 = arith.addf %45, %53 : vector<32x512xf32>
    %c1_i32_28 = arith.constant 1 : i32
    %55 = tpu.dynamic_rotate %21 by %c1_i32_28 dim 1 : vector<16x512xf32>, i32 -> vector<16x512xf32>
    %56 = vector.broadcast %0 : vector<1x512xf32> to vector<16x512xf32>
    %57 = arith.mulf %55, %56 : vector<16x512xf32>
    %58 = arith.truncf %57 : vector<16x512xf32> to vector<16x512xbf16>
    %c3_29 = arith.constant 3 : index
    %c0_30 = arith.constant 0 : index
    %c0_31 = arith.constant 0 : index
    %59 = vector.load %arg5[%c3_29, %c0_30, %c0_31] : memref<9x32x16xbf16, #tpu.memory_space<vmem>>, vector<1x32x16xbf16>
    %60 = vector.shape_cast %59 : vector<1x32x16xbf16> to vector<32x16xbf16>
    %cst_32 = arith.constant dense<0.000000e+00> : vector<32x512xf32>
    %61 = tpu.matmul %60, %58, %cst_32 {dimension_numbers = #tpu.dot_dimension_numbers<[1], [0], [0], [1], [0, 0, 1, 1], [], []>} : vector<32x16xbf16>, vector<16x512xbf16>, vector<32x512xf32> -> vector<32x512xf32>
    %62 = arith.addf %54, %61 : vector<32x512xf32>
    %63 = arith.truncf %21 : vector<16x512xf32> to vector<16x512xbf16>
    %c4 = arith.constant 4 : index
    %c0_33 = arith.constant 0 : index
    %c0_34 = arith.constant 0 : index
    %64 = vector.load %arg5[%c4, %c0_33, %c0_34] : memref<9x32x16xbf16, #tpu.memory_space<vmem>>, vector<1x32x16xbf16>
    %65 = vector.shape_cast %64 : vector<1x32x16xbf16> to vector<32x16xbf16>
    %cst_35 = arith.constant dense<0.000000e+00> : vector<32x512xf32>
    %66 = tpu.matmul %65, %63, %cst_35 {dimension_numbers = #tpu.dot_dimension_numbers<[1], [0], [0], [1], [0, 0, 1, 1], [], []>} : vector<32x16xbf16>, vector<16x512xbf16>, vector<32x512xf32> -> vector<32x512xf32>
    %67 = arith.addf %62, %66 : vector<32x512xf32>
    %c511_i32 = arith.constant 511 : i32
    %68 = tpu.dynamic_rotate %21 by %c511_i32 dim 1 : vector<16x512xf32>, i32 -> vector<16x512xf32>
    %69 = vector.broadcast %1 : vector<1x512xf32> to vector<16x512xf32>
    %70 = arith.mulf %68, %69 : vector<16x512xf32>
    %71 = arith.truncf %70 : vector<16x512xf32> to vector<16x512xbf16>
    %c5 = arith.constant 5 : index
    %c0_36 = arith.constant 0 : index
    %c0_37 = arith.constant 0 : index
    %72 = vector.load %arg5[%c5, %c0_36, %c0_37] : memref<9x32x16xbf16, #tpu.memory_space<vmem>>, vector<1x32x16xbf16>
    %73 = vector.shape_cast %72 : vector<1x32x16xbf16> to vector<32x16xbf16>
    %cst_38 = arith.constant dense<0.000000e+00> : vector<32x512xf32>
    %74 = tpu.matmul %73, %71, %cst_38 {dimension_numbers = #tpu.dot_dimension_numbers<[1], [0], [0], [1], [0, 0, 1, 1], [], []>} : vector<32x16xbf16>, vector<16x512xbf16>, vector<32x512xf32> -> vector<32x512xf32>
    %75 = arith.addf %67, %74 : vector<32x512xf32>
    %c481_i32 = arith.constant 481 : i32
    %76 = tpu.dynamic_rotate %21 by %c481_i32 dim 1 : vector<16x512xf32>, i32 -> vector<16x512xf32>
    %77 = arith.mulf %3, %0 : vector<1x512xf32>
    %78 = vector.broadcast %77 : vector<1x512xf32> to vector<16x512xf32>
    %79 = arith.mulf %76, %78 : vector<16x512xf32>
    %80 = arith.truncf %79 : vector<16x512xf32> to vector<16x512xbf16>
    %c6 = arith.constant 6 : index
    %c0_39 = arith.constant 0 : index
    %c0_40 = arith.constant 0 : index
    %81 = vector.load %arg5[%c6, %c0_39, %c0_40] : memref<9x32x16xbf16, #tpu.memory_space<vmem>>, vector<1x32x16xbf16>
    %82 = vector.shape_cast %81 : vector<1x32x16xbf16> to vector<32x16xbf16>
    %cst_41 = arith.constant dense<0.000000e+00> : vector<32x512xf32>
    %83 = tpu.matmul %82, %80, %cst_41 {dimension_numbers = #tpu.dot_dimension_numbers<[1], [0], [0], [1], [0, 0, 1, 1], [], []>} : vector<32x16xbf16>, vector<16x512xbf16>, vector<32x512xf32> -> vector<32x512xf32>
    %84 = arith.addf %75, %83 : vector<32x512xf32>
    %c480_i32 = arith.constant 480 : i32
    %85 = tpu.dynamic_rotate %21 by %c480_i32 dim 1 : vector<16x512xf32>, i32 -> vector<16x512xf32>
    %86 = vector.broadcast %3 : vector<1x512xf32> to vector<16x512xf32>
    %87 = arith.mulf %85, %86 : vector<16x512xf32>
    %88 = arith.truncf %87 : vector<16x512xf32> to vector<16x512xbf16>
    %c7 = arith.constant 7 : index
    %c0_42 = arith.constant 0 : index
    %c0_43 = arith.constant 0 : index
    %89 = vector.load %arg5[%c7, %c0_42, %c0_43] : memref<9x32x16xbf16, #tpu.memory_space<vmem>>, vector<1x32x16xbf16>
    %90 = vector.shape_cast %89 : vector<1x32x16xbf16> to vector<32x16xbf16>
    %cst_44 = arith.constant dense<0.000000e+00> : vector<32x512xf32>
    %91 = tpu.matmul %90, %88, %cst_44 {dimension_numbers = #tpu.dot_dimension_numbers<[1], [0], [0], [1], [0, 0, 1, 1], [], []>} : vector<32x16xbf16>, vector<16x512xbf16>, vector<32x512xf32> -> vector<32x512xf32>
    %92 = arith.addf %84, %91 : vector<32x512xf32>
    %c479_i32 = arith.constant 479 : i32
    %93 = tpu.dynamic_rotate %21 by %c479_i32 dim 1 : vector<16x512xf32>, i32 -> vector<16x512xf32>
    %94 = arith.mulf %3, %1 : vector<1x512xf32>
    %95 = vector.broadcast %94 : vector<1x512xf32> to vector<16x512xf32>
    %96 = arith.mulf %93, %95 : vector<16x512xf32>
    %97 = arith.truncf %96 : vector<16x512xf32> to vector<16x512xbf16>
    %c8 = arith.constant 8 : index
    %c0_45 = arith.constant 0 : index
    %c0_46 = arith.constant 0 : index
    %98 = vector.load %arg5[%c8, %c0_45, %c0_46] : memref<9x32x16xbf16, #tpu.memory_space<vmem>>, vector<1x32x16xbf16>
    %99 = vector.shape_cast %98 : vector<1x32x16xbf16> to vector<32x16xbf16>
    %cst_47 = arith.constant dense<0.000000e+00> : vector<32x512xf32>
    %100 = tpu.matmul %99, %97, %cst_47 {dimension_numbers = #tpu.dot_dimension_numbers<[1], [0], [0], [1], [0, 0, 1, 1], [], []>} : vector<32x16xbf16>, vector<16x512xbf16>, vector<32x512xf32> -> vector<32x512xf32>
    %101 = arith.addf %92, %100 : vector<32x512xf32>
    %cst_48 = arith.constant 0.000000e+00 : f32
    %102 = vector.broadcast %cst_48 : f32 to vector<32x512xf32>
    %103 = arith.cmpf ogt, %101, %102 : vector<32x512xf32>
    %cst_49 = arith.constant 0.00999999977 : f32
    %104 = vector.broadcast %cst_49 : f32 to vector<32x512xf32>
    %105 = arith.mulf %104, %101 : vector<32x512xf32>
    %106 = arith.select %103, %101, %105 : vector<32x512xi1>, vector<32x512xf32>
    %c1_i32_50 = arith.constant 1 : i32
    %107 = tpu.dynamic_rotate %25 by %c1_i32_50 dim 1 : vector<16x512xf32>, i32 -> vector<16x512xf32>
    %108 = vector.broadcast %0 : vector<1x512xf32> to vector<16x512xf32>
    %109 = arith.mulf %107, %108 : vector<16x512xf32>
    %110 = arith.truncf %109 : vector<16x512xf32> to vector<16x512xbf16>
    %c0_51 = arith.constant 0 : index
    %c0_52 = arith.constant 0 : index
    %c0_53 = arith.constant 0 : index
    %111 = vector.load %arg6[%c0_51, %c0_52, %c0_53] : memref<9x32x16xbf16, #tpu.memory_space<vmem>>, vector<1x32x16xbf16>
    %112 = vector.shape_cast %111 : vector<1x32x16xbf16> to vector<32x16xbf16>
    %cst_54 = arith.constant dense<0.000000e+00> : vector<32x512xf32>
    %113 = tpu.matmul %112, %110, %cst_54 {dimension_numbers = #tpu.dot_dimension_numbers<[1], [0], [0], [1], [0, 0, 1, 1], [], []>} : vector<32x16xbf16>, vector<16x512xbf16>, vector<32x512xf32> -> vector<32x512xf32>
    %114 = arith.truncf %25 : vector<16x512xf32> to vector<16x512xbf16>
    %c1_55 = arith.constant 1 : index
    %c0_56 = arith.constant 0 : index
    %c0_57 = arith.constant 0 : index
    %115 = vector.load %arg6[%c1_55, %c0_56, %c0_57] : memref<9x32x16xbf16, #tpu.memory_space<vmem>>, vector<1x32x16xbf16>
    %116 = vector.shape_cast %115 : vector<1x32x16xbf16> to vector<32x16xbf16>
    %cst_58 = arith.constant dense<0.000000e+00> : vector<32x512xf32>
    %117 = tpu.matmul %116, %114, %cst_58 {dimension_numbers = #tpu.dot_dimension_numbers<[1], [0], [0], [1], [0, 0, 1, 1], [], []>} : vector<32x16xbf16>, vector<16x512xbf16>, vector<32x512xf32> -> vector<32x512xf32>
    %118 = arith.addf %113, %117 : vector<32x512xf32>
    %c511_i32_59 = arith.constant 511 : i32
    %119 = tpu.dynamic_rotate %25 by %c511_i32_59 dim 1 : vector<16x512xf32>, i32 -> vector<16x512xf32>
    %120 = vector.broadcast %1 : vector<1x512xf32> to vector<16x512xf32>
    %121 = arith.mulf %119, %120 : vector<16x512xf32>
    %122 = arith.truncf %121 : vector<16x512xf32> to vector<16x512xbf16>
    %c2_60 = arith.constant 2 : index
    %c0_61 = arith.constant 0 : index
    %c0_62 = arith.constant 0 : index
    %123 = vector.load %arg6[%c2_60, %c0_61, %c0_62] : memref<9x32x16xbf16, #tpu.memory_space<vmem>>, vector<1x32x16xbf16>
    %124 = vector.shape_cast %123 : vector<1x32x16xbf16> to vector<32x16xbf16>
    %cst_63 = arith.constant dense<0.000000e+00> : vector<32x512xf32>
    %125 = tpu.matmul %124, %122, %cst_63 {dimension_numbers = #tpu.dot_dimension_numbers<[1], [0], [0], [1], [0, 0, 1, 1], [], []>} : vector<32x16xbf16>, vector<16x512xbf16>, vector<32x512xf32> -> vector<32x512xf32>
    %126 = arith.addf %118, %125 : vector<32x512xf32>
    %c1_i32_64 = arith.constant 1 : i32
    %127 = tpu.dynamic_rotate %21 by %c1_i32_64 dim 1 : vector<16x512xf32>, i32 -> vector<16x512xf32>
    %128 = vector.broadcast %0 : vector<1x512xf32> to vector<16x512xf32>
    %129 = arith.mulf %127, %128 : vector<16x512xf32>
    %130 = arith.truncf %129 : vector<16x512xf32> to vector<16x512xbf16>
    %c3_65 = arith.constant 3 : index
    %c0_66 = arith.constant 0 : index
    %c0_67 = arith.constant 0 : index
    %131 = vector.load %arg6[%c3_65, %c0_66, %c0_67] : memref<9x32x16xbf16, #tpu.memory_space<vmem>>, vector<1x32x16xbf16>
    %132 = vector.shape_cast %131 : vector<1x32x16xbf16> to vector<32x16xbf16>
    %cst_68 = arith.constant dense<0.000000e+00> : vector<32x512xf32>
    %133 = tpu.matmul %132, %130, %cst_68 {dimension_numbers = #tpu.dot_dimension_numbers<[1], [0], [0], [1], [0, 0, 1, 1], [], []>} : vector<32x16xbf16>, vector<16x512xbf16>, vector<32x512xf32> -> vector<32x512xf32>
    %134 = arith.addf %126, %133 : vector<32x512xf32>
    %135 = arith.truncf %21 : vector<16x512xf32> to vector<16x512xbf16>
    %c4_69 = arith.constant 4 : index
    %c0_70 = arith.constant 0 : index
    %c0_71 = arith.constant 0 : index
    %136 = vector.load %arg6[%c4_69, %c0_70, %c0_71] : memref<9x32x16xbf16, #tpu.memory_space<vmem>>, vector<1x32x16xbf16>
    %137 = vector.shape_cast %136 : vector<1x32x16xbf16> to vector<32x16xbf16>
    %cst_72 = arith.constant dense<0.000000e+00> : vector<32x512xf32>
    %138 = tpu.matmul %137, %135, %cst_72 {dimension_numbers = #tpu.dot_dimension_numbers<[1], [0], [0], [1], [0, 0, 1, 1], [], []>} : vector<32x16xbf16>, vector<16x512xbf16>, vector<32x512xf32> -> vector<32x512xf32>
    %139 = arith.addf %134, %138 : vector<32x512xf32>
    %c511_i32_73 = arith.constant 511 : i32
    %140 = tpu.dynamic_rotate %21 by %c511_i32_73 dim 1 : vector<16x512xf32>, i32 -> vector<16x512xf32>
    %141 = vector.broadcast %1 : vector<1x512xf32> to vector<16x512xf32>
    %142 = arith.mulf %140, %141 : vector<16x512xf32>
    %143 = arith.truncf %142 : vector<16x512xf32> to vector<16x512xbf16>
    %c5_74 = arith.constant 5 : index
    %c0_75 = arith.constant 0 : index
    %c0_76 = arith.constant 0 : index
    %144 = vector.load %arg6[%c5_74, %c0_75, %c0_76] : memref<9x32x16xbf16, #tpu.memory_space<vmem>>, vector<1x32x16xbf16>
    %145 = vector.shape_cast %144 : vector<1x32x16xbf16> to vector<32x16xbf16>
    %cst_77 = arith.constant dense<0.000000e+00> : vector<32x512xf32>
    %146 = tpu.matmul %145, %143, %cst_77 {dimension_numbers = #tpu.dot_dimension_numbers<[1], [0], [0], [1], [0, 0, 1, 1], [], []>} : vector<32x16xbf16>, vector<16x512xbf16>, vector<32x512xf32> -> vector<32x512xf32>
    %147 = arith.addf %139, %146 : vector<32x512xf32>
    %c1_i32_78 = arith.constant 1 : i32
    %148 = tpu.dynamic_rotate %29 by %c1_i32_78 dim 1 : vector<16x512xf32>, i32 -> vector<16x512xf32>
    %149 = vector.broadcast %0 : vector<1x512xf32> to vector<16x512xf32>
    %150 = arith.mulf %148, %149 : vector<16x512xf32>
    %151 = arith.truncf %150 : vector<16x512xf32> to vector<16x512xbf16>
    %c6_79 = arith.constant 6 : index
    %c0_80 = arith.constant 0 : index
    %c0_81 = arith.constant 0 : index
    %152 = vector.load %arg6[%c6_79, %c0_80, %c0_81] : memref<9x32x16xbf16, #tpu.memory_space<vmem>>, vector<1x32x16xbf16>
    %153 = vector.shape_cast %152 : vector<1x32x16xbf16> to vector<32x16xbf16>
    %cst_82 = arith.constant dense<0.000000e+00> : vector<32x512xf32>
    %154 = tpu.matmul %153, %151, %cst_82 {dimension_numbers = #tpu.dot_dimension_numbers<[1], [0], [0], [1], [0, 0, 1, 1], [], []>} : vector<32x16xbf16>, vector<16x512xbf16>, vector<32x512xf32> -> vector<32x512xf32>
    %155 = arith.addf %147, %154 : vector<32x512xf32>
    %156 = arith.truncf %29 : vector<16x512xf32> to vector<16x512xbf16>
    %c7_83 = arith.constant 7 : index
    %c0_84 = arith.constant 0 : index
    %c0_85 = arith.constant 0 : index
    %157 = vector.load %arg6[%c7_83, %c0_84, %c0_85] : memref<9x32x16xbf16, #tpu.memory_space<vmem>>, vector<1x32x16xbf16>
    %158 = vector.shape_cast %157 : vector<1x32x16xbf16> to vector<32x16xbf16>
    %cst_86 = arith.constant dense<0.000000e+00> : vector<32x512xf32>
    %159 = tpu.matmul %158, %156, %cst_86 {dimension_numbers = #tpu.dot_dimension_numbers<[1], [0], [0], [1], [0, 0, 1, 1], [], []>} : vector<32x16xbf16>, vector<16x512xbf16>, vector<32x512xf32> -> vector<32x512xf32>
    %160 = arith.addf %155, %159 : vector<32x512xf32>
    %c511_i32_87 = arith.constant 511 : i32
    %161 = tpu.dynamic_rotate %29 by %c511_i32_87 dim 1 : vector<16x512xf32>, i32 -> vector<16x512xf32>
    %162 = vector.broadcast %1 : vector<1x512xf32> to vector<16x512xf32>
    %163 = arith.mulf %161, %162 : vector<16x512xf32>
    %164 = arith.truncf %163 : vector<16x512xf32> to vector<16x512xbf16>
    %c8_88 = arith.constant 8 : index
    %c0_89 = arith.constant 0 : index
    %c0_90 = arith.constant 0 : index
    %165 = vector.load %arg6[%c8_88, %c0_89, %c0_90] : memref<9x32x16xbf16, #tpu.memory_space<vmem>>, vector<1x32x16xbf16>
    %166 = vector.shape_cast %165 : vector<1x32x16xbf16> to vector<32x16xbf16>
    %cst_91 = arith.constant dense<0.000000e+00> : vector<32x512xf32>
    %167 = tpu.matmul %166, %164, %cst_91 {dimension_numbers = #tpu.dot_dimension_numbers<[1], [0], [0], [1], [0, 0, 1, 1], [], []>} : vector<32x16xbf16>, vector<16x512xbf16>, vector<32x512xf32> -> vector<32x512xf32>
    %168 = arith.addf %160, %167 : vector<32x512xf32>
    %cst_92 = arith.constant 0.000000e+00 : f32
    %169 = vector.broadcast %cst_92 : f32 to vector<32x512xf32>
    %170 = arith.cmpf ogt, %168, %169 : vector<32x512xf32>
    %cst_93 = arith.constant 0.00999999977 : f32
    %171 = vector.broadcast %cst_93 : f32 to vector<32x512xf32>
    %172 = arith.mulf %171, %168 : vector<32x512xf32>
    %173 = arith.select %170, %168, %172 : vector<32x512xi1>, vector<32x512xf32>
    %c0_94 = arith.constant 0 : index
    %c0_95 = arith.constant 0 : index
    %c0_96 = arith.constant 0 : index
    %174 = vector.load %arg7[%c0_94, %c0_95, %c0_96] : memref<1x32x512xf32, #tpu.memory_space<vmem>>, vector<1x32x512xf32>
    %175 = vector.shape_cast %174 : vector<1x32x512xf32> to vector<32x512xf32>
    %176 = vector.shape_cast %106 : vector<32x512xf32> to vector<1x32x512xf32>
    tpu.vector_store %arg7[%c0_94, %c0_95, %c0_96], %176 {strides = array<i32>} : memref<1x32x512xf32, #tpu.memory_space<vmem>>, vector<1x32x512xf32>,
    %c0_97 = arith.constant 0 : index
    %c0_98 = arith.constant 0 : index
    %c0_99 = arith.constant 0 : index
    %177 = vector.load %arg8[%c0_97, %c0_98, %c0_99] : memref<1x32x512xf32, #tpu.memory_space<vmem>>, vector<1x32x512xf32>
    %178 = vector.shape_cast %177 : vector<1x32x512xf32> to vector<32x512xf32>
    %179 = vector.shape_cast %173 : vector<32x512xf32> to vector<1x32x512xf32>
    tpu.vector_store %arg8[%c0_97, %c0_98, %c0_99], %179 {strides = array<i32>} : memref<1x32x512xf32, #tpu.memory_space<vmem>>, vector<1x32x512xf32>,
    %cst_100 = arith.constant dense<0.000000e+00> : vector<32xf32>
    %180 = vector.multi_reduction <add>, %106, %cst_100 [1] : vector<32x512xf32> to vector<32xf32>
    %c0_101 = arith.constant 0 : index
    %c0_102 = arith.constant 0 : index
    %c0_103 = arith.constant 0 : index
    %181 = vector.load %arg9[%c0_101, %c0_102, %c0_103] : memref<1x4x32xf32, #tpu.memory_space<vmem>>, vector<1x1x32xf32>
    %182 = vector.shape_cast %181 : vector<1x1x32xf32> to vector<32xf32>
    %183 = vector.shape_cast %180 : vector<32xf32> to vector<1x1x32xf32>
    tpu.vector_store %arg9[%c0_101, %c0_102, %c0_103], %183 {strides = array<i32>} : memref<1x4x32xf32, #tpu.memory_space<vmem>>, vector<1x1x32xf32>,
    %184 = arith.mulf %106, %106 : vector<32x512xf32>
    %cst_104 = arith.constant dense<0.000000e+00> : vector<32xf32>
    %185 = vector.multi_reduction <add>, %184, %cst_104 [1] : vector<32x512xf32> to vector<32xf32>
    %c0_105 = arith.constant 0 : index
    %c1_106 = arith.constant 1 : index
    %c0_107 = arith.constant 0 : index
    %186 = vector.load %arg9[%c0_105, %c1_106, %c0_107] : memref<1x4x32xf32, #tpu.memory_space<vmem>>, vector<1x1x32xf32>
    %187 = vector.shape_cast %186 : vector<1x1x32xf32> to vector<32xf32>
    %188 = vector.shape_cast %185 : vector<32xf32> to vector<1x1x32xf32>
    tpu.vector_store %arg9[%c0_105, %c1_106, %c0_107], %188 {strides = array<i32>} : memref<1x4x32xf32, #tpu.memory_space<vmem>>, vector<1x1x32xf32>,
    %cst_108 = arith.constant dense<0.000000e+00> : vector<32xf32>
    %189 = vector.multi_reduction <add>, %173, %cst_108 [1] : vector<32x512xf32> to vector<32xf32>
    %c0_109 = arith.constant 0 : index
    %c2_110 = arith.constant 2 : index
    %c0_111 = arith.constant 0 : index
    %190 = vector.load %arg9[%c0_109, %c2_110, %c0_111] : memref<1x4x32xf32, #tpu.memory_space<vmem>>, vector<1x1x32xf32>
    %191 = vector.shape_cast %190 : vector<1x1x32xf32> to vector<32xf32>
    %192 = vector.shape_cast %189 : vector<32xf32> to vector<1x1x32xf32>
    tpu.vector_store %arg9[%c0_109, %c2_110, %c0_111], %192 {strides = array<i32>} : memref<1x4x32xf32, #tpu.memory_space<vmem>>, vector<1x1x32xf32>,
    %193 = arith.mulf %173, %173 : vector<32x512xf32>
    %cst_112 = arith.constant dense<0.000000e+00> : vector<32xf32>
    %194 = vector.multi_reduction <add>, %193, %cst_112 [1] : vector<32x512xf32> to vector<32xf32>
    %c0_113 = arith.constant 0 : index
    %c3_114 = arith.constant 3 : index
    %c0_115 = arith.constant 0 : index
    %195 = vector.load %arg9[%c0_113, %c3_114, %c0_115] : memref<1x4x32xf32, #tpu.memory_space<vmem>>, vector<1x1x32xf32>
    %196 = vector.shape_cast %195 : vector<1x1x32xf32> to vector<32xf32>
    %197 = vector.shape_cast %194 : vector<32xf32> to vector<1x1x32xf32>
    tpu.vector_store %arg9[%c0_113, %c3_114, %c0_115], %197 {strides = array<i32>} : memref<1x4x32xf32, #tpu.memory_space<vmem>>, vector<1x1x32xf32>,
    return
  }
  func.func @transform_0(%arg0: i32) -> (i32, i32, i32) {
    %c1_i32 = arith.constant 1 : i32
    %0 = arith.subi %arg0, %c1_i32 : i32
    %c0_i32 = arith.constant 0 : i32
    %1 = arith.maxsi %0, %c0_i32 : i32
    %c0_i32_0 = arith.constant 0 : i32
    %c0_i32_1 = arith.constant 0 : i32
    %c0_i32_2 = arith.constant 0 : i32
    return %1, %c0_i32_0, %c0_i32_1 : i32, i32, i32
  }
  func.func @transform_1(%arg0: i32) -> (i32, i32, i32) {
    %c0_i32 = arith.constant 0 : i32
    %c0_i32_0 = arith.constant 0 : i32
    %c0_i32_1 = arith.constant 0 : i32
    return %arg0, %c0_i32, %c0_i32_0 : i32, i32, i32
  }
  func.func @transform_2(%arg0: i32) -> (i32, i32, i32) {
    %c1_i32 = arith.constant 1 : i32
    %0 = arith.addi %arg0, %c1_i32 : i32
    %c7_i32 = arith.constant 7 : i32
    %1 = arith.minsi %0, %c7_i32 : i32
    %c0_i32 = arith.constant 0 : i32
    %c0_i32_0 = arith.constant 0 : i32
    %c0_i32_1 = arith.constant 0 : i32
    return %1, %c0_i32, %c0_i32_0 : i32, i32, i32
  }
  func.func @transform_3(%arg0: i32) -> (i32, i32) {
    %c0_i32 = arith.constant 0 : i32
    %c0_i32_0 = arith.constant 0 : i32
    %c0_i32_1 = arith.constant 0 : i32
    return %c0_i32, %c0_i32_0 : i32, i32
  }
  func.func @transform_4(%arg0: i32) -> (i32, i32, i32) {
    %c0_i32 = arith.constant 0 : i32
    %c0_i32_0 = arith.constant 0 : i32
    %c0_i32_1 = arith.constant 0 : i32
    %c0_i32_2 = arith.constant 0 : i32
    return %c0_i32, %c0_i32_0, %c0_i32_1 : i32, i32, i32
  }
  func.func @transform_5(%arg0: i32) -> (i32, i32, i32) {
    %c0_i32 = arith.constant 0 : i32
    %c0_i32_0 = arith.constant 0 : i32
    %c0_i32_1 = arith.constant 0 : i32
    %c0_i32_2 = arith.constant 0 : i32
    return %c0_i32, %c0_i32_0, %c0_i32_1 : i32, i32, i32
  }
  func.func @transform_6(%arg0: i32) -> (i32, i32, i32) {
    %c0_i32 = arith.constant 0 : i32
    %c0_i32_0 = arith.constant 0 : i32
    %c0_i32_1 = arith.constant 0 : i32
    return %arg0, %c0_i32, %c0_i32_0 : i32, i32, i32
  }
  func.func @transform_7(%arg0: i32) -> (i32, i32, i32) {
    %c0_i32 = arith.constant 0 : i32
    %c0_i32_0 = arith.constant 0 : i32
    %c0_i32_1 = arith.constant 0 : i32
    return %arg0, %c0_i32, %c0_i32_0 : i32, i32, i32
  }
  func.func @transform_8(%arg0: i32) -> (i32, i32, i32) {
    %c0_i32 = arith.constant 0 : i32
    %c0_i32_0 = arith.constant 0 : i32
    %c0_i32_1 = arith.constant 0 : i32
    return %arg0, %c0_i32, %c0_i32_0 : i32, i32, i32
  }
}

module attributes {stable_mosaic.version = 11 : i64} {
  func.func @pass3(%arg0: i32, %arg1: memref<1x32x512xf32, #tpu.memory_space<vmem>>, %arg2: memref<1x32x512xf32, #tpu.memory_space<vmem>>, %arg3: memref<4x32x1xf32, #tpu.memory_space<vmem>>, %arg4: memref<1x32x512xf32, #tpu.memory_space<vmem>>) attributes {dimension_semantics = [#tpu.dimension_semantics<parallel>], iteration_bounds = array<i64: 8>, scalar_prefetch = 0 : i64, scratch_operands = 0 : i64, tpu.core_type = #tpu.core_type<tc>, window_params = [{transform_indices = @transform_0, window_bounds = array<i64: 1, 32, 512>}, {transform_indices = @transform_1, window_bounds = array<i64: 1, 32, 512>}, {pipeline_mode = #tpu.pipeline_mode<synchronous>, transform_indices = @transform_2, window_bounds = array<i64: 4, 32, 1>}, {transform_indices = @transform_3, window_bounds = array<i64: 1, 32, 512>}]} {
    %c0 = arith.constant 0 : index
    %c0_0 = arith.constant 0 : index
    %c0_1 = arith.constant 0 : index
    %0 = vector.load %arg3[%c0, %c0_0, %c0_1] : memref<4x32x1xf32, #tpu.memory_space<vmem>>, vector<1x32x1xf32>
    %1 = vector.shape_cast %0 : vector<1x32x1xf32> to vector<32x1xf32>
    %c1 = arith.constant 1 : index
    %c0_2 = arith.constant 0 : index
    %c0_3 = arith.constant 0 : index
    %2 = vector.load %arg3[%c1, %c0_2, %c0_3] : memref<4x32x1xf32, #tpu.memory_space<vmem>>, vector<1x32x1xf32>
    %3 = vector.shape_cast %2 : vector<1x32x1xf32> to vector<32x1xf32>
    %c2 = arith.constant 2 : index
    %c0_4 = arith.constant 0 : index
    %c0_5 = arith.constant 0 : index
    %4 = vector.load %arg3[%c2, %c0_4, %c0_5] : memref<4x32x1xf32, #tpu.memory_space<vmem>>, vector<1x32x1xf32>
    %5 = vector.shape_cast %4 : vector<1x32x1xf32> to vector<32x1xf32>
    %c3 = arith.constant 3 : index
    %c0_6 = arith.constant 0 : index
    %c0_7 = arith.constant 0 : index
    %6 = vector.load %arg3[%c3, %c0_6, %c0_7] : memref<4x32x1xf32, #tpu.memory_space<vmem>>, vector<1x32x1xf32>
    %7 = vector.shape_cast %6 : vector<1x32x1xf32> to vector<32x1xf32>
    %c0_8 = arith.constant 0 : index
    %c0_9 = arith.constant 0 : index
    %c0_10 = arith.constant 0 : index
    %8 = vector.load %arg2[%c0_8, %c0_9, %c0_10] : memref<1x32x512xf32, #tpu.memory_space<vmem>>, vector<1x32x512xf32>
    %9 = vector.shape_cast %8 : vector<1x32x512xf32> to vector<32x512xf32>
    %10 = vector.broadcast %5 : vector<32x1xf32> to vector<32x512xf32>
    %11 = arith.mulf %9, %10 : vector<32x512xf32>
    %c0_11 = arith.constant 0 : index
    %c0_12 = arith.constant 0 : index
    %c0_13 = arith.constant 0 : index
    %12 = vector.load %arg1[%c0_11, %c0_12, %c0_13] : memref<1x32x512xf32, #tpu.memory_space<vmem>>, vector<1x32x512xf32>
    %13 = vector.shape_cast %12 : vector<1x32x512xf32> to vector<32x512xf32>
    %14 = vector.broadcast %1 : vector<32x1xf32> to vector<32x512xf32>
    %15 = arith.mulf %13, %14 : vector<32x512xf32>
    %16 = arith.addf %11, %15 : vector<32x512xf32>
    %17 = arith.addf %3, %7 : vector<32x1xf32>
    %18 = vector.broadcast %17 : vector<32x1xf32> to vector<32x512xf32>
    %19 = arith.addf %16, %18 : vector<32x512xf32>
    %c0_14 = arith.constant 0 : index
    %c0_15 = arith.constant 0 : index
    %c0_16 = arith.constant 0 : index
    %20 = vector.load %arg4[%c0_14, %c0_15, %c0_16] : memref<1x32x512xf32, #tpu.memory_space<vmem>>, vector<1x32x512xf32>
    %21 = vector.shape_cast %20 : vector<1x32x512xf32> to vector<32x512xf32>
    %22 = vector.shape_cast %19 : vector<32x512xf32> to vector<1x32x512xf32>
    tpu.vector_store %arg4[%c0_14, %c0_15, %c0_16], %22 {strides = array<i32>} : memref<1x32x512xf32, #tpu.memory_space<vmem>>, vector<1x32x512xf32>,
    return
  }
  func.func @transform_0(%arg0: i32) -> (i32, i32, i32) {
    %c0_i32 = arith.constant 0 : i32
    %c0_i32_0 = arith.constant 0 : i32
    %c0_i32_1 = arith.constant 0 : i32
    return %arg0, %c0_i32, %c0_i32_0 : i32, i32, i32
  }
  func.func @transform_1(%arg0: i32) -> (i32, i32, i32) {
    %c0_i32 = arith.constant 0 : i32
    %c0_i32_0 = arith.constant 0 : i32
    %c0_i32_1 = arith.constant 0 : i32
    return %arg0, %c0_i32, %c0_i32_0 : i32, i32, i32
  }
  func.func @transform_2(%arg0: i32) -> (i32, i32, i32) {
    %c0_i32 = arith.constant 0 : i32
    %c0_i32_0 = arith.constant 0 : i32
    %c0_i32_1 = arith.constant 0 : i32
    %c0_i32_2 = arith.constant 0 : i32
    return %c0_i32, %c0_i32_0, %c0_i32_1 : i32, i32, i32
  }
  func.func @transform_3(%arg0: i32) -> (i32, i32, i32) {
    %c0_i32 = arith.constant 0 : i32
    %c0_i32_0 = arith.constant 0 : i32
    %c0_i32_1 = arith.constant 0 : i32
    return %arg0, %c0_i32, %c0_i32_0 : i32, i32, i32
  }
}

module attributes {stable_mosaic.version = 11 : i64} {
  func.func @pass2(%arg0: i32, %arg1: memref<1x32x512xf32, #tpu.memory_space<vmem>>, %arg2: memref<1x32x512xf32, #tpu.memory_space<vmem>>, %arg3: memref<1x32x512xf32, #tpu.memory_space<vmem>>, %arg4: memref<1x32x512xf32, #tpu.memory_space<vmem>>, %arg5: memref<4x512xf32, #tpu.memory_space<vmem>>, %arg6: memref<9x32x32xbf16, #tpu.memory_space<vmem>>, %arg7: memref<9x32x32xbf16, #tpu.memory_space<vmem>>, %arg8: memref<4x32x1xf32, #tpu.memory_space<vmem>>, %arg9: memref<1x32x512xf32, #tpu.memory_space<vmem>>, %arg10: memref<1x32x512xf32, #tpu.memory_space<vmem>>, %arg11: memref<1x4x32xf32, #tpu.memory_space<vmem>>) attributes {dimension_semantics = [#tpu.dimension_semantics<parallel>], iteration_bounds = array<i64: 8>, scalar_prefetch = 0 : i64, scratch_operands = 0 : i64, tpu.core_type = #tpu.core_type<tc>, window_params = [{transform_indices = @transform_0, window_bounds = array<i64: 1, 32, 512>}, {transform_indices = @transform_1, window_bounds = array<i64: 1, 32, 512>}, {transform_indices = @transform_2, window_bounds = array<i64: 1, 32, 512>}, {transform_indices = @transform_3, window_bounds = array<i64: 1, 32, 512>}, {pipeline_mode = #tpu.pipeline_mode<synchronous>, transform_indices = @transform_4, window_bounds = array<i64: 4, 512>}, {pipeline_mode = #tpu.pipeline_mode<synchronous>, transform_indices = @transform_5, window_bounds = array<i64: 9, 32, 32>}, {pipeline_mode = #tpu.pipeline_mode<synchronous>, transform_indices = @transform_6, window_bounds = array<i64: 9, 32, 32>}, {pipeline_mode = #tpu.pipeline_mode<synchronous>, transform_indices = @transform_7, window_bounds = array<i64: 4, 32, 1>}, {transform_indices = @transform_8, window_bounds = array<i64: 1, 32, 512>}, {transform_indices = @transform_9, window_bounds = array<i64: 1, 32, 512>}, {transform_indices = @transform_10, window_bounds = array<i64: 1, 4, 32>}]} {
    %c0 = arith.constant 0 : index
    %c0_0 = arith.constant 0 : index
    %0 = vector.load %arg5[%c0, %c0_0] : memref<4x512xf32, #tpu.memory_space<vmem>>, vector<1x512xf32>
    %c1 = arith.constant 1 : index
    %c0_1 = arith.constant 0 : index
    %1 = vector.load %arg5[%c1, %c0_1] : memref<4x512xf32, #tpu.memory_space<vmem>>, vector<1x512xf32>
    %c2 = arith.constant 2 : index
    %c0_2 = arith.constant 0 : index
    %2 = vector.load %arg5[%c2, %c0_2] : memref<4x512xf32, #tpu.memory_space<vmem>>, vector<1x512xf32>
    %c3 = arith.constant 3 : index
    %c0_3 = arith.constant 0 : index
    %3 = vector.load %arg5[%c3, %c0_3] : memref<4x512xf32, #tpu.memory_space<vmem>>, vector<1x512xf32>
    %c4_i32 = arith.constant 4 : i32
    %c0_i32 = arith.constant 0 : i32
    %4 = arith.cmpi eq, %c4_i32, %c0_i32 : i32
    %c1_i32 = arith.constant 1 : i32
    %5 = arith.select %4, %c1_i32, %c4_i32 : i32
    %6 = arith.remsi %arg0, %5 : i32
    %c0_i32_4 = arith.constant 0 : i32
    %7 = arith.cmpi ne, %6, %c0_i32_4 : i32
    %c0_i32_5 = arith.constant 0 : i32
    %8 = arith.cmpi slt, %6, %c0_i32_5 : i32
    %c0_i32_6 = arith.constant 0 : i32
    %9 = arith.cmpi slt, %5, %c0_i32_6 : i32
    %10 = arith.xori %8, %9 : i1
    %11 = arith.andi %10, %7 : i1
    %12 = arith.addi %6, %5 : i32
    %13 = arith.select %11, %12, %6 : i32
    %c0_i32_7 = arith.constant 0 : i32
    %14 = arith.cmpi sgt, %13, %c0_i32_7 : i32
    %15 = arith.extui %14 : i1 to i32
    %16 = arith.sitofp %15 : i32 to f32
    %c3_i32 = arith.constant 3 : i32
    %17 = arith.cmpi slt, %13, %c3_i32 : i32
    %18 = arith.extui %17 : i1 to i32
    %19 = arith.sitofp %18 : i32 to f32
    %c0_8 = arith.constant 0 : index
    %c0_9 = arith.constant 0 : index
    %c0_10 = arith.constant 0 : index
    %20 = vector.load %arg8[%c0_8, %c0_9, %c0_10] : memref<4x32x1xf32, #tpu.memory_space<vmem>>, vector<1x32x1xf32>
    %21 = vector.shape_cast %20 : vector<1x32x1xf32> to vector<32x1xf32>
    %c1_11 = arith.constant 1 : index
    %c0_12 = arith.constant 0 : index
    %c0_13 = arith.constant 0 : index
    %22 = vector.load %arg8[%c1_11, %c0_12, %c0_13] : memref<4x32x1xf32, #tpu.memory_space<vmem>>, vector<1x32x1xf32>
    %23 = vector.shape_cast %22 : vector<1x32x1xf32> to vector<32x1xf32>
    %c2_14 = arith.constant 2 : index
    %c0_15 = arith.constant 0 : index
    %c0_16 = arith.constant 0 : index
    %24 = vector.load %arg8[%c2_14, %c0_15, %c0_16] : memref<4x32x1xf32, #tpu.memory_space<vmem>>, vector<1x32x1xf32>
    %25 = vector.shape_cast %24 : vector<1x32x1xf32> to vector<32x1xf32>
    %c3_17 = arith.constant 3 : index
    %c0_18 = arith.constant 0 : index
    %c0_19 = arith.constant 0 : index
    %26 = vector.load %arg8[%c3_17, %c0_18, %c0_19] : memref<4x32x1xf32, #tpu.memory_space<vmem>>, vector<1x32x1xf32>
    %27 = vector.shape_cast %26 : vector<1x32x1xf32> to vector<32x1xf32>
    %c0_20 = arith.constant 0 : index
    %c0_21 = arith.constant 0 : index
    %c0_22 = arith.constant 0 : index
    %28 = vector.load %arg2[%c0_20, %c0_21, %c0_22] : memref<1x32x512xf32, #tpu.memory_space<vmem>>, vector<1x32x512xf32>
    %29 = vector.shape_cast %28 : vector<1x32x512xf32> to vector<32x512xf32>
    %30 = vector.broadcast %21 : vector<32x1xf32> to vector<32x512xf32>
    %31 = arith.mulf %29, %30 : vector<32x512xf32>
    %32 = vector.broadcast %23 : vector<32x1xf32> to vector<32x512xf32>
    %33 = arith.addf %31, %32 : vector<32x512xf32>
    %c0_23 = arith.constant 0 : index
    %c0_24 = arith.constant 0 : index
    %c0_25 = arith.constant 0 : index
    %34 = vector.load %arg1[%c0_23, %c0_24, %c0_25] : memref<1x32x512xf32, #tpu.memory_space<vmem>>, vector<1x32x512xf32>
    %35 = vector.shape_cast %34 : vector<1x32x512xf32> to vector<32x512xf32>
    %36 = vector.broadcast %21 : vector<32x1xf32> to vector<32x512xf32>
    %37 = arith.mulf %35, %36 : vector<32x512xf32>
    %38 = vector.broadcast %23 : vector<32x1xf32> to vector<32x512xf32>
    %39 = arith.addf %37, %38 : vector<32x512xf32>
    %40 = vector.broadcast %16 : f32 to vector<32x512xf32>
    %41 = arith.mulf %39, %40 : vector<32x512xf32>
    %c0_26 = arith.constant 0 : index
    %c0_27 = arith.constant 0 : index
    %c0_28 = arith.constant 0 : index
    %42 = vector.load %arg3[%c0_26, %c0_27, %c0_28] : memref<1x32x512xf32, #tpu.memory_space<vmem>>, vector<1x32x512xf32>
    %43 = vector.shape_cast %42 : vector<1x32x512xf32> to vector<32x512xf32>
    %44 = vector.broadcast %21 : vector<32x1xf32> to vector<32x512xf32>
    %45 = arith.mulf %43, %44 : vector<32x512xf32>
    %46 = vector.broadcast %23 : vector<32x1xf32> to vector<32x512xf32>
    %47 = arith.addf %45, %46 : vector<32x512xf32>
    %48 = vector.broadcast %19 : f32 to vector<32x512xf32>
    %49 = arith.mulf %47, %48 : vector<32x512xf32>
    %c0_29 = arith.constant 0 : index
    %c0_30 = arith.constant 0 : index
    %c0_31 = arith.constant 0 : index
    %50 = vector.load %arg4[%c0_29, %c0_30, %c0_31] : memref<1x32x512xf32, #tpu.memory_space<vmem>>, vector<1x32x512xf32>
    %51 = vector.shape_cast %50 : vector<1x32x512xf32> to vector<32x512xf32>
    %52 = vector.broadcast %25 : vector<32x1xf32> to vector<32x512xf32>
    %53 = arith.mulf %51, %52 : vector<32x512xf32>
    %54 = vector.broadcast %27 : vector<32x1xf32> to vector<32x512xf32>
    %55 = arith.addf %53, %54 : vector<32x512xf32>
    %c1_i32_32 = arith.constant 1 : i32
    %56 = tpu.dynamic_rotate %41 by %c1_i32_32 dim 1 : vector<32x512xf32>, i32 -> vector<32x512xf32>
    %57 = vector.broadcast %0 : vector<1x512xf32> to vector<32x512xf32>
    %58 = arith.mulf %56, %57 : vector<32x512xf32>
    %59 = arith.truncf %58 : vector<32x512xf32> to vector<32x512xbf16>
    %c0_33 = arith.constant 0 : index
    %c0_34 = arith.constant 0 : index
    %c0_35 = arith.constant 0 : index
    %60 = vector.load %arg6[%c0_33, %c0_34, %c0_35] : memref<9x32x32xbf16, #tpu.memory_space<vmem>>, vector<1x32x32xbf16>
    %61 = vector.shape_cast %60 : vector<1x32x32xbf16> to vector<32x32xbf16>
    %cst = arith.constant dense<0.000000e+00> : vector<32x512xf32>
    %62 = tpu.matmul %61, %59, %cst {dimension_numbers = #tpu.dot_dimension_numbers<[1], [0], [0], [1], [0, 0, 1, 1], [], []>} : vector<32x32xbf16>, vector<32x512xbf16>, vector<32x512xf32> -> vector<32x512xf32>
    %63 = arith.truncf %41 : vector<32x512xf32> to vector<32x512xbf16>
    %c1_36 = arith.constant 1 : index
    %c0_37 = arith.constant 0 : index
    %c0_38 = arith.constant 0 : index
    %64 = vector.load %arg6[%c1_36, %c0_37, %c0_38] : memref<9x32x32xbf16, #tpu.memory_space<vmem>>, vector<1x32x32xbf16>
    %65 = vector.shape_cast %64 : vector<1x32x32xbf16> to vector<32x32xbf16>
    %cst_39 = arith.constant dense<0.000000e+00> : vector<32x512xf32>
    %66 = tpu.matmul %65, %63, %cst_39 {dimension_numbers = #tpu.dot_dimension_numbers<[1], [0], [0], [1], [0, 0, 1, 1], [], []>} : vector<32x32xbf16>, vector<32x512xbf16>, vector<32x512xf32> -> vector<32x512xf32>
    %67 = arith.addf %62, %66 : vector<32x512xf32>
    %c511_i32 = arith.constant 511 : i32
    %68 = tpu.dynamic_rotate %41 by %c511_i32 dim 1 : vector<32x512xf32>, i32 -> vector<32x512xf32>
    %69 = vector.broadcast %1 : vector<1x512xf32> to vector<32x512xf32>
    %70 = arith.mulf %68, %69 : vector<32x512xf32>
    %71 = arith.truncf %70 : vector<32x512xf32> to vector<32x512xbf16>
    %c2_40 = arith.constant 2 : index
    %c0_41 = arith.constant 0 : index
    %c0_42 = arith.constant 0 : index
    %72 = vector.load %arg6[%c2_40, %c0_41, %c0_42] : memref<9x32x32xbf16, #tpu.memory_space<vmem>>, vector<1x32x32xbf16>
    %73 = vector.shape_cast %72 : vector<1x32x32xbf16> to vector<32x32xbf16>
    %cst_43 = arith.constant dense<0.000000e+00> : vector<32x512xf32>
    %74 = tpu.matmul %73, %71, %cst_43 {dimension_numbers = #tpu.dot_dimension_numbers<[1], [0], [0], [1], [0, 0, 1, 1], [], []>} : vector<32x32xbf16>, vector<32x512xbf16>, vector<32x512xf32> -> vector<32x512xf32>
    %75 = arith.addf %67, %74 : vector<32x512xf32>
    %c1_i32_44 = arith.constant 1 : i32
    %76 = tpu.dynamic_rotate %33 by %c1_i32_44 dim 1 : vector<32x512xf32>, i32 -> vector<32x512xf32>
    %77 = vector.broadcast %0 : vector<1x512xf32> to vector<32x512xf32>
    %78 = arith.mulf %76, %77 : vector<32x512xf32>
    %79 = arith.truncf %78 : vector<32x512xf32> to vector<32x512xbf16>
    %c3_45 = arith.constant 3 : index
    %c0_46 = arith.constant 0 : index
    %c0_47 = arith.constant 0 : index
    %80 = vector.load %arg6[%c3_45, %c0_46, %c0_47] : memref<9x32x32xbf16, #tpu.memory_space<vmem>>, vector<1x32x32xbf16>
    %81 = vector.shape_cast %80 : vector<1x32x32xbf16> to vector<32x32xbf16>
    %cst_48 = arith.constant dense<0.000000e+00> : vector<32x512xf32>
    %82 = tpu.matmul %81, %79, %cst_48 {dimension_numbers = #tpu.dot_dimension_numbers<[1], [0], [0], [1], [0, 0, 1, 1], [], []>} : vector<32x32xbf16>, vector<32x512xbf16>, vector<32x512xf32> -> vector<32x512xf32>
    %83 = arith.addf %75, %82 : vector<32x512xf32>
    %84 = arith.truncf %33 : vector<32x512xf32> to vector<32x512xbf16>
    %c4 = arith.constant 4 : index
    %c0_49 = arith.constant 0 : index
    %c0_50 = arith.constant 0 : index
    %85 = vector.load %arg6[%c4, %c0_49, %c0_50] : memref<9x32x32xbf16, #tpu.memory_space<vmem>>, vector<1x32x32xbf16>
    %86 = vector.shape_cast %85 : vector<1x32x32xbf16> to vector<32x32xbf16>
    %cst_51 = arith.constant dense<0.000000e+00> : vector<32x512xf32>
    %87 = tpu.matmul %86, %84, %cst_51 {dimension_numbers = #tpu.dot_dimension_numbers<[1], [0], [0], [1], [0, 0, 1, 1], [], []>} : vector<32x32xbf16>, vector<32x512xbf16>, vector<32x512xf32> -> vector<32x512xf32>
    %88 = arith.addf %83, %87 : vector<32x512xf32>
    %c511_i32_52 = arith.constant 511 : i32
    %89 = tpu.dynamic_rotate %33 by %c511_i32_52 dim 1 : vector<32x512xf32>, i32 -> vector<32x512xf32>
    %90 = vector.broadcast %1 : vector<1x512xf32> to vector<32x512xf32>
    %91 = arith.mulf %89, %90 : vector<32x512xf32>
    %92 = arith.truncf %91 : vector<32x512xf32> to vector<32x512xbf16>
    %c5 = arith.constant 5 : index
    %c0_53 = arith.constant 0 : index
    %c0_54 = arith.constant 0 : index
    %93 = vector.load %arg6[%c5, %c0_53, %c0_54] : memref<9x32x32xbf16, #tpu.memory_space<vmem>>, vector<1x32x32xbf16>
    %94 = vector.shape_cast %93 : vector<1x32x32xbf16> to vector<32x32xbf16>
    %cst_55 = arith.constant dense<0.000000e+00> : vector<32x512xf32>
    %95 = tpu.matmul %94, %92, %cst_55 {dimension_numbers = #tpu.dot_dimension_numbers<[1], [0], [0], [1], [0, 0, 1, 1], [], []>} : vector<32x32xbf16>, vector<32x512xbf16>, vector<32x512xf32> -> vector<32x512xf32>
    %96 = arith.addf %88, %95 : vector<32x512xf32>
    %c1_i32_56 = arith.constant 1 : i32
    %97 = tpu.dynamic_rotate %49 by %c1_i32_56 dim 1 : vector<32x512xf32>, i32 -> vector<32x512xf32>
    %98 = vector.broadcast %0 : vector<1x512xf32> to vector<32x512xf32>
    %99 = arith.mulf %97, %98 : vector<32x512xf32>
    %100 = arith.truncf %99 : vector<32x512xf32> to vector<32x512xbf16>
    %c6 = arith.constant 6 : index
    %c0_57 = arith.constant 0 : index
    %c0_58 = arith.constant 0 : index
    %101 = vector.load %arg6[%c6, %c0_57, %c0_58] : memref<9x32x32xbf16, #tpu.memory_space<vmem>>, vector<1x32x32xbf16>
    %102 = vector.shape_cast %101 : vector<1x32x32xbf16> to vector<32x32xbf16>
    %cst_59 = arith.constant dense<0.000000e+00> : vector<32x512xf32>
    %103 = tpu.matmul %102, %100, %cst_59 {dimension_numbers = #tpu.dot_dimension_numbers<[1], [0], [0], [1], [0, 0, 1, 1], [], []>} : vector<32x32xbf16>, vector<32x512xbf16>, vector<32x512xf32> -> vector<32x512xf32>
    %104 = arith.addf %96, %103 : vector<32x512xf32>
    %105 = arith.truncf %49 : vector<32x512xf32> to vector<32x512xbf16>
    %c7 = arith.constant 7 : index
    %c0_60 = arith.constant 0 : index
    %c0_61 = arith.constant 0 : index
    %106 = vector.load %arg6[%c7, %c0_60, %c0_61] : memref<9x32x32xbf16, #tpu.memory_space<vmem>>, vector<1x32x32xbf16>
    %107 = vector.shape_cast %106 : vector<1x32x32xbf16> to vector<32x32xbf16>
    %cst_62 = arith.constant dense<0.000000e+00> : vector<32x512xf32>
    %108 = tpu.matmul %107, %105, %cst_62 {dimension_numbers = #tpu.dot_dimension_numbers<[1], [0], [0], [1], [0, 0, 1, 1], [], []>} : vector<32x32xbf16>, vector<32x512xbf16>, vector<32x512xf32> -> vector<32x512xf32>
    %109 = arith.addf %104, %108 : vector<32x512xf32>
    %c511_i32_63 = arith.constant 511 : i32
    %110 = tpu.dynamic_rotate %49 by %c511_i32_63 dim 1 : vector<32x512xf32>, i32 -> vector<32x512xf32>
    %111 = vector.broadcast %1 : vector<1x512xf32> to vector<32x512xf32>
    %112 = arith.mulf %110, %111 : vector<32x512xf32>
    %113 = arith.truncf %112 : vector<32x512xf32> to vector<32x512xbf16>
    %c8 = arith.constant 8 : index
    %c0_64 = arith.constant 0 : index
    %c0_65 = arith.constant 0 : index
    %114 = vector.load %arg6[%c8, %c0_64, %c0_65] : memref<9x32x32xbf16, #tpu.memory_space<vmem>>, vector<1x32x32xbf16>
    %115 = vector.shape_cast %114 : vector<1x32x32xbf16> to vector<32x32xbf16>
    %cst_66 = arith.constant dense<0.000000e+00> : vector<32x512xf32>
    %116 = tpu.matmul %115, %113, %cst_66 {dimension_numbers = #tpu.dot_dimension_numbers<[1], [0], [0], [1], [0, 0, 1, 1], [], []>} : vector<32x32xbf16>, vector<32x512xbf16>, vector<32x512xf32> -> vector<32x512xf32>
    %117 = arith.addf %109, %116 : vector<32x512xf32>
    %cst_67 = arith.constant 0.000000e+00 : f32
    %118 = vector.broadcast %cst_67 : f32 to vector<32x512xf32>
    %119 = arith.cmpf ogt, %117, %118 : vector<32x512xf32>
    %cst_68 = arith.constant 0.00999999977 : f32
    %120 = vector.broadcast %cst_68 : f32 to vector<32x512xf32>
    %121 = arith.mulf %120, %117 : vector<32x512xf32>
    %122 = arith.select %119, %117, %121 : vector<32x512xi1>, vector<32x512xf32>
    %c33_i32 = arith.constant 33 : i32
    %123 = tpu.dynamic_rotate %55 by %c33_i32 dim 1 : vector<32x512xf32>, i32 -> vector<32x512xf32>
    %124 = arith.mulf %2, %0 : vector<1x512xf32>
    %125 = vector.broadcast %124 : vector<1x512xf32> to vector<32x512xf32>
    %126 = arith.mulf %123, %125 : vector<32x512xf32>
    %127 = arith.truncf %126 : vector<32x512xf32> to vector<32x512xbf16>
    %c0_69 = arith.constant 0 : index
    %c0_70 = arith.constant 0 : index
    %c0_71 = arith.constant 0 : index
    %128 = vector.load %arg7[%c0_69, %c0_70, %c0_71] : memref<9x32x32xbf16, #tpu.memory_space<vmem>>, vector<1x32x32xbf16>
    %129 = vector.shape_cast %128 : vector<1x32x32xbf16> to vector<32x32xbf16>
    %cst_72 = arith.constant dense<0.000000e+00> : vector<32x512xf32>
    %130 = tpu.matmul %129, %127, %cst_72 {dimension_numbers = #tpu.dot_dimension_numbers<[1], [0], [0], [1], [0, 0, 1, 1], [], []>} : vector<32x32xbf16>, vector<32x512xbf16>, vector<32x512xf32> -> vector<32x512xf32>
    %c32_i32 = arith.constant 32 : i32
    %131 = tpu.dynamic_rotate %55 by %c32_i32 dim 1 : vector<32x512xf32>, i32 -> vector<32x512xf32>
    %132 = vector.broadcast %2 : vector<1x512xf32> to vector<32x512xf32>
    %133 = arith.mulf %131, %132 : vector<32x512xf32>
    %134 = arith.truncf %133 : vector<32x512xf32> to vector<32x512xbf16>
    %c1_73 = arith.constant 1 : index
    %c0_74 = arith.constant 0 : index
    %c0_75 = arith.constant 0 : index
    %135 = vector.load %arg7[%c1_73, %c0_74, %c0_75] : memref<9x32x32xbf16, #tpu.memory_space<vmem>>, vector<1x32x32xbf16>
    %136 = vector.shape_cast %135 : vector<1x32x32xbf16> to vector<32x32xbf16>
    %cst_76 = arith.constant dense<0.000000e+00> : vector<32x512xf32>
    %137 = tpu.matmul %136, %134, %cst_76 {dimension_numbers = #tpu.dot_dimension_numbers<[1], [0], [0], [1], [0, 0, 1, 1], [], []>} : vector<32x32xbf16>, vector<32x512xbf16>, vector<32x512xf32> -> vector<32x512xf32>
    %138 = arith.addf %130, %137 : vector<32x512xf32>
    %c31_i32 = arith.constant 31 : i32
    %139 = tpu.dynamic_rotate %55 by %c31_i32 dim 1 : vector<32x512xf32>, i32 -> vector<32x512xf32>
    %140 = arith.mulf %2, %1 : vector<1x512xf32>
    %141 = vector.broadcast %140 : vector<1x512xf32> to vector<32x512xf32>
    %142 = arith.mulf %139, %141 : vector<32x512xf32>
    %143 = arith.truncf %142 : vector<32x512xf32> to vector<32x512xbf16>
    %c2_77 = arith.constant 2 : index
    %c0_78 = arith.constant 0 : index
    %c0_79 = arith.constant 0 : index
    %144 = vector.load %arg7[%c2_77, %c0_78, %c0_79] : memref<9x32x32xbf16, #tpu.memory_space<vmem>>, vector<1x32x32xbf16>
    %145 = vector.shape_cast %144 : vector<1x32x32xbf16> to vector<32x32xbf16>
    %cst_80 = arith.constant dense<0.000000e+00> : vector<32x512xf32>
    %146 = tpu.matmul %145, %143, %cst_80 {dimension_numbers = #tpu.dot_dimension_numbers<[1], [0], [0], [1], [0, 0, 1, 1], [], []>} : vector<32x32xbf16>, vector<32x512xbf16>, vector<32x512xf32> -> vector<32x512xf32>
    %147 = arith.addf %138, %146 : vector<32x512xf32>
    %c1_i32_81 = arith.constant 1 : i32
    %148 = tpu.dynamic_rotate %55 by %c1_i32_81 dim 1 : vector<32x512xf32>, i32 -> vector<32x512xf32>
    %149 = vector.broadcast %0 : vector<1x512xf32> to vector<32x512xf32>
    %150 = arith.mulf %148, %149 : vector<32x512xf32>
    %151 = arith.truncf %150 : vector<32x512xf32> to vector<32x512xbf16>
    %c3_82 = arith.constant 3 : index
    %c0_83 = arith.constant 0 : index
    %c0_84 = arith.constant 0 : index
    %152 = vector.load %arg7[%c3_82, %c0_83, %c0_84] : memref<9x32x32xbf16, #tpu.memory_space<vmem>>, vector<1x32x32xbf16>
    %153 = vector.shape_cast %152 : vector<1x32x32xbf16> to vector<32x32xbf16>
    %cst_85 = arith.constant dense<0.000000e+00> : vector<32x512xf32>
    %154 = tpu.matmul %153, %151, %cst_85 {dimension_numbers = #tpu.dot_dimension_numbers<[1], [0], [0], [1], [0, 0, 1, 1], [], []>} : vector<32x32xbf16>, vector<32x512xbf16>, vector<32x512xf32> -> vector<32x512xf32>
    %155 = arith.addf %147, %154 : vector<32x512xf32>
    %156 = arith.truncf %55 : vector<32x512xf32> to vector<32x512xbf16>
    %c4_86 = arith.constant 4 : index
    %c0_87 = arith.constant 0 : index
    %c0_88 = arith.constant 0 : index
    %157 = vector.load %arg7[%c4_86, %c0_87, %c0_88] : memref<9x32x32xbf16, #tpu.memory_space<vmem>>, vector<1x32x32xbf16>
    %158 = vector.shape_cast %157 : vector<1x32x32xbf16> to vector<32x32xbf16>
    %cst_89 = arith.constant dense<0.000000e+00> : vector<32x512xf32>
    %159 = tpu.matmul %158, %156, %cst_89 {dimension_numbers = #tpu.dot_dimension_numbers<[1], [0], [0], [1], [0, 0, 1, 1], [], []>} : vector<32x32xbf16>, vector<32x512xbf16>, vector<32x512xf32> -> vector<32x512xf32>
    %160 = arith.addf %155, %159 : vector<32x512xf32>
    %c511_i32_90 = arith.constant 511 : i32
    %161 = tpu.dynamic_rotate %55 by %c511_i32_90 dim 1 : vector<32x512xf32>, i32 -> vector<32x512xf32>
    %162 = vector.broadcast %1 : vector<1x512xf32> to vector<32x512xf32>
    %163 = arith.mulf %161, %162 : vector<32x512xf32>
    %164 = arith.truncf %163 : vector<32x512xf32> to vector<32x512xbf16>
    %c5_91 = arith.constant 5 : index
    %c0_92 = arith.constant 0 : index
    %c0_93 = arith.constant 0 : index
    %165 = vector.load %arg7[%c5_91, %c0_92, %c0_93] : memref<9x32x32xbf16, #tpu.memory_space<vmem>>, vector<1x32x32xbf16>
    %166 = vector.shape_cast %165 : vector<1x32x32xbf16> to vector<32x32xbf16>
    %cst_94 = arith.constant dense<0.000000e+00> : vector<32x512xf32>
    %167 = tpu.matmul %166, %164, %cst_94 {dimension_numbers = #tpu.dot_dimension_numbers<[1], [0], [0], [1], [0, 0, 1, 1], [], []>} : vector<32x32xbf16>, vector<32x512xbf16>, vector<32x512xf32> -> vector<32x512xf32>
    %168 = arith.addf %160, %167 : vector<32x512xf32>
    %c481_i32 = arith.constant 481 : i32
    %169 = tpu.dynamic_rotate %55 by %c481_i32 dim 1 : vector<32x512xf32>, i32 -> vector<32x512xf32>
    %170 = arith.mulf %3, %0 : vector<1x512xf32>
    %171 = vector.broadcast %170 : vector<1x512xf32> to vector<32x512xf32>
    %172 = arith.mulf %169, %171 : vector<32x512xf32>
    %173 = arith.truncf %172 : vector<32x512xf32> to vector<32x512xbf16>
    %c6_95 = arith.constant 6 : index
    %c0_96 = arith.constant 0 : index
    %c0_97 = arith.constant 0 : index
    %174 = vector.load %arg7[%c6_95, %c0_96, %c0_97] : memref<9x32x32xbf16, #tpu.memory_space<vmem>>, vector<1x32x32xbf16>
    %175 = vector.shape_cast %174 : vector<1x32x32xbf16> to vector<32x32xbf16>
    %cst_98 = arith.constant dense<0.000000e+00> : vector<32x512xf32>
    %176 = tpu.matmul %175, %173, %cst_98 {dimension_numbers = #tpu.dot_dimension_numbers<[1], [0], [0], [1], [0, 0, 1, 1], [], []>} : vector<32x32xbf16>, vector<32x512xbf16>, vector<32x512xf32> -> vector<32x512xf32>
    %177 = arith.addf %168, %176 : vector<32x512xf32>
    %c480_i32 = arith.constant 480 : i32
    %178 = tpu.dynamic_rotate %55 by %c480_i32 dim 1 : vector<32x512xf32>, i32 -> vector<32x512xf32>
    %179 = vector.broadcast %3 : vector<1x512xf32> to vector<32x512xf32>
    %180 = arith.mulf %178, %179 : vector<32x512xf32>
    %181 = arith.truncf %180 : vector<32x512xf32> to vector<32x512xbf16>
    %c7_99 = arith.constant 7 : index
    %c0_100 = arith.constant 0 : index
    %c0_101 = arith.constant 0 : index
    %182 = vector.load %arg7[%c7_99, %c0_100, %c0_101] : memref<9x32x32xbf16, #tpu.memory_space<vmem>>, vector<1x32x32xbf16>
    %183 = vector.shape_cast %182 : vector<1x32x32xbf16> to vector<32x32xbf16>
    %cst_102 = arith.constant dense<0.000000e+00> : vector<32x512xf32>
    %184 = tpu.matmul %183, %181, %cst_102 {dimension_numbers = #tpu.dot_dimension_numbers<[1], [0], [0], [1], [0, 0, 1, 1], [], []>} : vector<32x32xbf16>, vector<32x512xbf16>, vector<32x512xf32> -> vector<32x512xf32>
    %185 = arith.addf %177, %184 : vector<32x512xf32>
    %c479_i32 = arith.constant 479 : i32
    %186 = tpu.dynamic_rotate %55 by %c479_i32 dim 1 : vector<32x512xf32>, i32 -> vector<32x512xf32>
    %187 = arith.mulf %3, %1 : vector<1x512xf32>
    %188 = vector.broadcast %187 : vector<1x512xf32> to vector<32x512xf32>
    %189 = arith.mulf %186, %188 : vector<32x512xf32>
    %190 = arith.truncf %189 : vector<32x512xf32> to vector<32x512xbf16>
    %c8_103 = arith.constant 8 : index
    %c0_104 = arith.constant 0 : index
    %c0_105 = arith.constant 0 : index
    %191 = vector.load %arg7[%c8_103, %c0_104, %c0_105] : memref<9x32x32xbf16, #tpu.memory_space<vmem>>, vector<1x32x32xbf16>
    %192 = vector.shape_cast %191 : vector<1x32x32xbf16> to vector<32x32xbf16>
    %cst_106 = arith.constant dense<0.000000e+00> : vector<32x512xf32>
    %193 = tpu.matmul %192, %190, %cst_106 {dimension_numbers = #tpu.dot_dimension_numbers<[1], [0], [0], [1], [0, 0, 1, 1], [], []>} : vector<32x32xbf16>, vector<32x512xbf16>, vector<32x512xf32> -> vector<32x512xf32>
    %194 = arith.addf %185, %193 : vector<32x512xf32>
    %cst_107 = arith.constant 0.000000e+00 : f32
    %195 = vector.broadcast %cst_107 : f32 to vector<32x512xf32>
    %196 = arith.cmpf ogt, %194, %195 : vector<32x512xf32>
    %cst_108 = arith.constant 0.00999999977 : f32
    %197 = vector.broadcast %cst_108 : f32 to vector<32x512xf32>
    %198 = arith.mulf %197, %194 : vector<32x512xf32>
    %199 = arith.select %196, %194, %198 : vector<32x512xi1>, vector<32x512xf32>
    %c0_109 = arith.constant 0 : index
    %c0_110 = arith.constant 0 : index
    %c0_111 = arith.constant 0 : index
    %200 = vector.load %arg9[%c0_109, %c0_110, %c0_111] : memref<1x32x512xf32, #tpu.memory_space<vmem>>, vector<1x32x512xf32>
    %201 = vector.shape_cast %200 : vector<1x32x512xf32> to vector<32x512xf32>
    %202 = vector.shape_cast %122 : vector<32x512xf32> to vector<1x32x512xf32>
    tpu.vector_store %arg9[%c0_109, %c0_110, %c0_111], %202 {strides = array<i32>} : memref<1x32x512xf32, #tpu.memory_space<vmem>>, vector<1x32x512xf32>,
    %c0_112 = arith.constant 0 : index
    %c0_113 = arith.constant 0 : index
    %c0_114 = arith.constant 0 : index
    %203 = vector.load %arg10[%c0_112, %c0_113, %c0_114] : memref<1x32x512xf32, #tpu.memory_space<vmem>>, vector<1x32x512xf32>
    %204 = vector.shape_cast %203 : vector<1x32x512xf32> to vector<32x512xf32>
    %205 = vector.shape_cast %199 : vector<32x512xf32> to vector<1x32x512xf32>
    tpu.vector_store %arg10[%c0_112, %c0_113, %c0_114], %205 {strides = array<i32>} : memref<1x32x512xf32, #tpu.memory_space<vmem>>, vector<1x32x512xf32>,
    %cst_115 = arith.constant dense<0.000000e+00> : vector<32xf32>
    %206 = vector.multi_reduction <add>, %122, %cst_115 [1] : vector<32x512xf32> to vector<32xf32>
    %c0_116 = arith.constant 0 : index
    %c0_117 = arith.constant 0 : index
    %c0_118 = arith.constant 0 : index
    %207 = vector.load %arg11[%c0_116, %c0_117, %c0_118] : memref<1x4x32xf32, #tpu.memory_space<vmem>>, vector<1x1x32xf32>
    %208 = vector.shape_cast %207 : vector<1x1x32xf32> to vector<32xf32>
    %209 = vector.shape_cast %206 : vector<32xf32> to vector<1x1x32xf32>
    tpu.vector_store %arg11[%c0_116, %c0_117, %c0_118], %209 {strides = array<i32>} : memref<1x4x32xf32, #tpu.memory_space<vmem>>, vector<1x1x32xf32>,
    %210 = arith.mulf %122, %122 : vector<32x512xf32>
    %cst_119 = arith.constant dense<0.000000e+00> : vector<32xf32>
    %211 = vector.multi_reduction <add>, %210, %cst_119 [1] : vector<32x512xf32> to vector<32xf32>
    %c0_120 = arith.constant 0 : index
    %c1_121 = arith.constant 1 : index
    %c0_122 = arith.constant 0 : index
    %212 = vector.load %arg11[%c0_120, %c1_121, %c0_122] : memref<1x4x32xf32, #tpu.memory_space<vmem>>, vector<1x1x32xf32>
    %213 = vector.shape_cast %212 : vector<1x1x32xf32> to vector<32xf32>
    %214 = vector.shape_cast %211 : vector<32xf32> to vector<1x1x32xf32>
    tpu.vector_store %arg11[%c0_120, %c1_121, %c0_122], %214 {strides = array<i32>} : memref<1x4x32xf32, #tpu.memory_space<vmem>>, vector<1x1x32xf32>,
    %cst_123 = arith.constant dense<0.000000e+00> : vector<32xf32>
    %215 = vector.multi_reduction <add>, %199, %cst_123 [1] : vector<32x512xf32> to vector<32xf32>
    %c0_124 = arith.constant 0 : index
    %c2_125 = arith.constant 2 : index
    %c0_126 = arith.constant 0 : index
    %216 = vector.load %arg11[%c0_124, %c2_125, %c0_126] : memref<1x4x32xf32, #tpu.memory_space<vmem>>, vector<1x1x32xf32>
    %217 = vector.shape_cast %216 : vector<1x1x32xf32> to vector<32xf32>
    %218 = vector.shape_cast %215 : vector<32xf32> to vector<1x1x32xf32>
    tpu.vector_store %arg11[%c0_124, %c2_125, %c0_126], %218 {strides = array<i32>} : memref<1x4x32xf32, #tpu.memory_space<vmem>>, vector<1x1x32xf32>,
    %219 = arith.mulf %199, %199 : vector<32x512xf32>
    %cst_127 = arith.constant dense<0.000000e+00> : vector<32xf32>
    %220 = vector.multi_reduction <add>, %219, %cst_127 [1] : vector<32x512xf32> to vector<32xf32>
    %c0_128 = arith.constant 0 : index
    %c3_129 = arith.constant 3 : index
    %c0_130 = arith.constant 0 : index
    %221 = vector.load %arg11[%c0_128, %c3_129, %c0_130] : memref<1x4x32xf32, #tpu.memory_space<vmem>>, vector<1x1x32xf32>
    %222 = vector.shape_cast %221 : vector<1x1x32xf32> to vector<32xf32>
    %223 = vector.shape_cast %220 : vector<32xf32> to vector<1x1x32xf32>
    tpu.vector_store %arg11[%c0_128, %c3_129, %c0_130], %223 {strides = array<i32>} : memref<1x4x32xf32, #tpu.memory_space<vmem>>, vector<1x1x32xf32>,
    return
  }
  func.func @transform_0(%arg0: i32) -> (i32, i32, i32) {
    %c1_i32 = arith.constant 1 : i32
    %0 = arith.subi %arg0, %c1_i32 : i32
    %c0_i32 = arith.constant 0 : i32
    %1 = arith.maxsi %0, %c0_i32 : i32
    %c0_i32_0 = arith.constant 0 : i32
    %c0_i32_1 = arith.constant 0 : i32
    %c0_i32_2 = arith.constant 0 : i32
    return %1, %c0_i32_0, %c0_i32_1 : i32, i32, i32
  }
  func.func @transform_1(%arg0: i32) -> (i32, i32, i32) {
    %c0_i32 = arith.constant 0 : i32
    %c0_i32_0 = arith.constant 0 : i32
    %c0_i32_1 = arith.constant 0 : i32
    return %arg0, %c0_i32, %c0_i32_0 : i32, i32, i32
  }
  func.func @transform_2(%arg0: i32) -> (i32, i32, i32) {
    %c1_i32 = arith.constant 1 : i32
    %0 = arith.addi %arg0, %c1_i32 : i32
    %c7_i32 = arith.constant 7 : i32
    %1 = arith.minsi %0, %c7_i32 : i32
    %c0_i32 = arith.constant 0 : i32
    %c0_i32_0 = arith.constant 0 : i32
    %c0_i32_1 = arith.constant 0 : i32
    return %1, %c0_i32, %c0_i32_0 : i32, i32, i32
  }
  func.func @transform_3(%arg0: i32) -> (i32, i32, i32) {
    %c0_i32 = arith.constant 0 : i32
    %c0_i32_0 = arith.constant 0 : i32
    %c0_i32_1 = arith.constant 0 : i32
    return %arg0, %c0_i32, %c0_i32_0 : i32, i32, i32
  }
  func.func @transform_4(%arg0: i32) -> (i32, i32) {
    %c0_i32 = arith.constant 0 : i32
    %c0_i32_0 = arith.constant 0 : i32
    %c0_i32_1 = arith.constant 0 : i32
    return %c0_i32, %c0_i32_0 : i32, i32
  }
  func.func @transform_5(%arg0: i32) -> (i32, i32, i32) {
    %c0_i32 = arith.constant 0 : i32
    %c0_i32_0 = arith.constant 0 : i32
    %c0_i32_1 = arith.constant 0 : i32
    %c0_i32_2 = arith.constant 0 : i32
    return %c0_i32, %c0_i32_0, %c0_i32_1 : i32, i32, i32
  }
  func.func @transform_6(%arg0: i32) -> (i32, i32, i32) {
    %c0_i32 = arith.constant 0 : i32
    %c0_i32_0 = arith.constant 0 : i32
    %c0_i32_1 = arith.constant 0 : i32
    %c0_i32_2 = arith.constant 0 : i32
    return %c0_i32, %c0_i32_0, %c0_i32_1 : i32, i32, i32
  }
  func.func @transform_7(%arg0: i32) -> (i32, i32, i32) {
    %c0_i32 = arith.constant 0 : i32
    %c0_i32_0 = arith.constant 0 : i32
    %c0_i32_1 = arith.constant 0 : i32
    %c0_i32_2 = arith.constant 0 : i32
    return %c0_i32, %c0_i32_0, %c0_i32_1 : i32, i32, i32
  }
  func.func @transform_8(%arg0: i32) -> (i32, i32, i32) {
    %c0_i32 = arith.constant 0 : i32
    %c0_i32_0 = arith.constant 0 : i32
    %c0_i32_1 = arith.constant 0 : i32
    return %arg0, %c0_i32, %c0_i32_0 : i32, i32, i32
  }
  func.func @transform_9(%arg0: i32) -> (i32, i32, i32) {
    %c0_i32 = arith.constant 0 : i32
    %c0_i32_0 = arith.constant 0 : i32
    %c0_i32_1 = arith.constant 0 : i32
    return %arg0, %c0_i32, %c0_i32_0 : i32, i32, i32
  }
  func.func @transform_10(%arg0: i32) -> (i32, i32, i32) {
    %c0_i32 = arith.constant 0 : i32
    %c0_i32_0 = arith.constant 0 : i32
    %c0_i32_1 = arith.constant 0 : i32
    return %arg0, %c0_i32, %c0_i32_0 : i32, i32, i32
  }
}

</mosaic_0001>

<llo_original>
// kernel: res_context_block_forward.5
$region0: #{res_context_block_forward.5}
  #allocation0 [shape = 'u32[]', space=smem, size = 0x4, offset = 0x4, fixed_abs, tag = 'smem constant byte address 0x4 - core index']
  #allocation1 [shape = 'u32[72,128]{1,0:T(1,128)}', space=vmem, size = 0x9000, scoped, tag = 'internal scratch']
  %s0 = inlined_call_operand.vmem [shape: f32[8,32,512], index: 0, kind: input, shape index: {}]
  %s1 = inlined_call_operand.vmem [shape: f32[8,32,512], index: 1, kind: input, shape index: {}]
  %s2 = inlined_call_operand.vmem [shape: f32[4,32,1], index: 2, kind: input, shape index: {}]
  %s3 = inlined_call_operand.vmem [shape: f32[8,32,512], index: 3, kind: output, shape index: {}]
  %s4 = sld [smem:[#allocation0]]
  $region45: #{res_context_block_forward.5} parent=0
    _
  %s6 = ssub.s32 1, %s4
  %s7 = scalar_select 0, %s6, %s4
  loop: start=0, step=1, limit=10
  $region2: #{res_context_block_forward.5} parent=0 // loop_pre_header
    _
  $region3: #{res_context_block_forward.5} parent=0 // loop_header
    %s9 = sphi 0, %s13
    %p10 = scmp.ge.s32.totalorder %s9, 10
    %s19 = sphi 0, %s21
    %s22 = sphi 0, %s19
    %s23 = sphi 0, %s22
    %s39 = sphi 0, %s23
    %s45 = sphi 0, %s47
    %s48 = sphi 0, %s45
    %s49 = sphi 0, %s48
    %s65 = sphi 0, %s49
    %s69 = sphi 0, %s69
    %s71 = sphi 0, %s69
    %s72 = sphi 0, %s71
    %s86 = sphi 0, %s72
    %s92 = sphi 0, %s94
    %s95 = sphi 0, %s92
    %s96 = sphi 0, %s95
    %s112 = sphi 0, %s96
  $region4: #{res_context_block_forward.5} parent=0 // loop_header_branch
    %12 = sbr.rel (%p10) target = $region8
  $region5: #{res_context_block_forward.5} parent=0 // loop_body
    %s14 = ssub.s32 %s9, 1
    %s15 = ssub.s32 %s9, 2
    %s16 = sadd.s32 %s9, 1
    %s17 = ssub.s32 %s9, %s16
    %p18 = scmp.eq.s32.totalorder %s17, 0
    %s20 = sadd.s32 %s19, 1
    %s21 = scalar_select %p18, %s19, %s20
    %p24 = pneg %p18
    %p25 = scmp.eq.s32.totalorder %s9, 7
    %p26 = por %p24, %p25
    %p27 = scmp.ne.s32.totalorder %s19, %s22
    %p28 = scmp.eq.s32.totalorder %s9, 0
    %p29 = por %p27, %p28
    %p30 = scmp.ne.s32.totalorder %s19, %s22
    %p31 = scmp.eq.s32.totalorder %s14, 7
    %p32 = por %p30, %p31
    %p33 = scmp.ne.s32.totalorder %s22, %s23
    %p34 = scmp.eq.s32.totalorder %s14, 0
    %p35 = por %p33, %p34
    %p36 = scmp.ne.s32.totalorder %s22, %s23
    %p37 = scmp.eq.s32.totalorder %s15, 7
    %p38 = por %p36, %p37
    %p40 = scmp.ne.s32.totalorder %s23, %s39
    %p41 = scmp.eq.s32.totalorder %s15, 0
    %p42 = por %p40, %p41
    %s43 = ssub.s32 %s9, %s16
    %p44 = scmp.eq.s32.totalorder %s43, 0
    %s46 = sadd.s32 %s45, 1
    %s47 = scalar_select %p44, %s45, %s46
    %p50 = pneg %p44
    %p51 = scmp.eq.s32.totalorder %s9, 7
    %p52 = por %p50, %p51
    %p53 = scmp.ne.s32.totalorder %s45, %s48
    %p54 = scmp.eq.s32.totalorder %s9, 0
    %p55 = por %p53, %p54
    %p56 = scmp.ne.s32.totalorder %s45, %s48
    %p57 = scmp.eq.s32.totalorder %s14, 7
    %p58 = por %p56, %p57
    %p59 = scmp.ne.s32.totalorder %s48, %s49
    %p60 = scmp.eq.s32.totalorder %s14, 0
    %p61 = por %p59, %p60
    %p62 = scmp.ne.s32.totalorder %s48, %s49
    %p63 = scmp.eq.s32.totalorder %s15, 7
    %p64 = por %p62, %p63
    %p66 = scmp.ne.s32.totalorder %s49, %s65
    %p67 = scmp.eq.s32.totalorder %s15, 0
    %p68 = por %p66, %p67
    %s70 = sadd.s32 %s69, 1
    %p73 = scmp.eq.s32.totalorder %s9, 7
    %p74 = scmp.ne.s32.totalorder %s69, %s71
    %p75 = scmp.eq.s32.totalorder %s9, 0
    %p76 = por %p74, %p75
    %p77 = scmp.ne.s32.totalorder %s69, %s71
    %p78 = scmp.eq.s32.totalorder %s14, 7
    %p79 = por %p77, %p78
    %p80 = scmp.ne.s32.totalorder %s71, %s72
    %p81 = scmp.eq.s32.totalorder %s14, 0
    %p82 = por %p80, %p81
    %p83 = scmp.ne.s32.totalorder %s71, %s72
    %p84 = scmp.eq.s32.totalorder %s15, 7
    %p85 = por %p83, %p84
    %p87 = scmp.ne.s32.totalorder %s72, %s86
    %p88 = scmp.eq.s32.totalorder %s15, 0
    %p89 = por %p87, %p88
    %s90 = ssub.s32 %s9, %s16
    %p91 = scmp.eq.s32.totalorder %s90, 0
    %s93 = sadd.s32 %s92, 1
    %s94 = scalar_select %p91, %s92, %s93
    %p97 = pneg %p91
    %p98 = scmp.eq.s32.totalorder %s9, 7
    %p99 = por %p97, %p98
    %p100 = scmp.ne.s32.totalorder %s92, %s95
    %p101 = scmp.eq.s32.totalorder %s9, 0
    %p102 = por %p100, %p101
    %p103 = scmp.ne.s32.totalorder %s92, %s95
    %p104 = scmp.eq.s32.totalorder %s14, 7
    %p105 = por %p103, %p104
    %p106 = scmp.ne.s32.totalorder %s95, %s96
    %p107 = scmp.eq.s32.totalorder %s14, 0
    %p108 = por %p106, %p107
    %p109 = scmp.ne.s32.totalorder %s95, %s96
    %p110 = scmp.eq.s32.totalorder %s15, 7
    %p111 = por %p109, %p110
    %p113 = scmp.ne.s32.totalorder %s96, %s112
    %p114 = scmp.eq.s32.totalorder %s15, 0
    %p115 = por %p113, %p114
    %p116 = scmp.le.s32.totalorder 1, %s9
    %p117 = scmp.lt.s32.totalorder %s9, 9
    %p118 = pnand %p116, %p117
    %p119 = pneg %p118
    // Predicated region
    $region9: #{res_context_block_forward.5} parent=5 // pred_check
      _
    $region10: #{res_context_block_forward.5} parent=5 // pred_check_branch
      %121 = sbr.rel (%p118) target = $region12
    $region11: #{res_context_block_forward.5} parent=5 // pred_region
      %s122 = ssub.s32 %s9, 1
      // Predicated region
      $region13: #{res_context_block_forward.5} parent=11 // pred_check
        %p123 = pneg %p82
      $region14: #{res_context_block_forward.5} parent=11 // pred_check_branch
        %125 = sbr.rel (%p123) target = $region16
      $region15: #{res_context_block_forward.5} parent=11 // pred_region
        _
      $region16: #{res_context_block_forward.5} parent=11 // pred_fallthru
        _
    $region12: #{res_context_block_forward.5} parent=5 // pred_fallthru
      _
    %p126 = scmp.lt.s32.totalorder %s9, 8
    // Predicated region
    $region17: #{res_context_block_forward.5} parent=5 // pred_check
      %p127 = pneg %p126
    $region18: #{res_context_block_forward.5} parent=5 // pred_check_branch
      %129 = sbr.rel (%p127) target = $region20
    $region19: #{res_context_block_forward.5} parent=5 // pred_region
      // Predicated region
      $region21: #{res_context_block_forward.5} parent=19 // pred_check
        %p130 = pneg %p29
      $region22: #{res_context_block_forward.5} parent=19 // pred_check_branch
        %132 = sbr.rel (%p130) target = $region24
      $region23: #{res_context_block_forward.5} parent=19 // pred_region
        %p133 = scmp.lt.s32.totalorder %s9, 7
        %s134 = scalar_select %p133, %s9, 7
        %s135 = smul.addr %s134, 16
        %s136 = smul.addr %s135, 8
        %s137 = scalar_lea.vmem %s0, %s136
      $region24: #{res_context_block_forward.5} parent=19 // pred_fallthru
        _
      // Predicated region
      $region25: #{res_context_block_forward.5} parent=19 // pred_check
        %p138 = pneg %p55
      $region26: #{res_context_block_forward.5} parent=19 // pred_check_branch
        %140 = sbr.rel (%p138) target = $region28
      $region27: #{res_context_block_forward.5} parent=19 // pred_region
        %p141 = scmp.lt.s32.totalorder %s9, 7
        %s142 = scalar_select %p141, %s9, 7
        %s143 = smul.addr %s142, 16
        %s144 = smul.addr %s143, 8
        %s145 = scalar_lea.vmem %s1, %s144
      $region28: #{res_context_block_forward.5} parent=19 // pred_fallthru
        _
    $region20: #{res_context_block_forward.5} parent=5 // pred_fallthru
      _
    %p146 = scmp.le.s32.totalorder 1, %s9
    %p147 = scmp.lt.s32.totalorder %s9, 9
    %p148 = pnand %p146, %p147
    %p149 = pneg %p148
    // Predicated region
    $region29: #{res_context_block_forward.5} parent=5 // pred_check
      _
    $region30: #{res_context_block_forward.5} parent=5 // pred_check_branch
      %151 = sbr.rel (%p148) target = $region32
    $region31: #{res_context_block_forward.5} parent=5 // pred_region
      %s152 = ssub.s32 %s9, 1
      %p153 = scmp.lt.s32.totalorder %s14, 7
      %s154 = scalar_select %p153, %s14, 7
      %s155 = smul.addr %s154, 16
      %s156 = smul.addr %s155, 8
      %s157 = scalar_lea.vmem %s0, %s156
      %p158 = pneg %p35
      %p159 = pneg %p32
      %p160 = scmp.lt.s32.totalorder %s14, 7
      %s161 = scalar_select %p160, %s14, 7
      %s162 = smul.addr %s161, 16
      %s163 = smul.addr %s162, 8
      %s164 = scalar_lea.vmem %s1, %s163
      %p165 = pneg %p61
      %p166 = pneg %p58
      %p167 = pneg %p82
      %p168 = pneg %p79
      %p169 = pneg %p108
      %p170 = pneg %p105
      %p171 = scmp.lt.s32.totalorder %s14, 7
      %s172 = scalar_select %p171, %s14, 7
      %s173 = smul.addr %s172, 16
      %s174 = smul.addr %s173, 8
      %s175 = scalar_lea.vmem %s3, %s174
      %p176 = scmp.lt.s32.totalorder %s14, 7
      %s177 = scalar_select %p176, %s14, 7
      %s178 = smul.addr %s177, 16
      %s179 = smul.addr %s178, 8
      %s180 = scalar_lea.vmem %s0, %s179
      %p181 = scmp.lt.s32.totalorder %s14, 7
      %s182 = scalar_select %p181, %s14, 7
      %s183 = smul.addr %s182, 16
      %s184 = smul.addr %s183, 8
      %s185 = scalar_lea.vmem %s1, %s184
      %p186 = scmp.lt.s32.totalorder %s14, 7
      %s187 = scalar_select %p186, %s14, 7
      %s188 = smul.addr %s187, 16
      %s189 = smul.addr %s188, 8
      %s190 = scalar_lea.vmem %s3, %s189
      %v191 = vld [vmem:[%s2] sm:$0xff]
      %v192 = vld [vmem:[%s2 + $0x8] sm:$0xff]
      %v193 = vld [vmem:[%s2 + $0x10] sm:$0xff]
      %v194 = vld [vmem:[%s2 + $0x18] sm:$0xff]
      %s195 = scalar_lea.vmem %s2, 32
      %v196 = vld [vmem:[%s195] sm:$0xff]
      %v197 = vld [vmem:[%s195 + $0x8] sm:$0xff]
      %v198 = vld [vmem:[%s195 + $0x10] sm:$0xff]
      %v199 = vld [vmem:[%s195 + $0x18] sm:$0xff]
      %s200 = scalar_lea.vmem %s2, 64
      %v201 = vld [vmem:[%s200] sm:$0xff]
      %v202 = vld [vmem:[%s200 + $0x8] sm:$0xff]
      %v203 = vld [vmem:[%s200 + $0x10] sm:$0xff]
      %v204 = vld [vmem:[%s200 + $0x18] sm:$0xff]
      %s205 = scalar_lea.vmem %s2, 96
      %v206 = vld [vmem:[%s205] sm:$0xff]
      %v207 = vld [vmem:[%s205 + $0x8] sm:$0xff]
      %v208 = vld [vmem:[%s205 + $0x10] sm:$0xff]
      %v209 = vld [vmem:[%s205 + $0x18] sm:$0xff]
      %v210 = vld [vmem:[%s185] sm:$0xff]
      %v211 = vld [vmem:[%s185 + $0x8] sm:$0xff]
      %v212 = vld [vmem:[%s185 + $0x10] sm:$0xff]
      %v213 = vld [vmem:[%s185 + $0x18] sm:$0xff]
      %v214 = vld [vmem:[%s185 + $0x20] sm:$0xff]
      %v215 = vld [vmem:[%s185 + $0x28] sm:$0xff]
      %v216 = vld [vmem:[%s185 + $0x30] sm:$0xff]
      %v217 = vld [vmem:[%s185 + $0x38] sm:$0xff]
      %v218 = vld [vmem:[%s185 + $0x40] sm:$0xff]
      %v219 = vld [vmem:[%s185 + $0x48] sm:$0xff]
      %v220 = vld [vmem:[%s185 + $0x50] sm:$0xff]
      %v221 = vld [vmem:[%s185 + $0x58] sm:$0xff]
      %v222 = vld [vmem:[%s185 + $0x60] sm:$0xff]
      %v223 = vld [vmem:[%s185 + $0x68] sm:$0xff]
      %v224 = vld [vmem:[%s185 + $0x70] sm:$0xff]
      %v225 = vld [vmem:[%s185 + $0x78] sm:$0xff]
      %227 = vset.pattern.permute.xlu0 0
      %228 = vperm.xlu0 %227, %v201
      %v229 = vpop.permute.xlu0 %228
      %232 = vset.pattern.permute.xlu0 0
      %233 = vperm.xlu0 %232, %v202
      %v234 = vpop.permute.xlu0 %233
      %237 = vset.pattern.permute.xlu0 0
      %238 = vperm.xlu0 %237, %v203
      %v239 = vpop.permute.xlu0 %238
      %242 = vset.pattern.permute.xlu0 0
      %243 = vperm.xlu0 %242, %v204
      %v244 = vpop.permute.xlu0 %243
      %v246 = vmul.f32 %v210, %v229
      %v247 = vmul.f32 %v211, %v229
      %v248 = vmul.f32 %v212, %v229
      %v249 = vmul.f32 %v213, %v229
      %v250 = vmul.f32 %v214, %v234
      %v251 = vmul.f32 %v215, %v234
      %v252 = vmul.f32 %v216, %v234
      %v253 = vmul.f32 %v217, %v234
      %v254 = vmul.f32 %v218, %v239
      %v255 = vmul.f32 %v219, %v239
      %v256 = vmul.f32 %v220, %v239
      %v257 = vmul.f32 %v221, %v239
      %v258 = vmul.f32 %v222, %v244
      %v259 = vmul.f32 %v223, %v244
      %v260 = vmul.f32 %v224, %v244
      %v261 = vmul.f32 %v225, %v244
      %v262 = vld [vmem:[%s180] sm:$0xff]
      %v263 = vld [vmem:[%s180 + $0x8] sm:$0xff]
      %v264 = vld [vmem:[%s180 + $0x10] sm:$0xff]
      %v265 = vld [vmem:[%s180 + $0x18] sm:$0xff]
      %v266 = vld [vmem:[%s180 + $0x20] sm:$0xff]
      %v267 = vld [vmem:[%s180 + $0x28] sm:$0xff]
      %v268 = vld [vmem:[%s180 + $0x30] sm:$0xff]
      %v269 = vld [vmem:[%s180 + $0x38] sm:$0xff]
      %v270 = vld [vmem:[%s180 + $0x40] sm:$0xff]
      %v271 = vld [vmem:[%s180 + $0x48] sm:$0xff]
      %v272 = vld [vmem:[%s180 + $0x50] sm:$0xff]
      %v273 = vld [vmem:[%s180 + $0x58] sm:$0xff]
      %v274 = vld [vmem:[%s180 + $0x60] sm:$0xff]
      %v275 = vld [vmem:[%s180 + $0x68] sm:$0xff]
      %v276 = vld [vmem:[%s180 + $0x70] sm:$0xff]
      %v277 = vld [vmem:[%s180 + $0x78] sm:$0xff]
      %279 = vset.pattern.permute.xlu0 0
      %280 = vperm.xlu0 %279, %v191
      %v281 = vpop.permute.xlu0 %280
      %284 = vset.pattern.permute.xlu0 0
      %285 = vperm.xlu0 %284, %v192
      %v286 = vpop.permute.xlu0 %285
      %289 = vset.pattern.permute.xlu0 0
      %290 = vperm.xlu0 %289, %v193
      %v291 = vpop.permute.xlu0 %290
      %294 = vset.pattern.permute.xlu0 0
      %295 = vperm.xlu0 %294, %v194
      %v296 = vpop.permute.xlu0 %295
      %v298 = vmul.f32 %v262, %v281
      %v299 = vmul.f32 %v263, %v281
      %v300 = vmul.f32 %v264, %v281
      %v301 = vmul.f32 %v265, %v281
      %v302 = vmul.f32 %v266, %v286
      %v303 = vmul.f32 %v267, %v286
      %v304 = vmul.f32 %v268, %v286
      %v305 = vmul.f32 %v269, %v286
      %v306 = vmul.f32 %v270, %v291
      %v307 = vmul.f32 %v271, %v291
      %v308 = vmul.f32 %v272, %v291
      %v309 = vmul.f32 %v273, %v291
      %v310 = vmul.f32 %v274, %v296
      %v311 = vmul.f32 %v275, %v296
      %v312 = vmul.f32 %v276, %v296
      %v313 = vmul.f32 %v277, %v296
      %v314 = vadd.f32 %v246, %v298
      %v315 = vadd.f32 %v247, %v299
      %v316 = vadd.f32 %v248, %v300
      %v317 = vadd.f32 %v249, %v301
      %v318 = vadd.f32 %v250, %v302
      %v319 = vadd.f32 %v251, %v303
      %v320 = vadd.f32 %v252, %v304
      %v321 = vadd.f32 %v253, %v305
      %v322 = vadd.f32 %v254, %v306
      %v323 = vadd.f32 %v255, %v307
      %v324 = vadd.f32 %v256, %v308
      %v325 = vadd.f32 %v257, %v309
      %v326 = vadd.f32 %v258, %v310
      %v327 = vadd.f32 %v259, %v311
      %v328 = vadd.f32 %v260, %v312
      %v329 = vadd.f32 %v261, %v313
      %v330 = vadd.f32 %v196, %v206
      %v331 = vadd.f32 %v197, %v207
      %v332 = vadd.f32 %v198, %v208
      %v333 = vadd.f32 %v199, %v209
      %335 = vset.pattern.permute.xlu0 0
      %336 = vperm.xlu0 %335, %v330
      %v337 = vpop.permute.xlu0 %336
      %340 = vset.pattern.permute.xlu0 0
      %341 = vperm.xlu0 %340, %v331
      %v342 = vpop.permute.xlu0 %341
      %345 = vset.pattern.permute.xlu0 0
      %346 = vperm.xlu0 %345, %v332
      %v347 = vpop.permute.xlu0 %346
      %350 = vset.pattern.permute.xlu0 0
      %351 = vperm.xlu0 %350, %v333
      %v352 = vpop.permute.xlu0 %351
      %v354 = vadd.f32 %v314, %v337
      %v355 = vadd.f32 %v315, %v337
      %v356 = vadd.f32 %v316, %v337
      %v357 = vadd.f32 %v317, %v337
      %v358 = vadd.f32 %v318, %v342
      %v359 = vadd.f32 %v319, %v342
      %v360 = vadd.f32 %v320, %v342
      %v361 = vadd.f32 %v321, %v342
      %v362 = vadd.f32 %v322, %v347
      %v363 = vadd.f32 %v323, %v347
      %v364 = vadd.f32 %v324, %v347
      %v365 = vadd.f32 %v325, %v347
      %v366 = vadd.f32 %v326, %v352
      %v367 = vadd.f32 %v327, %v352
      %v368 = vadd.f32 %v328, %v352
      %v369 = vadd.f32 %v329, %v352
      %370 = vst [vmem:[%s190] sm:$0xff] %v354
      %371 = vst [vmem:[%s190 + $0x8] sm:$0xff] %v355
      %372 = vst [vmem:[%s190 + $0x10] sm:$0xff] %v356
      %373 = vst [vmem:[%s190 + $0x18] sm:$0xff] %v357
      %374 = vst [vmem:[%s190 + $0x20] sm:$0xff] %v358
      %375 = vst [vmem:[%s190 + $0x28] sm:$0xff] %v359
      %376 = vst [vmem:[%s190 + $0x30] sm:$0xff] %v360
      %377 = vst [vmem:[%s190 + $0x38] sm:$0xff] %v361
      %378 = vst [vmem:[%s190 + $0x40] sm:$0xff] %v362
      %379 = vst [vmem:[%s190 + $0x48] sm:$0xff] %v363
      %380 = vst [vmem:[%s190 + $0x50] sm:$0xff] %v364
      %381 = vst [vmem:[%s190 + $0x58] sm:$0xff] %v365
      %382 = vst [vmem:[%s190 + $0x60] sm:$0xff] %v366
      %383 = vst [vmem:[%s190 + $0x68] sm:$0xff] %v367
      %384 = vst [vmem:[%s190 + $0x70] sm:$0xff] %v368
      %385 = vst [vmem:[%s190 + $0x78] sm:$0xff] %v369
      %p386 = scmp.lt.s32.totalorder %s14, 7
      %s387 = scalar_select %p386, %s14, 7
      %s388 = smul.addr %s387, 16
      %s389 = smul.addr %s388, 8
      %s390 = scalar_lea.vmem %s3, %s389
      // Predicated region
      $region33: #{res_context_block_forward.5} parent=31 // pred_check
        %p391 = pneg %p105
      $region34: #{res_context_block_forward.5} parent=31 // pred_check_branch
        %393 = sbr.rel (%p391) target = $region36
      $region35: #{res_context_block_forward.5} parent=31 // pred_region
        _
      $region36: #{res_context_block_forward.5} parent=31 // pred_fallthru
        _
    $region32: #{res_context_block_forward.5} parent=5 // pred_fallthru
      _
    %p394 = scmp.le.s32.totalorder 2, %s9
    // Predicated region
    $region37: #{res_context_block_forward.5} parent=5 // pred_check
      %p395 = pneg %p394
    $region38: #{res_context_block_forward.5} parent=5 // pred_check_branch
      %397 = sbr.rel (%p395) target = $region40
    $region39: #{res_context_block_forward.5} parent=5 // pred_region
      %s398 = ssub.s32 %s9, 2
      // Predicated region
      $region41: #{res_context_block_forward.5} parent=39 // pred_check
        %p399 = pneg %p111
      $region42: #{res_context_block_forward.5} parent=39 // pred_check_branch
        %401 = sbr.rel (%p399) target = $region44
      $region43: #{res_context_block_forward.5} parent=39 // pred_region
        %p402 = scmp.lt.s32.totalorder %s15, 7
        %s403 = scalar_select %p402, %s15, 7
        %s404 = smul.addr %s403, 16
        %s405 = smul.addr %s404, 8
        %s406 = scalar_lea.vmem %s3, %s405
      $region44: #{res_context_block_forward.5} parent=39 // pred_fallthru
        _
    $region40: #{res_context_block_forward.5} parent=5 // pred_fallthru
      _
  $region6: #{res_context_block_forward.5} parent=0 // loop_footer
    %s13 = sadd.s32 1, %s9
  $region7: #{res_context_block_forward.5} parent=0 // loop_footer_branch
    %8 = sbr.rel target = $region3
  $region8: #{res_context_block_forward.5} parent=0 // loop_exit
    _

// kernel: res_context_block_forward.3
$region0: #{res_context_block_forward.3}
  #allocation0 [shape = 'u32[]', space=smem, size = 0x4, offset = 0x4, fixed_abs, tag = 'smem constant byte address 0x4 - core index']
  #allocation1 [shape = 'u32[72,128]{1,0:T(1,128)}', space=vmem, size = 0x9000, scoped, tag = 'internal scratch']
  %s0 = inlined_call_operand.vmem [shape: f32[8,16,512], index: 0, kind: input, shape index: {}, may-alias: {0,1,2}]
  %s1 = inlined_call_operand.vmem [shape: f32[8,16,512], index: 1, kind: input, shape index: {}, may-alias: {0,1,2}]
  %s2 = inlined_call_operand.vmem [shape: f32[8,16,512], index: 2, kind: input, shape index: {}, may-alias: {0,1,2}]
  %s3 = inlined_call_operand.vmem [shape: f32[4,512], index: 3, kind: input, shape index: {}]
  %s4 = inlined_call_operand.vmem [shape: bf16[9,32,16], index: 4, kind: input, shape index: {}]
  %s5 = inlined_call_operand.vmem [shape: bf16[9,32,16], index: 5, kind: input, shape index: {}]
  %s6 = inlined_call_operand.vmem [shape: f32[8,32,512], index: 6, kind: output, shape index: {0}]
  %s7 = inlined_call_operand.vmem [shape: f32[8,32,512], index: 7, kind: output, shape index: {1}]
  %s8 = inlined_call_operand.vmem [shape: f32[8,4,32], index: 8, kind: output, shape index: {2}]
  %9 = xla_tuple %s6, %s7, %s8
  %s10 = sld [smem:[#allocation0]]
  $region73: #{res_context_block_forward.3} parent=0
    _
  %s12 = ssub.s32 1, %s10
  %s13 = scalar_select 0, %s12, %s10
  loop: start=0, step=1, limit=10
  $region2: #{res_context_block_forward.3} parent=0 // loop_pre_header
    _
  $region3: #{res_context_block_forward.3} parent=0 // loop_header
    %s15 = sphi 0, %s19
    %p16 = scmp.ge.s32.totalorder %s15, 10
    %s31 = sphi 0, %s33
    %s34 = sphi 0, %s31
    %s35 = sphi 0, %s34
    %s51 = sphi 0, %s35
    %s57 = sphi 0, %s59
    %s60 = sphi 0, %s57
    %s61 = sphi 0, %s60
    %s77 = sphi 0, %s61
    %s89 = sphi 0, %s91
    %s92 = sphi 0, %s89
    %s93 = sphi 0, %s92
    %s109 = sphi 0, %s93
    %s113 = sphi 0, %s113
    %s115 = sphi 0, %s113
    %s116 = sphi 0, %s115
    %s130 = sphi 0, %s116
    %s134 = sphi 0, %s134
    %s136 = sphi 0, %s134
    %s137 = sphi 0, %s136
    %s151 = sphi 0, %s137
    %s155 = sphi 0, %s155
    %s157 = sphi 0, %s155
    %s158 = sphi 0, %s157
    %s172 = sphi 0, %s158
    %s178 = sphi 0, %s180
    %s181 = sphi 0, %s178
    %s182 = sphi 0, %s181
    %s198 = sphi 0, %s182
    %s204 = sphi 0, %s206
    %s207 = sphi 0, %s204
    %s208 = sphi 0, %s207
    %s224 = sphi 0, %s208
    %s230 = sphi 0, %s232
    %s233 = sphi 0, %s230
    %s234 = sphi 0, %s233
    %s250 = sphi 0, %s234
  $region4: #{res_context_block_forward.3} parent=0 // loop_header_branch
    %18 = sbr.rel (%p16) target = $region8
  $region5: #{res_context_block_forward.3} parent=0 // loop_body
    %s20 = ssub.s32 %s15, 1
    %s21 = ssub.s32 %s15, 2
    %s22 = sadd.s32 %s15, 1
    %s23 = ssub.s32 %s15, 1
    %p24 = scmp.gt.s32.totalorder %s23, 0
    %s25 = scalar_select %p24, %s23, 0
    %s26 = ssub.s32 %s22, 1
    %p27 = scmp.gt.s32.totalorder %s26, 0
    %s28 = scalar_select %p27, %s26, 0
    %s29 = ssub.s32 %s25, %s28
    %p30 = scmp.eq.s32.totalorder %s29, 0
    %s32 = sadd.s32 %s31, 1
    %s33 = scalar_select %p30, %s31, %s32
    %p36 = pneg %p30
    %p37 = scmp.eq.s32.totalorder %s15, 7
    %p38 = por %p36, %p37
    %p39 = scmp.ne.s32.totalorder %s31, %s34
    %p40 = scmp.eq.s32.totalorder %s15, 0
    %p41 = por %p39, %p40
    %p42 = scmp.ne.s32.totalorder %s31, %s34
    %p43 = scmp.eq.s32.totalorder %s20, 7
    %p44 = por %p42, %p43
    %p45 = scmp.ne.s32.totalorder %s34, %s35
    %p46 = scmp.eq.s32.totalorder %s20, 0
    %p47 = por %p45, %p46
    %p48 = scmp.ne.s32.totalorder %s34, %s35
    %p49 = scmp.eq.s32.totalorder %s21, 7
    %p50 = por %p48, %p49
    %p52 = scmp.ne.s32.totalorder %s35, %s51
    %p53 = scmp.eq.s32.totalorder %s21, 0
    %p54 = por %p52, %p53
    %s55 = ssub.s32 %s15, %s22
    %p56 = scmp.eq.s32.totalorder %s55, 0
    %s58 = sadd.s32 %s57, 1
    %s59 = scalar_select %p56, %s57, %s58
    %p62 = pneg %p56
    %p63 = scmp.eq.s32.totalorder %s15, 7
    %p64 = por %p62, %p63
    %p65 = scmp.ne.s32.totalorder %s57, %s60
    %p66 = scmp.eq.s32.totalorder %s15, 0
    %p67 = por %p65, %p66
    %p68 = scmp.ne.s32.totalorder %s57, %s60
    %p69 = scmp.eq.s32.totalorder %s20, 7
    %p70 = por %p68, %p69
    %p71 = scmp.ne.s32.totalorder %s60, %s61
    %p72 = scmp.eq.s32.totalorder %s20, 0
    %p73 = por %p71, %p72
    %p74 = scmp.ne.s32.totalorder %s60, %s61
    %p75 = scmp.eq.s32.totalorder %s21, 7
    %p76 = por %p74, %p75
    %p78 = scmp.ne.s32.totalorder %s61, %s77
    %p79 = scmp.eq.s32.totalorder %s21, 0
    %p80 = por %p78, %p79
    %s81 = sadd.s32 %s15, 1
    %p82 = scmp.lt.s32.totalorder %s81, 7
    %s83 = scalar_select %p82, %s81, 7
    %s84 = sadd.s32 %s22, 1
    %p85 = scmp.lt.s32.totalorder %s84, 7
    %s86 = scalar_select %p85, %s84, 7
    %s87 = ssub.s32 %s83, %s86
    %p88 = scmp.eq.s32.totalorder %s87, 0
    %s90 = sadd.s32 %s89, 1
    %s91 = scalar_select %p88, %s89, %s90
    %p94 = pneg %p88
    %p95 = scmp.eq.s32.totalorder %s15, 7
    %p96 = por %p94, %p95
    %p97 = scmp.ne.s32.totalorder %s89, %s92
    %p98 = scmp.eq.s32.totalorder %s15, 0
    %p99 = por %p97, %p98
    %p100 = scmp.ne.s32.totalorder %s89, %s92
    %p101 = scmp.eq.s32.totalorder %s20, 7
    %p102 = por %p100, %p101
    %p103 = scmp.ne.s32.totalorder %s92, %s93
    %p104 = scmp.eq.s32.totalorder %s20, 0
    %p105 = por %p103, %p104
    %p106 = scmp.ne.s32.totalorder %s92, %s93
    %p107 = scmp.eq.s32.totalorder %s21, 7
    %p108 = por %p106, %p107
    %p110 = scmp.ne.s32.totalorder %s93, %s109
    %p111 = scmp.eq.s32.totalorder %s21, 0
    %p112 = por %p110, %p111
    %s114 = sadd.s32 %s113, 1
    %p117 = scmp.eq.s32.totalorder %s15, 7
    %p118 = scmp.ne.s32.totalorder %s113, %s115
    %p119 = scmp.eq.s32.totalorder %s15, 0
    %p120 = por %p118, %p119
    %p121 = scmp.ne.s32.totalorder %s113, %s115
    %p122 = scmp.eq.s32.totalorder %s20, 7
    %p123 = por %p121, %p122
    %p124 = scmp.ne.s32.totalorder %s115, %s116
    %p125 = scmp.eq.s32.totalorder %s20, 0
    %p126 = por %p124, %p125
    %p127 = scmp.ne.s32.totalorder %s115, %s116
    %p128 = scmp.eq.s32.totalorder %s21, 7
    %p129 = por %p127, %p128
    %p131 = scmp.ne.s32.totalorder %s116, %s130
    %p132 = scmp.eq.s32.totalorder %s21, 0
    %p133 = por %p131, %p132
    %s135 = sadd.s32 %s134, 1
    %p138 = scmp.eq.s32.totalorder %s15, 7
    %p139 = scmp.ne.s32.totalorder %s134, %s136
    %p140 = scmp.eq.s32.totalorder %s15, 0
    %p141 = por %p139, %p140
    %p142 = scmp.ne.s32.totalorder %s134, %s136
    %p143 = scmp.eq.s32.totalorder %s20, 7
    %p144 = por %p142, %p143
    %p145 = scmp.ne.s32.totalorder %s136, %s137
    %p146 = scmp.eq.s32.totalorder %s20, 0
    %p147 = por %p145, %p146
    %p148 = scmp.ne.s32.totalorder %s136, %s137
    %p149 = scmp.eq.s32.totalorder %s21, 7
    %p150 = por %p148, %p149
    %p152 = scmp.ne.s32.totalorder %s137, %s151
    %p153 = scmp.eq.s32.totalorder %s21, 0
    %p154 = por %p152, %p153
    %s156 = sadd.s32 %s155, 1
    %p159 = scmp.eq.s32.totalorder %s15, 7
    %p160 = scmp.ne.s32.totalorder %s155, %s157
    %p161 = scmp.eq.s32.totalorder %s15, 0
    %p162 = por %p160, %p161
    %p163 = scmp.ne.s32.totalorder %s155, %s157
    %p164 = scmp.eq.s32.totalorder %s20, 7
    %p165 = por %p163, %p164
    %p166 = scmp.ne.s32.totalorder %s157, %s158
    %p167 = scmp.eq.s32.totalorder %s20, 0
    %p168 = por %p166, %p167
    %p169 = scmp.ne.s32.totalorder %s157, %s158
    %p170 = scmp.eq.s32.totalorder %s21, 7
    %p171 = por %p169, %p170
    %p173 = scmp.ne.s32.totalorder %s158, %s172
    %p174 = scmp.eq.s32.totalorder %s21, 0
    %p175 = por %p173, %p174
    %s176 = ssub.s32 %s15, %s22
    %p177 = scmp.eq.s32.totalorder %s176, 0
    %s179 = sadd.s32 %s178, 1
    %s180 = scalar_select %p177, %s178, %s179
    %p183 = pneg %p177
    %p184 = scmp.eq.s32.totalorder %s15, 7
    %p185 = por %p183, %p184
    %p186 = scmp.ne.s32.totalorder %s178, %s181
    %p187 = scmp.eq.s32.totalorder %s15, 0
    %p188 = por %p186, %p187
    %p189 = scmp.ne.s32.totalorder %s178, %s181
    %p190 = scmp.eq.s32.totalorder %s20, 7
    %p191 = por %p189, %p190
    %p192 = scmp.ne.s32.totalorder %s181, %s182
    %p193 = scmp.eq.s32.totalorder %s20, 0
    %p194 = por %p192, %p193
    %p195 = scmp.ne.s32.totalorder %s181, %s182
    %p196 = scmp.eq.s32.totalorder %s21, 7
    %p197 = por %p195, %p196
    %p199 = scmp.ne.s32.totalorder %s182, %s198
    %p200 = scmp.eq.s32.totalorder %s21, 0
    %p201 = por %p199, %p200
    %s202 = ssub.s32 %s15, %s22
    %p203 = scmp.eq.s32.totalorder %s202, 0
    %s205 = sadd.s32 %s204, 1
    %s206 = scalar_select %p203, %s204, %s205
    %p209 = pneg %p203
    %p210 = scmp.eq.s32.totalorder %s15, 7
    %p211 = por %p209, %p210
    %p212 = scmp.ne.s32.totalorder %s204, %s207
    %p213 = scmp.eq.s32.totalorder %s15, 0
    %p214 = por %p212, %p213
    %p215 = scmp.ne.s32.totalorder %s204, %s207
    %p216 = scmp.eq.s32.totalorder %s20, 7
    %p217 = por %p215, %p216
    %p218 = scmp.ne.s32.totalorder %s207, %s208
    %p219 = scmp.eq.s32.totalorder %s20, 0
    %p220 = por %p218, %p219
    %p221 = scmp.ne.s32.totalorder %s207, %s208
    %p222 = scmp.eq.s32.totalorder %s21, 7
    %p223 = por %p221, %p222
    %p225 = scmp.ne.s32.totalorder %s208, %s224
    %p226 = scmp.eq.s32.totalorder %s21, 0
    %p227 = por %p225, %p226
    %s228 = ssub.s32 %s15, %s22
    %p229 = scmp.eq.s32.totalorder %s228, 0
    %s231 = sadd.s32 %s230, 1
    %s232 = scalar_select %p229, %s230, %s231
    %p235 = pneg %p229
    %p236 = scmp.eq.s32.totalorder %s15, 7
    %p237 = por %p235, %p236
    %p238 = scmp.ne.s32.totalorder %s230, %s233
    %p239 = scmp.eq.s32.totalorder %s15, 0
    %p240 = por %p238, %p239
    %p241 = scmp.ne.s32.totalorder %s230, %s233
    %p242 = scmp.eq.s32.totalorder %s20, 7
    %p243 = por %p241, %p242
    %p244 = scmp.ne.s32.totalorder %s233, %s234
    %p245 = scmp.eq.s32.totalorder %s20, 0
    %p246 = por %p244, %p245
    %p247 = scmp.ne.s32.totalorder %s233, %s234
    %p248 = scmp.eq.s32.totalorder %s21, 7
    %p249 = por %p247, %p248
    %p251 = scmp.ne.s32.totalorder %s234, %s250
    %p252 = scmp.eq.s32.totalorder %s21, 0
    %p253 = por %p251, %p252
    %p254 = scmp.le.s32.totalorder 1, %s15
    %p255 = scmp.lt.s32.totalorder %s15, 9
    %p256 = pnand %p254, %p255
    %p257 = pneg %p256
    // Predicated region
    $region9: #{res_context_block_forward.3} parent=5 // pred_check
      _
    $region10: #{res_context_block_forward.3} parent=5 // pred_check_branch
      %259 = sbr.rel (%p256) target = $region12
    $region11: #{res_context_block_forward.3} parent=5 // pred_region
      %s260 = ssub.s32 %s15, 1
      // Predicated region
      $region13: #{res_context_block_forward.3} parent=11 // pred_check
        %p261 = pneg %p126
      $region14: #{res_context_block_forward.3} parent=11 // pred_check_branch
        %263 = sbr.rel (%p261) target = $region16
      $region15: #{res_context_block_forward.3} parent=11 // pred_region
        _
      $region16: #{res_context_block_forward.3} parent=11 // pred_fallthru
        _
      // Predicated region
      $region17: #{res_context_block_forward.3} parent=11 // pred_check
        %p264 = pneg %p147
      $region18: #{res_context_block_forward.3} parent=11 // pred_check_branch
        %266 = sbr.rel (%p264) target = $region20
      $region19: #{res_context_block_forward.3} parent=11 // pred_region
        _
      $region20: #{res_context_block_forward.3} parent=11 // pred_fallthru
        _
      // Predicated region
      $region21: #{res_context_block_forward.3} parent=11 // pred_check
        %p267 = pneg %p168
      $region22: #{res_context_block_forward.3} parent=11 // pred_check_branch
        %269 = sbr.rel (%p267) target = $region24
      $region23: #{res_context_block_forward.3} parent=11 // pred_region
        _
      $region24: #{res_context_block_forward.3} parent=11 // pred_fallthru
        _
    $region12: #{res_context_block_forward.3} parent=5 // pred_fallthru
      _
    %p270 = scmp.lt.s32.totalorder %s15, 8
    // Predicated region
    $region25: #{res_context_block_forward.3} parent=5 // pred_check
      %p271 = pneg %p270
    $region26: #{res_context_block_forward.3} parent=5 // pred_check_branch
      %273 = sbr.rel (%p271) target = $region28
    $region27: #{res_context_block_forward.3} parent=5 // pred_region
      // Predicated region
      $region29: #{res_context_block_forward.3} parent=27 // pred_check
        %p274 = pneg %p41
      $region30: #{res_context_block_forward.3} parent=27 // pred_check_branch
        %276 = sbr.rel (%p274) target = $region32
      $region31: #{res_context_block_forward.3} parent=27 // pred_region
        %s277 = ssub.s32 %s15, 1
        %p278 = scmp.gt.s32.totalorder %s277, 0
        %s279 = scalar_select %p278, %s277, 0
        %p280 = scmp.lt.s32.totalorder %s279, 7
        %s281 = scalar_select %p280, %s279, 7
        %s282 = smul.addr %s281, 8
        %s283 = smul.addr %s282, 8
        %s284 = scalar_lea.vmem %s0, %s283
        %s285 = ssub.s32 %s15, 1
        %p286 = scmp.gt.s32.totalorder %s285, 0
        %s287 = scalar_select %p286, %s285, 0
      $region32: #{res_context_block_forward.3} parent=27 // pred_fallthru
        _
      // Predicated region
      $region33: #{res_context_block_forward.3} parent=27 // pred_check
        %p288 = pneg %p67
      $region34: #{res_context_block_forward.3} parent=27 // pred_check_branch
        %290 = sbr.rel (%p288) target = $region36
      $region35: #{res_context_block_forward.3} parent=27 // pred_region
        %p291 = scmp.lt.s32.totalorder %s15, 7
        %s292 = scalar_select %p291, %s15, 7
        %s293 = smul.addr %s292, 8
        %s294 = smul.addr %s293, 8
        %s295 = scalar_lea.vmem %s1, %s294
      $region36: #{res_context_block_forward.3} parent=27 // pred_fallthru
        _
      // Predicated region
      $region37: #{res_context_block_forward.3} parent=27 // pred_check
        %p296 = pneg %p99
      $region38: #{res_context_block_forward.3} parent=27 // pred_check_branch
        %298 = sbr.rel (%p296) target = $region40
      $region39: #{res_context_block_forward.3} parent=27 // pred_region
        %s299 = sadd.s32 %s15, 1
        %p300 = scmp.lt.s32.totalorder %s299, 7
        %s301 = scalar_select %p300, %s299, 7
        %p302 = scmp.lt.s32.totalorder %s301, 7
        %s303 = scalar_select %p302, %s301, 7
        %s304 = smul.addr %s303, 8
        %s305 = smul.addr %s304, 8
        %s306 = scalar_lea.vmem %s2, %s305
        %s307 = sadd.s32 %s15, 1
        %p308 = scmp.lt.s32.totalorder %s307, 7
        %s309 = scalar_select %p308, %s307, 7
      $region40: #{res_context_block_forward.3} parent=27 // pred_fallthru
        _
    $region28: #{res_context_block_forward.3} parent=5 // pred_fallthru
      _
    %p310 = scmp.le.s32.totalorder 1, %s15
    %p311 = scmp.lt.s32.totalorder %s15, 9
    %p312 = pnand %p310, %p311
    %p313 = pneg %p312
    // Predicated region
    $region41: #{res_context_block_forward.3} parent=5 // pred_check
      _
    $region42: #{res_context_block_forward.3} parent=5 // pred_check_branch
      %315 = sbr.rel (%p312) target = $region44
    $region43: #{res_context_block_forward.3} parent=5 // pred_region
      %s316 = ssub.s32 %s15, 1
      %s317 = ssub.s32 %s20, 1
      %p318 = scmp.gt.s32.totalorder %s317, 0
      %s319 = scalar_select %p318, %s317, 0
      %p320 = scmp.lt.s32.totalorder %s319, 7
      %s321 = scalar_select %p320, %s319, 7
      %s322 = smul.addr %s321, 8
      %s323 = smul.addr %s322, 8
      %s324 = scalar_lea.vmem %s0, %s323
      %p325 = pneg %p47
      %p326 = pneg %p44
      %p327 = scmp.lt.s32.totalorder %s20, 7
      %s328 = scalar_select %p327, %s20, 7
      %s329 = smul.addr %s328, 8
      %s330 = smul.addr %s329, 8
      %s331 = scalar_lea.vmem %s1, %s330
      %p332 = pneg %p73
      %p333 = pneg %p70
      %s334 = sadd.s32 %s20, 1
      %p335 = scmp.lt.s32.totalorder %s334, 7
      %s336 = scalar_select %p335, %s334, 7
      %p337 = scmp.lt.s32.totalorder %s336, 7
      %s338 = scalar_select %p337, %s336, 7
      %s339 = smul.addr %s338, 8
      %s340 = smul.addr %s339, 8
      %s341 = scalar_lea.vmem %s2, %s340
      %p342 = pneg %p105
      %p343 = pneg %p102
      %p344 = pneg %p126
      %p345 = pneg %p123
      %p346 = pneg %p147
      %p347 = pneg %p144
      %p348 = pneg %p168
      %p349 = pneg %p165
      %p350 = pneg %p194
      %p351 = pneg %p191
      %p352 = scmp.lt.s32.totalorder %s20, 7
      %s353 = scalar_select %p352, %s20, 7
      %s354 = smul.addr %s353, 16
      %s355 = smul.addr %s354, 8
      %s356 = scalar_lea.vmem %s6, %s355
      %p357 = pneg %p220
      %p358 = pneg %p217
      %p359 = scmp.lt.s32.totalorder %s20, 7
      %s360 = scalar_select %p359, %s20, 7
      %s361 = smul.addr %s360, 16
      %s362 = smul.addr %s361, 8
      %s363 = scalar_lea.vmem %s7, %s362
      %p364 = pneg %p246
      %p365 = pneg %p243
      %p366 = scmp.lt.s32.totalorder %s20, 7
      %s367 = scalar_select %p366, %s20, 7
      %s368 = smul.addr %s367, 4
      %s369 = scalar_lea.vmem %s8, %s368
      %s370 = ssub.s32 %s20, 1
      %p371 = scmp.gt.s32.totalorder %s370, 0
      %s372 = scalar_select %p371, %s370, 0
      %p373 = scmp.lt.s32.totalorder %s372, 7
      %s374 = scalar_select %p373, %s372, 7
      %s375 = smul.addr %s374, 8
      %s376 = smul.addr %s375, 8
      %s377 = scalar_lea.vmem %s0, %s376
      %s378 = ssub.s32 %s20, 1
      %p379 = scmp.gt.s32.totalorder %s378, 0
      %s380 = scalar_select %p379, %s378, 0
      %p381 = scmp.lt.s32.totalorder %s20, 7
      %s382 = scalar_select %p381, %s20, 7
      %s383 = smul.addr %s382, 8
      %s384 = smul.addr %s383, 8
      %s385 = scalar_lea.vmem %s1, %s384
      %s386 = sadd.s32 %s20, 1
      %p387 = scmp.lt.s32.totalorder %s386, 7
      %s388 = scalar_select %p387, %s386, 7
      %p389 = scmp.lt.s32.totalorder %s388, 7
      %s390 = scalar_select %p389, %s388, 7
      %s391 = smul.addr %s390, 8
      %s392 = smul.addr %s391, 8
      %s393 = scalar_lea.vmem %s2, %s392
      %s394 = sadd.s32 %s20, 1
      %p395 = scmp.lt.s32.totalorder %s394, 7
      %s396 = scalar_select %p395, %s394, 7
      %p397 = scmp.lt.s32.totalorder %s20, 7
      %s398 = scalar_select %p397, %s20, 7
      %s399 = smul.addr %s398, 16
      %s400 = smul.addr %s399, 8
      %s401 = scalar_lea.vmem %s6, %s400
      %p402 = scmp.lt.s32.totalorder %s20, 7
      %s403 = scalar_select %p402, %s20, 7
      %s404 = smul.addr %s403, 16
      %s405 = smul.addr %s404, 8
      %s406 = scalar_lea.vmem %s7, %s405
      %p407 = scmp.lt.s32.totalorder %s20, 7
      %s408 = scalar_select %p407, %s20, 7
      %s409 = smul.addr %s408, 4
      %s410 = scalar_lea.vmem %s8, %s409
      %v412 = vld [vmem:[%s3] ss:$4 sm:$0xf]
      %s413 = scalar_lea.vmem %s3, 1
      %v414 = vld [vmem:[%s413] ss:$4 sm:$0xf]
      %s415 = scalar_lea.vmem %s3, 2
      %v416 = vld [vmem:[%s415] ss:$4 sm:$0xf]
      %s417 = scalar_lea.vmem %s3, 3
      %v418 = vld [vmem:[%s417] ss:$4 sm:$0xf]
      %p419 = scmp.lt.s32.totalorder %s20, 0
      %s420 = ssub.s32 0, %s20
      %s421 = scalar_select %p419, %s420, %s20
      %s422 = sand.u32 %s421, 3
      %s423 = ssub.s32 0, %s422
      %s424 = scalar_select %p419, %s423, %s422
      %p425 = scmp.ne.s32.totalorder %s424, 0
      %p426 = scmp.lt.s32.totalorder %s424, 0
      %p427 = pnand %p426, %p425
      %p428 = pneg %p427
      %s429 = sadd.s32 %s424, 4
      %s430 = scalar_select %p428, %s429, %s424
      %p431 = scmp.gt.s32.totalorder %s430, 0
      %s432 = scalar_select %p431, 1, 0
      %s433 = scvt.s32.f32 %s432
      %p434 = scmp.lt.s32.totalorder %s430, 3
      %s435 = scalar_select %p434, 1, 0
      %s436 = scvt.s32.f32 %s435
      %v437 = vld [vmem:[%s385] sm:$0xff]
      %v438 = vld [vmem:[%s385 + $0x8] sm:$0xff]
      %v439 = vld [vmem:[%s385 + $0x10] sm:$0xff]
      %v440 = vld [vmem:[%s385 + $0x18] sm:$0xff]
      %v441 = vld [vmem:[%s385 + $0x20] sm:$0xff]
      %v442 = vld [vmem:[%s385 + $0x28] sm:$0xff]
      %v443 = vld [vmem:[%s385 + $0x30] sm:$0xff]
      %v444 = vld [vmem:[%s385 + $0x38] sm:$0xff]
      %v445 = vld [vmem:[%s377] sm:$0xff]
      %v446 = vld [vmem:[%s377 + $0x8] sm:$0xff]
      %v447 = vld [vmem:[%s377 + $0x10] sm:$0xff]
      %v448 = vld [vmem:[%s377 + $0x18] sm:$0xff]
      %v449 = vld [vmem:[%s377 + $0x20] sm:$0xff]
      %v450 = vld [vmem:[%s377 + $0x28] sm:$0xff]
      %v451 = vld [vmem:[%s377 + $0x30] sm:$0xff]
      %v452 = vld [vmem:[%s377 + $0x38] sm:$0xff]
      %v453 = vstv %s433
      %v454 = vmul.f32 %v445, %v453
      %v455 = vmul.f32 %v446, %v453
      %v456 = vmul.f32 %v447, %v453
      %v457 = vmul.f32 %v448, %v453
      %v458 = vmul.f32 %v449, %v453
      %v459 = vmul.f32 %v450, %v453
      %v460 = vmul.f32 %v451, %v453
      %v461 = vmul.f32 %v452, %v453
      %v462 = vld [vmem:[%s393] sm:$0xff]
      %v463 = vld [vmem:[%s393 + $0x8] sm:$0xff]
      %v464 = vld [vmem:[%s393 + $0x10] sm:$0xff]
      %v465 = vld [vmem:[%s393 + $0x18] sm:$0xff]
      %v466 = vld [vmem:[%s393 + $0x20] sm:$0xff]
      %v467 = vld [vmem:[%s393 + $0x28] sm:$0xff]
      %v468 = vld [vmem:[%s393 + $0x30] sm:$0xff]
      %v469 = vld [vmem:[%s393 + $0x38] sm:$0xff]
      %v470 = vstv %s436
      %v471 = vmul.f32 %v462, %v470
      %v472 = vmul.f32 %v463, %v470
      %v473 = vmul.f32 %v464, %v470
      %v474 = vmul.f32 %v465, %v470
      %v475 = vmul.f32 %v466, %v470
      %v476 = vmul.f32 %v467, %v470
      %v477 = vmul.f32 %v468, %v470
      %v478 = vmul.f32 %v469, %v470
      %479 = vrot.lane.b32.xlu0 %v437, 33
      %v480 = vpop.permute.xlu0 %479
      %481 = vrot.lane.b32.xlu0 %v441, 33
      %v482 = vpop.permute.xlu0 %481
      %483 = vrot.lane.b32.xlu0 %v438, 33
      %v484 = vpop.permute.xlu0 %483
      %485 = vrot.lane.b32.xlu0 %v442, 33
      %v486 = vpop.permute.xlu0 %485
      %487 = vrot.lane.b32.xlu0 %v439, 33
      %v488 = vpop.permute.xlu0 %487
      %489 = vrot.lane.b32.xlu0 %v443, 33
      %v490 = vpop.permute.xlu0 %489
      %491 = vrot.lane.b32.xlu0 %v440, 33
      %v492 = vpop.permute.xlu0 %491
      %493 = vrot.lane.b32.xlu0 %v444, 33
      %v494 = vpop.permute.xlu0 %493
      %v495 = vlaneseq
      %v496 = vand.u32 %v495, 127
      %vm497 = vcmp.lt.s32.totalorder %v496, 33
      %v498 = vsel %vm497, %v488, %v492
      %v499 = vsel %vm497, %v490, %v494
      %v500 = vsel %vm497, %v484, %v488
      %v501 = vsel %vm497, %v486, %v490
      %v502 = vsel %vm497, %v480, %v484
      %v503 = vsel %vm497, %v482, %v486
      %v504 = vsel %vm497, %v492, %v480
      %v505 = vsel %vm497, %v494, %v482
      %v506 = vmul.f32 %v416, %v412
      %v508 = vperm.slane %v506, 0
      %v509 = vperm.slane %v506, 1
      %v510 = vperm.slane %v506, 2
      %v511 = vperm.slane %v506, 3
      %v516 = vmul.f32 %v504, %v508
      %v517 = vmul.f32 %v502, %v509
      %v518 = vmul.f32 %v500, %v510
      %v519 = vmul.f32 %v498, %v511
      %v520 = vmul.f32 %v505, %v508
      %v521 = vmul.f32 %v503, %v509
      %v522 = vmul.f32 %v501, %v510
      %v523 = vmul.f32 %v499, %v511
      %v524 = vpack.c.bf16 %v520, %v516
      %v525 = vpack.c.bf16 %v521, %v517
      %v526 = vpack.c.bf16 %v522, %v518
      %v527 = vpack.c.bf16 %v523, %v519
      %v528 = vld [vmem:[%s4] sm:$0xf]
      %v529 = vld [vmem:[%s4 + $0x4] sm:$0xf]
      %v530 = vld [vmem:[%s4 + $0x8] sm:$0xf]
      %v531 = vld [vmem:[%s4 + $0xc] sm:$0xf]
      %532 = vrot.lane.b32.xlu0 %v437, 32
      %v533 = vpop.permute.xlu0 %532
      %534 = vrot.lane.b32.xlu0 %v441, 32
      %v535 = vpop.permute.xlu0 %534
      %536 = vrot.lane.b32.xlu0 %v438, 32
      %v537 = vpop.permute.xlu0 %536
      %538 = vrot.lane.b32.xlu0 %v442, 32
      %v539 = vpop.permute.xlu0 %538
      %540 = vrot.lane.b32.xlu0 %v439, 32
      %v541 = vpop.permute.xlu0 %540
      %542 = vrot.lane.b32.xlu0 %v443, 32
      %v543 = vpop.permute.xlu0 %542
      %544 = vrot.lane.b32.xlu0 %v440, 32
      %v545 = vpop.permute.xlu0 %544
      %546 = vrot.lane.b32.xlu0 %v444, 32
      %v547 = vpop.permute.xlu0 %546
      %vm548 = vcmp.lt.s32.totalorder %v496, 32
      %v549 = vsel %vm548, %v541, %v545
      %v550 = vsel %vm548, %v543, %v547
      %v551 = vsel %vm548, %v537, %v541
      %v552 = vsel %vm548, %v539, %v543
      %v553 = vsel %vm548, %v533, %v537
      %v554 = vsel %vm548, %v535, %v539
      %v555 = vsel %vm548, %v545, %v533
      %v556 = vsel %vm548, %v547, %v535
      %v558 = vperm.slane %v416, 0
      %v559 = vperm.slane %v416, 1
      %v560 = vperm.slane %v416, 2
      %v561 = vperm.slane %v416, 3
      %v566 = vmul.f32 %v555, %v558
      %v567 = vmul.f32 %v553, %v559
      %v568 = vmul.f32 %v551, %v560
      %v569 = vmul.f32 %v549, %v561
      %v570 = vmul.f32 %v556, %v558
      %v571 = vmul.f32 %v554, %v559
      %v572 = vmul.f32 %v552, %v560
      %v573 = vmul.f32 %v550, %v561
      %v574 = vpack.c.bf16 %v570, %v566
      %v575 = vpack.c.bf16 %v571, %v567
      %v576 = vpack.c.bf16 %v572, %v568
      %v577 = vpack.c.bf16 %v573, %v569
      %s578 = scalar_lea.vmem %s4, 16
      %v579 = vld [vmem:[%s578] sm:$0xf]
      %v580 = vld [vmem:[%s578 + $0x4] sm:$0xf]
      %v581 = vld [vmem:[%s578 + $0x8] sm:$0xf]
      %v582 = vld [vmem:[%s578 + $0xc] sm:$0xf]
      %v587 = vunpack.c.l.b16 %v579
      %v588 = vunpack.c.l.b16 %v580
      %v589 = vunpack.c.l.b16 %v581
      %v590 = vunpack.c.l.b16 %v582
      %v591 = vpack.c.b16 %v588, %v587
      %v592 = vpack.c.b16 %v590, %v589
      %vm593 = vcmask 130048
      %v595 = vsel %vm593, %v591, 0
      %v598 = vsel %vm593, %v592, 0
      %600 = vmatpush.bf16.msra.mxu0 0
      %601 = vmatpush.bf16.msra.mxu0 0
      %602 = vmatpush.bf16.msra.mxu0 0
      %603 = vmatpush.bf16.msra.mxu0 0
      %604 = vmatpush.bf16.msra.mxu0 0
      %605 = vmatpush.bf16.msra.mxu0 0
      %606 = vmatpush.bf16.msra.mxu0 0
      %607 = vmatpush.bf16.msra.mxu0 %v574
      %608 = vmatmul.bf16.gmra.mxu0 %v595
      %v609 = vpop.f32.mrf.mxu0
      %v610 = vadd.f32 0.0, %v609
      %v611 = vpop.f32.mrf.mxu0
      %v612 = vadd.f32 0.0, %v611
      %613 = vmatmul.bf16.gmra.mxu0 %v598
      %v614 = vpop.f32.mrf.mxu0
      %v615 = vadd.f32 0.0, %v614
      %v616 = vpop.f32.mrf.mxu0
      %v617 = vadd.f32 0.0, %v616
      %618 = vdwg.mxu0
      %619 = vmatpush.bf16.msra.mxu0 0
      %620 = vmatpush.bf16.msra.mxu0 0
      %621 = vmatpush.bf16.msra.mxu0 0
      %622 = vmatpush.bf16.msra.mxu0 0
      %623 = vmatpush.bf16.msra.mxu0 0
      %624 = vmatpush.bf16.msra.mxu0 0
      %625 = vmatpush.bf16.msra.mxu0 0
      %626 = vmatpush.bf16.msra.mxu0 %v575
      %627 = vmatmul.bf16.gmra.mxu0 %v595
      %v628 = vpop.f32.mrf.mxu0
      %v629 = vadd.f32 0.0, %v628
      %v630 = vpop.f32.mrf.mxu0
      %v631 = vadd.f32 0.0, %v630
      %632 = vmatmul.bf16.gmra.mxu0 %v598
      %v633 = vpop.f32.mrf.mxu0
      %v634 = vadd.f32 0.0, %v633
      %v635 = vpop.f32.mrf.mxu0
      %v636 = vadd.f32 0.0, %v635
      %637 = vdwg.mxu0
      %638 = vmatpush.bf16.msra.mxu0 0
      %639 = vmatpush.bf16.msra.mxu0 0
      %640 = vmatpush.bf16.msra.mxu0 0
      %641 = vmatpush.bf16.msra.mxu0 0
      %642 = vmatpush.bf16.msra.mxu0 0
      %643 = vmatpush.bf16.msra.mxu0 0
      %644 = vmatpush.bf16.msra.mxu0 0
      %645 = vmatpush.bf16.msra.mxu0 %v576
      %646 = vmatmul.bf16.gmra.mxu0 %v595
      %v647 = vpop.f32.mrf.mxu0
      %v648 = vadd.f32 0.0, %v647
      %v649 = vpop.f32.mrf.mxu0
      %v650 = vadd.f32 0.0, %v649
      %651 = vmatmul.bf16.gmra.mxu0 %v598
      %v652 = vpop.f32.mrf.mxu0
      %v653 = vadd.f32 0.0, %v652
      %v654 = vpop.f32.mrf.mxu0
      %v655 = vadd.f32 0.0, %v654
      %656 = vdwg.mxu0
      %657 = vmatpush.bf16.msra.mxu0 0
      %658 = vmatpush.bf16.msra.mxu0 0
      %659 = vmatpush.bf16.msra.mxu0 0
      %660 = vmatpush.bf16.msra.mxu0 0
      %661 = vmatpush.bf16.msra.mxu0 0
      %662 = vmatpush.bf16.msra.mxu0 0
      %663 = vmatpush.bf16.msra.mxu0 0
      %664 = vmatpush.bf16.msra.mxu0 %v577
      %665 = vmatmul.bf16.gmra.mxu0 %v595
      %v666 = vpop.f32.mrf.mxu0
      %v667 = vadd.f32 0.0, %v666
      %v668 = vpop.f32.mrf.mxu0
      %v669 = vadd.f32 0.0, %v668
      %670 = vmatmul.bf16.gmra.mxu0 %v598
      %v671 = vpop.f32.mrf.mxu0
      %v672 = vadd.f32 0.0, %v671
      %v673 = vpop.f32.mrf.mxu0
      %v674 = vadd.f32 0.0, %v673
      %675 = vdwg.mxu0
      %v680 = vunpack.c.l.b16 %v528
      %v681 = vunpack.c.l.b16 %v529
      %v682 = vunpack.c.l.b16 %v530
      %v683 = vunpack.c.l.b16 %v531
      %v684 = vpack.c.b16 %v681, %v680
      %v685 = vpack.c.b16 %v683, %v682
      %v687 = vsel %vm593, %v684, 0
      %v690 = vsel %vm593, %v685, 0
      %692 = vmatpush.bf16.msra.mxu0 0
      %693 = vmatpush.bf16.msra.mxu0 0
      %694 = vmatpush.bf16.msra.mxu0 0
      %695 = vmatpush.bf16.msra.mxu0 0
      %696 = vmatpush.bf16.msra.mxu0 0
      %697 = vmatpush.bf16.msra.mxu0 0
      %698 = vmatpush.bf16.msra.mxu0 0
      %699 = vmatpush.bf16.msra.mxu0 %v524
      %700 = vmatmul.bf16.gmra.mxu0 %v687
      %v701 = vpop.f32.mrf.mxu0
      %v702 = vadd.f32 %v610, %v701
      %v703 = vpop.f32.mrf.mxu0
      %v704 = vadd.f32 %v612, %v703
      %705 = vmatmul.bf16.gmra.mxu0 %v690
      %v706 = vpop.f32.mrf.mxu0
      %v707 = vadd.f32 %v615, %v706
      %v708 = vpop.f32.mrf.mxu0
      %v709 = vadd.f32 %v617, %v708
      %710 = vdwg.mxu0
      %711 = vmatpush.bf16.msra.mxu0 0
      %712 = vmatpush.bf16.msra.mxu0 0
      %713 = vmatpush.bf16.msra.mxu0 0
      %714 = vmatpush.bf16.msra.mxu0 0
      %715 = vmatpush.bf16.msra.mxu0 0
      %716 = vmatpush.bf16.msra.mxu0 0
      %717 = vmatpush.bf16.msra.mxu0 0
      %718 = vmatpush.bf16.msra.mxu0 %v525
      %719 = vmatmul.bf16.gmra.mxu0 %v687
      %v720 = vpop.f32.mrf.mxu0
      %v721 = vadd.f32 %v629, %v720
      %v722 = vpop.f32.mrf.mxu0
      %v723 = vadd.f32 %v631, %v722
      %724 = vmatmul.bf16.gmra.mxu0 %v690
      %v725 = vpop.f32.mrf.mxu0
      %v726 = vadd.f32 %v634, %v725
      %v727 = vpop.f32.mrf.mxu0
      %v728 = vadd.f32 %v636, %v727
      %729 = vdwg.mxu0
      %730 = vmatpush.bf16.msra.mxu0 0
      %731 = vmatpush.bf16.msra.mxu0 0
      %732 = vmatpush.bf16.msra.mxu0 0
      %733 = vmatpush.bf16.msra.mxu0 0
      %734 = vmatpush.bf16.msra.mxu0 0
      %735 = vmatpush.bf16.msra.mxu0 0
      %736 = vmatpush.bf16.msra.mxu0 0
      %737 = vmatpush.bf16.msra.mxu0 %v526
      %738 = vmatmul.bf16.gmra.mxu0 %v687
      %v739 = vpop.f32.mrf.mxu0
      %v740 = vadd.f32 %v648, %v739
      %v741 = vpop.f32.mrf.mxu0
      %v742 = vadd.f32 %v650, %v741
      %743 = vmatmul.bf16.gmra.mxu0 %v690
      %v744 = vpop.f32.mrf.mxu0
      %v745 = vadd.f32 %v653, %v744
      %v746 = vpop.f32.mrf.mxu0
      %v747 = vadd.f32 %v655, %v746
      %748 = vdwg.mxu0
      %749 = vmatpush.bf16.msra.mxu0 0
      %750 = vmatpush.bf16.msra.mxu0 0
      %751 = vmatpush.bf16.msra.mxu0 0
      %752 = vmatpush.bf16.msra.mxu0 0
      %753 = vmatpush.bf16.msra.mxu0 0
      %754 = vmatpush.bf16.msra.mxu0 0
      %755 = vmatpush.bf16.msra.mxu0 0
      %756 = vmatpush.bf16.msra.mxu0 %v527
      %757 = vmatmul.bf16.gmra.mxu0 %v687
      %v758 = vpop.f32.mrf.mxu0
      %v759 = vadd.f32 %v667, %v758
      %v760 = vpop.f32.mrf.mxu0
      %v761 = vadd.f32 %v669, %v760
      %762 = vmatmul.bf16.gmra.mxu0 %v690
      %v763 = vpop.f32.mrf.mxu0
      %v764 = vadd.f32 %v672, %v763
      %v765 = vpop.f32.mrf.mxu0
      %v766 = vadd.f32 %v674, %v765
      %767 = vdwg.mxu0
      %768 = vrot.lane.b32.xlu0 %v437, 31
      %v769 = vpop.permute.xlu0 %768
      %770 = vrot.lane.b32.xlu0 %v441, 31
      %v771 = vpop.permute.xlu0 %770
      %772 = vrot.lane.b32.xlu0 %v438, 31
      %v773 = vpop.permute.xlu0 %772
      %774 = vrot.lane.b32.xlu0 %v442, 31
      %v775 = vpop.permute.xlu0 %774
      %776 = vrot.lane.b32.xlu0 %v439, 31
      %v777 = vpop.permute.xlu0 %776
      %778 = vrot.lane.b32.xlu0 %v443, 31
      %v779 = vpop.permute.xlu0 %778
      %780 = vrot.lane.b32.xlu0 %v440, 31
      %v781 = vpop.permute.xlu0 %780
      %782 = vrot.lane.b32.xlu0 %v444, 31
      %v783 = vpop.permute.xlu0 %782
      %vm784 = vcmp.lt.s32.totalorder %v496, 31
      %v785 = vsel %vm784, %v777, %v781
      %v786 = vsel %vm784, %v779, %v783
      %v787 = vsel %vm784, %v773, %v777
      %v788 = vsel %vm784, %v775, %v779
      %v789 = vsel %vm784, %v769, %v773
      %v790 = vsel %vm784, %v771, %v775
      %v791 = vsel %vm784, %v781, %v769
      %v792 = vsel %vm784, %v783, %v771
      %v793 = vmul.f32 %v416, %v414
      %v795 = vperm.slane %v793, 0
      %v796 = vperm.slane %v793, 1
      %v797 = vperm.slane %v793, 2
      %v798 = vperm.slane %v793, 3
      %v803 = vmul.f32 %v791, %v795
      %v804 = vmul.f32 %v789, %v796
      %v805 = vmul.f32 %v787, %v797
      %v806 = vmul.f32 %v785, %v798
      %v807 = vmul.f32 %v792, %v795
      %v808 = vmul.f32 %v790, %v796
      %v809 = vmul.f32 %v788, %v797
      %v810 = vmul.f32 %v786, %v798
      %v811 = vpack.c.bf16 %v807, %v803
      %v812 = vpack.c.bf16 %v808, %v804
      %v813 = vpack.c.bf16 %v809, %v805
      %v814 = vpack.c.bf16 %v810, %v806
      %s815 = scalar_lea.vmem %s4, 32
      %v816 = vld [vmem:[%s815] sm:$0xf]
      %v817 = vld [vmem:[%s815 + $0x4] sm:$0xf]
      %v818 = vld [vmem:[%s815 + $0x8] sm:$0xf]
      %v819 = vld [vmem:[%s815 + $0xc] sm:$0xf]
      %v824 = vunpack.c.l.b16 %v816
      %v825 = vunpack.c.l.b16 %v817
      %v826 = vunpack.c.l.b16 %v818
      %v827 = vunpack.c.l.b16 %v819
      %v828 = vpack.c.b16 %v825, %v824
      %v829 = vpack.c.b16 %v827, %v826
      %v831 = vsel %vm593, %v828, 0
      %v834 = vsel %vm593, %v829, 0
      %836 = vmatpush.bf16.msra.mxu0 0
      %837 = vmatpush.bf16.msra.mxu0 0
      %838 = vmatpush.bf16.msra.mxu0 0
      %839 = vmatpush.bf16.msra.mxu0 0
      %840 = vmatpush.bf16.msra.mxu0 0
      %841 = vmatpush.bf16.msra.mxu0 0
      %842 = vmatpush.bf16.msra.mxu0 0
      %843 = vmatpush.bf16.msra.mxu0 %v811
      %844 = vmatmul.bf16.gmra.mxu0 %v831
      %v845 = vpop.f32.mrf.mxu0
      %v846 = vadd.f32 0.0, %v845
      %v847 = vpop.f32.mrf.mxu0
      %v848 = vadd.f32 0.0, %v847
      %849 = vmatmul.bf16.gmra.mxu0 %v834
      %v850 = vpop.f32.mrf.mxu0
      %v851 = vadd.f32 0.0, %v850
      %v852 = vpop.f32.mrf.mxu0
      %v853 = vadd.f32 0.0, %v852
      %854 = vdwg.mxu0
      %855 = vmatpush.bf16.msra.mxu0 0
      %856 = vmatpush.bf16.msra.mxu0 0
      %857 = vmatpush.bf16.msra.mxu0 0
      %858 = vmatpush.bf16.msra.mxu0 0
      %859 = vmatpush.bf16.msra.mxu0 0
      %860 = vmatpush.bf16.msra.mxu0 0
      %861 = vmatpush.bf16.msra.mxu0 0
      %862 = vmatpush.bf16.msra.mxu0 %v812
      %863 = vmatmul.bf16.gmra.mxu0 %v831
      %v864 = vpop.f32.mrf.mxu0
      %v865 = vadd.f32 0.0, %v864
      %v866 = vpop.f32.mrf.mxu0
      %v867 = vadd.f32 0.0, %v866
      %868 = vmatmul.bf16.gmra.mxu0 %v834
      %v869 = vpop.f32.mrf.mxu0
      %v870 = vadd.f32 0.0, %v869
      %v871 = vpop.f32.mrf.mxu0
      %v872 = vadd.f32 0.0, %v871
      %873 = vdwg.mxu0
      %874 = vmatpush.bf16.msra.mxu0 0
      %875 = vmatpush.bf16.msra.mxu0 0
      %876 = vmatpush.bf16.msra.mxu0 0
      %877 = vmatpush.bf16.msra.mxu0 0
      %878 = vmatpush.bf16.msra.mxu0 0
      %879 = vmatpush.bf16.msra.mxu0 0
      %880 = vmatpush.bf16.msra.mxu0 0
      %881 = vmatpush.bf16.msra.mxu0 %v813
      %882 = vmatmul.bf16.gmra.mxu0 %v831
      %v883 = vpop.f32.mrf.mxu0
      %v884 = vadd.f32 0.0, %v883
      %v885 = vpop.f32.mrf.mxu0
      %v886 = vadd.f32 0.0, %v885
      %887 = vmatmul.bf16.gmra.mxu0 %v834
      %v888 = vpop.f32.mrf.mxu0
      %v889 = vadd.f32 0.0, %v888
      %v890 = vpop.f32.mrf.mxu0
      %v891 = vadd.f32 0.0, %v890
      %892 = vdwg.mxu0
      %893 = vmatpush.bf16.msra.mxu0 0
      %894 = vmatpush.bf16.msra.mxu0 0
      %895 = vmatpush.bf16.msra.mxu0 0
      %896 = vmatpush.bf16.msra.mxu0 0
      %897 = vmatpush.bf16.msra.mxu0 0
      %898 = vmatpush.bf16.msra.mxu0 0
      %899 = vmatpush.bf16.msra.mxu0 0
      %900 = vmatpush.bf16.msra.mxu0 %v814
      %901 = vmatmul.bf16.gmra.mxu0 %v831
      %v902 = vpop.f32.mrf.mxu0
      %v903 = vadd.f32 0.0, %v902
      %v904 = vpop.f32.mrf.mxu0
      %v905 = vadd.f32 0.0, %v904
      %906 = vmatmul.bf16.gmra.mxu0 %v834
      %v907 = vpop.f32.mrf.mxu0
      %v908 = vadd.f32 0.0, %v907
      %v909 = vpop.f32.mrf.mxu0
      %v910 = vadd.f32 0.0, %v909
      %911 = vdwg.mxu0
      %v912 = vadd.f32 %v702, %v846
      %v913 = vadd.f32 %v721, %v865
      %v914 = vadd.f32 %v740, %v884
      %v915 = vadd.f32 %v759, %v903
      %v916 = vadd.f32 %v704, %v848
      %v917 = vadd.f32 %v723, %v867
      %v918 = vadd.f32 %v742, %v886
      %v919 = vadd.f32 %v761, %v905
      %v920 = vadd.f32 %v707, %v851
      %v921 = vadd.f32 %v726, %v870
      %v922 = vadd.f32 %v745, %v889
      %v923 = vadd.f32 %v764, %v908
      %v924 = vadd.f32 %v709, %v853
      %v925 = vadd.f32 %v728, %v872
      %v926 = vadd.f32 %v747, %v891
      %v927 = vadd.f32 %v766, %v910
      %928 = vrot.lane.b32.xlu0 %v437, 1
      %v929 = vpop.permute.xlu0 %928
      %930 = vrot.lane.b32.xlu0 %v441, 1
      %v931 = vpop.permute.xlu0 %930
      %932 = vrot.lane.b32.xlu0 %v438, 1
      %v933 = vpop.permute.xlu0 %932
      %934 = vrot.lane.b32.xlu0 %v442, 1
      %v935 = vpop.permute.xlu0 %934
      %936 = vrot.lane.b32.xlu0 %v439, 1
      %v937 = vpop.permute.xlu0 %936
      %938 = vrot.lane.b32.xlu0 %v443, 1
      %v939 = vpop.permute.xlu0 %938
      %940 = vrot.lane.b32.xlu0 %v440, 1
      %v941 = vpop.permute.xlu0 %940
      %942 = vrot.lane.b32.xlu0 %v444, 1
      %v943 = vpop.permute.xlu0 %942
      %vm944 = vcmp.lt.s32.totalorder %v496, 1
      %v945 = vsel %vm944, %v937, %v941
      %v946 = vsel %vm944, %v939, %v943
      %v947 = vsel %vm944, %v933, %v937
      %v948 = vsel %vm944, %v935, %v939
      %v949 = vsel %vm944, %v929, %v933
      %v950 = vsel %vm944, %v931, %v935
      %v951 = vsel %vm944, %v941, %v929
      %v952 = vsel %vm944, %v943, %v931
      %v954 = vperm.slane %v412, 0
      %v955 = vperm.slane %v412, 1
      %v956 = vperm.slane %v412, 2
      %v957 = vperm.slane %v412, 3
      %v962 = vmul.f32 %v951, %v954
      %v963 = vmul.f32 %v949, %v955
      %v964 = vmul.f32 %v947, %v956
      %v965 = vmul.f32 %v945, %v957
      %v966 = vmul.f32 %v952, %v954
      %v967 = vmul.f32 %v950, %v955
      %v968 = vmul.f32 %v948, %v956
      %v969 = vmul.f32 %v946, %v957
      %v970 = vpack.c.bf16 %v966, %v962
      %v971 = vpack.c.bf16 %v967, %v963
      %v972 = vpack.c.bf16 %v968, %v964
      %v973 = vpack.c.bf16 %v969, %v965
      %s974 = scalar_lea.vmem %s4, 48
      %v975 = vld [vmem:[%s974] sm:$0xf]
      %v976 = vld [vmem:[%s974 + $0x4] sm:$0xf]
      %v977 = vld [vmem:[%s974 + $0x8] sm:$0xf]
      %v978 = vld [vmem:[%s974 + $0xc] sm:$0xf]
      %v983 = vunpack.c.l.b16 %v975
      %v984 = vunpack.c.l.b16 %v976
      %v985 = vunpack.c.l.b16 %v977
      %v986 = vunpack.c.l.b16 %v978
      %v987 = vpack.c.b16 %v984, %v983
      %v988 = vpack.c.b16 %v986, %v985
      %v990 = vsel %vm593, %v987, 0
      %v993 = vsel %vm593, %v988, 0
      %995 = vmatpush.bf16.msra.mxu0 0
      %996 = vmatpush.bf16.msra.mxu0 0
      %997 = vmatpush.bf16.msra.mxu0 0
      %998 = vmatpush.bf16.msra.mxu0 0
      %999 = vmatpush.bf16.msra.mxu0 0
      %1000 = vmatpush.bf16.msra.mxu0 0
      %1001 = vmatpush.bf16.msra.mxu0 0
      %1002 = vmatpush.bf16.msra.mxu0 %v970
      %1003 = vmatmul.bf16.gmra.mxu0 %v990
      %v1004 = vpop.f32.mrf.mxu0
      %v1005 = vadd.f32 0.0, %v1004
      %v1006 = vpop.f32.mrf.mxu0
      %v1007 = vadd.f32 0.0, %v1006
      %1008 = vmatmul.bf16.gmra.mxu0 %v993
      %v1009 = vpop.f32.mrf.mxu0
      %v1010 = vadd.f32 0.0, %v1009
      %v1011 = vpop.f32.mrf.mxu0
      %v1012 = vadd.f32 0.0, %v1011
      %1013 = vdwg.mxu0
      %1014 = vmatpush.bf16.msra.mxu0 0
      %1015 = vmatpush.bf16.msra.mxu0 0
      %1016 = vmatpush.bf16.msra.mxu0 0
      %1017 = vmatpush.bf16.msra.mxu0 0
      %1018 = vmatpush.bf16.msra.mxu0 0
      %1019 = vmatpush.bf16.msra.mxu0 0
      %1020 = vmatpush.bf16.msra.mxu0 0
      %1021 = vmatpush.bf16.msra.mxu0 %v971
      %1022 = vmatmul.bf16.gmra.mxu0 %v990
      %v1023 = vpop.f32.mrf.mxu0
      %v1024 = vadd.f32 0.0, %v1023
      %v1025 = vpop.f32.mrf.mxu0
      %v1026 = vadd.f32 0.0, %v1025
      %1027 = vmatmul.bf16.gmra.mxu0 %v993
      %v1028 = vpop.f32.mrf.mxu0
      %v1029 = vadd.f32 0.0, %v1028
      %v1030 = vpop.f32.mrf.mxu0
      %v1031 = vadd.f32 0.0, %v1030
      %1032 = vdwg.mxu0
      %1033 = vmatpush.bf16.msra.mxu0 0
      %1034 = vmatpush.bf16.msra.mxu0 0
      %1035 = vmatpush.bf16.msra.mxu0 0
      %1036 = vmatpush.bf16.msra.mxu0 0
      %1037 = vmatpush.bf16.msra.mxu0 0
      %1038 = vmatpush.bf16.msra.mxu0 0
      %1039 = vmatpush.bf16.msra.mxu0 0
      %1040 = vmatpush.bf16.msra.mxu0 %v972
      %1041 = vmatmul.bf16.gmra.mxu0 %v990
      %v1042 = vpop.f32.mrf.mxu0
      %v1043 = vadd.f32 0.0, %v1042
      %v1044 = vpop.f32.mrf.mxu0
      %v1045 = vadd.f32 0.0, %v1044
      %1046 = vmatmul.bf16.gmra.mxu0 %v993
      %v1047 = vpop.f32.mrf.mxu0
      %v1048 = vadd.f32 0.0, %v1047
      %v1049 = vpop.f32.mrf.mxu0
      %v1050 = vadd.f32 0.0, %v1049
      %1051 = vdwg.mxu0
      %1052 = vmatpush.bf16.msra.mxu0 0
      %1053 = vmatpush.bf16.msra.mxu0 0
      %1054 = vmatpush.bf16.msra.mxu0 0
      %1055 = vmatpush.bf16.msra.mxu0 0
      %1056 = vmatpush.bf16.msra.mxu0 0
      %1057 = vmatpush.bf16.msra.mxu0 0
      %1058 = vmatpush.bf16.msra.mxu0 0
      %1059 = vmatpush.bf16.msra.mxu0 %v973
      %1060 = vmatmul.bf16.gmra.mxu0 %v990
      %v1061 = vpop.f32.mrf.mxu0
      %v1062 = vadd.f32 0.0, %v1061
      %v1063 = vpop.f32.mrf.mxu0
      %v1064 = vadd.f32 0.0, %v1063
      %1065 = vmatmul.bf16.gmra.mxu0 %v993
      %v1066 = vpop.f32.mrf.mxu0
      %v1067 = vadd.f32 0.0, %v1066
      %v1068 = vpop.f32.mrf.mxu0
      %v1069 = vadd.f32 0.0, %v1068
      %1070 = vdwg.mxu0
      %v1071 = vadd.f32 %v912, %v1005
      %v1072 = vadd.f32 %v913, %v1024
      %v1073 = vadd.f32 %v914, %v1043
      %v1074 = vadd.f32 %v915, %v1062
      %v1075 = vadd.f32 %v916, %v1007
      %v1076 = vadd.f32 %v917, %v1026
      %v1077 = vadd.f32 %v918, %v1045
      %v1078 = vadd.f32 %v919, %v1064
      %v1079 = vadd.f32 %v920, %v1010
      %v1080 = vadd.f32 %v921, %v1029
      %v1081 = vadd.f32 %v922, %v1048
      %v1082 = vadd.f32 %v923, %v1067
      %v1083 = vadd.f32 %v924, %v1012
      %v1084 = vadd.f32 %v925, %v1031
      %v1085 = vadd.f32 %v926, %v1050
      %v1086 = vadd.f32 %v927, %v1069
      %v1087 = vpack.c.bf16 %v441, %v437
      %v1088 = vpack.c.bf16 %v442, %v438
      %v1089 = vpack.c.bf16 %v443, %v439
      %v1090 = vpack.c.bf16 %v444, %v440
      %s1091 = scalar_lea.vmem %s4, 64
      %v1092 = vld [vmem:[%s1091] sm:$0xf]
      %v1093 = vld [vmem:[%s1091 + $0x4] sm:$0xf]
      %v1094 = vld [vmem:[%s1091 + $0x8] sm:$0xf]
      %v1095 = vld [vmem:[%s1091 + $0xc] sm:$0xf]
      %v1100 = vunpack.c.l.b16 %v1092
      %v1101 = vunpack.c.l.b16 %v1093
      %v1102 = vunpack.c.l.b16 %v1094
      %v1103 = vunpack.c.l.b16 %v1095
      %v1104 = vpack.c.b16 %v1101, %v1100
      %v1105 = vpack.c.b16 %v1103, %v1102
      %v1107 = vsel %vm593, %v1104, 0
      %v1110 = vsel %vm593, %v1105, 0
      %1112 = vmatpush.bf16.msra.mxu0 0
      %1113 = vmatpush.bf16.msra.mxu0 0
      %1114 = vmatpush.bf16.msra.mxu0 0
      %1115 = vmatpush.bf16.msra.mxu0 0
      %1116 = vmatpush.bf16.msra.mxu0 0
      %1117 = vmatpush.bf16.msra.mxu0 0
      %1118 = vmatpush.bf16.msra.mxu0 0
      %1119 = vmatpush.bf16.msra.mxu0 %v1087
      %1120 = vmatmul.bf16.gmra.mxu0 %v1107
      %v1121 = vpop.f32.mrf.mxu0
      %v1122 = vadd.f32 0.0, %v1121
      %v1123 = vpop.f32.mrf.mxu0
      %v1124 = vadd.f32 0.0, %v1123
      %1125 = vmatmul.bf16.gmra.mxu0 %v1110
      %v1126 = vpop.f32.mrf.mxu0
      %v1127 = vadd.f32 0.0, %v1126
      %v1128 = vpop.f32.mrf.mxu0
      %v1129 = vadd.f32 0.0, %v1128
      %1130 = vdwg.mxu0
      %1131 = vmatpush.bf16.msra.mxu0 0
      %1132 = vmatpush.bf16.msra.mxu0 0
      %1133 = vmatpush.bf16.msra.mxu0 0
      %1134 = vmatpush.bf16.msra.mxu0 0
      %1135 = vmatpush.bf16.msra.mxu0 0
      %1136 = vmatpush.bf16.msra.mxu0 0
      %1137 = vmatpush.bf16.msra.mxu0 0
      %1138 = vmatpush.bf16.msra.mxu0 %v1088
      %1139 = vmatmul.bf16.gmra.mxu0 %v1107
      %v1140 = vpop.f32.mrf.mxu0
      %v1141 = vadd.f32 0.0, %v1140
      %v1142 = vpop.f32.mrf.mxu0
      %v1143 = vadd.f32 0.0, %v1142
      %1144 = vmatmul.bf16.gmra.mxu0 %v1110
      %v1145 = vpop.f32.mrf.mxu0
      %v1146 = vadd.f32 0.0, %v1145
      %v1147 = vpop.f32.mrf.mxu0
      %v1148 = vadd.f32 0.0, %v1147
      %1149 = vdwg.mxu0
      %1150 = vmatpush.bf16.msra.mxu0 0
      %1151 = vmatpush.bf16.msra.mxu0 0
      %1152 = vmatpush.bf16.msra.mxu0 0
      %1153 = vmatpush.bf16.msra.mxu0 0
      %1154 = vmatpush.bf16.msra.mxu0 0
      %1155 = vmatpush.bf16.msra.mxu0 0
      %1156 = vmatpush.bf16.msra.mxu0 0
      %1157 = vmatpush.bf16.msra.mxu0 %v1089
      %1158 = vmatmul.bf16.gmra.mxu0 %v1107
      %v1159 = vpop.f32.mrf.mxu0
      %v1160 = vadd.f32 0.0, %v1159
      %v1161 = vpop.f32.mrf.mxu0
      %v1162 = vadd.f32 0.0, %v1161
      %1163 = vmatmul.bf16.gmra.mxu0 %v1110
      %v1164 = vpop.f32.mrf.mxu0
      %v1165 = vadd.f32 0.0, %v1164
      %v1166 = vpop.f32.mrf.mxu0
      %v1167 = vadd.f32 0.0, %v1166
      %1168 = vdwg.mxu0
      %1169 = vmatpush.bf16.msra.mxu0 0
      %1170 = vmatpush.bf16.msra.mxu0 0
      %1171 = vmatpush.bf16.msra.mxu0 0
      %1172 = vmatpush.bf16.msra.mxu0 0
      %1173 = vmatpush.bf16.msra.mxu0 0
      %1174 = vmatpush.bf16.msra.mxu0 0
      %1175 = vmatpush.bf16.msra.mxu0 0
      %1176 = vmatpush.bf16.msra.mxu0 %v1090
      %1177 = vmatmul.bf16.gmra.mxu0 %v1107
      %v1178 = vpop.f32.mrf.mxu0
      %v1179 = vadd.f32 0.0, %v1178
      %v1180 = vpop.f32.mrf.mxu0
      %v1181 = vadd.f32 0.0, %v1180
      %1182 = vmatmul.bf16.gmra.mxu0 %v1110
      %v1183 = vpop.f32.mrf.mxu0
      %v1184 = vadd.f32 0.0, %v1183
      %v1185 = vpop.f32.mrf.mxu0
      %v1186 = vadd.f32 0.0, %v1185
      %1187 = vdwg.mxu0
      %v1188 = vadd.f32 %v1071, %v1122
      %v1189 = vadd.f32 %v1072, %v1141
      %v1190 = vadd.f32 %v1073, %v1160
      %v1191 = vadd.f32 %v1074, %v1179
      %v1192 = vadd.f32 %v1075, %v1124
      %v1193 = vadd.f32 %v1076, %v1143
      %v1194 = vadd.f32 %v1077, %v1162
      %v1195 = vadd.f32 %v1078, %v1181
      %v1196 = vadd.f32 %v1079, %v1127
      %v1197 = vadd.f32 %v1080, %v1146
      %v1198 = vadd.f32 %v1081, %v1165
      %v1199 = vadd.f32 %v1082, %v1184
      %v1200 = vadd.f32 %v1083, %v1129
      %v1201 = vadd.f32 %v1084, %v1148
      %v1202 = vadd.f32 %v1085, %v1167
      %v1203 = vadd.f32 %v1086, %v1186
      %1204 = vrot.lane.b32.xlu0 %v437, 127
      %v1205 = vpop.permute.xlu0 %1204
      %1206 = vrot.lane.b32.xlu0 %v441, 127
      %v1207 = vpop.permute.xlu0 %1206
      %1208 = vrot.lane.b32.xlu0 %v438, 127
      %v1209 = vpop.permute.xlu0 %1208
      %1210 = vrot.lane.b32.xlu0 %v442, 127
      %v1211 = vpop.permute.xlu0 %1210
      %1212 = vrot.lane.b32.xlu0 %v439, 127
      %v1213 = vpop.permute.xlu0 %1212
      %1214 = vrot.lane.b32.xlu0 %v443, 127
      %v1215 = vpop.permute.xlu0 %1214
      %1216 = vrot.lane.b32.xlu0 %v440, 127
      %v1217 = vpop.permute.xlu0 %1216
      %1218 = vrot.lane.b32.xlu0 %v444, 127
      %v1219 = vpop.permute.xlu0 %1218
      %vm1220 = vcmp.lt.s32.totalorder %v496, 127
      %v1221 = vsel %vm1220, %v1213, %v1217
      %v1222 = vsel %vm1220, %v1215, %v1219
      %v1223 = vsel %vm1220, %v1209, %v1213
      %v1224 = vsel %vm1220, %v1211, %v1215
      %v1225 = vsel %vm1220, %v1205, %v1209
      %v1226 = vsel %vm1220, %v1207, %v1211
      %v1227 = vsel %vm1220, %v1217, %v1205
      %v1228 = vsel %vm1220, %v1219, %v1207
      %v1230 = vperm.slane %v414, 0
      %v1231 = vperm.slane %v414, 1
      %v1232 = vperm.slane %v414, 2
      %v1233 = vperm.slane %v414, 3
      %v1238 = vmul.f32 %v1225, %v1230
      %v1239 = vmul.f32 %v1223, %v1231
      %v1240 = vmul.f32 %v1221, %v1232
      %v1241 = vmul.f32 %v1227, %v1233
      %v1242 = vmul.f32 %v1226, %v1230
      %v1243 = vmul.f32 %v1224, %v1231
      %v1244 = vmul.f32 %v1222, %v1232
      %v1245 = vmul.f32 %v1228, %v1233
      %v1246 = vpack.c.bf16 %v1242, %v1238
      %v1247 = vpack.c.bf16 %v1243, %v1239
      %v1248 = vpack.c.bf16 %v1244, %v1240
      %v1249 = vpack.c.bf16 %v1245, %v1241
      %s1250 = scalar_lea.vmem %s4, 80
      %v1251 = vld [vmem:[%s1250] sm:$0xf]
      %v1252 = vld [vmem:[%s1250 + $0x4] sm:$0xf]
      %v1253 = vld [vmem:[%s1250 + $0x8] sm:$0xf]
      %v1254 = vld [vmem:[%s1250 + $0xc] sm:$0xf]
      %v1259 = vunpack.c.l.b16 %v1251
      %v1260 = vunpack.c.l.b16 %v1252
      %v1261 = vunpack.c.l.b16 %v1253
      %v1262 = vunpack.c.l.b16 %v1254
      %v1263 = vpack.c.b16 %v1260, %v1259
      %v1264 = vpack.c.b16 %v1262, %v1261
      %v1266 = vsel %vm593, %v1263, 0
      %v1269 = vsel %vm593, %v1264, 0
      %1271 = vmatpush.bf16.msra.mxu0 0
      %1272 = vmatpush.bf16.msra.mxu0 0
      %1273 = vmatpush.bf16.msra.mxu0 0
      %1274 = vmatpush.bf16.msra.mxu0 0
      %1275 = vmatpush.bf16.msra.mxu0 0
      %1276 = vmatpush.bf16.msra.mxu0 0
      %1277 = vmatpush.bf16.msra.mxu0 0
      %1278 = vmatpush.bf16.msra.mxu0 %v1246
      %1279 = vmatmul.bf16.gmra.mxu0 %v1266
      %v1280 = vpop.f32.mrf.mxu0
      %v1281 = vadd.f32 0.0, %v1280
      %v1282 = vpop.f32.mrf.mxu0
      %v1283 = vadd.f32 0.0, %v1282
      %1284 = vmatmul.bf16.gmra.mxu0 %v1269
      %v1285 = vpop.f32.mrf.mxu0
      %v1286 = vadd.f32 0.0, %v1285
      %v1287 = vpop.f32.mrf.mxu0
      %v1288 = vadd.f32 0.0, %v1287
      %1289 = vdwg.mxu0
      %1290 = vmatpush.bf16.msra.mxu0 0
      %1291 = vmatpush.bf16.msra.mxu0 0
      %1292 = vmatpush.bf16.msra.mxu0 0
      %1293 = vmatpush.bf16.msra.mxu0 0
      %1294 = vmatpush.bf16.msra.mxu0 0
      %1295 = vmatpush.bf16.msra.mxu0 0
      %1296 = vmatpush.bf16.msra.mxu0 0
      %1297 = vmatpush.bf16.msra.mxu0 %v1247
      %1298 = vmatmul.bf16.gmra.mxu0 %v1266
      %v1299 = vpop.f32.mrf.mxu0
      %v1300 = vadd.f32 0.0, %v1299
      %v1301 = vpop.f32.mrf.mxu0
      %v1302 = vadd.f32 0.0, %v1301
      %1303 = vmatmul.bf16.gmra.mxu0 %v1269
      %v1304 = vpop.f32.mrf.mxu0
      %v1305 = vadd.f32 0.0, %v1304
      %v1306 = vpop.f32.mrf.mxu0
      %v1307 = vadd.f32 0.0, %v1306
      %1308 = vdwg.mxu0
      %1309 = vmatpush.bf16.msra.mxu0 0
      %1310 = vmatpush.bf16.msra.mxu0 0
      %1311 = vmatpush.bf16.msra.mxu0 0
      %1312 = vmatpush.bf16.msra.mxu0 0
      %1313 = vmatpush.bf16.msra.mxu0 0
      %1314 = vmatpush.bf16.msra.mxu0 0
      %1315 = vmatpush.bf16.msra.mxu0 0
      %1316 = vmatpush.bf16.msra.mxu0 %v1248
      %1317 = vmatmul.bf16.gmra.mxu0 %v1266
      %v1318 = vpop.f32.mrf.mxu0
      %v1319 = vadd.f32 0.0, %v1318
      %v1320 = vpop.f32.mrf.mxu0
      %v1321 = vadd.f32 0.0, %v1320
      %1322 = vmatmul.bf16.gmra.mxu0 %v1269
      %v1323 = vpop.f32.mrf.mxu0
      %v1324 = vadd.f32 0.0, %v1323
      %v1325 = vpop.f32.mrf.mxu0
      %v1326 = vadd.f32 0.0, %v1325
      %1327 = vdwg.mxu0
      %1328 = vmatpush.bf16.msra.mxu0 0
      %1329 = vmatpush.bf16.msra.mxu0 0
      %1330 = vmatpush.bf16.msra.mxu0 0
      %1331 = vmatpush.bf16.msra.mxu0 0
      %1332 = vmatpush.bf16.msra.mxu0 0
      %1333 = vmatpush.bf16.msra.mxu0 0
      %1334 = vmatpush.bf16.msra.mxu0 0
      %1335 = vmatpush.bf16.msra.mxu0 %v1249
      %1336 = vmatmul.bf16.gmra.mxu0 %v1266
      %v1337 = vpop.f32.mrf.mxu0
      %v1338 = vadd.f32 0.0, %v1337
      %v1339 = vpop.f32.mrf.mxu0
      %v1340 = vadd.f32 0.0, %v1339
      %1341 = vmatmul.bf16.gmra.mxu0 %v1269
      %v1342 = vpop.f32.mrf.mxu0
      %v1343 = vadd.f32 0.0, %v1342
      %v1344 = vpop.f32.mrf.mxu0
      %v1345 = vadd.f32 0.0, %v1344
      %1346 = vdwg.mxu0
      %v1347 = vadd.f32 %v1188, %v1281
      %v1348 = vadd.f32 %v1189, %v1300
      %v1349 = vadd.f32 %v1190, %v1319
      %v1350 = vadd.f32 %v1191, %v1338
      %v1351 = vadd.f32 %v1192, %v1283
      %v1352 = vadd.f32 %v1193, %v1302
      %v1353 = vadd.f32 %v1194, %v1321
      %v1354 = vadd.f32 %v1195, %v1340
      %v1355 = vadd.f32 %v1196, %v1286
      %v1356 = vadd.f32 %v1197, %v1305
      %v1357 = vadd.f32 %v1198, %v1324
      %v1358 = vadd.f32 %v1199, %v1343
      %v1359 = vadd.f32 %v1200, %v1288
      %v1360 = vadd.f32 %v1201, %v1307
      %v1361 = vadd.f32 %v1202, %v1326
      %v1362 = vadd.f32 %v1203, %v1345
      %1363 = vrot.lane.b32.xlu0 %v437, 97
      %v1364 = vpop.permute.xlu0 %1363
      %1365 = vrot.lane.b32.xlu0 %v441, 97
      %v1366 = vpop.permute.xlu0 %1365
      %1367 = vrot.lane.b32.xlu0 %v438, 97
      %v1368 = vpop.permute.xlu0 %1367
      %1369 = vrot.lane.b32.xlu0 %v442, 97
      %v1370 = vpop.permute.xlu0 %1369
      %1371 = vrot.lane.b32.xlu0 %v439, 97
      %v1372 = vpop.permute.xlu0 %1371
      %1373 = vrot.lane.b32.xlu0 %v443, 97
      %v1374 = vpop.permute.xlu0 %1373
      %1375 = vrot.lane.b32.xlu0 %v440, 97
      %v1376 = vpop.permute.xlu0 %1375
      %1377 = vrot.lane.b32.xlu0 %v444, 97
      %v1378 = vpop.permute.xlu0 %1377
      %vm1379 = vcmp.lt.s32.totalorder %v496, 97
      %v1380 = vsel %vm1379, %v1372, %v1376
      %v1381 = vsel %vm1379, %v1374, %v1378
      %v1382 = vsel %vm1379, %v1368, %v1372
      %v1383 = vsel %vm1379, %v1370, %v1374
      %v1384 = vsel %vm1379, %v1364, %v1368
      %v1385 = vsel %vm1379, %v1366, %v1370
      %v1386 = vsel %vm1379, %v1376, %v1364
      %v1387 = vsel %vm1379, %v1378, %v1366
      %v1388 = vmul.f32 %v418, %v412
      %v1390 = vperm.slane %v1388, 0
      %v1391 = vperm.slane %v1388, 1
      %v1392 = vperm.slane %v1388, 2
      %v1393 = vperm.slane %v1388, 3
      %v1398 = vmul.f32 %v1384, %v1390
      %v1399 = vmul.f32 %v1382, %v1391
      %v1400 = vmul.f32 %v1380, %v1392
      %v1401 = vmul.f32 %v1386, %v1393
      %v1402 = vmul.f32 %v1385, %v1390
      %v1403 = vmul.f32 %v1383, %v1391
      %v1404 = vmul.f32 %v1381, %v1392
      %v1405 = vmul.f32 %v1387, %v1393
      %v1406 = vpack.c.bf16 %v1402, %v1398
      %v1407 = vpack.c.bf16 %v1403, %v1399
      %v1408 = vpack.c.bf16 %v1404, %v1400
      %v1409 = vpack.c.bf16 %v1405, %v1401
      %s1410 = scalar_lea.vmem %s4, 96
      %v1411 = vld [vmem:[%s1410] sm:$0xf]
      %v1412 = vld [vmem:[%s1410 + $0x4] sm:$0xf]
      %v1413 = vld [vmem:[%s1410 + $0x8] sm:$0xf]
      %v1414 = vld [vmem:[%s1410 + $0xc] sm:$0xf]
      %v1419 = vunpack.c.l.b16 %v1411
      %v1420 = vunpack.c.l.b16 %v1412
      %v1421 = vunpack.c.l.b16 %v1413
      %v1422 = vunpack.c.l.b16 %v1414
      %v1423 = vpack.c.b16 %v1420, %v1419
      %v1424 = vpack.c.b16 %v1422, %v1421
      %v1426 = vsel %vm593, %v1423, 0
      %v1429 = vsel %vm593, %v1424, 0
      %1431 = vmatpush.bf16.msra.mxu0 0
      %1432 = vmatpush.bf16.msra.mxu0 0
      %1433 = vmatpush.bf16.msra.mxu0 0
      %1434 = vmatpush.bf16.msra.mxu0 0
      %1435 = vmatpush.bf16.msra.mxu0 0
      %1436 = vmatpush.bf16.msra.mxu0 0
      %1437 = vmatpush.bf16.msra.mxu0 0
      %1438 = vmatpush.bf16.msra.mxu0 %v1406
      %1439 = vmatmul.bf16.gmra.mxu0 %v1426
      %v1440 = vpop.f32.mrf.mxu0
      %v1441 = vadd.f32 0.0, %v1440
      %v1442 = vpop.f32.mrf.mxu0
      %v1443 = vadd.f32 0.0, %v1442
      %1444 = vmatmul.bf16.gmra.mxu0 %v1429
      %v1445 = vpop.f32.mrf.mxu0
      %v1446 = vadd.f32 0.0, %v1445
      %v1447 = vpop.f32.mrf.mxu0
      %v1448 = vadd.f32 0.0, %v1447
      %1449 = vdwg.mxu0
      %1450 = vmatpush.bf16.msra.mxu0 0
      %1451 = vmatpush.bf16.msra.mxu0 0
      %1452 = vmatpush.bf16.msra.mxu0 0
      %1453 = vmatpush.bf16.msra.mxu0 0
      %1454 = vmatpush.bf16.msra.mxu0 0
      %1455 = vmatpush.bf16.msra.mxu0 0
      %1456 = vmatpush.bf16.msra.mxu0 0
      %1457 = vmatpush.bf16.msra.mxu0 %v1407
      %1458 = vmatmul.bf16.gmra.mxu0 %v1426
      %v1459 = vpop.f32.mrf.mxu0
      %v1460 = vadd.f32 0.0, %v1459
      %v1461 = vpop.f32.mrf.mxu0
      %v1462 = vadd.f32 0.0, %v1461
      %1463 = vmatmul.bf16.gmra.mxu0 %v1429
      %v1464 = vpop.f32.mrf.mxu0
      %v1465 = vadd.f32 0.0, %v1464
      %v1466 = vpop.f32.mrf.mxu0
      %v1467 = vadd.f32 0.0, %v1466
      %1468 = vdwg.mxu0
      %1469 = vmatpush.bf16.msra.mxu0 0
      %1470 = vmatpush.bf16.msra.mxu0 0
      %1471 = vmatpush.bf16.msra.mxu0 0
      %1472 = vmatpush.bf16.msra.mxu0 0
      %1473 = vmatpush.bf16.msra.mxu0 0
      %1474 = vmatpush.bf16.msra.mxu0 0
      %1475 = vmatpush.bf16.msra.mxu0 0
      %1476 = vmatpush.bf16.msra.mxu0 %v1408
      %1477 = vmatmul.bf16.gmra.mxu0 %v1426
      %v1478 = vpop.f32.mrf.mxu0
      %v1479 = vadd.f32 0.0, %v1478
      %v1480 = vpop.f32.mrf.mxu0
      %v1481 = vadd.f32 0.0, %v1480
      %1482 = vmatmul.bf16.gmra.mxu0 %v1429
      %v1483 = vpop.f32.mrf.mxu0
      %v1484 = vadd.f32 0.0, %v1483
      %v1485 = vpop.f32.mrf.mxu0
      %v1486 = vadd.f32 0.0, %v1485
      %1487 = vdwg.mxu0
      %1488 = vmatpush.bf16.msra.mxu0 0
      %1489 = vmatpush.bf16.msra.mxu0 0
      %1490 = vmatpush.bf16.msra.mxu0 0
      %1491 = vmatpush.bf16.msra.mxu0 0
      %1492 = vmatpush.bf16.msra.mxu0 0
      %1493 = vmatpush.bf16.msra.mxu0 0
      %1494 = vmatpush.bf16.msra.mxu0 0
      %1495 = vmatpush.bf16.msra.mxu0 %v1409
      %1496 = vmatmul.bf16.gmra.mxu0 %v1426
      %v1497 = vpop.f32.mrf.mxu0
      %v1498 = vadd.f32 0.0, %v1497
      %v1499 = vpop.f32.mrf.mxu0
      %v1500 = vadd.f32 0.0, %v1499
      %1501 = vmatmul.bf16.gmra.mxu0 %v1429
      %v1502 = vpop.f32.mrf.mxu0
      %v1503 = vadd.f32 0.0, %v1502
      %v1504 = vpop.f32.mrf.mxu0
      %v1505 = vadd.f32 0.0, %v1504
      %1506 = vdwg.mxu0
      %v1507 = vadd.f32 %v1347, %v1441
      %v1508 = vadd.f32 %v1348, %v1460
      %v1509 = vadd.f32 %v1349, %v1479
      %v1510 = vadd.f32 %v1350, %v1498
      %v1511 = vadd.f32 %v1351, %v1443
      %v1512 = vadd.f32 %v1352, %v1462
      %v1513 = vadd.f32 %v1353, %v1481
      %v1514 = vadd.f32 %v1354, %v1500
      %v1515 = vadd.f32 %v1355, %v1446
      %v1516 = vadd.f32 %v1356, %v1465
      %v1517 = vadd.f32 %v1357, %v1484
      %v1518 = vadd.f32 %v1358, %v1503
      %v1519 = vadd.f32 %v1359, %v1448
      %v1520 = vadd.f32 %v1360, %v1467
      %v1521 = vadd.f32 %v1361, %v1486
      %v1522 = vadd.f32 %v1362, %v1505
      %1523 = vrot.lane.b32.xlu0 %v437, 96
      %v1524 = vpop.permute.xlu0 %1523
      %1525 = vrot.lane.b32.xlu0 %v441, 96
      %v1526 = vpop.permute.xlu0 %1525
      %1527 = vrot.lane.b32.xlu0 %v438, 96
      %v1528 = vpop.permute.xlu0 %1527
      %1529 = vrot.lane.b32.xlu0 %v442, 96
      %v1530 = vpop.permute.xlu0 %1529
      %1531 = vrot.lane.b32.xlu0 %v439, 96
      %v1532 = vpop.permute.xlu0 %1531
      %1533 = vrot.lane.b32.xlu0 %v443, 96
      %v1534 = vpop.permute.xlu0 %1533
      %1535 = vrot.lane.b32.xlu0 %v440, 96
      %v1536 = vpop.permute.xlu0 %1535
      %1537 = vrot.lane.b32.xlu0 %v444, 96
      %v1538 = vpop.permute.xlu0 %1537
      %vm1539 = vcmp.lt.s32.totalorder %v496, 96
      %v1540 = vsel %vm1539, %v1532, %v1536
      %v1541 = vsel %vm1539, %v1534, %v1538
      %v1542 = vsel %vm1539, %v1528, %v1532
      %v1543 = vsel %vm1539, %v1530, %v1534
      %v1544 = vsel %vm1539, %v1524, %v1528
      %v1545 = vsel %vm1539, %v1526, %v1530
      %v1546 = vsel %vm1539, %v1536, %v1524
      %v1547 = vsel %vm1539, %v1538, %v1526
      %v1549 = vperm.slane %v418, 0
      %v1550 = vperm.slane %v418, 1
      %v1551 = vperm.slane %v418, 2
      %v1552 = vperm.slane %v418, 3
      %v1557 = vmul.f32 %v1544, %v1549
      %v1558 = vmul.f32 %v1542, %v1550
      %v1559 = vmul.f32 %v1540, %v1551
      %v1560 = vmul.f32 %v1546, %v1552
      %v1561 = vmul.f32 %v1545, %v1549
      %v1562 = vmul.f32 %v1543, %v1550
      %v1563 = vmul.f32 %v1541, %v1551
      %v1564 = vmul.f32 %v1547, %v1552
      %v1565 = vpack.c.bf16 %v1561, %v1557
      %v1566 = vpack.c.bf16 %v1562, %v1558
      %v1567 = vpack.c.bf16 %v1563, %v1559
      %v1568 = vpack.c.bf16 %v1564, %v1560
      %s1569 = scalar_lea.vmem %s4, 112
      %v1570 = vld [vmem:[%s1569] sm:$0xf]
      %v1571 = vld [vmem:[%s1569 + $0x4] sm:$0xf]
      %v1572 = vld [vmem:[%s1569 + $0x8] sm:$0xf]
      %v1573 = vld [vmem:[%s1569 + $0xc] sm:$0xf]
      %v1578 = vunpack.c.l.b16 %v1570
      %v1579 = vunpack.c.l.b16 %v1571
      %v1580 = vunpack.c.l.b16 %v1572
      %v1581 = vunpack.c.l.b16 %v1573
      %v1582 = vpack.c.b16 %v1579, %v1578
      %v1583 = vpack.c.b16 %v1581, %v1580
      %v1585 = vsel %vm593, %v1582, 0
      %v1588 = vsel %vm593, %v1583, 0
      %1590 = vmatpush.bf16.msra.mxu0 0
      %1591 = vmatpush.bf16.msra.mxu0 0
      %1592 = vmatpush.bf16.msra.mxu0 0
      %1593 = vmatpush.bf16.msra.mxu0 0
      %1594 = vmatpush.bf16.msra.mxu0 0
      %1595 = vmatpush.bf16.msra.mxu0 0
      %1596 = vmatpush.bf16.msra.mxu0 0
      %1597 = vmatpush.bf16.msra.mxu0 %v1565
      %1598 = vmatmul.bf16.gmra.mxu0 %v1585
      %v1599 = vpop.f32.mrf.mxu0
      %v1600 = vadd.f32 0.0, %v1599
      %v1601 = vpop.f32.mrf.mxu0
      %v1602 = vadd.f32 0.0, %v1601
      %1603 = vmatmul.bf16.gmra.mxu0 %v1588
      %v1604 = vpop.f32.mrf.mxu0
      %v1605 = vadd.f32 0.0, %v1604
      %v1606 = vpop.f32.mrf.mxu0
      %v1607 = vadd.f32 0.0, %v1606
      %1608 = vdwg.mxu0
      %1609 = vmatpush.bf16.msra.mxu0 0
      %1610 = vmatpush.bf16.msra.mxu0 0
      %1611 = vmatpush.bf16.msra.mxu0 0
      %1612 = vmatpush.bf16.msra.mxu0 0
      %1613 = vmatpush.bf16.msra.mxu0 0
      %1614 = vmatpush.bf16.msra.mxu0 0
      %1615 = vmatpush.bf16.msra.mxu0 0
      %1616 = vmatpush.bf16.msra.mxu0 %v1566
      %1617 = vmatmul.bf16.gmra.mxu0 %v1585
      %v1618 = vpop.f32.mrf.mxu0
      %v1619 = vadd.f32 0.0, %v1618
      %v1620 = vpop.f32.mrf.mxu0
      %v1621 = vadd.f32 0.0, %v1620
      %1622 = vmatmul.bf16.gmra.mxu0 %v1588
      %v1623 = vpop.f32.mrf.mxu0
      %v1624 = vadd.f32 0.0, %v1623
      %v1625 = vpop.f32.mrf.mxu0
      %v1626 = vadd.f32 0.0, %v1625
      %1627 = vdwg.mxu0
      %1628 = vmatpush.bf16.msra.mxu0 0
      %1629 = vmatpush.bf16.msra.mxu0 0
      %1630 = vmatpush.bf16.msra.mxu0 0
      %1631 = vmatpush.bf16.msra.mxu0 0
      %1632 = vmatpush.bf16.msra.mxu0 0
      %1633 = vmatpush.bf16.msra.mxu0 0
      %1634 = vmatpush.bf16.msra.mxu0 0
      %1635 = vmatpush.bf16.msra.mxu0 %v1567
      %1636 = vmatmul.bf16.gmra.mxu0 %v1585
      %v1637 = vpop.f32.mrf.mxu0
      %v1638 = vadd.f32 0.0, %v1637
      %v1639 = vpop.f32.mrf.mxu0
      %v1640 = vadd.f32 0.0, %v1639
      %1641 = vmatmul.bf16.gmra.mxu0 %v1588
      %v1642 = vpop.f32.mrf.mxu0
      %v1643 = vadd.f32 0.0, %v1642
      %v1644 = vpop.f32.mrf.mxu0
      %v1645 = vadd.f32 0.0, %v1644
      %1646 = vdwg.mxu0
      %1647 = vmatpush.bf16.msra.mxu0 0
      %1648 = vmatpush.bf16.msra.mxu0 0
      %1649 = vmatpush.bf16.msra.mxu0 0
      %1650 = vmatpush.bf16.msra.mxu0 0
      %1651 = vmatpush.bf16.msra.mxu0 0
      %1652 = vmatpush.bf16.msra.mxu0 0
      %1653 = vmatpush.bf16.msra.mxu0 0
      %1654 = vmatpush.bf16.msra.mxu0 %v1568
      %1655 = vmatmul.bf16.gmra.mxu0 %v1585
      %v1656 = vpop.f32.mrf.mxu0
      %v1657 = vadd.f32 0.0, %v1656
      %v1658 = vpop.f32.mrf.mxu0
      %v1659 = vadd.f32 0.0, %v1658
      %1660 = vmatmul.bf16.gmra.mxu0 %v1588
      %v1661 = vpop.f32.mrf.mxu0
      %v1662 = vadd.f32 0.0, %v1661
      %v1663 = vpop.f32.mrf.mxu0
      %v1664 = vadd.f32 0.0, %v1663
      %1665 = vdwg.mxu0
      %v1666 = vadd.f32 %v1507, %v1600
      %v1667 = vadd.f32 %v1508, %v1619
      %v1668 = vadd.f32 %v1509, %v1638
      %v1669 = vadd.f32 %v1510, %v1657
      %v1670 = vadd.f32 %v1511, %v1602
      %v1671 = vadd.f32 %v1512, %v1621
      %v1672 = vadd.f32 %v1513, %v1640
      %v1673 = vadd.f32 %v1514, %v1659
      %v1674 = vadd.f32 %v1515, %v1605
      %v1675 = vadd.f32 %v1516, %v1624
      %v1676 = vadd.f32 %v1517, %v1643
      %v1677 = vadd.f32 %v1518, %v1662
      %v1678 = vadd.f32 %v1519, %v1607
      %v1679 = vadd.f32 %v1520, %v1626
      %v1680 = vadd.f32 %v1521, %v1645
      %v1681 = vadd.f32 %v1522, %v1664
      %1682 = vrot.lane.b32.xlu0 %v437, 95
      %v1683 = vpop.permute.xlu0 %1682
      %1684 = vrot.lane.b32.xlu0 %v441, 95
      %v1685 = vpop.permute.xlu0 %1684
      %1686 = vrot.lane.b32.xlu0 %v438, 95
      %v1687 = vpop.permute.xlu0 %1686
      %1688 = vrot.lane.b32.xlu0 %v442, 95
      %v1689 = vpop.permute.xlu0 %1688
      %1690 = vrot.lane.b32.xlu0 %v439, 95
      %v1691 = vpop.permute.xlu0 %1690
      %1692 = vrot.lane.b32.xlu0 %v443, 95
      %v1693 = vpop.permute.xlu0 %1692
      %1694 = vrot.lane.b32.xlu0 %v440, 95
      %v1695 = vpop.permute.xlu0 %1694
      %1696 = vrot.lane.b32.xlu0 %v444, 95
      %v1697 = vpop.permute.xlu0 %1696
      %vm1698 = vcmp.lt.s32.totalorder %v496, 95
      %v1699 = vsel %vm1698, %v1691, %v1695
      %v1700 = vsel %vm1698, %v1693, %v1697
      %v1701 = vsel %vm1698, %v1687, %v1691
      %v1702 = vsel %vm1698, %v1689, %v1693
      %v1703 = vsel %vm1698, %v1683, %v1687
      %v1704 = vsel %vm1698, %v1685, %v1689
      %v1705 = vsel %vm1698, %v1695, %v1683
      %v1706 = vsel %vm1698, %v1697, %v1685
      %v1707 = vmul.f32 %v418, %v414
      %v1709 = vperm.slane %v1707, 0
      %v1710 = vperm.slane %v1707, 1
      %v1711 = vperm.slane %v1707, 2
      %v1712 = vperm.slane %v1707, 3
      %v1717 = vmul.f32 %v1703, %v1709
      %v1718 = vmul.f32 %v1701, %v1710
      %v1719 = vmul.f32 %v1699, %v1711
      %v1720 = vmul.f32 %v1705, %v1712
      %v1721 = vmul.f32 %v1704, %v1709
      %v1722 = vmul.f32 %v1702, %v1710
      %v1723 = vmul.f32 %v1700, %v1711
      %v1724 = vmul.f32 %v1706, %v1712
      %v1725 = vpack.c.bf16 %v1721, %v1717
      %v1726 = vpack.c.bf16 %v1722, %v1718
      %v1727 = vpack.c.bf16 %v1723, %v1719
      %v1728 = vpack.c.bf16 %v1724, %v1720
      %s1729 = scalar_lea.vmem %s4, 128
      %v1730 = vld [vmem:[%s1729] sm:$0xf]
      %v1731 = vld [vmem:[%s1729 + $0x4] sm:$0xf]
      %v1732 = vld [vmem:[%s1729 + $0x8] sm:$0xf]
      %v1733 = vld [vmem:[%s1729 + $0xc] sm:$0xf]
      %v1738 = vunpack.c.l.b16 %v1730
      %v1739 = vunpack.c.l.b16 %v1731
      %v1740 = vunpack.c.l.b16 %v1732
      %v1741 = vunpack.c.l.b16 %v1733
      %v1742 = vpack.c.b16 %v1739, %v1738
      %v1743 = vpack.c.b16 %v1741, %v1740
      %v1745 = vsel %vm593, %v1742, 0
      %v1748 = vsel %vm593, %v1743, 0
      %1750 = vmatpush.bf16.msra.mxu0 0
      %1751 = vmatpush.bf16.msra.mxu0 0
      %1752 = vmatpush.bf16.msra.mxu0 0
      %1753 = vmatpush.bf16.msra.mxu0 0
      %1754 = vmatpush.bf16.msra.mxu0 0
      %1755 = vmatpush.bf16.msra.mxu0 0
      %1756 = vmatpush.bf16.msra.mxu0 0
      %1757 = vmatpush.bf16.msra.mxu0 %v1725
      %1758 = vmatmul.bf16.gmra.mxu0 %v1745
      %v1759 = vpop.f32.mrf.mxu0
      %v1760 = vadd.f32 0.0, %v1759
      %v1761 = vpop.f32.mrf.mxu0
      %v1762 = vadd.f32 0.0, %v1761
      %1763 = vmatmul.bf16.gmra.mxu0 %v1748
      %v1764 = vpop.f32.mrf.mxu0
      %v1765 = vadd.f32 0.0, %v1764
      %v1766 = vpop.f32.mrf.mxu0
      %v1767 = vadd.f32 0.0, %v1766
      %1768 = vdwg.mxu0
      %1769 = vmatpush.bf16.msra.mxu0 0
      %1770 = vmatpush.bf16.msra.mxu0 0
      %1771 = vmatpush.bf16.msra.mxu0 0
      %1772 = vmatpush.bf16.msra.mxu0 0
      %1773 = vmatpush.bf16.msra.mxu0 0
      %1774 = vmatpush.bf16.msra.mxu0 0
      %1775 = vmatpush.bf16.msra.mxu0 0
      %1776 = vmatpush.bf16.msra.mxu0 %v1726
      %1777 = vmatmul.bf16.gmra.mxu0 %v1745
      %v1778 = vpop.f32.mrf.mxu0
      %v1779 = vadd.f32 0.0, %v1778
      %v1780 = vpop.f32.mrf.mxu0
      %v1781 = vadd.f32 0.0, %v1780
      %1782 = vmatmul.bf16.gmra.mxu0 %v1748
      %v1783 = vpop.f32.mrf.mxu0
      %v1784 = vadd.f32 0.0, %v1783
      %v1785 = vpop.f32.mrf.mxu0
      %v1786 = vadd.f32 0.0, %v1785
      %1787 = vdwg.mxu0
      %1788 = vmatpush.bf16.msra.mxu0 0
      %1789 = vmatpush.bf16.msra.mxu0 0
      %1790 = vmatpush.bf16.msra.mxu0 0
      %1791 = vmatpush.bf16.msra.mxu0 0
      %1792 = vmatpush.bf16.msra.mxu0 0
      %1793 = vmatpush.bf16.msra.mxu0 0
      %1794 = vmatpush.bf16.msra.mxu0 0
      %1795 = vmatpush.bf16.msra.mxu0 %v1727
      %1796 = vmatmul.bf16.gmra.mxu0 %v1745
      %v1797 = vpop.f32.mrf.mxu0
      %v1798 = vadd.f32 0.0, %v1797
      %v1799 = vpop.f32.mrf.mxu0
      %v1800 = vadd.f32 0.0, %v1799
      %1801 = vmatmul.bf16.gmra.mxu0 %v1748
      %v1802 = vpop.f32.mrf.mxu0
      %v1803 = vadd.f32 0.0, %v1802
      %v1804 = vpop.f32.mrf.mxu0
      %v1805 = vadd.f32 0.0, %v1804
      %1806 = vdwg.mxu0
      %1807 = vmatpush.bf16.msra.mxu0 0
      %1808 = vmatpush.bf16.msra.mxu0 0
      %1809 = vmatpush.bf16.msra.mxu0 0
      %1810 = vmatpush.bf16.msra.mxu0 0
      %1811 = vmatpush.bf16.msra.mxu0 0
      %1812 = vmatpush.bf16.msra.mxu0 0
      %1813 = vmatpush.bf16.msra.mxu0 0
      %1814 = vmatpush.bf16.msra.mxu0 %v1728
      %1815 = vmatmul.bf16.gmra.mxu0 %v1745
      %v1816 = vpop.f32.mrf.mxu0
      %v1817 = vadd.f32 0.0, %v1816
      %v1818 = vpop.f32.mrf.mxu0
      %v1819 = vadd.f32 0.0, %v1818
      %1820 = vmatmul.bf16.gmra.mxu0 %v1748
      %v1821 = vpop.f32.mrf.mxu0
      %v1822 = vadd.f32 0.0, %v1821
      %v1823 = vpop.f32.mrf.mxu0
      %v1824 = vadd.f32 0.0, %v1823
      %1825 = vdwg.mxu0
      %v1826 = vadd.f32 %v1666, %v1760
      %v1827 = vadd.f32 %v1667, %v1779
      %v1828 = vadd.f32 %v1668, %v1798
      %v1829 = vadd.f32 %v1669, %v1817
      %v1830 = vadd.f32 %v1670, %v1762
      %v1831 = vadd.f32 %v1671, %v1781
      %v1832 = vadd.f32 %v1672, %v1800
      %v1833 = vadd.f32 %v1673, %v1819
      %v1834 = vadd.f32 %v1674, %v1765
      %v1835 = vadd.f32 %v1675, %v1784
      %v1836 = vadd.f32 %v1676, %v1803
      %v1837 = vadd.f32 %v1677, %v1822
      %v1838 = vadd.f32 %v1678, %v1767
      %v1839 = vadd.f32 %v1679, %v1786
      %v1840 = vadd.f32 %v1680, %v1805
      %v1841 = vadd.f32 %v1681, %v1824
      %vm1842 = vcmp.gt.f32.partialorder %v1826, 0.0
      %vm1843 = vcmp.gt.f32.partialorder %v1827, 0.0
      %vm1844 = vcmp.gt.f32.partialorder %v1828, 0.0
      %vm1845 = vcmp.gt.f32.partialorder %v1829, 0.0
      %vm1846 = vcmp.gt.f32.partialorder %v1830, 0.0
      %vm1847 = vcmp.gt.f32.partialorder %v1831, 0.0
      %vm1848 = vcmp.gt.f32.partialorder %v1832, 0.0
      %vm1849 = vcmp.gt.f32.partialorder %v1833, 0.0
      %vm1850 = vcmp.gt.f32.partialorder %v1834, 0.0
      %vm1851 = vcmp.gt.f32.partialorder %v1835, 0.0
      %vm1852 = vcmp.gt.f32.partialorder %v1836, 0.0
      %vm1853 = vcmp.gt.f32.partialorder %v1837, 0.0
      %vm1854 = vcmp.gt.f32.partialorder %v1838, 0.0
      %vm1855 = vcmp.gt.f32.partialorder %v1839, 0.0
      %vm1856 = vcmp.gt.f32.partialorder %v1840, 0.0
      %vm1857 = vcmp.gt.f32.partialorder %v1841, 0.0
      %v1858 = vmul.f32 %v1826, 0.01
      %v1859 = vmul.f32 %v1827, 0.01
      %v1860 = vmul.f32 %v1828, 0.01
      %v1861 = vmul.f32 %v1829, 0.01
      %v1862 = vmul.f32 %v1830, 0.01
      %v1863 = vmul.f32 %v1831, 0.01
      %v1864 = vmul.f32 %v1832, 0.01
      %v1865 = vmul.f32 %v1833, 0.01
      %v1866 = vmul.f32 %v1834, 0.01
      %v1867 = vmul.f32 %v1835, 0.01
      %v1868 = vmul.f32 %v1836, 0.01
      %v1869 = vmul.f32 %v1837, 0.01
      %v1870 = vmul.f32 %v1838, 0.01
      %v1871 = vmul.f32 %v1839, 0.01
      %v1872 = vmul.f32 %v1840, 0.01
      %v1873 = vmul.f32 %v1841, 0.01
      %v1874 = vsel %vm1842, %v1826, %v1858
      %v1875 = vsel %vm1843, %v1827, %v1859
      %v1876 = vsel %vm1844, %v1828, %v1860
      %v1877 = vsel %vm1845, %v1829, %v1861
      %v1878 = vsel %vm1846, %v1830, %v1862
      %v1879 = vsel %vm1847, %v1831, %v1863
      %v1880 = vsel %vm1848, %v1832, %v1864
      %v1881 = vsel %vm1849, %v1833, %v1865
      %v1882 = vsel %vm1850, %v1834, %v1866
      %v1883 = vsel %vm1851, %v1835, %v1867
      %v1884 = vsel %vm1852, %v1836, %v1868
      %v1885 = vsel %vm1853, %v1837, %v1869
      %v1886 = vsel %vm1854, %v1838, %v1870
      %v1887 = vsel %vm1855, %v1839, %v1871
      %v1888 = vsel %vm1856, %v1840, %v1872
      %v1889 = vsel %vm1857, %v1841, %v1873
      %1890 = vrot.lane.b32.xlu0 %v454, 1
      %v1891 = vpop.permute.xlu0 %1890
      %1892 = vrot.lane.b32.xlu0 %v458, 1
      %v1893 = vpop.permute.xlu0 %1892
      %1894 = vrot.lane.b32.xlu0 %v455, 1
      %v1895 = vpop.permute.xlu0 %1894
      %1896 = vrot.lane.b32.xlu0 %v459, 1
      %v1897 = vpop.permute.xlu0 %1896
      %1898 = vrot.lane.b32.xlu0 %v456, 1
      %v1899 = vpop.permute.xlu0 %1898
      %1900 = vrot.lane.b32.xlu0 %v460, 1
      %v1901 = vpop.permute.xlu0 %1900
      %1902 = vrot.lane.b32.xlu0 %v457, 1
      %v1903 = vpop.permute.xlu0 %1902
      %1904 = vrot.lane.b32.xlu0 %v461, 1
      %v1905 = vpop.permute.xlu0 %1904
      %v1906 = vsel %vm944, %v1899, %v1903
      %v1907 = vsel %vm944, %v1901, %v1905
      %v1908 = vsel %vm944, %v1895, %v1899
      %v1909 = vsel %vm944, %v1897, %v1901
      %v1910 = vsel %vm944, %v1891, %v1895
      %v1911 = vsel %vm944, %v1893, %v1897
      %v1912 = vsel %vm944, %v1903, %v1891
      %v1913 = vsel %vm944, %v1905, %v1893
      %v1914 = vmul.f32 %v1912, %v954
      %v1915 = vmul.f32 %v1910, %v955
      %v1916 = vmul.f32 %v1908, %v956
      %v1917 = vmul.f32 %v1906, %v957
      %v1918 = vmul.f32 %v1913, %v954
      %v1919 = vmul.f32 %v1911, %v955
      %v1920 = vmul.f32 %v1909, %v956
      %v1921 = vmul.f32 %v1907, %v957
      %v1922 = vpack.c.bf16 %v1918, %v1914
      %v1923 = vpack.c.bf16 %v1919, %v1915
      %v1924 = vpack.c.bf16 %v1920, %v1916
      %v1925 = vpack.c.bf16 %v1921, %v1917
      %v1926 = vld [vmem:[%s5] sm:$0xf]
      %v1927 = vld [vmem:[%s5 + $0x4] sm:$0xf]
      %v1928 = vld [vmem:[%s5 + $0x8] sm:$0xf]
      %v1929 = vld [vmem:[%s5 + $0xc] sm:$0xf]
      %v1930 = vpack.c.bf16 %v458, %v454
      %v1931 = vpack.c.bf16 %v459, %v455
      %v1932 = vpack.c.bf16 %v460, %v456
      %v1933 = vpack.c.bf16 %v461, %v457
      %s1934 = scalar_lea.vmem %s5, 16
      %v1935 = vld [vmem:[%s1934] sm:$0xf]
      %v1936 = vld [vmem:[%s1934 + $0x4] sm:$0xf]
      %v1937 = vld [vmem:[%s1934 + $0x8] sm:$0xf]
      %v1938 = vld [vmem:[%s1934 + $0xc] sm:$0xf]
      %v1943 = vunpack.c.l.b16 %v1935
      %v1944 = vunpack.c.l.b16 %v1936
      %v1945 = vunpack.c.l.b16 %v1937
      %v1946 = vunpack.c.l.b16 %v1938
      %v1947 = vpack.c.b16 %v1944, %v1943
      %v1948 = vpack.c.b16 %v1946, %v1945
      %v1950 = vsel %vm593, %v1947, 0
      %v1953 = vsel %vm593, %v1948, 0
      %1955 = vmatpush.bf16.msra.mxu0 0
      %1956 = vmatpush.bf16.msra.mxu0 0
      %1957 = vmatpush.bf16.msra.mxu0 0
      %1958 = vmatpush.bf16.msra.mxu0 0
      %1959 = vmatpush.bf16.msra.mxu0 0
      %1960 = vmatpush.bf16.msra.mxu0 0
      %1961 = vmatpush.bf16.msra.mxu0 0
      %1962 = vmatpush.bf16.msra.mxu0 %v1930
      %1963 = vmatmul.bf16.gmra.mxu0 %v1950
      %v1964 = vpop.f32.mrf.mxu0
      %v1965 = vadd.f32 0.0, %v1964
      %v1966 = vpop.f32.mrf.mxu0
      %v1967 = vadd.f32 0.0, %v1966
      %1968 = vmatmul.bf16.gmra.mxu0 %v1953
      %v1969 = vpop.f32.mrf.mxu0
      %v1970 = vadd.f32 0.0, %v1969
      %v1971 = vpop.f32.mrf.mxu0
      %v1972 = vadd.f32 0.0, %v1971
      %1973 = vdwg.mxu0
      %1974 = vmatpush.bf16.msra.mxu0 0
      %1975 = vmatpush.bf16.msra.mxu0 0
      %1976 = vmatpush.bf16.msra.mxu0 0
      %1977 = vmatpush.bf16.msra.mxu0 0
      %1978 = vmatpush.bf16.msra.mxu0 0
      %1979 = vmatpush.bf16.msra.mxu0 0
      %1980 = vmatpush.bf16.msra.mxu0 0
      %1981 = vmatpush.bf16.msra.mxu0 %v1931
      %1982 = vmatmul.bf16.gmra.mxu0 %v1950
      %v1983 = vpop.f32.mrf.mxu0
      %v1984 = vadd.f32 0.0, %v1983
      %v1985 = vpop.f32.mrf.mxu0
      %v1986 = vadd.f32 0.0, %v1985
      %1987 = vmatmul.bf16.gmra.mxu0 %v1953
      %v1988 = vpop.f32.mrf.mxu0
      %v1989 = vadd.f32 0.0, %v1988
      %v1990 = vpop.f32.mrf.mxu0
      %v1991 = vadd.f32 0.0, %v1990
      %1992 = vdwg.mxu0
      %1993 = vmatpush.bf16.msra.mxu0 0
      %1994 = vmatpush.bf16.msra.mxu0 0
      %1995 = vmatpush.bf16.msra.mxu0 0
      %1996 = vmatpush.bf16.msra.mxu0 0
      %1997 = vmatpush.bf16.msra.mxu0 0
      %1998 = vmatpush.bf16.msra.mxu0 0
      %1999 = vmatpush.bf16.msra.mxu0 0
      %2000 = vmatpush.bf16.msra.mxu0 %v1932
      %2001 = vmatmul.bf16.gmra.mxu0 %v1950
      %v2002 = vpop.f32.mrf.mxu0
      %v2003 = vadd.f32 0.0, %v2002
      %v2004 = vpop.f32.mrf.mxu0
      %v2005 = vadd.f32 0.0, %v2004
      %2006 = vmatmul.bf16.gmra.mxu0 %v1953
      %v2007 = vpop.f32.mrf.mxu0
      %v2008 = vadd.f32 0.0, %v2007
      %v2009 = vpop.f32.mrf.mxu0
      %v2010 = vadd.f32 0.0, %v2009
      %2011 = vdwg.mxu0
      %2012 = vmatpush.bf16.msra.mxu0 0
      %2013 = vmatpush.bf16.msra.mxu0 0
      %2014 = vmatpush.bf16.msra.mxu0 0
      %2015 = vmatpush.bf16.msra.mxu0 0
      %2016 = vmatpush.bf16.msra.mxu0 0
      %2017 = vmatpush.bf16.msra.mxu0 0
      %2018 = vmatpush.bf16.msra.mxu0 0
      %2019 = vmatpush.bf16.msra.mxu0 %v1933
      %2020 = vmatmul.bf16.gmra.mxu0 %v1950
      %v2021 = vpop.f32.mrf.mxu0
      %v2022 = vadd.f32 0.0, %v2021
      %v2023 = vpop.f32.mrf.mxu0
      %v2024 = vadd.f32 0.0, %v2023
      %2025 = vmatmul.bf16.gmra.mxu0 %v1953
      %v2026 = vpop.f32.mrf.mxu0
      %v2027 = vadd.f32 0.0, %v2026
      %v2028 = vpop.f32.mrf.mxu0
      %v2029 = vadd.f32 0.0, %v2028
      %2030 = vdwg.mxu0
      %v2035 = vunpack.c.l.b16 %v1926
      %v2036 = vunpack.c.l.b16 %v1927
      %v2037 = vunpack.c.l.b16 %v1928
      %v2038 = vunpack.c.l.b16 %v1929
      %v2039 = vpack.c.b16 %v2036, %v2035
      %v2040 = vpack.c.b16 %v2038, %v2037
      %v2042 = vsel %vm593, %v2039, 0
      %v2045 = vsel %vm593, %v2040, 0
      %2047 = vmatpush.bf16.msra.mxu0 0
      %2048 = vmatpush.bf16.msra.mxu0 0
      %2049 = vmatpush.bf16.msra.mxu0 0
      %2050 = vmatpush.bf16.msra.mxu0 0
      %2051 = vmatpush.bf16.msra.mxu0 0
      %2052 = vmatpush.bf16.msra.mxu0 0
      %2053 = vmatpush.bf16.msra.mxu0 0
      %2054 = vmatpush.bf16.msra.mxu0 %v1922
      %2055 = vmatmul.bf16.gmra.mxu0 %v2042
      %v2056 = vpop.f32.mrf.mxu0
      %v2057 = vadd.f32 %v1965, %v2056
      %v2058 = vpop.f32.mrf.mxu0
      %v2059 = vadd.f32 %v1967, %v2058
      %2060 = vmatmul.bf16.gmra.mxu0 %v2045
      %v2061 = vpop.f32.mrf.mxu0
      %v2062 = vadd.f32 %v1970, %v2061
      %v2063 = vpop.f32.mrf.mxu0
      %v2064 = vadd.f32 %v1972, %v2063
      %2065 = vdwg.mxu0
      %2066 = vmatpush.bf16.msra.mxu0 0
      %2067 = vmatpush.bf16.msra.mxu0 0
      %2068 = vmatpush.bf16.msra.mxu0 0
      %2069 = vmatpush.bf16.msra.mxu0 0
      %2070 = vmatpush.bf16.msra.mxu0 0
      %2071 = vmatpush.bf16.msra.mxu0 0
      %2072 = vmatpush.bf16.msra.mxu0 0
      %2073 = vmatpush.bf16.msra.mxu0 %v1923
      %2074 = vmatmul.bf16.gmra.mxu0 %v2042
      %v2075 = vpop.f32.mrf.mxu0
      %v2076 = vadd.f32 %v1984, %v2075
      %v2077 = vpop.f32.mrf.mxu0
      %v2078 = vadd.f32 %v1986, %v2077
      %2079 = vmatmul.bf16.gmra.mxu0 %v2045
      %v2080 = vpop.f32.mrf.mxu0
      %v2081 = vadd.f32 %v1989, %v2080
      %v2082 = vpop.f32.mrf.mxu0
      %v2083 = vadd.f32 %v1991, %v2082
      %2084 = vdwg.mxu0
      %2085 = vmatpush.bf16.msra.mxu0 0
      %2086 = vmatpush.bf16.msra.mxu0 0
      %2087 = vmatpush.bf16.msra.mxu0 0
      %2088 = vmatpush.bf16.msra.mxu0 0
      %2089 = vmatpush.bf16.msra.mxu0 0
      %2090 = vmatpush.bf16.msra.mxu0 0
      %2091 = vmatpush.bf16.msra.mxu0 0
      %2092 = vmatpush.bf16.msra.mxu0 %v1924
      %2093 = vmatmul.bf16.gmra.mxu0 %v2042
      %v2094 = vpop.f32.mrf.mxu0
      %v2095 = vadd.f32 %v2003, %v2094
      %v2096 = vpop.f32.mrf.mxu0
      %v2097 = vadd.f32 %v2005, %v2096
      %2098 = vmatmul.bf16.gmra.mxu0 %v2045
      %v2099 = vpop.f32.mrf.mxu0
      %v2100 = vadd.f32 %v2008, %v2099
      %v2101 = vpop.f32.mrf.mxu0
      %v2102 = vadd.f32 %v2010, %v2101
      %2103 = vdwg.mxu0
      %2104 = vmatpush.bf16.msra.mxu0 0
      %2105 = vmatpush.bf16.msra.mxu0 0
      %2106 = vmatpush.bf16.msra.mxu0 0
      %2107 = vmatpush.bf16.msra.mxu0 0
      %2108 = vmatpush.bf16.msra.mxu0 0
      %2109 = vmatpush.bf16.msra.mxu0 0
      %2110 = vmatpush.bf16.msra.mxu0 0
      %2111 = vmatpush.bf16.msra.mxu0 %v1925
      %2112 = vmatmul.bf16.gmra.mxu0 %v2042
      %v2113 = vpop.f32.mrf.mxu0
      %v2114 = vadd.f32 %v2022, %v2113
      %v2115 = vpop.f32.mrf.mxu0
      %v2116 = vadd.f32 %v2024, %v2115
      %2117 = vmatmul.bf16.gmra.mxu0 %v2045
      %v2118 = vpop.f32.mrf.mxu0
      %v2119 = vadd.f32 %v2027, %v2118
      %v2120 = vpop.f32.mrf.mxu0
      %v2121 = vadd.f32 %v2029, %v2120
      %2122 = vdwg.mxu0
      %2123 = vrot.lane.b32.xlu0 %v454, 127
      %v2124 = vpop.permute.xlu0 %2123
      %2125 = vrot.lane.b32.xlu0 %v458, 127
      %v2126 = vpop.permute.xlu0 %2125
      %2127 = vrot.lane.b32.xlu0 %v455, 127
      %v2128 = vpop.permute.xlu0 %2127
      %2129 = vrot.lane.b32.xlu0 %v459, 127
      %v2130 = vpop.permute.xlu0 %2129
      %2131 = vrot.lane.b32.xlu0 %v456, 127
      %v2132 = vpop.permute.xlu0 %2131
      %2133 = vrot.lane.b32.xlu0 %v460, 127
      %v2134 = vpop.permute.xlu0 %2133
      %2135 = vrot.lane.b32.xlu0 %v457, 127
      %v2136 = vpop.permute.xlu0 %2135
      %2137 = vrot.lane.b32.xlu0 %v461, 127
      %v2138 = vpop.permute.xlu0 %2137
      %v2139 = vsel %vm1220, %v2132, %v2136
      %v2140 = vsel %vm1220, %v2134, %v2138
      %v2141 = vsel %vm1220, %v2128, %v2132
      %v2142 = vsel %vm1220, %v2130, %v2134
      %v2143 = vsel %vm1220, %v2124, %v2128
      %v2144 = vsel %vm1220, %v2126, %v2130
      %v2145 = vsel %vm1220, %v2136, %v2124
      %v2146 = vsel %vm1220, %v2138, %v2126
      %v2147 = vmul.f32 %v2143, %v1230
      %v2148 = vmul.f32 %v2141, %v1231
      %v2149 = vmul.f32 %v2139, %v1232
      %v2150 = vmul.f32 %v2145, %v1233
      %v2151 = vmul.f32 %v2144, %v1230
      %v2152 = vmul.f32 %v2142, %v1231
      %v2153 = vmul.f32 %v2140, %v1232
      %v2154 = vmul.f32 %v2146, %v1233
      %v2155 = vpack.c.bf16 %v2151, %v2147
      %v2156 = vpack.c.bf16 %v2152, %v2148
      %v2157 = vpack.c.bf16 %v2153, %v2149
      %v2158 = vpack.c.bf16 %v2154, %v2150
      %s2159 = scalar_lea.vmem %s5, 32
      %v2160 = vld [vmem:[%s2159] sm:$0xf]
      %v2161 = vld [vmem:[%s2159 + $0x4] sm:$0xf]
      %v2162 = vld [vmem:[%s2159 + $0x8] sm:$0xf]
      %v2163 = vld [vmem:[%s2159 + $0xc] sm:$0xf]
      %v2168 = vunpack.c.l.b16 %v2160
      %v2169 = vunpack.c.l.b16 %v2161
      %v2170 = vunpack.c.l.b16 %v2162
      %v2171 = vunpack.c.l.b16 %v2163
      %v2172 = vpack.c.b16 %v2169, %v2168
      %v2173 = vpack.c.b16 %v2171, %v2170
      %v2175 = vsel %vm593, %v2172, 0
      %v2178 = vsel %vm593, %v2173, 0
      %2180 = vmatpush.bf16.msra.mxu0 0
      %2181 = vmatpush.bf16.msra.mxu0 0
      %2182 = vmatpush.bf16.msra.mxu0 0
      %2183 = vmatpush.bf16.msra.mxu0 0
      %2184 = vmatpush.bf16.msra.mxu0 0
      %2185 = vmatpush.bf16.msra.mxu0 0
      %2186 = vmatpush.bf16.msra.mxu0 0
      %2187 = vmatpush.bf16.msra.mxu0 %v2155
      %2188 = vmatmul.bf16.gmra.mxu0 %v2175
      %v2189 = vpop.f32.mrf.mxu0
      %v2190 = vadd.f32 0.0, %v2189
      %v2191 = vpop.f32.mrf.mxu0
      %v2192 = vadd.f32 0.0, %v2191
      %2193 = vmatmul.bf16.gmra.mxu0 %v2178
      %v2194 = vpop.f32.mrf.mxu0
      %v2195 = vadd.f32 0.0, %v2194
      %v2196 = vpop.f32.mrf.mxu0
      %v2197 = vadd.f32 0.0, %v2196
      %2198 = vdwg.mxu0
      %2199 = vmatpush.bf16.msra.mxu0 0
      %2200 = vmatpush.bf16.msra.mxu0 0
      %2201 = vmatpush.bf16.msra.mxu0 0
      %2202 = vmatpush.bf16.msra.mxu0 0
      %2203 = vmatpush.bf16.msra.mxu0 0
      %2204 = vmatpush.bf16.msra.mxu0 0
      %2205 = vmatpush.bf16.msra.mxu0 0
      %2206 = vmatpush.bf16.msra.mxu0 %v2156
      %2207 = vmatmul.bf16.gmra.mxu0 %v2175
      %v2208 = vpop.f32.mrf.mxu0
      %v2209 = vadd.f32 0.0, %v2208
      %v2210 = vpop.f32.mrf.mxu0
      %v2211 = vadd.f32 0.0, %v2210
      %2212 = vmatmul.bf16.gmra.mxu0 %v2178
      %v2213 = vpop.f32.mrf.mxu0
      %v2214 = vadd.f32 0.0, %v2213
      %v2215 = vpop.f32.mrf.mxu0
      %v2216 = vadd.f32 0.0, %v2215
      %2217 = vdwg.mxu0
      %2218 = vmatpush.bf16.msra.mxu0 0
      %2219 = vmatpush.bf16.msra.mxu0 0
      %2220 = vmatpush.bf16.msra.mxu0 0
      %2221 = vmatpush.bf16.msra.mxu0 0
      %2222 = vmatpush.bf16.msra.mxu0 0
      %2223 = vmatpush.bf16.msra.mxu0 0
      %2224 = vmatpush.bf16.msra.mxu0 0
      %2225 = vmatpush.bf16.msra.mxu0 %v2157
      %2226 = vmatmul.bf16.gmra.mxu0 %v2175
      %v2227 = vpop.f32.mrf.mxu0
      %v2228 = vadd.f32 0.0, %v2227
      %v2229 = vpop.f32.mrf.mxu0
      %v2230 = vadd.f32 0.0, %v2229
      %2231 = vmatmul.bf16.gmra.mxu0 %v2178
      %v2232 = vpop.f32.mrf.mxu0
      %v2233 = vadd.f32 0.0, %v2232
      %v2234 = vpop.f32.mrf.mxu0
      %v2235 = vadd.f32 0.0, %v2234
      %2236 = vdwg.mxu0
      %2237 = vmatpush.bf16.msra.mxu0 0
      %2238 = vmatpush.bf16.msra.mxu0 0
      %2239 = vmatpush.bf16.msra.mxu0 0
      %2240 = vmatpush.bf16.msra.mxu0 0
      %2241 = vmatpush.bf16.msra.mxu0 0
      %2242 = vmatpush.bf16.msra.mxu0 0
      %2243 = vmatpush.bf16.msra.mxu0 0
      %2244 = vmatpush.bf16.msra.mxu0 %v2158
      %2245 = vmatmul.bf16.gmra.mxu0 %v2175
      %v2246 = vpop.f32.mrf.mxu0
      %v2247 = vadd.f32 0.0, %v2246
      %v2248 = vpop.f32.mrf.mxu0
      %v2249 = vadd.f32 0.0, %v2248
      %2250 = vmatmul.bf16.gmra.mxu0 %v2178
      %v2251 = vpop.f32.mrf.mxu0
      %v2252 = vadd.f32 0.0, %v2251
      %v2253 = vpop.f32.mrf.mxu0
      %v2254 = vadd.f32 0.0, %v2253
      %2255 = vdwg.mxu0
      %v2256 = vadd.f32 %v2057, %v2190
      %v2257 = vadd.f32 %v2076, %v2209
      %v2258 = vadd.f32 %v2095, %v2228
      %v2259 = vadd.f32 %v2114, %v2247
      %v2260 = vadd.f32 %v2059, %v2192
      %v2261 = vadd.f32 %v2078, %v2211
      %v2262 = vadd.f32 %v2097, %v2230
      %v2263 = vadd.f32 %v2116, %v2249
      %v2264 = vadd.f32 %v2062, %v2195
      %v2265 = vadd.f32 %v2081, %v2214
      %v2266 = vadd.f32 %v2100, %v2233
      %v2267 = vadd.f32 %v2119, %v2252
      %v2268 = vadd.f32 %v2064, %v2197
      %v2269 = vadd.f32 %v2083, %v2216
      %v2270 = vadd.f32 %v2102, %v2235
      %v2271 = vadd.f32 %v2121, %v2254
      %s2272 = scalar_lea.vmem %s5, 48
      %v2273 = vld [vmem:[%s2272] sm:$0xf]
      %v2274 = vld [vmem:[%s2272 + $0x4] sm:$0xf]
      %v2275 = vld [vmem:[%s2272 + $0x8] sm:$0xf]
      %v2276 = vld [vmem:[%s2272 + $0xc] sm:$0xf]
      %v2281 = vunpack.c.l.b16 %v2273
      %v2282 = vunpack.c.l.b16 %v2274
      %v2283 = vunpack.c.l.b16 %v2275
      %v2284 = vunpack.c.l.b16 %v2276
      %v2285 = vpack.c.b16 %v2282, %v2281
      %v2286 = vpack.c.b16 %v2284, %v2283
      %v2288 = vsel %vm593, %v2285, 0
      %v2291 = vsel %vm593, %v2286, 0
      %2293 = vmatpush.bf16.msra.mxu0 0
      %2294 = vmatpush.bf16.msra.mxu0 0
      %2295 = vmatpush.bf16.msra.mxu0 0
      %2296 = vmatpush.bf16.msra.mxu0 0
      %2297 = vmatpush.bf16.msra.mxu0 0
      %2298 = vmatpush.bf16.msra.mxu0 0
      %2299 = vmatpush.bf16.msra.mxu0 0
      %2300 = vmatpush.bf16.msra.mxu0 %v970
      %2301 = vmatmul.bf16.gmra.mxu0 %v2288
      %v2302 = vpop.f32.mrf.mxu0
      %v2303 = vadd.f32 0.0, %v2302
      %v2304 = vpop.f32.mrf.mxu0
      %v2305 = vadd.f32 0.0, %v2304
      %2306 = vmatmul.bf16.gmra.mxu0 %v2291
      %v2307 = vpop.f32.mrf.mxu0
      %v2308 = vadd.f32 0.0, %v2307
      %v2309 = vpop.f32.mrf.mxu0
      %v2310 = vadd.f32 0.0, %v2309
      %2311 = vdwg.mxu0
      %2312 = vmatpush.bf16.msra.mxu0 0
      %2313 = vmatpush.bf16.msra.mxu0 0
      %2314 = vmatpush.bf16.msra.mxu0 0
      %2315 = vmatpush.bf16.msra.mxu0 0
      %2316 = vmatpush.bf16.msra.mxu0 0
      %2317 = vmatpush.bf16.msra.mxu0 0
      %2318 = vmatpush.bf16.msra.mxu0 0
      %2319 = vmatpush.bf16.msra.mxu0 %v971
      %2320 = vmatmul.bf16.gmra.mxu0 %v2288
      %v2321 = vpop.f32.mrf.mxu0
      %v2322 = vadd.f32 0.0, %v2321
      %v2323 = vpop.f32.mrf.mxu0
      %v2324 = vadd.f32 0.0, %v2323
      %2325 = vmatmul.bf16.gmra.mxu0 %v2291
      %v2326 = vpop.f32.mrf.mxu0
      %v2327 = vadd.f32 0.0, %v2326
      %v2328 = vpop.f32.mrf.mxu0
      %v2329 = vadd.f32 0.0, %v2328
      %2330 = vdwg.mxu0
      %2331 = vmatpush.bf16.msra.mxu0 0
      %2332 = vmatpush.bf16.msra.mxu0 0
      %2333 = vmatpush.bf16.msra.mxu0 0
      %2334 = vmatpush.bf16.msra.mxu0 0
      %2335 = vmatpush.bf16.msra.mxu0 0
      %2336 = vmatpush.bf16.msra.mxu0 0
      %2337 = vmatpush.bf16.msra.mxu0 0
      %2338 = vmatpush.bf16.msra.mxu0 %v972
      %2339 = vmatmul.bf16.gmra.mxu0 %v2288
      %v2340 = vpop.f32.mrf.mxu0
      %v2341 = vadd.f32 0.0, %v2340
      %v2342 = vpop.f32.mrf.mxu0
      %v2343 = vadd.f32 0.0, %v2342
      %2344 = vmatmul.bf16.gmra.mxu0 %v2291
      %v2345 = vpop.f32.mrf.mxu0
      %v2346 = vadd.f32 0.0, %v2345
      %v2347 = vpop.f32.mrf.mxu0
      %v2348 = vadd.f32 0.0, %v2347
      %2349 = vdwg.mxu0
      %2350 = vmatpush.bf16.msra.mxu0 0
      %2351 = vmatpush.bf16.msra.mxu0 0
      %2352 = vmatpush.bf16.msra.mxu0 0
      %2353 = vmatpush.bf16.msra.mxu0 0
      %2354 = vmatpush.bf16.msra.mxu0 0
      %2355 = vmatpush.bf16.msra.mxu0 0
      %2356 = vmatpush.bf16.msra.mxu0 0
      %2357 = vmatpush.bf16.msra.mxu0 %v973
      %2358 = vmatmul.bf16.gmra.mxu0 %v2288
      %v2359 = vpop.f32.mrf.mxu0
      %v2360 = vadd.f32 0.0, %v2359
      %v2361 = vpop.f32.mrf.mxu0
      %v2362 = vadd.f32 0.0, %v2361
      %2363 = vmatmul.bf16.gmra.mxu0 %v2291
      %v2364 = vpop.f32.mrf.mxu0
      %v2365 = vadd.f32 0.0, %v2364
      %v2366 = vpop.f32.mrf.mxu0
      %v2367 = vadd.f32 0.0, %v2366
      %2368 = vdwg.mxu0
      %v2369 = vadd.f32 %v2256, %v2303
      %v2370 = vadd.f32 %v2257, %v2322
      %v2371 = vadd.f32 %v2258, %v2341
      %v2372 = vadd.f32 %v2259, %v2360
      %v2373 = vadd.f32 %v2260, %v2305
      %v2374 = vadd.f32 %v2261, %v2324
      %v2375 = vadd.f32 %v2262, %v2343
      %v2376 = vadd.f32 %v2263, %v2362
      %v2377 = vadd.f32 %v2264, %v2308
      %v2378 = vadd.f32 %v2265, %v2327
      %v2379 = vadd.f32 %v2266, %v2346
      %v2380 = vadd.f32 %v2267, %v2365
      %v2381 = vadd.f32 %v2268, %v2310
      %v2382 = vadd.f32 %v2269, %v2329
      %v2383 = vadd.f32 %v2270, %v2348
      %v2384 = vadd.f32 %v2271, %v2367
      %s2385 = scalar_lea.vmem %s5, 64
      %v2386 = vld [vmem:[%s2385] sm:$0xf]
      %v2387 = vld [vmem:[%s2385 + $0x4] sm:$0xf]
      %v2388 = vld [vmem:[%s2385 + $0x8] sm:$0xf]
      %v2389 = vld [vmem:[%s2385 + $0xc] sm:$0xf]
      %v2394 = vunpack.c.l.b16 %v2386
      %v2395 = vunpack.c.l.b16 %v2387
      %v2396 = vunpack.c.l.b16 %v2388
      %v2397 = vunpack.c.l.b16 %v2389
      %v2398 = vpack.c.b16 %v2395, %v2394
      %v2399 = vpack.c.b16 %v2397, %v2396
      %v2401 = vsel %vm593, %v2398, 0
      %v2404 = vsel %vm593, %v2399, 0
      %2406 = vmatpush.bf16.msra.mxu0 0
      %2407 = vmatpush.bf16.msra.mxu0 0
      %2408 = vmatpush.bf16.msra.mxu0 0
      %2409 = vmatpush.bf16.msra.mxu0 0
      %2410 = vmatpush.bf16.msra.mxu0 0
      %2411 = vmatpush.bf16.msra.mxu0 0
      %2412 = vmatpush.bf16.msra.mxu0 0
      %2413 = vmatpush.bf16.msra.mxu0 %v1087
      %2414 = vmatmul.bf16.gmra.mxu0 %v2401
      %v2415 = vpop.f32.mrf.mxu0
      %v2416 = vadd.f32 0.0, %v2415
      %v2417 = vpop.f32.mrf.mxu0
      %v2418 = vadd.f32 0.0, %v2417
      %2419 = vmatmul.bf16.gmra.mxu0 %v2404
      %v2420 = vpop.f32.mrf.mxu0
      %v2421 = vadd.f32 0.0, %v2420
      %v2422 = vpop.f32.mrf.mxu0
      %v2423 = vadd.f32 0.0, %v2422
      %2424 = vdwg.mxu0
      %2425 = vmatpush.bf16.msra.mxu0 0
      %2426 = vmatpush.bf16.msra.mxu0 0
      %2427 = vmatpush.bf16.msra.mxu0 0
      %2428 = vmatpush.bf16.msra.mxu0 0
      %2429 = vmatpush.bf16.msra.mxu0 0
      %2430 = vmatpush.bf16.msra.mxu0 0
      %2431 = vmatpush.bf16.msra.mxu0 0
      %2432 = vmatpush.bf16.msra.mxu0 %v1088
      %2433 = vmatmul.bf16.gmra.mxu0 %v2401
      %v2434 = vpop.f32.mrf.mxu0
      %v2435 = vadd.f32 0.0, %v2434
      %v2436 = vpop.f32.mrf.mxu0
      %v2437 = vadd.f32 0.0, %v2436
      %2438 = vmatmul.bf16.gmra.mxu0 %v2404
      %v2439 = vpop.f32.mrf.mxu0
      %v2440 = vadd.f32 0.0, %v2439
      %v2441 = vpop.f32.mrf.mxu0
      %v2442 = vadd.f32 0.0, %v2441
      %2443 = vdwg.mxu0
      %2444 = vmatpush.bf16.msra.mxu0 0
      %2445 = vmatpush.bf16.msra.mxu0 0
      %2446 = vmatpush.bf16.msra.mxu0 0
      %2447 = vmatpush.bf16.msra.mxu0 0
      %2448 = vmatpush.bf16.msra.mxu0 0
      %2449 = vmatpush.bf16.msra.mxu0 0
      %2450 = vmatpush.bf16.msra.mxu0 0
      %2451 = vmatpush.bf16.msra.mxu0 %v1089
      %2452 = vmatmul.bf16.gmra.mxu0 %v2401
      %v2453 = vpop.f32.mrf.mxu0
      %v2454 = vadd.f32 0.0, %v2453
      %v2455 = vpop.f32.mrf.mxu0
      %v2456 = vadd.f32 0.0, %v2455
      %2457 = vmatmul.bf16.gmra.mxu0 %v2404
      %v2458 = vpop.f32.mrf.mxu0
      %v2459 = vadd.f32 0.0, %v2458
      %v2460 = vpop.f32.mrf.mxu0
      %v2461 = vadd.f32 0.0, %v2460
      %2462 = vdwg.mxu0
      %2463 = vmatpush.bf16.msra.mxu0 0
      %2464 = vmatpush.bf16.msra.mxu0 0
      %2465 = vmatpush.bf16.msra.mxu0 0
      %2466 = vmatpush.bf16.msra.mxu0 0
      %2467 = vmatpush.bf16.msra.mxu0 0
      %2468 = vmatpush.bf16.msra.mxu0 0
      %2469 = vmatpush.bf16.msra.mxu0 0
      %2470 = vmatpush.bf16.msra.mxu0 %v1090
      %2471 = vmatmul.bf16.gmra.mxu0 %v2401
      %v2472 = vpop.f32.mrf.mxu0
      %v2473 = vadd.f32 0.0, %v2472
      %v2474 = vpop.f32.mrf.mxu0
      %v2475 = vadd.f32 0.0, %v2474
      %2476 = vmatmul.bf16.gmra.mxu0 %v2404
      %v2477 = vpop.f32.mrf.mxu0
      %v2478 = vadd.f32 0.0, %v2477
      %v2479 = vpop.f32.mrf.mxu0
      %v2480 = vadd.f32 0.0, %v2479
      %2481 = vdwg.mxu0
      %v2482 = vadd.f32 %v2369, %v2416
      %v2483 = vadd.f32 %v2370, %v2435
      %v2484 = vadd.f32 %v2371, %v2454
      %v2485 = vadd.f32 %v2372, %v2473
      %v2486 = vadd.f32 %v2373, %v2418
      %v2487 = vadd.f32 %v2374, %v2437
      %v2488 = vadd.f32 %v2375, %v2456
      %v2489 = vadd.f32 %v2376, %v2475
      %v2490 = vadd.f32 %v2377, %v2421
      %v2491 = vadd.f32 %v2378, %v2440
      %v2492 = vadd.f32 %v2379, %v2459
      %v2493 = vadd.f32 %v2380, %v2478
      %v2494 = vadd.f32 %v2381, %v2423
      %v2495 = vadd.f32 %v2382, %v2442
      %v2496 = vadd.f32 %v2383, %v2461
      %v2497 = vadd.f32 %v2384, %v2480
      %s2498 = scalar_lea.vmem %s5, 80
      %v2499 = vld [vmem:[%s2498] sm:$0xf]
      %v2500 = vld [vmem:[%s2498 + $0x4] sm:$0xf]
      %v2501 = vld [vmem:[%s2498 + $0x8] sm:$0xf]
      %v2502 = vld [vmem:[%s2498 + $0xc] sm:$0xf]
      %v2507 = vunpack.c.l.b16 %v2499
      %v2508 = vunpack.c.l.b16 %v2500
      %v2509 = vunpack.c.l.b16 %v2501
      %v2510 = vunpack.c.l.b16 %v2502
      %v2511 = vpack.c.b16 %v2508, %v2507
      %v2512 = vpack.c.b16 %v2510, %v2509
      %v2514 = vsel %vm593, %v2511, 0
      %v2517 = vsel %vm593, %v2512, 0
      %2519 = vmatpush.bf16.msra.mxu0 0
      %2520 = vmatpush.bf16.msra.mxu0 0
      %2521 = vmatpush.bf16.msra.mxu0 0
      %2522 = vmatpush.bf16.msra.mxu0 0
      %2523 = vmatpush.bf16.msra.mxu0 0
      %2524 = vmatpush.bf16.msra.mxu0 0
      %2525 = vmatpush.bf16.msra.mxu0 0
      %2526 = vmatpush.bf16.msra.mxu0 %v1246
      %2527 = vmatmul.bf16.gmra.mxu0 %v2514
      %v2528 = vpop.f32.mrf.mxu0
      %v2529 = vadd.f32 0.0, %v2528
      %v2530 = vpop.f32.mrf.mxu0
      %v2531 = vadd.f32 0.0, %v2530
      %2532 = vmatmul.bf16.gmra.mxu0 %v2517
      %v2533 = vpop.f32.mrf.mxu0
      %v2534 = vadd.f32 0.0, %v2533
      %v2535 = vpop.f32.mrf.mxu0
      %v2536 = vadd.f32 0.0, %v2535
      %2537 = vdwg.mxu0
      %2538 = vmatpush.bf16.msra.mxu0 0
      %2539 = vmatpush.bf16.msra.mxu0 0
      %2540 = vmatpush.bf16.msra.mxu0 0
      %2541 = vmatpush.bf16.msra.mxu0 0
      %2542 = vmatpush.bf16.msra.mxu0 0
      %2543 = vmatpush.bf16.msra.mxu0 0
      %2544 = vmatpush.bf16.msra.mxu0 0
      %2545 = vmatpush.bf16.msra.mxu0 %v1247
      %2546 = vmatmul.bf16.gmra.mxu0 %v2514
      %v2547 = vpop.f32.mrf.mxu0
      %v2548 = vadd.f32 0.0, %v2547
      %v2549 = vpop.f32.mrf.mxu0
      %v2550 = vadd.f32 0.0, %v2549
      %2551 = vmatmul.bf16.gmra.mxu0 %v2517
      %v2552 = vpop.f32.mrf.mxu0
      %v2553 = vadd.f32 0.0, %v2552
      %v2554 = vpop.f32.mrf.mxu0
      %v2555 = vadd.f32 0.0, %v2554
      %2556 = vdwg.mxu0
      %2557 = vmatpush.bf16.msra.mxu0 0
      %2558 = vmatpush.bf16.msra.mxu0 0
      %2559 = vmatpush.bf16.msra.mxu0 0
      %2560 = vmatpush.bf16.msra.mxu0 0
      %2561 = vmatpush.bf16.msra.mxu0 0
      %2562 = vmatpush.bf16.msra.mxu0 0
      %2563 = vmatpush.bf16.msra.mxu0 0
      %2564 = vmatpush.bf16.msra.mxu0 %v1248
      %2565 = vmatmul.bf16.gmra.mxu0 %v2514
      %v2566 = vpop.f32.mrf.mxu0
      %v2567 = vadd.f32 0.0, %v2566
      %v2568 = vpop.f32.mrf.mxu0
      %v2569 = vadd.f32 0.0, %v2568
      %2570 = vmatmul.bf16.gmra.mxu0 %v2517
      %v2571 = vpop.f32.mrf.mxu0
      %v2572 = vadd.f32 0.0, %v2571
      %v2573 = vpop.f32.mrf.mxu0
      %v2574 = vadd.f32 0.0, %v2573
      %2575 = vdwg.mxu0
      %2576 = vmatpush.bf16.msra.mxu0 0
      %2577 = vmatpush.bf16.msra.mxu0 0
      %2578 = vmatpush.bf16.msra.mxu0 0
      %2579 = vmatpush.bf16.msra.mxu0 0
      %2580 = vmatpush.bf16.msra.mxu0 0
      %2581 = vmatpush.bf16.msra.mxu0 0
      %2582 = vmatpush.bf16.msra.mxu0 0
      %2583 = vmatpush.bf16.msra.mxu0 %v1249
      %2584 = vmatmul.bf16.gmra.mxu0 %v2514
      %v2585 = vpop.f32.mrf.mxu0
      %v2586 = vadd.f32 0.0, %v2585
      %v2587 = vpop.f32.mrf.mxu0
      %v2588 = vadd.f32 0.0, %v2587
      %2589 = vmatmul.bf16.gmra.mxu0 %v2517
      %v2590 = vpop.f32.mrf.mxu0
      %v2591 = vadd.f32 0.0, %v2590
      %v2592 = vpop.f32.mrf.mxu0
      %v2593 = vadd.f32 0.0, %v2592
      %2594 = vdwg.mxu0
      %v2595 = vadd.f32 %v2482, %v2529
      %v2596 = vadd.f32 %v2483, %v2548
      %v2597 = vadd.f32 %v2484, %v2567
      %v2598 = vadd.f32 %v2485, %v2586
      %v2599 = vadd.f32 %v2486, %v2531
      %v2600 = vadd.f32 %v2487, %v2550
      %v2601 = vadd.f32 %v2488, %v2569
      %v2602 = vadd.f32 %v2489, %v2588
      %v2603 = vadd.f32 %v2490, %v2534
      %v2604 = vadd.f32 %v2491, %v2553
      %v2605 = vadd.f32 %v2492, %v2572
      %v2606 = vadd.f32 %v2493, %v2591
      %v2607 = vadd.f32 %v2494, %v2536
      %v2608 = vadd.f32 %v2495, %v2555
      %v2609 = vadd.f32 %v2496, %v2574
      %v2610 = vadd.f32 %v2497, %v2593
      %2611 = vrot.lane.b32.xlu0 %v471, 1
      %v2612 = vpop.permute.xlu0 %2611
      %2613 = vrot.lane.b32.xlu0 %v475, 1
      %v2614 = vpop.permute.xlu0 %2613
      %2615 = vrot.lane.b32.xlu0 %v472, 1
      %v2616 = vpop.permute.xlu0 %2615
      %2617 = vrot.lane.b32.xlu0 %v476, 1
      %v2618 = vpop.permute.xlu0 %2617
      %2619 = vrot.lane.b32.xlu0 %v473, 1
      %v2620 = vpop.permute.xlu0 %2619
      %2621 = vrot.lane.b32.xlu0 %v477, 1
      %v2622 = vpop.permute.xlu0 %2621
      %2623 = vrot.lane.b32.xlu0 %v474, 1
      %v2624 = vpop.permute.xlu0 %2623
      %2625 = vrot.lane.b32.xlu0 %v478, 1
      %v2626 = vpop.permute.xlu0 %2625
      %v2627 = vsel %vm944, %v2620, %v2624
      %v2628 = vsel %vm944, %v2622, %v2626
      %v2629 = vsel %vm944, %v2616, %v2620
      %v2630 = vsel %vm944, %v2618, %v2622
      %v2631 = vsel %vm944, %v2612, %v2616
      %v2632 = vsel %vm944, %v2614, %v2618
      %v2633 = vsel %vm944, %v2624, %v2612
      %v2634 = vsel %vm944, %v2626, %v2614
      %v2635 = vmul.f32 %v2633, %v954
      %v2636 = vmul.f32 %v2631, %v955
      %v2637 = vmul.f32 %v2629, %v956
      %v2638 = vmul.f32 %v2627, %v957
      %v2639 = vmul.f32 %v2634, %v954
      %v2640 = vmul.f32 %v2632, %v955
      %v2641 = vmul.f32 %v2630, %v956
      %v2642 = vmul.f32 %v2628, %v957
      %v2643 = vpack.c.bf16 %v2639, %v2635
      %v2644 = vpack.c.bf16 %v2640, %v2636
      %v2645 = vpack.c.bf16 %v2641, %v2637
      %v2646 = vpack.c.bf16 %v2642, %v2638
      %s2647 = scalar_lea.vmem %s5, 96
      %v2648 = vld [vmem:[%s2647] sm:$0xf]
      %v2649 = vld [vmem:[%s2647 + $0x4] sm:$0xf]
      %v2650 = vld [vmem:[%s2647 + $0x8] sm:$0xf]
      %v2651 = vld [vmem:[%s2647 + $0xc] sm:$0xf]
      %v2656 = vunpack.c.l.b16 %v2648
      %v2657 = vunpack.c.l.b16 %v2649
      %v2658 = vunpack.c.l.b16 %v2650
      %v2659 = vunpack.c.l.b16 %v2651
      %v2660 = vpack.c.b16 %v2657, %v2656
      %v2661 = vpack.c.b16 %v2659, %v2658
      %v2663 = vsel %vm593, %v2660, 0
      %v2666 = vsel %vm593, %v2661, 0
      %2668 = vmatpush.bf16.msra.mxu0 0
      %2669 = vmatpush.bf16.msra.mxu0 0
      %2670 = vmatpush.bf16.msra.mxu0 0
      %2671 = vmatpush.bf16.msra.mxu0 0
      %2672 = vmatpush.bf16.msra.mxu0 0
      %2673 = vmatpush.bf16.msra.mxu0 0
      %2674 = vmatpush.bf16.msra.mxu0 0
      %2675 = vmatpush.bf16.msra.mxu0 %v2643
      %2676 = vmatmul.bf16.gmra.mxu0 %v2663
      %v2677 = vpop.f32.mrf.mxu0
      %v2678 = vadd.f32 0.0, %v2677
      %v2679 = vpop.f32.mrf.mxu0
      %v2680 = vadd.f32 0.0, %v2679
      %2681 = vmatmul.bf16.gmra.mxu0 %v2666
      %v2682 = vpop.f32.mrf.mxu0
      %v2683 = vadd.f32 0.0, %v2682
      %v2684 = vpop.f32.mrf.mxu0
      %v2685 = vadd.f32 0.0, %v2684
      %2686 = vdwg.mxu0
      %2687 = vmatpush.bf16.msra.mxu0 0
      %2688 = vmatpush.bf16.msra.mxu0 0
      %2689 = vmatpush.bf16.msra.mxu0 0
      %2690 = vmatpush.bf16.msra.mxu0 0
      %2691 = vmatpush.bf16.msra.mxu0 0
      %2692 = vmatpush.bf16.msra.mxu0 0
      %2693 = vmatpush.bf16.msra.mxu0 0
      %2694 = vmatpush.bf16.msra.mxu0 %v2644
      %2695 = vmatmul.bf16.gmra.mxu0 %v2663
      %v2696 = vpop.f32.mrf.mxu0
      %v2697 = vadd.f32 0.0, %v2696
      %v2698 = vpop.f32.mrf.mxu0
      %v2699 = vadd.f32 0.0, %v2698
      %2700 = vmatmul.bf16.gmra.mxu0 %v2666
      %v2701 = vpop.f32.mrf.mxu0
      %v2702 = vadd.f32 0.0, %v2701
      %v2703 = vpop.f32.mrf.mxu0
      %v2704 = vadd.f32 0.0, %v2703
      %2705 = vdwg.mxu0
      %2706 = vmatpush.bf16.msra.mxu0 0
      %2707 = vmatpush.bf16.msra.mxu0 0
      %2708 = vmatpush.bf16.msra.mxu0 0
      %2709 = vmatpush.bf16.msra.mxu0 0
      %2710 = vmatpush.bf16.msra.mxu0 0
      %2711 = vmatpush.bf16.msra.mxu0 0
      %2712 = vmatpush.bf16.msra.mxu0 0
      %2713 = vmatpush.bf16.msra.mxu0 %v2645
      %2714 = vmatmul.bf16.gmra.mxu0 %v2663
      %v2715 = vpop.f32.mrf.mxu0
      %v2716 = vadd.f32 0.0, %v2715
      %v2717 = vpop.f32.mrf.mxu0
      %v2718 = vadd.f32 0.0, %v2717
      %2719 = vmatmul.bf16.gmra.mxu0 %v2666
      %v2720 = vpop.f32.mrf.mxu0
      %v2721 = vadd.f32 0.0, %v2720
      %v2722 = vpop.f32.mrf.mxu0
      %v2723 = vadd.f32 0.0, %v2722
      %2724 = vdwg.mxu0
      %2725 = vmatpush.bf16.msra.mxu0 0
      %2726 = vmatpush.bf16.msra.mxu0 0
      %2727 = vmatpush.bf16.msra.mxu0 0
      %2728 = vmatpush.bf16.msra.mxu0 0
      %2729 = vmatpush.bf16.msra.mxu0 0
      %2730 = vmatpush.bf16.msra.mxu0 0
      %2731 = vmatpush.bf16.msra.mxu0 0
      %2732 = vmatpush.bf16.msra.mxu0 %v2646
      %2733 = vmatmul.bf16.gmra.mxu0 %v2663
      %v2734 = vpop.f32.mrf.mxu0
      %v2735 = vadd.f32 0.0, %v2734
      %v2736 = vpop.f32.mrf.mxu0
      %v2737 = vadd.f32 0.0, %v2736
      %2738 = vmatmul.bf16.gmra.mxu0 %v2666
      %v2739 = vpop.f32.mrf.mxu0
      %v2740 = vadd.f32 0.0, %v2739
      %v2741 = vpop.f32.mrf.mxu0
      %v2742 = vadd.f32 0.0, %v2741
      %2743 = vdwg.mxu0
      %v2744 = vadd.f32 %v2595, %v2678
      %v2745 = vadd.f32 %v2596, %v2697
      %v2746 = vadd.f32 %v2597, %v2716
      %v2747 = vadd.f32 %v2598, %v2735
      %v2748 = vadd.f32 %v2599, %v2680
      %v2749 = vadd.f32 %v2600, %v2699
      %v2750 = vadd.f32 %v2601, %v2718
      %v2751 = vadd.f32 %v2602, %v2737
      %v2752 = vadd.f32 %v2603, %v2683
      %v2753 = vadd.f32 %v2604, %v2702
      %v2754 = vadd.f32 %v2605, %v2721
      %v2755 = vadd.f32 %v2606, %v2740
      %v2756 = vadd.f32 %v2607, %v2685
      %v2757 = vadd.f32 %v2608, %v2704
      %v2758 = vadd.f32 %v2609, %v2723
      %v2759 = vadd.f32 %v2610, %v2742
      %v2760 = vpack.c.bf16 %v475, %v471
      %v2761 = vpack.c.bf16 %v476, %v472
      %v2762 = vpack.c.bf16 %v477, %v473
      %v2763 = vpack.c.bf16 %v478, %v474
      %s2764 = scalar_lea.vmem %s5, 112
      %v2765 = vld [vmem:[%s2764] sm:$0xf]
      %v2766 = vld [vmem:[%s2764 + $0x4] sm:$0xf]
      %v2767 = vld [vmem:[%s2764 + $0x8] sm:$0xf]
      %v2768 = vld [vmem:[%s2764 + $0xc] sm:$0xf]
      %v2773 = vunpack.c.l.b16 %v2765
      %v2774 = vunpack.c.l.b16 %v2766
      %v2775 = vunpack.c.l.b16 %v2767
      %v2776 = vunpack.c.l.b16 %v2768
      %v2777 = vpack.c.b16 %v2774, %v2773
      %v2778 = vpack.c.b16 %v2776, %v2775
      %v2780 = vsel %vm593, %v2777, 0
      %v2783 = vsel %vm593, %v2778, 0
      %2785 = vmatpush.bf16.msra.mxu0 0
      %2786 = vmatpush.bf16.msra.mxu0 0
      %2787 = vmatpush.bf16.msra.mxu0 0
      %2788 = vmatpush.bf16.msra.mxu0 0
      %2789 = vmatpush.bf16.msra.mxu0 0
      %2790 = vmatpush.bf16.msra.mxu0 0
      %2791 = vmatpush.bf16.msra.mxu0 0
      %2792 = vmatpush.bf16.msra.mxu0 %v2760
      %2793 = vmatmul.bf16.gmra.mxu0 %v2780
      %v2794 = vpop.f32.mrf.mxu0
      %v2795 = vadd.f32 0.0, %v2794
      %v2796 = vpop.f32.mrf.mxu0
      %v2797 = vadd.f32 0.0, %v2796
      %2798 = vmatmul.bf16.gmra.mxu0 %v2783
      %v2799 = vpop.f32.mrf.mxu0
      %v2800 = vadd.f32 0.0, %v2799
      %v2801 = vpop.f32.mrf.mxu0
      %v2802 = vadd.f32 0.0, %v2801
      %2803 = vdwg.mxu0
      %2804 = vmatpush.bf16.msra.mxu0 0
      %2805 = vmatpush.bf16.msra.mxu0 0
      %2806 = vmatpush.bf16.msra.mxu0 0
      %2807 = vmatpush.bf16.msra.mxu0 0
      %2808 = vmatpush.bf16.msra.mxu0 0
      %2809 = vmatpush.bf16.msra.mxu0 0
      %2810 = vmatpush.bf16.msra.mxu0 0
      %2811 = vmatpush.bf16.msra.mxu0 %v2761
      %2812 = vmatmul.bf16.gmra.mxu0 %v2780
      %v2813 = vpop.f32.mrf.mxu0
      %v2814 = vadd.f32 0.0, %v2813
      %v2815 = vpop.f32.mrf.mxu0
      %v2816 = vadd.f32 0.0, %v2815
      %2817 = vmatmul.bf16.gmra.mxu0 %v2783
      %v2818 = vpop.f32.mrf.mxu0
      %v2819 = vadd.f32 0.0, %v2818
      %v2820 = vpop.f32.mrf.mxu0
      %v2821 = vadd.f32 0.0, %v2820
      %2822 = vdwg.mxu0
      %2823 = vmatpush.bf16.msra.mxu0 0
      %2824 = vmatpush.bf16.msra.mxu0 0
      %2825 = vmatpush.bf16.msra.mxu0 0
      %2826 = vmatpush.bf16.msra.mxu0 0
      %2827 = vmatpush.bf16.msra.mxu0 0
      %2828 = vmatpush.bf16.msra.mxu0 0
      %2829 = vmatpush.bf16.msra.mxu0 0
      %2830 = vmatpush.bf16.msra.mxu0 %v2762
      %2831 = vmatmul.bf16.gmra.mxu0 %v2780
      %v2832 = vpop.f32.mrf.mxu0
      %v2833 = vadd.f32 0.0, %v2832
      %v2834 = vpop.f32.mrf.mxu0
      %v2835 = vadd.f32 0.0, %v2834
      %2836 = vmatmul.bf16.gmra.mxu0 %v2783
      %v2837 = vpop.f32.mrf.mxu0
      %v2838 = vadd.f32 0.0, %v2837
      %v2839 = vpop.f32.mrf.mxu0
      %v2840 = vadd.f32 0.0, %v2839
      %2841 = vdwg.mxu0
      %2842 = vmatpush.bf16.msra.mxu0 0
      %2843 = vmatpush.bf16.msra.mxu0 0
      %2844 = vmatpush.bf16.msra.mxu0 0
      %2845 = vmatpush.bf16.msra.mxu0 0
      %2846 = vmatpush.bf16.msra.mxu0 0
      %2847 = vmatpush.bf16.msra.mxu0 0
      %2848 = vmatpush.bf16.msra.mxu0 0
      %2849 = vmatpush.bf16.msra.mxu0 %v2763
      %2850 = vmatmul.bf16.gmra.mxu0 %v2780
      %v2851 = vpop.f32.mrf.mxu0
      %v2852 = vadd.f32 0.0, %v2851
      %v2853 = vpop.f32.mrf.mxu0
      %v2854 = vadd.f32 0.0, %v2853
      %2855 = vmatmul.bf16.gmra.mxu0 %v2783
      %v2856 = vpop.f32.mrf.mxu0
      %v2857 = vadd.f32 0.0, %v2856
      %v2858 = vpop.f32.mrf.mxu0
      %v2859 = vadd.f32 0.0, %v2858
      %2860 = vdwg.mxu0
      %v2861 = vadd.f32 %v2744, %v2795
      %v2862 = vadd.f32 %v2745, %v2814
      %v2863 = vadd.f32 %v2746, %v2833
      %v2864 = vadd.f32 %v2747, %v2852
      %v2865 = vadd.f32 %v2748, %v2797
      %v2866 = vadd.f32 %v2749, %v2816
      %v2867 = vadd.f32 %v2750, %v2835
      %v2868 = vadd.f32 %v2751, %v2854
      %v2869 = vadd.f32 %v2752, %v2800
      %v2870 = vadd.f32 %v2753, %v2819
      %v2871 = vadd.f32 %v2754, %v2838
      %v2872 = vadd.f32 %v2755, %v2857
      %v2873 = vadd.f32 %v2756, %v2802
      %v2874 = vadd.f32 %v2757, %v2821
      %v2875 = vadd.f32 %v2758, %v2840
      %v2876 = vadd.f32 %v2759, %v2859
      %2877 = vrot.lane.b32.xlu0 %v471, 127
      %v2878 = vpop.permute.xlu0 %2877
      %2879 = vrot.lane.b32.xlu0 %v475, 127
      %v2880 = vpop.permute.xlu0 %2879
      %2881 = vrot.lane.b32.xlu0 %v472, 127
      %v2882 = vpop.permute.xlu0 %2881
      %2883 = vrot.lane.b32.xlu0 %v476, 127
      %v2884 = vpop.permute.xlu0 %2883
      %2885 = vrot.lane.b32.xlu0 %v473, 127
      %v2886 = vpop.permute.xlu0 %2885
      %2887 = vrot.lane.b32.xlu0 %v477, 127
      %v2888 = vpop.permute.xlu0 %2887
      %2889 = vrot.lane.b32.xlu0 %v474, 127
      %v2890 = vpop.permute.xlu0 %2889
      %2891 = vrot.lane.b32.xlu0 %v478, 127
      %v2892 = vpop.permute.xlu0 %2891
      %v2893 = vsel %vm1220, %v2886, %v2890
      %v2894 = vsel %vm1220, %v2888, %v2892
      %v2895 = vsel %vm1220, %v2882, %v2886
      %v2896 = vsel %vm1220, %v2884, %v2888
      %v2897 = vsel %vm1220, %v2878, %v2882
      %v2898 = vsel %vm1220, %v2880, %v2884
      %v2899 = vsel %vm1220, %v2890, %v2878
      %v2900 = vsel %vm1220, %v2892, %v2880
      %v2901 = vmul.f32 %v2897, %v1230
      %v2902 = vmul.f32 %v2895, %v1231
      %v2903 = vmul.f32 %v2893, %v1232
      %v2904 = vmul.f32 %v2899, %v1233
      %v2905 = vmul.f32 %v2898, %v1230
      %v2906 = vmul.f32 %v2896, %v1231
      %v2907 = vmul.f32 %v2894, %v1232
      %v2908 = vmul.f32 %v2900, %v1233
      %v2909 = vpack.c.bf16 %v2905, %v2901
      %v2910 = vpack.c.bf16 %v2906, %v2902
      %v2911 = vpack.c.bf16 %v2907, %v2903
      %v2912 = vpack.c.bf16 %v2908, %v2904
      %s2913 = scalar_lea.vmem %s5, 128
      %v2914 = vld [vmem:[%s2913] sm:$0xf]
      %v2915 = vld [vmem:[%s2913 + $0x4] sm:$0xf]
      %v2916 = vld [vmem:[%s2913 + $0x8] sm:$0xf]
      %v2917 = vld [vmem:[%s2913 + $0xc] sm:$0xf]
      %v2922 = vunpack.c.l.b16 %v2914
      %v2923 = vunpack.c.l.b16 %v2915
      %v2924 = vunpack.c.l.b16 %v2916
      %v2925 = vunpack.c.l.b16 %v2917
      %v2926 = vpack.c.b16 %v2923, %v2922
      %v2927 = vpack.c.b16 %v2925, %v2924
      %v2929 = vsel %vm593, %v2926, 0
      %v2932 = vsel %vm593, %v2927, 0
      %2934 = vmatpush.bf16.msra.mxu0 0
      %2935 = vmatpush.bf16.msra.mxu0 0
      %2936 = vmatpush.bf16.msra.mxu0 0
      %2937 = vmatpush.bf16.msra.mxu0 0
      %2938 = vmatpush.bf16.msra.mxu0 0
      %2939 = vmatpush.bf16.msra.mxu0 0
      %2940 = vmatpush.bf16.msra.mxu0 0
      %2941 = vmatpush.bf16.msra.mxu0 %v2909
      %2942 = vmatmul.bf16.gmra.mxu0 %v2929
      %v2943 = vpop.f32.mrf.mxu0
      %v2944 = vadd.f32 0.0, %v2943
      %v2945 = vpop.f32.mrf.mxu0
      %v2946 = vadd.f32 0.0, %v2945
      %2947 = vmatmul.bf16.gmra.mxu0 %v2932
      %v2948 = vpop.f32.mrf.mxu0
      %v2949 = vadd.f32 0.0, %v2948
      %v2950 = vpop.f32.mrf.mxu0
      %v2951 = vadd.f32 0.0, %v2950
      %2952 = vdwg.mxu0
      %2953 = vmatpush.bf16.msra.mxu0 0
      %2954 = vmatpush.bf16.msra.mxu0 0
      %2955 = vmatpush.bf16.msra.mxu0 0
      %2956 = vmatpush.bf16.msra.mxu0 0
      %2957 = vmatpush.bf16.msra.mxu0 0
      %2958 = vmatpush.bf16.msra.mxu0 0
      %2959 = vmatpush.bf16.msra.mxu0 0
      %2960 = vmatpush.bf16.msra.mxu0 %v2910
      %2961 = vmatmul.bf16.gmra.mxu0 %v2929
      %v2962 = vpop.f32.mrf.mxu0
      %v2963 = vadd.f32 0.0, %v2962
      %v2964 = vpop.f32.mrf.mxu0
      %v2965 = vadd.f32 0.0, %v2964
      %2966 = vmatmul.bf16.gmra.mxu0 %v2932
      %v2967 = vpop.f32.mrf.mxu0
      %v2968 = vadd.f32 0.0, %v2967
      %v2969 = vpop.f32.mrf.mxu0
      %v2970 = vadd.f32 0.0, %v2969
      %2971 = vdwg.mxu0
      %2972 = vmatpush.bf16.msra.mxu0 0
      %2973 = vmatpush.bf16.msra.mxu0 0
      %2974 = vmatpush.bf16.msra.mxu0 0
      %2975 = vmatpush.bf16.msra.mxu0 0
      %2976 = vmatpush.bf16.msra.mxu0 0
      %2977 = vmatpush.bf16.msra.mxu0 0
      %2978 = vmatpush.bf16.msra.mxu0 0
      %2979 = vmatpush.bf16.msra.mxu0 %v2911
      %2980 = vmatmul.bf16.gmra.mxu0 %v2929
      %v2981 = vpop.f32.mrf.mxu0
      %v2982 = vadd.f32 0.0, %v2981
      %v2983 = vpop.f32.mrf.mxu0
      %v2984 = vadd.f32 0.0, %v2983
      %2985 = vmatmul.bf16.gmra.mxu0 %v2932
      %v2986 = vpop.f32.mrf.mxu0
      %v2987 = vadd.f32 0.0, %v2986
      %v2988 = vpop.f32.mrf.mxu0
      %v2989 = vadd.f32 0.0, %v2988
      %2990 = vdwg.mxu0
      %2991 = vmatpush.bf16.msra.mxu0 0
      %2992 = vmatpush.bf16.msra.mxu0 0
      %2993 = vmatpush.bf16.msra.mxu0 0
      %2994 = vmatpush.bf16.msra.mxu0 0
      %2995 = vmatpush.bf16.msra.mxu0 0
      %2996 = vmatpush.bf16.msra.mxu0 0
      %2997 = vmatpush.bf16.msra.mxu0 0
      %2998 = vmatpush.bf16.msra.mxu0 %v2912
      %2999 = vmatmul.bf16.gmra.mxu0 %v2929
      %v3000 = vpop.f32.mrf.mxu0
      %v3001 = vadd.f32 0.0, %v3000
      %v3002 = vpop.f32.mrf.mxu0
      %v3003 = vadd.f32 0.0, %v3002
      %3004 = vmatmul.bf16.gmra.mxu0 %v2932
      %v3005 = vpop.f32.mrf.mxu0
      %v3006 = vadd.f32 0.0, %v3005
      %v3007 = vpop.f32.mrf.mxu0
      %v3008 = vadd.f32 0.0, %v3007
      %3009 = vdwg.mxu0
      %v3010 = vadd.f32 %v2861, %v2944
      %v3011 = vadd.f32 %v2862, %v2963
      %v3012 = vadd.f32 %v2863, %v2982
      %v3013 = vadd.f32 %v2864, %v3001
      %v3014 = vadd.f32 %v2865, %v2946
      %v3015 = vadd.f32 %v2866, %v2965
      %v3016 = vadd.f32 %v2867, %v2984
      %v3017 = vadd.f32 %v2868, %v3003
      %v3018 = vadd.f32 %v2869, %v2949
      %v3019 = vadd.f32 %v2870, %v2968
      %v3020 = vadd.f32 %v2871, %v2987
      %v3021 = vadd.f32 %v2872, %v3006
      %v3022 = vadd.f32 %v2873, %v2951
      %v3023 = vadd.f32 %v2874, %v2970
      %v3024 = vadd.f32 %v2875, %v2989
      %v3025 = vadd.f32 %v2876, %v3008
      %vm3026 = vcmp.gt.f32.partialorder %v3010, 0.0
      %vm3027 = vcmp.gt.f32.partialorder %v3011, 0.0
      %vm3028 = vcmp.gt.f32.partialorder %v3012, 0.0
      %vm3029 = vcmp.gt.f32.partialorder %v3013, 0.0
      %vm3030 = vcmp.gt.f32.partialorder %v3014, 0.0
      %vm3031 = vcmp.gt.f32.partialorder %v3015, 0.0
      %vm3032 = vcmp.gt.f32.partialorder %v3016, 0.0
      %vm3033 = vcmp.gt.f32.partialorder %v3017, 0.0
      %vm3034 = vcmp.gt.f32.partialorder %v3018, 0.0
      %vm3035 = vcmp.gt.f32.partialorder %v3019, 0.0
      %vm3036 = vcmp.gt.f32.partialorder %v3020, 0.0
      %vm3037 = vcmp.gt.f32.partialorder %v3021, 0.0
      %vm3038 = vcmp.gt.f32.partialorder %v3022, 0.0
      %vm3039 = vcmp.gt.f32.partialorder %v3023, 0.0
      %vm3040 = vcmp.gt.f32.partialorder %v3024, 0.0
      %vm3041 = vcmp.gt.f32.partialorder %v3025, 0.0
      %v3042 = vmul.f32 %v3010, 0.01
      %v3043 = vmul.f32 %v3011, 0.01
      %v3044 = vmul.f32 %v3012, 0.01
      %v3045 = vmul.f32 %v3013, 0.01
      %v3046 = vmul.f32 %v3014, 0.01
      %v3047 = vmul.f32 %v3015, 0.01
      %v3048 = vmul.f32 %v3016, 0.01
      %v3049 = vmul.f32 %v3017, 0.01
      %v3050 = vmul.f32 %v3018, 0.01
      %v3051 = vmul.f32 %v3019, 0.01
      %v3052 = vmul.f32 %v3020, 0.01
      %v3053 = vmul.f32 %v3021, 0.01
      %v3054 = vmul.f32 %v3022, 0.01
      %v3055 = vmul.f32 %v3023, 0.01
      %v3056 = vmul.f32 %v3024, 0.01
      %v3057 = vmul.f32 %v3025, 0.01
      %v3058 = vsel %vm3026, %v3010, %v3042
      %v3059 = vsel %vm3027, %v3011, %v3043
      %v3060 = vsel %vm3028, %v3012, %v3044
      %v3061 = vsel %vm3029, %v3013, %v3045
      %v3062 = vsel %vm3030, %v3014, %v3046
      %v3063 = vsel %vm3031, %v3015, %v3047
      %v3064 = vsel %vm3032, %v3016, %v3048
      %v3065 = vsel %vm3033, %v3017, %v3049
      %v3066 = vsel %vm3034, %v3018, %v3050
      %v3067 = vsel %vm3035, %v3019, %v3051
      %v3068 = vsel %vm3036, %v3020, %v3052
      %v3069 = vsel %vm3037, %v3021, %v3053
      %v3070 = vsel %vm3038, %v3022, %v3054
      %v3071 = vsel %vm3039, %v3023, %v3055
      %v3072 = vsel %vm3040, %v3024, %v3056
      %v3073 = vsel %vm3041, %v3025, %v3057
      %3074 = vst [vmem:[%s401] sm:$0xff] %v1874
      %3075 = vst [vmem:[%s401 + $0x8] sm:$0xff] %v1875
      %3076 = vst [vmem:[%s401 + $0x10] sm:$0xff] %v1876
      %3077 = vst [vmem:[%s401 + $0x18] sm:$0xff] %v1877
      %3078 = vst [vmem:[%s401 + $0x20] sm:$0xff] %v1878
      %3079 = vst [vmem:[%s401 + $0x28] sm:$0xff] %v1879
      %3080 = vst [vmem:[%s401 + $0x30] sm:$0xff] %v1880
      %3081 = vst [vmem:[%s401 + $0x38] sm:$0xff] %v1881
      %3082 = vst [vmem:[%s401 + $0x40] sm:$0xff] %v1882
      %3083 = vst [vmem:[%s401 + $0x48] sm:$0xff] %v1883
      %3084 = vst [vmem:[%s401 + $0x50] sm:$0xff] %v1884
      %3085 = vst [vmem:[%s401 + $0x58] sm:$0xff] %v1885
      %3086 = vst [vmem:[%s401 + $0x60] sm:$0xff] %v1886
      %3087 = vst [vmem:[%s401 + $0x68] sm:$0xff] %v1887
      %3088 = vst [vmem:[%s401 + $0x70] sm:$0xff] %v1888
      %3089 = vst [vmem:[%s401 + $0x78] sm:$0xff] %v1889
      %3090 = vst [vmem:[%s406] sm:$0xff] %v3058
      %3091 = vst [vmem:[%s406 + $0x8] sm:$0xff] %v3059
      %3092 = vst [vmem:[%s406 + $0x10] sm:$0xff] %v3060
      %3093 = vst [vmem:[%s406 + $0x18] sm:$0xff] %v3061
      %3094 = vst [vmem:[%s406 + $0x20] sm:$0xff] %v3062
      %3095 = vst [vmem:[%s406 + $0x28] sm:$0xff] %v3063
      %3096 = vst [vmem:[%s406 + $0x30] sm:$0xff] %v3064
      %3097 = vst [vmem:[%s406 + $0x38] sm:$0xff] %v3065
      %3098 = vst [vmem:[%s406 + $0x40] sm:$0xff] %v3066
      %3099 = vst [vmem:[%s406 + $0x48] sm:$0xff] %v3067
      %3100 = vst [vmem:[%s406 + $0x50] sm:$0xff] %v3068
      %3101 = vst [vmem:[%s406 + $0x58] sm:$0xff] %v3069
      %3102 = vst [vmem:[%s406 + $0x60] sm:$0xff] %v3070
      %3103 = vst [vmem:[%s406 + $0x68] sm:$0xff] %v3071
      %3104 = vst [vmem:[%s406 + $0x70] sm:$0xff] %v3072
      %3105 = vst [vmem:[%s406 + $0x78] sm:$0xff] %v3073
      %v3106 = vadd.f32 %v1874, %v1875
      %v3107 = vadd.f32 %v3106, %v1876
      %v3108 = vadd.f32 %v3107, %v1877
      %3109 = vadd.xlane.f32.xlu0 %v3108
      %v3110 = vpop.xlane.xlu0 %3109
      %v3111 = vadd.f32 %v1878, %v1879
      %v3112 = vadd.f32 %v3111, %v1880
      %v3113 = vadd.f32 %v3112, %v1881
      %3114 = vadd.xlane.f32.xlu0 %v3113
      %v3115 = vpop.xlane.xlu0 %3114
      %v3116 = vadd.f32 %v1882, %v1883
      %v3117 = vadd.f32 %v3116, %v1884
      %v3118 = vadd.f32 %v3117, %v1885
      %3119 = vadd.xlane.f32.xlu0 %v3118
      %v3120 = vpop.xlane.xlu0 %3119
      %v3121 = vadd.f32 %v1886, %v1887
      %v3122 = vadd.f32 %v3121, %v1888
      %v3123 = vadd.f32 %v3122, %v1889
      %3124 = vadd.xlane.f32.xlu0 %v3123
      %v3125 = vpop.xlane.xlu0 %3124
      %v3130 = vperm.slane %v3110, %v496
      %v3131 = vadd.s32 %v496, 4294967288
      %v3132 = vperm.slane %v3115, %v3131
      %vm3133 = vcmask 130112
      %v3134 = vsel %vm3133, %v3132, %v3130
      %v3135 = vadd.s32 %v496, 4294967280
      %v3136 = vperm.slane %v3120, %v3135
      %vm3137 = vcmask 195712
      %v3138 = vsel %vm3137, %v3136, %v3134
      %v3139 = vadd.s32 %v496, 4294967272
      %v3140 = vperm.slane %v3125, %v3139
      %vm3141 = vcmask 261312
      %v3142 = vsel %vm3141, %v3140, %v3138
      %vm3144 = vcmask 253952
      %3145 = vst.msk [vmem:[%s410] sm:$0x1] %vm3144, %v3142
      %v3146 = vmul.f32 %v1874, %v1874
      %v3147 = vmul.f32 %v1875, %v1875
      %v3148 = vmul.f32 %v1876, %v1876
      %v3149 = vmul.f32 %v1877, %v1877
      %v3150 = vmul.f32 %v1878, %v1878
      %v3151 = vmul.f32 %v1879, %v1879
      %v3152 = vmul.f32 %v1880, %v1880
      %v3153 = vmul.f32 %v1881, %v1881
      %v3154 = vmul.f32 %v1882, %v1882
      %v3155 = vmul.f32 %v1883, %v1883
      %v3156 = vmul.f32 %v1884, %v1884
      %v3157 = vmul.f32 %v1885, %v1885
      %v3158 = vmul.f32 %v1886, %v1886
      %v3159 = vmul.f32 %v1887, %v1887
      %v3160 = vmul.f32 %v1888, %v1888
      %v3161 = vmul.f32 %v1889, %v1889
      %v3162 = vadd.f32 %v3146, %v3147
      %v3163 = vadd.f32 %v3162, %v3148
      %v3164 = vadd.f32 %v3163, %v3149
      %3165 = vadd.xlane.f32.xlu0 %v3164
      %v3166 = vpop.xlane.xlu0 %3165
      %v3167 = vadd.f32 %v3150, %v3151
      %v3168 = vadd.f32 %v3167, %v3152
      %v3169 = vadd.f32 %v3168, %v3153
      %3170 = vadd.xlane.f32.xlu0 %v3169
      %v3171 = vpop.xlane.xlu0 %3170
      %v3172 = vadd.f32 %v3154, %v3155
      %v3173 = vadd.f32 %v3172, %v3156
      %v3174 = vadd.f32 %v3173, %v3157
      %3175 = vadd.xlane.f32.xlu0 %v3174
      %v3176 = vpop.xlane.xlu0 %3175
      %v3177 = vadd.f32 %v3158, %v3159
      %v3178 = vadd.f32 %v3177, %v3160
      %v3179 = vadd.f32 %v3178, %v3161
      %3180 = vadd.xlane.f32.xlu0 %v3179
      %v3181 = vpop.xlane.xlu0 %3180
      %v3186 = vperm.slane %v3166, %v496
      %v3187 = vperm.slane %v3171, %v3131
      %v3188 = vsel %vm3133, %v3187, %v3186
      %v3189 = vperm.slane %v3176, %v3135
      %v3190 = vsel %vm3137, %v3189, %v3188
      %v3191 = vperm.slane %v3181, %v3139
      %v3192 = vsel %vm3141, %v3191, %v3190
      %3194 = vst.msk [vmem:[%s410 + $0x1] sm:$0x1] %vm3144, %v3192
      %v3195 = vadd.f32 %v3058, %v3059
      %v3196 = vadd.f32 %v3195, %v3060
      %v3197 = vadd.f32 %v3196, %v3061
      %3198 = vadd.xlane.f32.xlu0 %v3197
      %v3199 = vpop.xlane.xlu0 %3198
      %v3200 = vadd.f32 %v3062, %v3063
      %v3201 = vadd.f32 %v3200, %v3064
      %v3202 = vadd.f32 %v3201, %v3065
      %3203 = vadd.xlane.f32.xlu0 %v3202
      %v3204 = vpop.xlane.xlu0 %3203
      %v3205 = vadd.f32 %v3066, %v3067
      %v3206 = vadd.f32 %v3205, %v3068
      %v3207 = vadd.f32 %v3206, %v3069
      %3208 = vadd.xlane.f32.xlu0 %v3207
      %v3209 = vpop.xlane.xlu0 %3208
      %v3210 = vadd.f32 %v3070, %v3071
      %v3211 = vadd.f32 %v3210, %v3072
      %v3212 = vadd.f32 %v3211, %v3073
      %3213 = vadd.xlane.f32.xlu0 %v3212
      %v3214 = vpop.xlane.xlu0 %3213
      %v3219 = vperm.slane %v3199, %v496
      %v3220 = vperm.slane %v3204, %v3131
      %v3221 = vsel %vm3133, %v3220, %v3219
      %v3222 = vperm.slane %v3209, %v3135
      %v3223 = vsel %vm3137, %v3222, %v3221
      %v3224 = vperm.slane %v3214, %v3139
      %v3225 = vsel %vm3141, %v3224, %v3223
      %3227 = vst.msk [vmem:[%s410 + $0x2] sm:$0x1] %vm3144, %v3225
      %v3228 = vmul.f32 %v3058, %v3058
      %v3229 = vmul.f32 %v3059, %v3059
      %v3230 = vmul.f32 %v3060, %v3060
      %v3231 = vmul.f32 %v3061, %v3061
      %v3232 = vmul.f32 %v3062, %v3062
      %v3233 = vmul.f32 %v3063, %v3063
      %v3234 = vmul.f32 %v3064, %v3064
      %v3235 = vmul.f32 %v3065, %v3065
      %v3236 = vmul.f32 %v3066, %v3066
      %v3237 = vmul.f32 %v3067, %v3067
      %v3238 = vmul.f32 %v3068, %v3068
      %v3239 = vmul.f32 %v3069, %v3069
      %v3240 = vmul.f32 %v3070, %v3070
      %v3241 = vmul.f32 %v3071, %v3071
      %v3242 = vmul.f32 %v3072, %v3072
      %v3243 = vmul.f32 %v3073, %v3073
      %v3244 = vadd.f32 %v3228, %v3229
      %v3245 = vadd.f32 %v3244, %v3230
      %v3246 = vadd.f32 %v3245, %v3231
      %3247 = vadd.xlane.f32.xlu0 %v3246
      %v3248 = vpop.xlane.xlu0 %3247
      %v3249 = vadd.f32 %v3232, %v3233
      %v3250 = vadd.f32 %v3249, %v3234
      %v3251 = vadd.f32 %v3250, %v3235
      %3252 = vadd.xlane.f32.xlu0 %v3251
      %v3253 = vpop.xlane.xlu0 %3252
      %v3254 = vadd.f32 %v3236, %v3237
      %v3255 = vadd.f32 %v3254, %v3238
      %v3256 = vadd.f32 %v3255, %v3239
      %3257 = vadd.xlane.f32.xlu0 %v3256
      %v3258 = vpop.xlane.xlu0 %3257
      %v3259 = vadd.f32 %v3240, %v3241
      %v3260 = vadd.f32 %v3259, %v3242
      %v3261 = vadd.f32 %v3260, %v3243
      %3262 = vadd.xlane.f32.xlu0 %v3261
      %v3263 = vpop.xlane.xlu0 %3262
      %v3268 = vperm.slane %v3248, %v496
      %v3269 = vperm.slane %v3253, %v3131
      %v3270 = vsel %vm3133, %v3269, %v3268
      %v3271 = vperm.slane %v3258, %v3135
      %v3272 = vsel %vm3137, %v3271, %v3270
      %v3273 = vperm.slane %v3263, %v3139
      %v3274 = vsel %vm3141, %v3273, %v3272
      %3276 = vst.msk [vmem:[%s410 + $0x3] sm:$0x1] %vm3144, %v3274
      %p3277 = scmp.lt.s32.totalorder %s20, 7
      %s3278 = scalar_select %p3277, %s20, 7
      %s3279 = smul.addr %s3278, 16
      %s3280 = smul.addr %s3279, 8
      %s3281 = scalar_lea.vmem %s6, %s3280
      %p3282 = scmp.lt.s32.totalorder %s20, 7
      %s3283 = scalar_select %p3282, %s20, 7
      %s3284 = smul.addr %s3283, 16
      %s3285 = smul.addr %s3284, 8
      %s3286 = scalar_lea.vmem %s7, %s3285
      %p3287 = scmp.lt.s32.totalorder %s20, 7
      %s3288 = scalar_select %p3287, %s20, 7
      %s3289 = smul.addr %s3288, 4
      %s3290 = scalar_lea.vmem %s8, %s3289
      // Predicated region
      $region45: #{res_context_block_forward.3} parent=43 // pred_check
        %p3291 = pneg %p191
      $region46: #{res_context_block_forward.3} parent=43 // pred_check_branch
        %3293 = sbr.rel (%p3291) target = $region48
      $region47: #{res_context_block_forward.3} parent=43 // pred_region
        _
      $region48: #{res_context_block_forward.3} parent=43 // pred_fallthru
        _
      // Predicated region
      $region49: #{res_context_block_forward.3} parent=43 // pred_check
        %p3294 = pneg %p217
      $region50: #{res_context_block_forward.3} parent=43 // pred_check_branch
        %3296 = sbr.rel (%p3294) target = $region52
      $region51: #{res_context_block_forward.3} parent=43 // pred_region
        _
      $region52: #{res_context_block_forward.3} parent=43 // pred_fallthru
        _
      // Predicated region
      $region53: #{res_context_block_forward.3} parent=43 // pred_check
        %p3297 = pneg %p243
      $region54: #{res_context_block_forward.3} parent=43 // pred_check_branch
        %3299 = sbr.rel (%p3297) target = $region56
      $region55: #{res_context_block_forward.3} parent=43 // pred_region
        _
      $region56: #{res_context_block_forward.3} parent=43 // pred_fallthru
        _
    $region44: #{res_context_block_forward.3} parent=5 // pred_fallthru
      _
    %p3300 = scmp.le.s32.totalorder 2, %s15
    // Predicated region
    $region57: #{res_context_block_forward.3} parent=5 // pred_check
      %p3301 = pneg %p3300
    $region58: #{res_context_block_forward.3} parent=5 // pred_check_branch
      %3303 = sbr.rel (%p3301) target = $region60
    $region59: #{res_context_block_forward.3} parent=5 // pred_region
      %s3304 = ssub.s32 %s15, 2
      // Predicated region
      $region61: #{res_context_block_forward.3} parent=59 // pred_check
        %p3305 = pneg %p197
      $region62: #{res_context_block_forward.3} parent=59 // pred_check_branch
        %3307 = sbr.rel (%p3305) target = $region64
      $region63: #{res_context_block_forward.3} parent=59 // pred_region
        %p3308 = scmp.lt.s32.totalorder %s21, 7
        %s3309 = scalar_select %p3308, %s21, 7
        %s3310 = smul.addr %s3309, 16
        %s3311 = smul.addr %s3310, 8
        %s3312 = scalar_lea.vmem %s6, %s3311
      $region64: #{res_context_block_forward.3} parent=59 // pred_fallthru
        _
      // Predicated region
      $region65: #{res_context_block_forward.3} parent=59 // pred_check
        %p3313 = pneg %p223
      $region66: #{res_context_block_forward.3} parent=59 // pred_check_branch
        %3315 = sbr.rel (%p3313) target = $region68
      $region67: #{res_context_block_forward.3} parent=59 // pred_region
        %p3316 = scmp.lt.s32.totalorder %s21, 7
        %s3317 = scalar_select %p3316, %s21, 7
        %s3318 = smul.addr %s3317, 16
        %s3319 = smul.addr %s3318, 8
        %s3320 = scalar_lea.vmem %s7, %s3319
      $region68: #{res_context_block_forward.3} parent=59 // pred_fallthru
        _
      // Predicated region
      $region69: #{res_context_block_forward.3} parent=59 // pred_check
        %p3321 = pneg %p249
      $region70: #{res_context_block_forward.3} parent=59 // pred_check_branch
        %3323 = sbr.rel (%p3321) target = $region72
      $region71: #{res_context_block_forward.3} parent=59 // pred_region
        %p3324 = scmp.lt.s32.totalorder %s21, 7
        %s3325 = scalar_select %p3324, %s21, 7
        %s3326 = smul.addr %s3325, 4
        %s3327 = scalar_lea.vmem %s8, %s3326
      $region72: #{res_context_block_forward.3} parent=59 // pred_fallthru
        _
    $region60: #{res_context_block_forward.3} parent=5 // pred_fallthru
      _
  $region6: #{res_context_block_forward.3} parent=0 // loop_footer
    %s19 = sadd.s32 1, %s15
  $region7: #{res_context_block_forward.3} parent=0 // loop_footer_branch
    %14 = sbr.rel target = $region3
  $region8: #{res_context_block_forward.3} parent=0 // loop_exit
    _

// kernel: res_context_block_forward.4
$region0: #{res_context_block_forward.4}
  #allocation0 [shape = 'u32[]', space=smem, size = 0x4, offset = 0x4, fixed_abs, tag = 'smem constant byte address 0x4 - core index']
  #allocation1 [shape = 'u32[72,128]{1,0:T(1,128)}', space=vmem, size = 0x9000, scoped, tag = 'internal scratch']
  %s0 = inlined_call_operand.vmem [shape: f32[8,32,512], index: 0, kind: input, shape index: {}, may-alias: {0,1,2}]
  %s1 = inlined_call_operand.vmem [shape: f32[8,32,512], index: 1, kind: input, shape index: {}, may-alias: {0,1,2}]
  %s2 = inlined_call_operand.vmem [shape: f32[8,32,512], index: 2, kind: input, shape index: {}, may-alias: {0,1,2}]
  %s3 = inlined_call_operand.vmem [shape: f32[8,32,512], index: 3, kind: input, shape index: {}]
  %s4 = inlined_call_operand.vmem [shape: f32[4,512], index: 4, kind: input, shape index: {}]
  %s5 = inlined_call_operand.vmem [shape: bf16[9,32,32], index: 5, kind: input, shape index: {}]
  %s6 = inlined_call_operand.vmem [shape: bf16[9,32,32], index: 6, kind: input, shape index: {}]
  %s7 = inlined_call_operand.vmem [shape: f32[4,32,1], index: 7, kind: input, shape index: {}]
  %s8 = inlined_call_operand.vmem [shape: f32[8,32,512], index: 8, kind: output, shape index: {0}]
  %s9 = inlined_call_operand.vmem [shape: f32[8,32,512], index: 9, kind: output, shape index: {1}]
  %s10 = inlined_call_operand.vmem [shape: f32[8,4,32], index: 10, kind: output, shape index: {2}]
  %11 = xla_tuple %s8, %s9, %s10
  %s12 = sld [smem:[#allocation0]]
  $region81: #{res_context_block_forward.4} parent=0
    _
  %s14 = ssub.s32 1, %s12
  %s15 = scalar_select 0, %s14, %s12
  loop: start=0, step=1, limit=10
  $region2: #{res_context_block_forward.4} parent=0 // loop_pre_header
    _
  $region3: #{res_context_block_forward.4} parent=0 // loop_header
    %s17 = sphi 0, %s21
    %p18 = scmp.ge.s32.totalorder %s17, 10
    %s33 = sphi 0, %s35
    %s36 = sphi 0, %s33
    %s37 = sphi 0, %s36
    %s53 = sphi 0, %s37
    %s59 = sphi 0, %s61
    %s62 = sphi 0, %s59
    %s63 = sphi 0, %s62
    %s79 = sphi 0, %s63
    %s91 = sphi 0, %s93
    %s94 = sphi 0, %s91
    %s95 = sphi 0, %s94
    %s111 = sphi 0, %s95
    %s117 = sphi 0, %s119
    %s120 = sphi 0, %s117
    %s121 = sphi 0, %s120
    %s137 = sphi 0, %s121
    %s141 = sphi 0, %s141
    %s143 = sphi 0, %s141
    %s144 = sphi 0, %s143
    %s158 = sphi 0, %s144
    %s162 = sphi 0, %s162
    %s164 = sphi 0, %s162
    %s165 = sphi 0, %s164
    %s179 = sphi 0, %s165
    %s183 = sphi 0, %s183
    %s185 = sphi 0, %s183
    %s186 = sphi 0, %s185
    %s200 = sphi 0, %s186
    %s204 = sphi 0, %s204
    %s206 = sphi 0, %s204
    %s207 = sphi 0, %s206
    %s221 = sphi 0, %s207
    %s227 = sphi 0, %s229
    %s230 = sphi 0, %s227
    %s231 = sphi 0, %s230
    %s247 = sphi 0, %s231
    %s253 = sphi 0, %s255
    %s256 = sphi 0, %s253
    %s257 = sphi 0, %s256
    %s273 = sphi 0, %s257
    %s279 = sphi 0, %s281
    %s282 = sphi 0, %s279
    %s283 = sphi 0, %s282
    %s299 = sphi 0, %s283
  $region4: #{res_context_block_forward.4} parent=0 // loop_header_branch
    %20 = sbr.rel (%p18) target = $region8
  $region5: #{res_context_block_forward.4} parent=0 // loop_body
    %s22 = ssub.s32 %s17, 1
    %s23 = ssub.s32 %s17, 2
    %s24 = sadd.s32 %s17, 1
    %s25 = ssub.s32 %s17, 1
    %p26 = scmp.gt.s32.totalorder %s25, 0
    %s27 = scalar_select %p26, %s25, 0
    %s28 = ssub.s32 %s24, 1
    %p29 = scmp.gt.s32.totalorder %s28, 0
    %s30 = scalar_select %p29, %s28, 0
    %s31 = ssub.s32 %s27, %s30
    %p32 = scmp.eq.s32.totalorder %s31, 0
    %s34 = sadd.s32 %s33, 1
    %s35 = scalar_select %p32, %s33, %s34
    %p38 = pneg %p32
    %p39 = scmp.eq.s32.totalorder %s17, 7
    %p40 = por %p38, %p39
    %p41 = scmp.ne.s32.totalorder %s33, %s36
    %p42 = scmp.eq.s32.totalorder %s17, 0
    %p43 = por %p41, %p42
    %p44 = scmp.ne.s32.totalorder %s33, %s36
    %p45 = scmp.eq.s32.totalorder %s22, 7
    %p46 = por %p44, %p45
    %p47 = scmp.ne.s32.totalorder %s36, %s37
    %p48 = scmp.eq.s32.totalorder %s22, 0
    %p49 = por %p47, %p48
    %p50 = scmp.ne.s32.totalorder %s36, %s37
    %p51 = scmp.eq.s32.totalorder %s23, 7
    %p52 = por %p50, %p51
    %p54 = scmp.ne.s32.totalorder %s37, %s53
    %p55 = scmp.eq.s32.totalorder %s23, 0
    %p56 = por %p54, %p55
    %s57 = ssub.s32 %s17, %s24
    %p58 = scmp.eq.s32.totalorder %s57, 0
    %s60 = sadd.s32 %s59, 1
    %s61 = scalar_select %p58, %s59, %s60
    %p64 = pneg %p58
    %p65 = scmp.eq.s32.totalorder %s17, 7
    %p66 = por %p64, %p65
    %p67 = scmp.ne.s32.totalorder %s59, %s62
    %p68 = scmp.eq.s32.totalorder %s17, 0
    %p69 = por %p67, %p68
    %p70 = scmp.ne.s32.totalorder %s59, %s62
    %p71 = scmp.eq.s32.totalorder %s22, 7
    %p72 = por %p70, %p71
    %p73 = scmp.ne.s32.totalorder %s62, %s63
    %p74 = scmp.eq.s32.totalorder %s22, 0
    %p75 = por %p73, %p74
    %p76 = scmp.ne.s32.totalorder %s62, %s63
    %p77 = scmp.eq.s32.totalorder %s23, 7
    %p78 = por %p76, %p77
    %p80 = scmp.ne.s32.totalorder %s63, %s79
    %p81 = scmp.eq.s32.totalorder %s23, 0
    %p82 = por %p80, %p81
    %s83 = sadd.s32 %s17, 1
    %p84 = scmp.lt.s32.totalorder %s83, 7
    %s85 = scalar_select %p84, %s83, 7
    %s86 = sadd.s32 %s24, 1
    %p87 = scmp.lt.s32.totalorder %s86, 7
    %s88 = scalar_select %p87, %s86, 7
    %s89 = ssub.s32 %s85, %s88
    %p90 = scmp.eq.s32.totalorder %s89, 0
    %s92 = sadd.s32 %s91, 1
    %s93 = scalar_select %p90, %s91, %s92
    %p96 = pneg %p90
    %p97 = scmp.eq.s32.totalorder %s17, 7
    %p98 = por %p96, %p97
    %p99 = scmp.ne.s32.totalorder %s91, %s94
    %p100 = scmp.eq.s32.totalorder %s17, 0
    %p101 = por %p99, %p100
    %p102 = scmp.ne.s32.totalorder %s91, %s94
    %p103 = scmp.eq.s32.totalorder %s22, 7
    %p104 = por %p102, %p103
    %p105 = scmp.ne.s32.totalorder %s94, %s95
    %p106 = scmp.eq.s32.totalorder %s22, 0
    %p107 = por %p105, %p106
    %p108 = scmp.ne.s32.totalorder %s94, %s95
    %p109 = scmp.eq.s32.totalorder %s23, 7
    %p110 = por %p108, %p109
    %p112 = scmp.ne.s32.totalorder %s95, %s111
    %p113 = scmp.eq.s32.totalorder %s23, 0
    %p114 = por %p112, %p113
    %s115 = ssub.s32 %s17, %s24
    %p116 = scmp.eq.s32.totalorder %s115, 0
    %s118 = sadd.s32 %s117, 1
    %s119 = scalar_select %p116, %s117, %s118
    %p122 = pneg %p116
    %p123 = scmp.eq.s32.totalorder %s17, 7
    %p124 = por %p122, %p123
    %p125 = scmp.ne.s32.totalorder %s117, %s120
    %p126 = scmp.eq.s32.totalorder %s17, 0
    %p127 = por %p125, %p126
    %p128 = scmp.ne.s32.totalorder %s117, %s120
    %p129 = scmp.eq.s32.totalorder %s22, 7
    %p130 = por %p128, %p129
    %p131 = scmp.ne.s32.totalorder %s120, %s121
    %p132 = scmp.eq.s32.totalorder %s22, 0
    %p133 = por %p131, %p132
    %p134 = scmp.ne.s32.totalorder %s120, %s121
    %p135 = scmp.eq.s32.totalorder %s23, 7
    %p136 = por %p134, %p135
    %p138 = scmp.ne.s32.totalorder %s121, %s137
    %p139 = scmp.eq.s32.totalorder %s23, 0
    %p140 = por %p138, %p139
    %s142 = sadd.s32 %s141, 1
    %p145 = scmp.eq.s32.totalorder %s17, 7
    %p146 = scmp.ne.s32.totalorder %s141, %s143
    %p147 = scmp.eq.s32.totalorder %s17, 0
    %p148 = por %p146, %p147
    %p149 = scmp.ne.s32.totalorder %s141, %s143
    %p150 = scmp.eq.s32.totalorder %s22, 7
    %p151 = por %p149, %p150
    %p152 = scmp.ne.s32.totalorder %s143, %s144
    %p153 = scmp.eq.s32.totalorder %s22, 0
    %p154 = por %p152, %p153
    %p155 = scmp.ne.s32.totalorder %s143, %s144
    %p156 = scmp.eq.s32.totalorder %s23, 7
    %p157 = por %p155, %p156
    %p159 = scmp.ne.s32.totalorder %s144, %s158
    %p160 = scmp.eq.s32.totalorder %s23, 0
    %p161 = por %p159, %p160
    %s163 = sadd.s32 %s162, 1
    %p166 = scmp.eq.s32.totalorder %s17, 7
    %p167 = scmp.ne.s32.totalorder %s162, %s164
    %p168 = scmp.eq.s32.totalorder %s17, 0
    %p169 = por %p167, %p168
    %p170 = scmp.ne.s32.totalorder %s162, %s164
    %p171 = scmp.eq.s32.totalorder %s22, 7
    %p172 = por %p170, %p171
    %p173 = scmp.ne.s32.totalorder %s164, %s165
    %p174 = scmp.eq.s32.totalorder %s22, 0
    %p175 = por %p173, %p174
    %p176 = scmp.ne.s32.totalorder %s164, %s165
    %p177 = scmp.eq.s32.totalorder %s23, 7
    %p178 = por %p176, %p177
    %p180 = scmp.ne.s32.totalorder %s165, %s179
    %p181 = scmp.eq.s32.totalorder %s23, 0
    %p182 = por %p180, %p181
    %s184 = sadd.s32 %s183, 1
    %p187 = scmp.eq.s32.totalorder %s17, 7
    %p188 = scmp.ne.s32.totalorder %s183, %s185
    %p189 = scmp.eq.s32.totalorder %s17, 0
    %p190 = por %p188, %p189
    %p191 = scmp.ne.s32.totalorder %s183, %s185
    %p192 = scmp.eq.s32.totalorder %s22, 7
    %p193 = por %p191, %p192
    %p194 = scmp.ne.s32.totalorder %s185, %s186
    %p195 = scmp.eq.s32.totalorder %s22, 0
    %p196 = por %p194, %p195
    %p197 = scmp.ne.s32.totalorder %s185, %s186
    %p198 = scmp.eq.s32.totalorder %s23, 7
    %p199 = por %p197, %p198
    %p201 = scmp.ne.s32.totalorder %s186, %s200
    %p202 = scmp.eq.s32.totalorder %s23, 0
    %p203 = por %p201, %p202
    %s205 = sadd.s32 %s204, 1
    %p208 = scmp.eq.s32.totalorder %s17, 7
    %p209 = scmp.ne.s32.totalorder %s204, %s206
    %p210 = scmp.eq.s32.totalorder %s17, 0
    %p211 = por %p209, %p210
    %p212 = scmp.ne.s32.totalorder %s204, %s206
    %p213 = scmp.eq.s32.totalorder %s22, 7
    %p214 = por %p212, %p213
    %p215 = scmp.ne.s32.totalorder %s206, %s207
    %p216 = scmp.eq.s32.totalorder %s22, 0
    %p217 = por %p215, %p216
    %p218 = scmp.ne.s32.totalorder %s206, %s207
    %p219 = scmp.eq.s32.totalorder %s23, 7
    %p220 = por %p218, %p219
    %p222 = scmp.ne.s32.totalorder %s207, %s221
    %p223 = scmp.eq.s32.totalorder %s23, 0
    %p224 = por %p222, %p223
    %s225 = ssub.s32 %s17, %s24
    %p226 = scmp.eq.s32.totalorder %s225, 0
    %s228 = sadd.s32 %s227, 1
    %s229 = scalar_select %p226, %s227, %s228
    %p232 = pneg %p226
    %p233 = scmp.eq.s32.totalorder %s17, 7
    %p234 = por %p232, %p233
    %p235 = scmp.ne.s32.totalorder %s227, %s230
    %p236 = scmp.eq.s32.totalorder %s17, 0
    %p237 = por %p235, %p236
    %p238 = scmp.ne.s32.totalorder %s227, %s230
    %p239 = scmp.eq.s32.totalorder %s22, 7
    %p240 = por %p238, %p239
    %p241 = scmp.ne.s32.totalorder %s230, %s231
    %p242 = scmp.eq.s32.totalorder %s22, 0
    %p243 = por %p241, %p242
    %p244 = scmp.ne.s32.totalorder %s230, %s231
    %p245 = scmp.eq.s32.totalorder %s23, 7
    %p246 = por %p244, %p245
    %p248 = scmp.ne.s32.totalorder %s231, %s247
    %p249 = scmp.eq.s32.totalorder %s23, 0
    %p250 = por %p248, %p249
    %s251 = ssub.s32 %s17, %s24
    %p252 = scmp.eq.s32.totalorder %s251, 0
    %s254 = sadd.s32 %s253, 1
    %s255 = scalar_select %p252, %s253, %s254
    %p258 = pneg %p252
    %p259 = scmp.eq.s32.totalorder %s17, 7
    %p260 = por %p258, %p259
    %p261 = scmp.ne.s32.totalorder %s253, %s256
    %p262 = scmp.eq.s32.totalorder %s17, 0
    %p263 = por %p261, %p262
    %p264 = scmp.ne.s32.totalorder %s253, %s256
    %p265 = scmp.eq.s32.totalorder %s22, 7
    %p266 = por %p264, %p265
    %p267 = scmp.ne.s32.totalorder %s256, %s257
    %p268 = scmp.eq.s32.totalorder %s22, 0
    %p269 = por %p267, %p268
    %p270 = scmp.ne.s32.totalorder %s256, %s257
    %p271 = scmp.eq.s32.totalorder %s23, 7
    %p272 = por %p270, %p271
    %p274 = scmp.ne.s32.totalorder %s257, %s273
    %p275 = scmp.eq.s32.totalorder %s23, 0
    %p276 = por %p274, %p275
    %s277 = ssub.s32 %s17, %s24
    %p278 = scmp.eq.s32.totalorder %s277, 0
    %s280 = sadd.s32 %s279, 1
    %s281 = scalar_select %p278, %s279, %s280
    %p284 = pneg %p278
    %p285 = scmp.eq.s32.totalorder %s17, 7
    %p286 = por %p284, %p285
    %p287 = scmp.ne.s32.totalorder %s279, %s282
    %p288 = scmp.eq.s32.totalorder %s17, 0
    %p289 = por %p287, %p288
    %p290 = scmp.ne.s32.totalorder %s279, %s282
    %p291 = scmp.eq.s32.totalorder %s22, 7
    %p292 = por %p290, %p291
    %p293 = scmp.ne.s32.totalorder %s282, %s283
    %p294 = scmp.eq.s32.totalorder %s22, 0
    %p295 = por %p293, %p294
    %p296 = scmp.ne.s32.totalorder %s282, %s283
    %p297 = scmp.eq.s32.totalorder %s23, 7
    %p298 = por %p296, %p297
    %p300 = scmp.ne.s32.totalorder %s283, %s299
    %p301 = scmp.eq.s32.totalorder %s23, 0
    %p302 = por %p300, %p301
    %p303 = scmp.le.s32.totalorder 1, %s17
    %p304 = scmp.lt.s32.totalorder %s17, 9
    %p305 = pnand %p303, %p304
    %p306 = pneg %p305
    // Predicated region
    $region9: #{res_context_block_forward.4} parent=5 // pred_check
      _
    $region10: #{res_context_block_forward.4} parent=5 // pred_check_branch
      %308 = sbr.rel (%p305) target = $region12
    $region11: #{res_context_block_forward.4} parent=5 // pred_region
      %s309 = ssub.s32 %s17, 1
      // Predicated region
      $region13: #{res_context_block_forward.4} parent=11 // pred_check
        %p310 = pneg %p154
      $region14: #{res_context_block_forward.4} parent=11 // pred_check_branch
        %312 = sbr.rel (%p310) target = $region16
      $region15: #{res_context_block_forward.4} parent=11 // pred_region
        _
      $region16: #{res_context_block_forward.4} parent=11 // pred_fallthru
        _
      // Predicated region
      $region17: #{res_context_block_forward.4} parent=11 // pred_check
        %p313 = pneg %p175
      $region18: #{res_context_block_forward.4} parent=11 // pred_check_branch
        %315 = sbr.rel (%p313) target = $region20
      $region19: #{res_context_block_forward.4} parent=11 // pred_region
        _
      $region20: #{res_context_block_forward.4} parent=11 // pred_fallthru
        _
      // Predicated region
      $region21: #{res_context_block_forward.4} parent=11 // pred_check
        %p316 = pneg %p196
      $region22: #{res_context_block_forward.4} parent=11 // pred_check_branch
        %318 = sbr.rel (%p316) target = $region24
      $region23: #{res_context_block_forward.4} parent=11 // pred_region
        _
      $region24: #{res_context_block_forward.4} parent=11 // pred_fallthru
        _
      // Predicated region
      $region25: #{res_context_block_forward.4} parent=11 // pred_check
        %p319 = pneg %p217
      $region26: #{res_context_block_forward.4} parent=11 // pred_check_branch
        %321 = sbr.rel (%p319) target = $region28
      $region27: #{res_context_block_forward.4} parent=11 // pred_region
        _
      $region28: #{res_context_block_forward.4} parent=11 // pred_fallthru
        _
    $region12: #{res_context_block_forward.4} parent=5 // pred_fallthru
      _
    %p322 = scmp.lt.s32.totalorder %s17, 8
    // Predicated region
    $region29: #{res_context_block_forward.4} parent=5 // pred_check
      %p323 = pneg %p322
    $region30: #{res_context_block_forward.4} parent=5 // pred_check_branch
      %325 = sbr.rel (%p323) target = $region32
    $region31: #{res_context_block_forward.4} parent=5 // pred_region
      // Predicated region
      $region33: #{res_context_block_forward.4} parent=31 // pred_check
        %p326 = pneg %p43
      $region34: #{res_context_block_forward.4} parent=31 // pred_check_branch
        %328 = sbr.rel (%p326) target = $region36
      $region35: #{res_context_block_forward.4} parent=31 // pred_region
        %s329 = ssub.s32 %s17, 1
        %p330 = scmp.gt.s32.totalorder %s329, 0
        %s331 = scalar_select %p330, %s329, 0
        %p332 = scmp.lt.s32.totalorder %s331, 7
        %s333 = scalar_select %p332, %s331, 7
        %s334 = smul.addr %s333, 16
        %s335 = smul.addr %s334, 8
        %s336 = scalar_lea.vmem %s0, %s335
        %s337 = ssub.s32 %s17, 1
        %p338 = scmp.gt.s32.totalorder %s337, 0
        %s339 = scalar_select %p338, %s337, 0
      $region36: #{res_context_block_forward.4} parent=31 // pred_fallthru
        _
      // Predicated region
      $region37: #{res_context_block_forward.4} parent=31 // pred_check
        %p340 = pneg %p69
      $region38: #{res_context_block_forward.4} parent=31 // pred_check_branch
        %342 = sbr.rel (%p340) target = $region40
      $region39: #{res_context_block_forward.4} parent=31 // pred_region
        %p343 = scmp.lt.s32.totalorder %s17, 7
        %s344 = scalar_select %p343, %s17, 7
        %s345 = smul.addr %s344, 16
        %s346 = smul.addr %s345, 8
        %s347 = scalar_lea.vmem %s1, %s346
      $region40: #{res_context_block_forward.4} parent=31 // pred_fallthru
        _
      // Predicated region
      $region41: #{res_context_block_forward.4} parent=31 // pred_check
        %p348 = pneg %p101
      $region42: #{res_context_block_forward.4} parent=31 // pred_check_branch
        %350 = sbr.rel (%p348) target = $region44
      $region43: #{res_context_block_forward.4} parent=31 // pred_region
        %s351 = sadd.s32 %s17, 1
        %p352 = scmp.lt.s32.totalorder %s351, 7
        %s353 = scalar_select %p352, %s351, 7
        %p354 = scmp.lt.s32.totalorder %s353, 7
        %s355 = scalar_select %p354, %s353, 7
        %s356 = smul.addr %s355, 16
        %s357 = smul.addr %s356, 8
        %s358 = scalar_lea.vmem %s2, %s357
        %s359 = sadd.s32 %s17, 1
        %p360 = scmp.lt.s32.totalorder %s359, 7
        %s361 = scalar_select %p360, %s359, 7
      $region44: #{res_context_block_forward.4} parent=31 // pred_fallthru
        _
      // Predicated region
      $region45: #{res_context_block_forward.4} parent=31 // pred_check
        %p362 = pneg %p127
      $region46: #{res_context_block_forward.4} parent=31 // pred_check_branch
        %364 = sbr.rel (%p362) target = $region48
      $region47: #{res_context_block_forward.4} parent=31 // pred_region
        %p365 = scmp.lt.s32.totalorder %s17, 7
        %s366 = scalar_select %p365, %s17, 7
        %s367 = smul.addr %s366, 16
        %s368 = smul.addr %s367, 8
        %s369 = scalar_lea.vmem %s3, %s368
      $region48: #{res_context_block_forward.4} parent=31 // pred_fallthru
        _
    $region32: #{res_context_block_forward.4} parent=5 // pred_fallthru
      _
    %p370 = scmp.le.s32.totalorder 1, %s17
    %p371 = scmp.lt.s32.totalorder %s17, 9
    %p372 = pnand %p370, %p371
    %p373 = pneg %p372
    // Predicated region
    $region49: #{res_context_block_forward.4} parent=5 // pred_check
      _
    $region50: #{res_context_block_forward.4} parent=5 // pred_check_branch
      %375 = sbr.rel (%p372) target = $region52
    $region51: #{res_context_block_forward.4} parent=5 // pred_region
      %s376 = ssub.s32 %s17, 1
      %s377 = ssub.s32 %s22, 1
      %p378 = scmp.gt.s32.totalorder %s377, 0
      %s379 = scalar_select %p378, %s377, 0
      %p380 = scmp.lt.s32.totalorder %s379, 7
      %s381 = scalar_select %p380, %s379, 7
      %s382 = smul.addr %s381, 16
      %s383 = smul.addr %s382, 8
      %s384 = scalar_lea.vmem %s0, %s383
      %p385 = pneg %p49
      %p386 = pneg %p46
      %p387 = scmp.lt.s32.totalorder %s22, 7
      %s388 = scalar_select %p387, %s22, 7
      %s389 = smul.addr %s388, 16
      %s390 = smul.addr %s389, 8
      %s391 = scalar_lea.vmem %s1, %s390
      %p392 = pneg %p75
      %p393 = pneg %p72
      %s394 = sadd.s32 %s22, 1
      %p395 = scmp.lt.s32.totalorder %s394, 7
      %s396 = scalar_select %p395, %s394, 7
      %p397 = scmp.lt.s32.totalorder %s396, 7
      %s398 = scalar_select %p397, %s396, 7
      %s399 = smul.addr %s398, 16
      %s400 = smul.addr %s399, 8
      %s401 = scalar_lea.vmem %s2, %s400
      %p402 = pneg %p107
      %p403 = pneg %p104
      %p404 = scmp.lt.s32.totalorder %s22, 7
      %s405 = scalar_select %p404, %s22, 7
      %s406 = smul.addr %s405, 16
      %s407 = smul.addr %s406, 8
      %s408 = scalar_lea.vmem %s3, %s407
      %p409 = pneg %p133
      %p410 = pneg %p130
      %p411 = pneg %p154
      %p412 = pneg %p151
      %p413 = pneg %p175
      %p414 = pneg %p172
      %p415 = pneg %p196
      %p416 = pneg %p193
      %p417 = pneg %p217
      %p418 = pneg %p214
      %p419 = pneg %p243
      %p420 = pneg %p240
      %p421 = scmp.lt.s32.totalorder %s22, 7
      %s422 = scalar_select %p421, %s22, 7
      %s423 = smul.addr %s422, 16
      %s424 = smul.addr %s423, 8
      %s425 = scalar_lea.vmem %s8, %s424
      %p426 = pneg %p269
      %p427 = pneg %p266
      %p428 = scmp.lt.s32.totalorder %s22, 7
      %s429 = scalar_select %p428, %s22, 7
      %s430 = smul.addr %s429, 16
      %s431 = smul.addr %s430, 8
      %s432 = scalar_lea.vmem %s9, %s431
      %p433 = pneg %p295
      %p434 = pneg %p292
      %p435 = scmp.lt.s32.totalorder %s22, 7
      %s436 = scalar_select %p435, %s22, 7
      %s437 = smul.addr %s436, 4
      %s438 = scalar_lea.vmem %s10, %s437
      %s439 = ssub.s32 %s22, 1
      %p440 = scmp.gt.s32.totalorder %s439, 0
      %s441 = scalar_select %p440, %s439, 0
      %p442 = scmp.lt.s32.totalorder %s441, 7
      %s443 = scalar_select %p442, %s441, 7
      %s444 = smul.addr %s443, 16
      %s445 = smul.addr %s444, 8
      %s446 = scalar_lea.vmem %s0, %s445
      %s447 = ssub.s32 %s22, 1
      %p448 = scmp.gt.s32.totalorder %s447, 0
      %s449 = scalar_select %p448, %s447, 0
      %p450 = scmp.lt.s32.totalorder %s22, 7
      %s451 = scalar_select %p450, %s22, 7
      %s452 = smul.addr %s451, 16
      %s453 = smul.addr %s452, 8
      %s454 = scalar_lea.vmem %s1, %s453
      %s455 = sadd.s32 %s22, 1
      %p456 = scmp.lt.s32.totalorder %s455, 7
      %s457 = scalar_select %p456, %s455, 7
      %p458 = scmp.lt.s32.totalorder %s457, 7
      %s459 = scalar_select %p458, %s457, 7
      %s460 = smul.addr %s459, 16
      %s461 = smul.addr %s460, 8
      %s462 = scalar_lea.vmem %s2, %s461
      %s463 = sadd.s32 %s22, 1
      %p464 = scmp.lt.s32.totalorder %s463, 7
      %s465 = scalar_select %p464, %s463, 7
      %p466 = scmp.lt.s32.totalorder %s22, 7
      %s467 = scalar_select %p466, %s22, 7
      %s468 = smul.addr %s467, 16
      %s469 = smul.addr %s468, 8
      %s470 = scalar_lea.vmem %s3, %s469
      %p471 = scmp.lt.s32.totalorder %s22, 7
      %s472 = scalar_select %p471, %s22, 7
      %s473 = smul.addr %s472, 16
      %s474 = smul.addr %s473, 8
      %s475 = scalar_lea.vmem %s8, %s474
      %p476 = scmp.lt.s32.totalorder %s22, 7
      %s477 = scalar_select %p476, %s22, 7
      %s478 = smul.addr %s477, 16
      %s479 = smul.addr %s478, 8
      %s480 = scalar_lea.vmem %s9, %s479
      %p481 = scmp.lt.s32.totalorder %s22, 7
      %s482 = scalar_select %p481, %s22, 7
      %s483 = smul.addr %s482, 4
      %s484 = scalar_lea.vmem %s10, %s483
      %v486 = vld [vmem:[%s4] ss:$4 sm:$0xf]
      %s487 = scalar_lea.vmem %s4, 1
      %v488 = vld [vmem:[%s487] ss:$4 sm:$0xf]
      %s489 = scalar_lea.vmem %s4, 2
      %v490 = vld [vmem:[%s489] ss:$4 sm:$0xf]
      %s491 = scalar_lea.vmem %s4, 3
      %v492 = vld [vmem:[%s491] ss:$4 sm:$0xf]
      %p493 = scmp.lt.s32.totalorder %s22, 0
      %s494 = ssub.s32 0, %s22
      %s495 = scalar_select %p493, %s494, %s22
      %s496 = sand.u32 %s495, 3
      %s497 = ssub.s32 0, %s496
      %s498 = scalar_select %p493, %s497, %s496
      %p499 = scmp.ne.s32.totalorder %s498, 0
      %p500 = scmp.lt.s32.totalorder %s498, 0
      %p501 = pnand %p500, %p499
      %p502 = pneg %p501
      %s503 = sadd.s32 %s498, 4
      %s504 = scalar_select %p502, %s503, %s498
      %p505 = scmp.gt.s32.totalorder %s504, 0
      %s506 = scalar_select %p505, 1, 0
      %s507 = scvt.s32.f32 %s506
      %p508 = scmp.lt.s32.totalorder %s504, 3
      %s509 = scalar_select %p508, 1, 0
      %s510 = scvt.s32.f32 %s509
      %v511 = vld [vmem:[%s7] sm:$0xff]
      %v512 = vld [vmem:[%s7 + $0x8] sm:$0xff]
      %v513 = vld [vmem:[%s7 + $0x10] sm:$0xff]
      %v514 = vld [vmem:[%s7 + $0x18] sm:$0xff]
      %s515 = scalar_lea.vmem %s7, 32
      %v516 = vld [vmem:[%s515] sm:$0xff]
      %v517 = vld [vmem:[%s515 + $0x8] sm:$0xff]
      %v518 = vld [vmem:[%s515 + $0x10] sm:$0xff]
      %v519 = vld [vmem:[%s515 + $0x18] sm:$0xff]
      %s520 = scalar_lea.vmem %s7, 64
      %v521 = vld [vmem:[%s520] sm:$0xff]
      %v522 = vld [vmem:[%s520 + $0x8] sm:$0xff]
      %v523 = vld [vmem:[%s520 + $0x10] sm:$0xff]
      %v524 = vld [vmem:[%s520 + $0x18] sm:$0xff]
      %s525 = scalar_lea.vmem %s7, 96
      %v526 = vld [vmem:[%s525] sm:$0xff]
      %v527 = vld [vmem:[%s525 + $0x8] sm:$0xff]
      %v528 = vld [vmem:[%s525 + $0x10] sm:$0xff]
      %v529 = vld [vmem:[%s525 + $0x18] sm:$0xff]
      %v530 = vld [vmem:[%s454] sm:$0xff]
      %v531 = vld [vmem:[%s454 + $0x8] sm:$0xff]
      %v532 = vld [vmem:[%s454 + $0x10] sm:$0xff]
      %v533 = vld [vmem:[%s454 + $0x18] sm:$0xff]
      %v534 = vld [vmem:[%s454 + $0x20] sm:$0xff]
      %v535 = vld [vmem:[%s454 + $0x28] sm:$0xff]
      %v536 = vld [vmem:[%s454 + $0x30] sm:$0xff]
      %v537 = vld [vmem:[%s454 + $0x38] sm:$0xff]
      %v538 = vld [vmem:[%s454 + $0x40] sm:$0xff]
      %v539 = vld [vmem:[%s454 + $0x48] sm:$0xff]
      %v540 = vld [vmem:[%s454 + $0x50] sm:$0xff]
      %v541 = vld [vmem:[%s454 + $0x58] sm:$0xff]
      %v542 = vld [vmem:[%s454 + $0x60] sm:$0xff]
      %v543 = vld [vmem:[%s454 + $0x68] sm:$0xff]
      %v544 = vld [vmem:[%s454 + $0x70] sm:$0xff]
      %v545 = vld [vmem:[%s454 + $0x78] sm:$0xff]
      %547 = vset.pattern.permute.xlu0 0
      %548 = vperm.xlu0 %547, %v511
      %v549 = vpop.permute.xlu0 %548
      %552 = vset.pattern.permute.xlu0 0
      %553 = vperm.xlu0 %552, %v512
      %v554 = vpop.permute.xlu0 %553
      %557 = vset.pattern.permute.xlu0 0
      %558 = vperm.xlu0 %557, %v513
      %v559 = vpop.permute.xlu0 %558
      %562 = vset.pattern.permute.xlu0 0
      %563 = vperm.xlu0 %562, %v514
      %v564 = vpop.permute.xlu0 %563
      %v566 = vmul.f32 %v530, %v549
      %v567 = vmul.f32 %v531, %v549
      %v568 = vmul.f32 %v532, %v549
      %v569 = vmul.f32 %v533, %v549
      %v570 = vmul.f32 %v534, %v554
      %v571 = vmul.f32 %v535, %v554
      %v572 = vmul.f32 %v536, %v554
      %v573 = vmul.f32 %v537, %v554
      %v574 = vmul.f32 %v538, %v559
      %v575 = vmul.f32 %v539, %v559
      %v576 = vmul.f32 %v540, %v559
      %v577 = vmul.f32 %v541, %v559
      %v578 = vmul.f32 %v542, %v564
      %v579 = vmul.f32 %v543, %v564
      %v580 = vmul.f32 %v544, %v564
      %v581 = vmul.f32 %v545, %v564
      %583 = vset.pattern.permute.xlu0 0
      %584 = vperm.xlu0 %583, %v516
      %v585 = vpop.permute.xlu0 %584
      %588 = vset.pattern.permute.xlu0 0
      %589 = vperm.xlu0 %588, %v517
      %v590 = vpop.permute.xlu0 %589
      %593 = vset.pattern.permute.xlu0 0
      %594 = vperm.xlu0 %593, %v518
      %v595 = vpop.permute.xlu0 %594
      %598 = vset.pattern.permute.xlu0 0
      %599 = vperm.xlu0 %598, %v519
      %v600 = vpop.permute.xlu0 %599
      %v602 = vadd.f32 %v566, %v585
      %v603 = vadd.f32 %v567, %v585
      %v604 = vadd.f32 %v568, %v585
      %v605 = vadd.f32 %v569, %v585
      %v606 = vadd.f32 %v570, %v590
      %v607 = vadd.f32 %v571, %v590
      %v608 = vadd.f32 %v572, %v590
      %v609 = vadd.f32 %v573, %v590
      %v610 = vadd.f32 %v574, %v595
      %v611 = vadd.f32 %v575, %v595
      %v612 = vadd.f32 %v576, %v595
      %v613 = vadd.f32 %v577, %v595
      %v614 = vadd.f32 %v578, %v600
      %v615 = vadd.f32 %v579, %v600
      %v616 = vadd.f32 %v580, %v600
      %v617 = vadd.f32 %v581, %v600
      %v618 = vld [vmem:[%s446] sm:$0xff]
      %v619 = vld [vmem:[%s446 + $0x8] sm:$0xff]
      %v620 = vld [vmem:[%s446 + $0x10] sm:$0xff]
      %v621 = vld [vmem:[%s446 + $0x18] sm:$0xff]
      %v622 = vld [vmem:[%s446 + $0x20] sm:$0xff]
      %v623 = vld [vmem:[%s446 + $0x28] sm:$0xff]
      %v624 = vld [vmem:[%s446 + $0x30] sm:$0xff]
      %v625 = vld [vmem:[%s446 + $0x38] sm:$0xff]
      %v626 = vld [vmem:[%s446 + $0x40] sm:$0xff]
      %v627 = vld [vmem:[%s446 + $0x48] sm:$0xff]
      %v628 = vld [vmem:[%s446 + $0x50] sm:$0xff]
      %v629 = vld [vmem:[%s446 + $0x58] sm:$0xff]
      %v630 = vld [vmem:[%s446 + $0x60] sm:$0xff]
      %v631 = vld [vmem:[%s446 + $0x68] sm:$0xff]
      %v632 = vld [vmem:[%s446 + $0x70] sm:$0xff]
      %v633 = vld [vmem:[%s446 + $0x78] sm:$0xff]
      %v634 = vmul.f32 %v618, %v549
      %v635 = vmul.f32 %v619, %v549
      %v636 = vmul.f32 %v620, %v549
      %v637 = vmul.f32 %v621, %v549
      %v638 = vmul.f32 %v622, %v554
      %v639 = vmul.f32 %v623, %v554
      %v640 = vmul.f32 %v624, %v554
      %v641 = vmul.f32 %v625, %v554
      %v642 = vmul.f32 %v626, %v559
      %v643 = vmul.f32 %v627, %v559
      %v644 = vmul.f32 %v628, %v559
      %v645 = vmul.f32 %v629, %v559
      %v646 = vmul.f32 %v630, %v564
      %v647 = vmul.f32 %v631, %v564
      %v648 = vmul.f32 %v632, %v564
      %v649 = vmul.f32 %v633, %v564
      %v650 = vadd.f32 %v634, %v585
      %v651 = vadd.f32 %v635, %v585
      %v652 = vadd.f32 %v636, %v585
      %v653 = vadd.f32 %v637, %v585
      %v654 = vadd.f32 %v638, %v590
      %v655 = vadd.f32 %v639, %v590
      %v656 = vadd.f32 %v640, %v590
      %v657 = vadd.f32 %v641, %v590
      %v658 = vadd.f32 %v642, %v595
      %v659 = vadd.f32 %v643, %v595
      %v660 = vadd.f32 %v644, %v595
      %v661 = vadd.f32 %v645, %v595
      %v662 = vadd.f32 %v646, %v600
      %v663 = vadd.f32 %v647, %v600
      %v664 = vadd.f32 %v648, %v600
      %v665 = vadd.f32 %v649, %v600
      %v666 = vstv %s507
      %v667 = vmul.f32 %v650, %v666
      %v668 = vmul.f32 %v651, %v666
      %v669 = vmul.f32 %v652, %v666
      %v670 = vmul.f32 %v653, %v666
      %v671 = vmul.f32 %v654, %v666
      %v672 = vmul.f32 %v655, %v666
      %v673 = vmul.f32 %v656, %v666
      %v674 = vmul.f32 %v657, %v666
      %v675 = vmul.f32 %v658, %v666
      %v676 = vmul.f32 %v659, %v666
      %v677 = vmul.f32 %v660, %v666
      %v678 = vmul.f32 %v661, %v666
      %v679 = vmul.f32 %v662, %v666
      %v680 = vmul.f32 %v663, %v666
      %v681 = vmul.f32 %v664, %v666
      %v682 = vmul.f32 %v665, %v666
      %v683 = vld [vmem:[%s462] sm:$0xff]
      %v684 = vld [vmem:[%s462 + $0x8] sm:$0xff]
      %v685 = vld [vmem:[%s462 + $0x10] sm:$0xff]
      %v686 = vld [vmem:[%s462 + $0x18] sm:$0xff]
      %v687 = vld [vmem:[%s462 + $0x20] sm:$0xff]
      %v688 = vld [vmem:[%s462 + $0x28] sm:$0xff]
      %v689 = vld [vmem:[%s462 + $0x30] sm:$0xff]
      %v690 = vld [vmem:[%s462 + $0x38] sm:$0xff]
      %v691 = vld [vmem:[%s462 + $0x40] sm:$0xff]
      %v692 = vld [vmem:[%s462 + $0x48] sm:$0xff]
      %v693 = vld [vmem:[%s462 + $0x50] sm:$0xff]
      %v694 = vld [vmem:[%s462 + $0x58] sm:$0xff]
      %v695 = vld [vmem:[%s462 + $0x60] sm:$0xff]
      %v696 = vld [vmem:[%s462 + $0x68] sm:$0xff]
      %v697 = vld [vmem:[%s462 + $0x70] sm:$0xff]
      %v698 = vld [vmem:[%s462 + $0x78] sm:$0xff]
      %v699 = vmul.f32 %v683, %v549
      %v700 = vmul.f32 %v684, %v549
      %v701 = vmul.f32 %v685, %v549
      %v702 = vmul.f32 %v686, %v549
      %v703 = vmul.f32 %v687, %v554
      %v704 = vmul.f32 %v688, %v554
      %v705 = vmul.f32 %v689, %v554
      %v706 = vmul.f32 %v690, %v554
      %v707 = vmul.f32 %v691, %v559
      %v708 = vmul.f32 %v692, %v559
      %v709 = vmul.f32 %v693, %v559
      %v710 = vmul.f32 %v694, %v559
      %v711 = vmul.f32 %v695, %v564
      %v712 = vmul.f32 %v696, %v564
      %v713 = vmul.f32 %v697, %v564
      %v714 = vmul.f32 %v698, %v564
      %v715 = vadd.f32 %v699, %v585
      %v716 = vadd.f32 %v700, %v585
      %v717 = vadd.f32 %v701, %v585
      %v718 = vadd.f32 %v702, %v585
      %v719 = vadd.f32 %v703, %v590
      %v720 = vadd.f32 %v704, %v590
      %v721 = vadd.f32 %v705, %v590
      %v722 = vadd.f32 %v706, %v590
      %v723 = vadd.f32 %v707, %v595
      %v724 = vadd.f32 %v708, %v595
      %v725 = vadd.f32 %v709, %v595
      %v726 = vadd.f32 %v710, %v595
      %v727 = vadd.f32 %v711, %v600
      %v728 = vadd.f32 %v712, %v600
      %v729 = vadd.f32 %v713, %v600
      %v730 = vadd.f32 %v714, %v600
      %v731 = vstv %s510
      %v732 = vmul.f32 %v715, %v731
      %v733 = vmul.f32 %v716, %v731
      %v734 = vmul.f32 %v717, %v731
      %v735 = vmul.f32 %v718, %v731
      %v736 = vmul.f32 %v719, %v731
      %v737 = vmul.f32 %v720, %v731
      %v738 = vmul.f32 %v721, %v731
      %v739 = vmul.f32 %v722, %v731
      %v740 = vmul.f32 %v723, %v731
      %v741 = vmul.f32 %v724, %v731
      %v742 = vmul.f32 %v725, %v731
      %v743 = vmul.f32 %v726, %v731
      %v744 = vmul.f32 %v727, %v731
      %v745 = vmul.f32 %v728, %v731
      %v746 = vmul.f32 %v729, %v731
      %v747 = vmul.f32 %v730, %v731
      %v748 = vld [vmem:[%s470] sm:$0xff]
      %v749 = vld [vmem:[%s470 + $0x8] sm:$0xff]
      %v750 = vld [vmem:[%s470 + $0x10] sm:$0xff]
      %v751 = vld [vmem:[%s470 + $0x18] sm:$0xff]
      %v752 = vld [vmem:[%s470 + $0x20] sm:$0xff]
      %v753 = vld [vmem:[%s470 + $0x28] sm:$0xff]
      %v754 = vld [vmem:[%s470 + $0x30] sm:$0xff]
      %v755 = vld [vmem:[%s470 + $0x38] sm:$0xff]
      %v756 = vld [vmem:[%s470 + $0x40] sm:$0xff]
      %v757 = vld [vmem:[%s470 + $0x48] sm:$0xff]
      %v758 = vld [vmem:[%s470 + $0x50] sm:$0xff]
      %v759 = vld [vmem:[%s470 + $0x58] sm:$0xff]
      %v760 = vld [vmem:[%s470 + $0x60] sm:$0xff]
      %v761 = vld [vmem:[%s470 + $0x68] sm:$0xff]
      %v762 = vld [vmem:[%s470 + $0x70] sm:$0xff]
      %v763 = vld [vmem:[%s470 + $0x78] sm:$0xff]
      %765 = vset.pattern.permute.xlu0 0
      %766 = vperm.xlu0 %765, %v521
      %v767 = vpop.permute.xlu0 %766
      %770 = vset.pattern.permute.xlu0 0
      %771 = vperm.xlu0 %770, %v522
      %v772 = vpop.permute.xlu0 %771
      %775 = vset.pattern.permute.xlu0 0
      %776 = vperm.xlu0 %775, %v523
      %v777 = vpop.permute.xlu0 %776
      %780 = vset.pattern.permute.xlu0 0
      %781 = vperm.xlu0 %780, %v524
      %v782 = vpop.permute.xlu0 %781
      %v784 = vmul.f32 %v748, %v767
      %v785 = vmul.f32 %v749, %v767
      %v786 = vmul.f32 %v750, %v767
      %v787 = vmul.f32 %v751, %v767
      %v788 = vmul.f32 %v752, %v772
      %v789 = vmul.f32 %v753, %v772
      %v790 = vmul.f32 %v754, %v772
      %v791 = vmul.f32 %v755, %v772
      %v792 = vmul.f32 %v756, %v777
      %v793 = vmul.f32 %v757, %v777
      %v794 = vmul.f32 %v758, %v777
      %v795 = vmul.f32 %v759, %v777
      %v796 = vmul.f32 %v760, %v782
      %v797 = vmul.f32 %v761, %v782
      %v798 = vmul.f32 %v762, %v782
      %v799 = vmul.f32 %v763, %v782
      %801 = vset.pattern.permute.xlu0 0
      %802 = vperm.xlu0 %801, %v526
      %v803 = vpop.permute.xlu0 %802
      %806 = vset.pattern.permute.xlu0 0
      %807 = vperm.xlu0 %806, %v527
      %v808 = vpop.permute.xlu0 %807
      %811 = vset.pattern.permute.xlu0 0
      %812 = vperm.xlu0 %811, %v528
      %v813 = vpop.permute.xlu0 %812
      %816 = vset.pattern.permute.xlu0 0
      %817 = vperm.xlu0 %816, %v529
      %v818 = vpop.permute.xlu0 %817
      %v820 = vadd.f32 %v784, %v803
      %v821 = vadd.f32 %v785, %v803
      %v822 = vadd.f32 %v786, %v803
      %v823 = vadd.f32 %v787, %v803
      %v824 = vadd.f32 %v788, %v808
      %v825 = vadd.f32 %v789, %v808
      %v826 = vadd.f32 %v790, %v808
      %v827 = vadd.f32 %v791, %v808
      %v828 = vadd.f32 %v792, %v813
      %v829 = vadd.f32 %v793, %v813
      %v830 = vadd.f32 %v794, %v813
      %v831 = vadd.f32 %v795, %v813
      %v832 = vadd.f32 %v796, %v818
      %v833 = vadd.f32 %v797, %v818
      %v834 = vadd.f32 %v798, %v818
      %v835 = vadd.f32 %v799, %v818
      %836 = vrot.lane.b32.xlu0 %v667, 1
      %v837 = vpop.permute.xlu0 %836
      %838 = vrot.lane.b32.xlu0 %v671, 1
      %v839 = vpop.permute.xlu0 %838
      %840 = vrot.lane.b32.xlu0 %v675, 1
      %v841 = vpop.permute.xlu0 %840
      %842 = vrot.lane.b32.xlu0 %v679, 1
      %v843 = vpop.permute.xlu0 %842
      %844 = vrot.lane.b32.xlu0 %v668, 1
      %v845 = vpop.permute.xlu0 %844
      %846 = vrot.lane.b32.xlu0 %v672, 1
      %v847 = vpop.permute.xlu0 %846
      %848 = vrot.lane.b32.xlu0 %v676, 1
      %v849 = vpop.permute.xlu0 %848
      %850 = vrot.lane.b32.xlu0 %v680, 1
      %v851 = vpop.permute.xlu0 %850
      %852 = vrot.lane.b32.xlu0 %v669, 1
      %v853 = vpop.permute.xlu0 %852
      %854 = vrot.lane.b32.xlu0 %v673, 1
      %v855 = vpop.permute.xlu0 %854
      %856 = vrot.lane.b32.xlu0 %v677, 1
      %v857 = vpop.permute.xlu0 %856
      %858 = vrot.lane.b32.xlu0 %v681, 1
      %v859 = vpop.permute.xlu0 %858
      %860 = vrot.lane.b32.xlu0 %v670, 1
      %v861 = vpop.permute.xlu0 %860
      %862 = vrot.lane.b32.xlu0 %v674, 1
      %v863 = vpop.permute.xlu0 %862
      %864 = vrot.lane.b32.xlu0 %v678, 1
      %v865 = vpop.permute.xlu0 %864
      %866 = vrot.lane.b32.xlu0 %v682, 1
      %v867 = vpop.permute.xlu0 %866
      %v868 = vlaneseq
      %v869 = vand.u32 %v868, 127
      %vm870 = vcmp.lt.s32.totalorder %v869, 1
      %v871 = vsel %vm870, %v853, %v861
      %v872 = vsel %vm870, %v855, %v863
      %v873 = vsel %vm870, %v857, %v865
      %v874 = vsel %vm870, %v859, %v867
      %v875 = vsel %vm870, %v845, %v853
      %v876 = vsel %vm870, %v847, %v855
      %v877 = vsel %vm870, %v849, %v857
      %v878 = vsel %vm870, %v851, %v859
      %v879 = vsel %vm870, %v837, %v845
      %v880 = vsel %vm870, %v839, %v847
      %v881 = vsel %vm870, %v841, %v849
      %v882 = vsel %vm870, %v843, %v851
      %v883 = vsel %vm870, %v861, %v837
      %v884 = vsel %vm870, %v863, %v839
      %v885 = vsel %vm870, %v865, %v841
      %v886 = vsel %vm870, %v867, %v843
      %v888 = vperm.slane %v486, 0
      %v889 = vperm.slane %v486, 1
      %v890 = vperm.slane %v486, 2
      %v891 = vperm.slane %v486, 3
      %v896 = vmul.f32 %v883, %v888
      %v897 = vmul.f32 %v879, %v889
      %v898 = vmul.f32 %v875, %v890
      %v899 = vmul.f32 %v871, %v891
      %v900 = vmul.f32 %v884, %v888
      %v901 = vmul.f32 %v880, %v889
      %v902 = vmul.f32 %v876, %v890
      %v903 = vmul.f32 %v872, %v891
      %v904 = vmul.f32 %v885, %v888
      %v905 = vmul.f32 %v881, %v889
      %v906 = vmul.f32 %v877, %v890
      %v907 = vmul.f32 %v873, %v891
      %v908 = vmul.f32 %v886, %v888
      %v909 = vmul.f32 %v882, %v889
      %v910 = vmul.f32 %v878, %v890
      %v911 = vmul.f32 %v874, %v891
      %v912 = vpack.c.bf16 %v900, %v896
      %v913 = vpack.c.bf16 %v901, %v897
      %v914 = vpack.c.bf16 %v902, %v898
      %v915 = vpack.c.bf16 %v903, %v899
      %v916 = vpack.c.bf16 %v908, %v904
      %v917 = vpack.c.bf16 %v909, %v905
      %v918 = vpack.c.bf16 %v910, %v906
      %v919 = vpack.c.bf16 %v911, %v907
      %v920 = vld [vmem:[%s5] sm:$0xf]
      %v921 = vld [vmem:[%s5 + $0x4] sm:$0xf]
      %v922 = vld [vmem:[%s5 + $0x8] sm:$0xf]
      %v923 = vld [vmem:[%s5 + $0xc] sm:$0xf]
      %v924 = vpack.c.bf16 %v671, %v667
      %v925 = vpack.c.bf16 %v672, %v668
      %v926 = vpack.c.bf16 %v673, %v669
      %v927 = vpack.c.bf16 %v674, %v670
      %v928 = vpack.c.bf16 %v679, %v675
      %v929 = vpack.c.bf16 %v680, %v676
      %v930 = vpack.c.bf16 %v681, %v677
      %v931 = vpack.c.bf16 %v682, %v678
      %s932 = scalar_lea.vmem %s5, 16
      %v933 = vld [vmem:[%s932] sm:$0xf]
      %v934 = vld [vmem:[%s932 + $0x4] sm:$0xf]
      %v935 = vld [vmem:[%s932 + $0x8] sm:$0xf]
      %v936 = vld [vmem:[%s932 + $0xc] sm:$0xf]
      %v941 = vunpack.c.l.b16 %v933
      %v942 = vunpack.c.l.b16 %v934
      %v943 = vunpack.c.l.b16 %v935
      %v944 = vunpack.c.l.b16 %v936
      %v945 = vpack.c.b16 %v942, %v941
      %v946 = vpack.c.b16 %v944, %v943
      %vm947 = vcmask 261120
      %v949 = vsel %vm947, %v945, 0
      %v952 = vsel %vm947, %v946, 0
      %954 = vmatpush.bf16.msra.mxu0 0
      %955 = vmatpush.bf16.msra.mxu0 0
      %956 = vmatpush.bf16.msra.mxu0 0
      %957 = vmatpush.bf16.msra.mxu0 0
      %958 = vmatpush.bf16.msra.mxu0 0
      %959 = vmatpush.bf16.msra.mxu0 0
      %960 = vmatpush.bf16.msra.mxu0 %v928
      %961 = vmatpush.bf16.msra.mxu0 %v924
      %962 = vmatmul.bf16.gmra.mxu0 %v949
      %v963 = vpop.f32.mrf.mxu0
      %v964 = vadd.f32 0.0, %v963
      %v965 = vpop.f32.mrf.mxu0
      %v966 = vadd.f32 0.0, %v965
      %967 = vmatmul.bf16.gmra.mxu0 %v952
      %v968 = vpop.f32.mrf.mxu0
      %v969 = vadd.f32 0.0, %v968
      %v970 = vpop.f32.mrf.mxu0
      %v971 = vadd.f32 0.0, %v970
      %972 = vdwg.mxu0
      %973 = vmatpush.bf16.msra.mxu0 0
      %974 = vmatpush.bf16.msra.mxu0 0
      %975 = vmatpush.bf16.msra.mxu0 0
      %976 = vmatpush.bf16.msra.mxu0 0
      %977 = vmatpush.bf16.msra.mxu0 0
      %978 = vmatpush.bf16.msra.mxu0 0
      %979 = vmatpush.bf16.msra.mxu0 %v929
      %980 = vmatpush.bf16.msra.mxu0 %v925
      %981 = vmatmul.bf16.gmra.mxu0 %v949
      %v982 = vpop.f32.mrf.mxu0
      %v983 = vadd.f32 0.0, %v982
      %v984 = vpop.f32.mrf.mxu0
      %v985 = vadd.f32 0.0, %v984
      %986 = vmatmul.bf16.gmra.mxu0 %v952
      %v987 = vpop.f32.mrf.mxu0
      %v988 = vadd.f32 0.0, %v987
      %v989 = vpop.f32.mrf.mxu0
      %v990 = vadd.f32 0.0, %v989
      %991 = vdwg.mxu0
      %992 = vmatpush.bf16.msra.mxu0 0
      %993 = vmatpush.bf16.msra.mxu0 0
      %994 = vmatpush.bf16.msra.mxu0 0
      %995 = vmatpush.bf16.msra.mxu0 0
      %996 = vmatpush.bf16.msra.mxu0 0
      %997 = vmatpush.bf16.msra.mxu0 0
      %998 = vmatpush.bf16.msra.mxu0 %v930
      %999 = vmatpush.bf16.msra.mxu0 %v926
      %1000 = vmatmul.bf16.gmra.mxu0 %v949
      %v1001 = vpop.f32.mrf.mxu0
      %v1002 = vadd.f32 0.0, %v1001
      %v1003 = vpop.f32.mrf.mxu0
      %v1004 = vadd.f32 0.0, %v1003
      %1005 = vmatmul.bf16.gmra.mxu0 %v952
      %v1006 = vpop.f32.mrf.mxu0
      %v1007 = vadd.f32 0.0, %v1006
      %v1008 = vpop.f32.mrf.mxu0
      %v1009 = vadd.f32 0.0, %v1008
      %1010 = vdwg.mxu0
      %1011 = vmatpush.bf16.msra.mxu0 0
      %1012 = vmatpush.bf16.msra.mxu0 0
      %1013 = vmatpush.bf16.msra.mxu0 0
      %1014 = vmatpush.bf16.msra.mxu0 0
      %1015 = vmatpush.bf16.msra.mxu0 0
      %1016 = vmatpush.bf16.msra.mxu0 0
      %1017 = vmatpush.bf16.msra.mxu0 %v931
      %1018 = vmatpush.bf16.msra.mxu0 %v927
      %1019 = vmatmul.bf16.gmra.mxu0 %v949
      %v1020 = vpop.f32.mrf.mxu0
      %v1021 = vadd.f32 0.0, %v1020
      %v1022 = vpop.f32.mrf.mxu0
      %v1023 = vadd.f32 0.0, %v1022
      %1024 = vmatmul.bf16.gmra.mxu0 %v952
      %v1025 = vpop.f32.mrf.mxu0
      %v1026 = vadd.f32 0.0, %v1025
      %v1027 = vpop.f32.mrf.mxu0
      %v1028 = vadd.f32 0.0, %v1027
      %1029 = vdwg.mxu0
      %v1034 = vunpack.c.l.b16 %v920
      %v1035 = vunpack.c.l.b16 %v921
      %v1036 = vunpack.c.l.b16 %v922
      %v1037 = vunpack.c.l.b16 %v923
      %v1038 = vpack.c.b16 %v1035, %v1034
      %v1039 = vpack.c.b16 %v1037, %v1036
      %v1041 = vsel %vm947, %v1038, 0
      %v1044 = vsel %vm947, %v1039, 0
      %1046 = vmatpush.bf16.msra.mxu0 0
      %1047 = vmatpush.bf16.msra.mxu0 0
      %1048 = vmatpush.bf16.msra.mxu0 0
      %1049 = vmatpush.bf16.msra.mxu0 0
      %1050 = vmatpush.bf16.msra.mxu0 0
      %1051 = vmatpush.bf16.msra.mxu0 0
      %1052 = vmatpush.bf16.msra.mxu0 %v916
      %1053 = vmatpush.bf16.msra.mxu0 %v912
      %1054 = vmatmul.bf16.gmra.mxu0 %v1041
      %v1055 = vpop.f32.mrf.mxu0
      %v1056 = vadd.f32 %v964, %v1055
      %v1057 = vpop.f32.mrf.mxu0
      %v1058 = vadd.f32 %v966, %v1057
      %1059 = vmatmul.bf16.gmra.mxu0 %v1044
      %v1060 = vpop.f32.mrf.mxu0
      %v1061 = vadd.f32 %v969, %v1060
      %v1062 = vpop.f32.mrf.mxu0
      %v1063 = vadd.f32 %v971, %v1062
      %1064 = vdwg.mxu0
      %1065 = vmatpush.bf16.msra.mxu0 0
      %1066 = vmatpush.bf16.msra.mxu0 0
      %1067 = vmatpush.bf16.msra.mxu0 0
      %1068 = vmatpush.bf16.msra.mxu0 0
      %1069 = vmatpush.bf16.msra.mxu0 0
      %1070 = vmatpush.bf16.msra.mxu0 0
      %1071 = vmatpush.bf16.msra.mxu0 %v917
      %1072 = vmatpush.bf16.msra.mxu0 %v913
      %1073 = vmatmul.bf16.gmra.mxu0 %v1041
      %v1074 = vpop.f32.mrf.mxu0
      %v1075 = vadd.f32 %v983, %v1074
      %v1076 = vpop.f32.mrf.mxu0
      %v1077 = vadd.f32 %v985, %v1076
      %1078 = vmatmul.bf16.gmra.mxu0 %v1044
      %v1079 = vpop.f32.mrf.mxu0
      %v1080 = vadd.f32 %v988, %v1079
      %v1081 = vpop.f32.mrf.mxu0
      %v1082 = vadd.f32 %v990, %v1081
      %1083 = vdwg.mxu0
      %1084 = vmatpush.bf16.msra.mxu0 0
      %1085 = vmatpush.bf16.msra.mxu0 0
      %1086 = vmatpush.bf16.msra.mxu0 0
      %1087 = vmatpush.bf16.msra.mxu0 0
      %1088 = vmatpush.bf16.msra.mxu0 0
      %1089 = vmatpush.bf16.msra.mxu0 0
      %1090 = vmatpush.bf16.msra.mxu0 %v918
      %1091 = vmatpush.bf16.msra.mxu0 %v914
      %1092 = vmatmul.bf16.gmra.mxu0 %v1041
      %v1093 = vpop.f32.mrf.mxu0
      %v1094 = vadd.f32 %v1002, %v1093
      %v1095 = vpop.f32.mrf.mxu0
      %v1096 = vadd.f32 %v1004, %v1095
      %1097 = vmatmul.bf16.gmra.mxu0 %v1044
      %v1098 = vpop.f32.mrf.mxu0
      %v1099 = vadd.f32 %v1007, %v1098
      %v1100 = vpop.f32.mrf.mxu0
      %v1101 = vadd.f32 %v1009, %v1100
      %1102 = vdwg.mxu0
      %1103 = vmatpush.bf16.msra.mxu0 0
      %1104 = vmatpush.bf16.msra.mxu0 0
      %1105 = vmatpush.bf16.msra.mxu0 0
      %1106 = vmatpush.bf16.msra.mxu0 0
      %1107 = vmatpush.bf16.msra.mxu0 0
      %1108 = vmatpush.bf16.msra.mxu0 0
      %1109 = vmatpush.bf16.msra.mxu0 %v919
      %1110 = vmatpush.bf16.msra.mxu0 %v915
      %1111 = vmatmul.bf16.gmra.mxu0 %v1041
      %v1112 = vpop.f32.mrf.mxu0
      %v1113 = vadd.f32 %v1021, %v1112
      %v1114 = vpop.f32.mrf.mxu0
      %v1115 = vadd.f32 %v1023, %v1114
      %1116 = vmatmul.bf16.gmra.mxu0 %v1044
      %v1117 = vpop.f32.mrf.mxu0
      %v1118 = vadd.f32 %v1026, %v1117
      %v1119 = vpop.f32.mrf.mxu0
      %v1120 = vadd.f32 %v1028, %v1119
      %1121 = vdwg.mxu0
      %1122 = vrot.lane.b32.xlu0 %v667, 127
      %v1123 = vpop.permute.xlu0 %1122
      %1124 = vrot.lane.b32.xlu0 %v671, 127
      %v1125 = vpop.permute.xlu0 %1124
      %1126 = vrot.lane.b32.xlu0 %v675, 127
      %v1127 = vpop.permute.xlu0 %1126
      %1128 = vrot.lane.b32.xlu0 %v679, 127
      %v1129 = vpop.permute.xlu0 %1128
      %1130 = vrot.lane.b32.xlu0 %v668, 127
      %v1131 = vpop.permute.xlu0 %1130
      %1132 = vrot.lane.b32.xlu0 %v672, 127
      %v1133 = vpop.permute.xlu0 %1132
      %1134 = vrot.lane.b32.xlu0 %v676, 127
      %v1135 = vpop.permute.xlu0 %1134
      %1136 = vrot.lane.b32.xlu0 %v680, 127
      %v1137 = vpop.permute.xlu0 %1136
      %1138 = vrot.lane.b32.xlu0 %v669, 127
      %v1139 = vpop.permute.xlu0 %1138
      %1140 = vrot.lane.b32.xlu0 %v673, 127
      %v1141 = vpop.permute.xlu0 %1140
      %1142 = vrot.lane.b32.xlu0 %v677, 127
      %v1143 = vpop.permute.xlu0 %1142
      %1144 = vrot.lane.b32.xlu0 %v681, 127
      %v1145 = vpop.permute.xlu0 %1144
      %1146 = vrot.lane.b32.xlu0 %v670, 127
      %v1147 = vpop.permute.xlu0 %1146
      %1148 = vrot.lane.b32.xlu0 %v674, 127
      %v1149 = vpop.permute.xlu0 %1148
      %1150 = vrot.lane.b32.xlu0 %v678, 127
      %v1151 = vpop.permute.xlu0 %1150
      %1152 = vrot.lane.b32.xlu0 %v682, 127
      %v1153 = vpop.permute.xlu0 %1152
      %vm1154 = vcmp.lt.s32.totalorder %v869, 127
      %v1155 = vsel %vm1154, %v1139, %v1147
      %v1156 = vsel %vm1154, %v1141, %v1149
      %v1157 = vsel %vm1154, %v1143, %v1151
      %v1158 = vsel %vm1154, %v1145, %v1153
      %v1159 = vsel %vm1154, %v1131, %v1139
      %v1160 = vsel %vm1154, %v1133, %v1141
      %v1161 = vsel %vm1154, %v1135, %v1143
      %v1162 = vsel %vm1154, %v1137, %v1145
      %v1163 = vsel %vm1154, %v1123, %v1131
      %v1164 = vsel %vm1154, %v1125, %v1133
      %v1165 = vsel %vm1154, %v1127, %v1135
      %v1166 = vsel %vm1154, %v1129, %v1137
      %v1167 = vsel %vm1154, %v1147, %v1123
      %v1168 = vsel %vm1154, %v1149, %v1125
      %v1169 = vsel %vm1154, %v1151, %v1127
      %v1170 = vsel %vm1154, %v1153, %v1129
      %v1172 = vperm.slane %v488, 0
      %v1173 = vperm.slane %v488, 1
      %v1174 = vperm.slane %v488, 2
      %v1175 = vperm.slane %v488, 3
      %v1180 = vmul.f32 %v1163, %v1172
      %v1181 = vmul.f32 %v1159, %v1173
      %v1182 = vmul.f32 %v1155, %v1174
      %v1183 = vmul.f32 %v1167, %v1175
      %v1184 = vmul.f32 %v1164, %v1172
      %v1185 = vmul.f32 %v1160, %v1173
      %v1186 = vmul.f32 %v1156, %v1174
      %v1187 = vmul.f32 %v1168, %v1175
      %v1188 = vmul.f32 %v1165, %v1172
      %v1189 = vmul.f32 %v1161, %v1173
      %v1190 = vmul.f32 %v1157, %v1174
      %v1191 = vmul.f32 %v1169, %v1175
      %v1192 = vmul.f32 %v1166, %v1172
      %v1193 = vmul.f32 %v1162, %v1173
      %v1194 = vmul.f32 %v1158, %v1174
      %v1195 = vmul.f32 %v1170, %v1175
      %v1196 = vpack.c.bf16 %v1184, %v1180
      %v1197 = vpack.c.bf16 %v1185, %v1181
      %v1198 = vpack.c.bf16 %v1186, %v1182
      %v1199 = vpack.c.bf16 %v1187, %v1183
      %v1200 = vpack.c.bf16 %v1192, %v1188
      %v1201 = vpack.c.bf16 %v1193, %v1189
      %v1202 = vpack.c.bf16 %v1194, %v1190
      %v1203 = vpack.c.bf16 %v1195, %v1191
      %s1204 = scalar_lea.vmem %s5, 32
      %v1205 = vld [vmem:[%s1204] sm:$0xf]
      %v1206 = vld [vmem:[%s1204 + $0x4] sm:$0xf]
      %v1207 = vld [vmem:[%s1204 + $0x8] sm:$0xf]
      %v1208 = vld [vmem:[%s1204 + $0xc] sm:$0xf]
      %v1213 = vunpack.c.l.b16 %v1205
      %v1214 = vunpack.c.l.b16 %v1206
      %v1215 = vunpack.c.l.b16 %v1207
      %v1216 = vunpack.c.l.b16 %v1208
      %v1217 = vpack.c.b16 %v1214, %v1213
      %v1218 = vpack.c.b16 %v1216, %v1215
      %v1220 = vsel %vm947, %v1217, 0
      %v1223 = vsel %vm947, %v1218, 0
      %1225 = vmatpush.bf16.msra.mxu0 0
      %1226 = vmatpush.bf16.msra.mxu0 0
      %1227 = vmatpush.bf16.msra.mxu0 0
      %1228 = vmatpush.bf16.msra.mxu0 0
      %1229 = vmatpush.bf16.msra.mxu0 0
      %1230 = vmatpush.bf16.msra.mxu0 0
      %1231 = vmatpush.bf16.msra.mxu0 %v1200
      %1232 = vmatpush.bf16.msra.mxu0 %v1196
      %1233 = vmatmul.bf16.gmra.mxu0 %v1220
      %v1234 = vpop.f32.mrf.mxu0
      %v1235 = vadd.f32 0.0, %v1234
      %v1236 = vpop.f32.mrf.mxu0
      %v1237 = vadd.f32 0.0, %v1236
      %1238 = vmatmul.bf16.gmra.mxu0 %v1223
      %v1239 = vpop.f32.mrf.mxu0
      %v1240 = vadd.f32 0.0, %v1239
      %v1241 = vpop.f32.mrf.mxu0
      %v1242 = vadd.f32 0.0, %v1241
      %1243 = vdwg.mxu0
      %1244 = vmatpush.bf16.msra.mxu0 0
      %1245 = vmatpush.bf16.msra.mxu0 0
      %1246 = vmatpush.bf16.msra.mxu0 0
      %1247 = vmatpush.bf16.msra.mxu0 0
      %1248 = vmatpush.bf16.msra.mxu0 0
      %1249 = vmatpush.bf16.msra.mxu0 0
      %1250 = vmatpush.bf16.msra.mxu0 %v1201
      %1251 = vmatpush.bf16.msra.mxu0 %v1197
      %1252 = vmatmul.bf16.gmra.mxu0 %v1220
      %v1253 = vpop.f32.mrf.mxu0
      %v1254 = vadd.f32 0.0, %v1253
      %v1255 = vpop.f32.mrf.mxu0
      %v1256 = vadd.f32 0.0, %v1255
      %1257 = vmatmul.bf16.gmra.mxu0 %v1223
      %v1258 = vpop.f32.mrf.mxu0
      %v1259 = vadd.f32 0.0, %v1258
      %v1260 = vpop.f32.mrf.mxu0
      %v1261 = vadd.f32 0.0, %v1260
      %1262 = vdwg.mxu0
      %1263 = vmatpush.bf16.msra.mxu0 0
      %1264 = vmatpush.bf16.msra.mxu0 0
      %1265 = vmatpush.bf16.msra.mxu0 0
      %1266 = vmatpush.bf16.msra.mxu0 0
      %1267 = vmatpush.bf16.msra.mxu0 0
      %1268 = vmatpush.bf16.msra.mxu0 0
      %1269 = vmatpush.bf16.msra.mxu0 %v1202
      %1270 = vmatpush.bf16.msra.mxu0 %v1198
      %1271 = vmatmul.bf16.gmra.mxu0 %v1220
      %v1272 = vpop.f32.mrf.mxu0
      %v1273 = vadd.f32 0.0, %v1272
      %v1274 = vpop.f32.mrf.mxu0
      %v1275 = vadd.f32 0.0, %v1274
      %1276 = vmatmul.bf16.gmra.mxu0 %v1223
      %v1277 = vpop.f32.mrf.mxu0
      %v1278 = vadd.f32 0.0, %v1277
      %v1279 = vpop.f32.mrf.mxu0
      %v1280 = vadd.f32 0.0, %v1279
      %1281 = vdwg.mxu0
      %1282 = vmatpush.bf16.msra.mxu0 0
      %1283 = vmatpush.bf16.msra.mxu0 0
      %1284 = vmatpush.bf16.msra.mxu0 0
      %1285 = vmatpush.bf16.msra.mxu0 0
      %1286 = vmatpush.bf16.msra.mxu0 0
      %1287 = vmatpush.bf16.msra.mxu0 0
      %1288 = vmatpush.bf16.msra.mxu0 %v1203
      %1289 = vmatpush.bf16.msra.mxu0 %v1199
      %1290 = vmatmul.bf16.gmra.mxu0 %v1220
      %v1291 = vpop.f32.mrf.mxu0
      %v1292 = vadd.f32 0.0, %v1291
      %v1293 = vpop.f32.mrf.mxu0
      %v1294 = vadd.f32 0.0, %v1293
      %1295 = vmatmul.bf16.gmra.mxu0 %v1223
      %v1296 = vpop.f32.mrf.mxu0
      %v1297 = vadd.f32 0.0, %v1296
      %v1298 = vpop.f32.mrf.mxu0
      %v1299 = vadd.f32 0.0, %v1298
      %1300 = vdwg.mxu0
      %v1301 = vadd.f32 %v1056, %v1235
      %v1302 = vadd.f32 %v1075, %v1254
      %v1303 = vadd.f32 %v1094, %v1273
      %v1304 = vadd.f32 %v1113, %v1292
      %v1305 = vadd.f32 %v1058, %v1237
      %v1306 = vadd.f32 %v1077, %v1256
      %v1307 = vadd.f32 %v1096, %v1275
      %v1308 = vadd.f32 %v1115, %v1294
      %v1309 = vadd.f32 %v1061, %v1240
      %v1310 = vadd.f32 %v1080, %v1259
      %v1311 = vadd.f32 %v1099, %v1278
      %v1312 = vadd.f32 %v1118, %v1297
      %v1313 = vadd.f32 %v1063, %v1242
      %v1314 = vadd.f32 %v1082, %v1261
      %v1315 = vadd.f32 %v1101, %v1280
      %v1316 = vadd.f32 %v1120, %v1299
      %1317 = vrot.lane.b32.xlu0 %v602, 1
      %v1318 = vpop.permute.xlu0 %1317
      %1319 = vrot.lane.b32.xlu0 %v606, 1
      %v1320 = vpop.permute.xlu0 %1319
      %1321 = vrot.lane.b32.xlu0 %v610, 1
      %v1322 = vpop.permute.xlu0 %1321
      %1323 = vrot.lane.b32.xlu0 %v614, 1
      %v1324 = vpop.permute.xlu0 %1323
      %1325 = vrot.lane.b32.xlu0 %v603, 1
      %v1326 = vpop.permute.xlu0 %1325
      %1327 = vrot.lane.b32.xlu0 %v607, 1
      %v1328 = vpop.permute.xlu0 %1327
      %1329 = vrot.lane.b32.xlu0 %v611, 1
      %v1330 = vpop.permute.xlu0 %1329
      %1331 = vrot.lane.b32.xlu0 %v615, 1
      %v1332 = vpop.permute.xlu0 %1331
      %1333 = vrot.lane.b32.xlu0 %v604, 1
      %v1334 = vpop.permute.xlu0 %1333
      %1335 = vrot.lane.b32.xlu0 %v608, 1
      %v1336 = vpop.permute.xlu0 %1335
      %1337 = vrot.lane.b32.xlu0 %v612, 1
      %v1338 = vpop.permute.xlu0 %1337
      %1339 = vrot.lane.b32.xlu0 %v616, 1
      %v1340 = vpop.permute.xlu0 %1339
      %1341 = vrot.lane.b32.xlu0 %v605, 1
      %v1342 = vpop.permute.xlu0 %1341
      %1343 = vrot.lane.b32.xlu0 %v609, 1
      %v1344 = vpop.permute.xlu0 %1343
      %1345 = vrot.lane.b32.xlu0 %v613, 1
      %v1346 = vpop.permute.xlu0 %1345
      %1347 = vrot.lane.b32.xlu0 %v617, 1
      %v1348 = vpop.permute.xlu0 %1347
      %v1349 = vsel %vm870, %v1334, %v1342
      %v1350 = vsel %vm870, %v1336, %v1344
      %v1351 = vsel %vm870, %v1338, %v1346
      %v1352 = vsel %vm870, %v1340, %v1348
      %v1353 = vsel %vm870, %v1326, %v1334
      %v1354 = vsel %vm870, %v1328, %v1336
      %v1355 = vsel %vm870, %v1330, %v1338
      %v1356 = vsel %vm870, %v1332, %v1340
      %v1357 = vsel %vm870, %v1318, %v1326
      %v1358 = vsel %vm870, %v1320, %v1328
      %v1359 = vsel %vm870, %v1322, %v1330
      %v1360 = vsel %vm870, %v1324, %v1332
      %v1361 = vsel %vm870, %v1342, %v1318
      %v1362 = vsel %vm870, %v1344, %v1320
      %v1363 = vsel %vm870, %v1346, %v1322
      %v1364 = vsel %vm870, %v1348, %v1324
      %v1365 = vmul.f32 %v1361, %v888
      %v1366 = vmul.f32 %v1357, %v889
      %v1367 = vmul.f32 %v1353, %v890
      %v1368 = vmul.f32 %v1349, %v891
      %v1369 = vmul.f32 %v1362, %v888
      %v1370 = vmul.f32 %v1358, %v889
      %v1371 = vmul.f32 %v1354, %v890
      %v1372 = vmul.f32 %v1350, %v891
      %v1373 = vmul.f32 %v1363, %v888
      %v1374 = vmul.f32 %v1359, %v889
      %v1375 = vmul.f32 %v1355, %v890
      %v1376 = vmul.f32 %v1351, %v891
      %v1377 = vmul.f32 %v1364, %v888
      %v1378 = vmul.f32 %v1360, %v889
      %v1379 = vmul.f32 %v1356, %v890
      %v1380 = vmul.f32 %v1352, %v891
      %v1381 = vpack.c.bf16 %v1369, %v1365
      %v1382 = vpack.c.bf16 %v1370, %v1366
      %v1383 = vpack.c.bf16 %v1371, %v1367
      %v1384 = vpack.c.bf16 %v1372, %v1368
      %v1385 = vpack.c.bf16 %v1377, %v1373
      %v1386 = vpack.c.bf16 %v1378, %v1374
      %v1387 = vpack.c.bf16 %v1379, %v1375
      %v1388 = vpack.c.bf16 %v1380, %v1376
      %s1389 = scalar_lea.vmem %s5, 48
      %v1390 = vld [vmem:[%s1389] sm:$0xf]
      %v1391 = vld [vmem:[%s1389 + $0x4] sm:$0xf]
      %v1392 = vld [vmem:[%s1389 + $0x8] sm:$0xf]
      %v1393 = vld [vmem:[%s1389 + $0xc] sm:$0xf]
      %v1398 = vunpack.c.l.b16 %v1390
      %v1399 = vunpack.c.l.b16 %v1391
      %v1400 = vunpack.c.l.b16 %v1392
      %v1401 = vunpack.c.l.b16 %v1393
      %v1402 = vpack.c.b16 %v1399, %v1398
      %v1403 = vpack.c.b16 %v1401, %v1400
      %v1405 = vsel %vm947, %v1402, 0
      %v1408 = vsel %vm947, %v1403, 0
      %1410 = vmatpush.bf16.msra.mxu0 0
      %1411 = vmatpush.bf16.msra.mxu0 0
      %1412 = vmatpush.bf16.msra.mxu0 0
      %1413 = vmatpush.bf16.msra.mxu0 0
      %1414 = vmatpush.bf16.msra.mxu0 0
      %1415 = vmatpush.bf16.msra.mxu0 0
      %1416 = vmatpush.bf16.msra.mxu0 %v1385
      %1417 = vmatpush.bf16.msra.mxu0 %v1381
      %1418 = vmatmul.bf16.gmra.mxu0 %v1405
      %v1419 = vpop.f32.mrf.mxu0
      %v1420 = vadd.f32 0.0, %v1419
      %v1421 = vpop.f32.mrf.mxu0
      %v1422 = vadd.f32 0.0, %v1421
      %1423 = vmatmul.bf16.gmra.mxu0 %v1408
      %v1424 = vpop.f32.mrf.mxu0
      %v1425 = vadd.f32 0.0, %v1424
      %v1426 = vpop.f32.mrf.mxu0
      %v1427 = vadd.f32 0.0, %v1426
      %1428 = vdwg.mxu0
      %1429 = vmatpush.bf16.msra.mxu0 0
      %1430 = vmatpush.bf16.msra.mxu0 0
      %1431 = vmatpush.bf16.msra.mxu0 0
      %1432 = vmatpush.bf16.msra.mxu0 0
      %1433 = vmatpush.bf16.msra.mxu0 0
      %1434 = vmatpush.bf16.msra.mxu0 0
      %1435 = vmatpush.bf16.msra.mxu0 %v1386
      %1436 = vmatpush.bf16.msra.mxu0 %v1382
      %1437 = vmatmul.bf16.gmra.mxu0 %v1405
      %v1438 = vpop.f32.mrf.mxu0
      %v1439 = vadd.f32 0.0, %v1438
      %v1440 = vpop.f32.mrf.mxu0
      %v1441 = vadd.f32 0.0, %v1440
      %1442 = vmatmul.bf16.gmra.mxu0 %v1408
      %v1443 = vpop.f32.mrf.mxu0
      %v1444 = vadd.f32 0.0, %v1443
      %v1445 = vpop.f32.mrf.mxu0
      %v1446 = vadd.f32 0.0, %v1445
      %1447 = vdwg.mxu0
      %1448 = vmatpush.bf16.msra.mxu0 0
      %1449 = vmatpush.bf16.msra.mxu0 0
      %1450 = vmatpush.bf16.msra.mxu0 0
      %1451 = vmatpush.bf16.msra.mxu0 0
      %1452 = vmatpush.bf16.msra.mxu0 0
      %1453 = vmatpush.bf16.msra.mxu0 0
      %1454 = vmatpush.bf16.msra.mxu0 %v1387
      %1455 = vmatpush.bf16.msra.mxu0 %v1383
      %1456 = vmatmul.bf16.gmra.mxu0 %v1405
      %v1457 = vpop.f32.mrf.mxu0
      %v1458 = vadd.f32 0.0, %v1457
      %v1459 = vpop.f32.mrf.mxu0
      %v1460 = vadd.f32 0.0, %v1459
      %1461 = vmatmul.bf16.gmra.mxu0 %v1408
      %v1462 = vpop.f32.mrf.mxu0
      %v1463 = vadd.f32 0.0, %v1462
      %v1464 = vpop.f32.mrf.mxu0
      %v1465 = vadd.f32 0.0, %v1464
      %1466 = vdwg.mxu0
      %1467 = vmatpush.bf16.msra.mxu0 0
      %1468 = vmatpush.bf16.msra.mxu0 0
      %1469 = vmatpush.bf16.msra.mxu0 0
      %1470 = vmatpush.bf16.msra.mxu0 0
      %1471 = vmatpush.bf16.msra.mxu0 0
      %1472 = vmatpush.bf16.msra.mxu0 0
      %1473 = vmatpush.bf16.msra.mxu0 %v1388
      %1474 = vmatpush.bf16.msra.mxu0 %v1384
      %1475 = vmatmul.bf16.gmra.mxu0 %v1405
      %v1476 = vpop.f32.mrf.mxu0
      %v1477 = vadd.f32 0.0, %v1476
      %v1478 = vpop.f32.mrf.mxu0
      %v1479 = vadd.f32 0.0, %v1478
      %1480 = vmatmul.bf16.gmra.mxu0 %v1408
      %v1481 = vpop.f32.mrf.mxu0
      %v1482 = vadd.f32 0.0, %v1481
      %v1483 = vpop.f32.mrf.mxu0
      %v1484 = vadd.f32 0.0, %v1483
      %1485 = vdwg.mxu0
      %v1486 = vadd.f32 %v1301, %v1420
      %v1487 = vadd.f32 %v1302, %v1439
      %v1488 = vadd.f32 %v1303, %v1458
      %v1489 = vadd.f32 %v1304, %v1477
      %v1490 = vadd.f32 %v1305, %v1422
      %v1491 = vadd.f32 %v1306, %v1441
      %v1492 = vadd.f32 %v1307, %v1460
      %v1493 = vadd.f32 %v1308, %v1479
      %v1494 = vadd.f32 %v1309, %v1425
      %v1495 = vadd.f32 %v1310, %v1444
      %v1496 = vadd.f32 %v1311, %v1463
      %v1497 = vadd.f32 %v1312, %v1482
      %v1498 = vadd.f32 %v1313, %v1427
      %v1499 = vadd.f32 %v1314, %v1446
      %v1500 = vadd.f32 %v1315, %v1465
      %v1501 = vadd.f32 %v1316, %v1484
      %v1502 = vpack.c.bf16 %v606, %v602
      %v1503 = vpack.c.bf16 %v607, %v603
      %v1504 = vpack.c.bf16 %v608, %v604
      %v1505 = vpack.c.bf16 %v609, %v605
      %v1506 = vpack.c.bf16 %v614, %v610
      %v1507 = vpack.c.bf16 %v615, %v611
      %v1508 = vpack.c.bf16 %v616, %v612
      %v1509 = vpack.c.bf16 %v617, %v613
      %s1510 = scalar_lea.vmem %s5, 64
      %v1511 = vld [vmem:[%s1510] sm:$0xf]
      %v1512 = vld [vmem:[%s1510 + $0x4] sm:$0xf]
      %v1513 = vld [vmem:[%s1510 + $0x8] sm:$0xf]
      %v1514 = vld [vmem:[%s1510 + $0xc] sm:$0xf]
      %v1519 = vunpack.c.l.b16 %v1511
      %v1520 = vunpack.c.l.b16 %v1512
      %v1521 = vunpack.c.l.b16 %v1513
      %v1522 = vunpack.c.l.b16 %v1514
      %v1523 = vpack.c.b16 %v1520, %v1519
      %v1524 = vpack.c.b16 %v1522, %v1521
      %v1526 = vsel %vm947, %v1523, 0
      %v1529 = vsel %vm947, %v1524, 0
      %1531 = vmatpush.bf16.msra.mxu0 0
      %1532 = vmatpush.bf16.msra.mxu0 0
      %1533 = vmatpush.bf16.msra.mxu0 0
      %1534 = vmatpush.bf16.msra.mxu0 0
      %1535 = vmatpush.bf16.msra.mxu0 0
      %1536 = vmatpush.bf16.msra.mxu0 0
      %1537 = vmatpush.bf16.msra.mxu0 %v1506
      %1538 = vmatpush.bf16.msra.mxu0 %v1502
      %1539 = vmatmul.bf16.gmra.mxu0 %v1526
      %v1540 = vpop.f32.mrf.mxu0
      %v1541 = vadd.f32 0.0, %v1540
      %v1542 = vpop.f32.mrf.mxu0
      %v1543 = vadd.f32 0.0, %v1542
      %1544 = vmatmul.bf16.gmra.mxu0 %v1529
      %v1545 = vpop.f32.mrf.mxu0
      %v1546 = vadd.f32 0.0, %v1545
      %v1547 = vpop.f32.mrf.mxu0
      %v1548 = vadd.f32 0.0, %v1547
      %1549 = vdwg.mxu0
      %1550 = vmatpush.bf16.msra.mxu0 0
      %1551 = vmatpush.bf16.msra.mxu0 0
      %1552 = vmatpush.bf16.msra.mxu0 0
      %1553 = vmatpush.bf16.msra.mxu0 0
      %1554 = vmatpush.bf16.msra.mxu0 0
      %1555 = vmatpush.bf16.msra.mxu0 0
      %1556 = vmatpush.bf16.msra.mxu0 %v1507
      %1557 = vmatpush.bf16.msra.mxu0 %v1503
      %1558 = vmatmul.bf16.gmra.mxu0 %v1526
      %v1559 = vpop.f32.mrf.mxu0
      %v1560 = vadd.f32 0.0, %v1559
      %v1561 = vpop.f32.mrf.mxu0
      %v1562 = vadd.f32 0.0, %v1561
      %1563 = vmatmul.bf16.gmra.mxu0 %v1529
      %v1564 = vpop.f32.mrf.mxu0
      %v1565 = vadd.f32 0.0, %v1564
      %v1566 = vpop.f32.mrf.mxu0
      %v1567 = vadd.f32 0.0, %v1566
      %1568 = vdwg.mxu0
      %1569 = vmatpush.bf16.msra.mxu0 0
      %1570 = vmatpush.bf16.msra.mxu0 0
      %1571 = vmatpush.bf16.msra.mxu0 0
      %1572 = vmatpush.bf16.msra.mxu0 0
      %1573 = vmatpush.bf16.msra.mxu0 0
      %1574 = vmatpush.bf16.msra.mxu0 0
      %1575 = vmatpush.bf16.msra.mxu0 %v1508
      %1576 = vmatpush.bf16.msra.mxu0 %v1504
      %1577 = vmatmul.bf16.gmra.mxu0 %v1526
      %v1578 = vpop.f32.mrf.mxu0
      %v1579 = vadd.f32 0.0, %v1578
      %v1580 = vpop.f32.mrf.mxu0
      %v1581 = vadd.f32 0.0, %v1580
      %1582 = vmatmul.bf16.gmra.mxu0 %v1529
      %v1583 = vpop.f32.mrf.mxu0
      %v1584 = vadd.f32 0.0, %v1583
      %v1585 = vpop.f32.mrf.mxu0
      %v1586 = vadd.f32 0.0, %v1585
      %1587 = vdwg.mxu0
      %1588 = vmatpush.bf16.msra.mxu0 0
      %1589 = vmatpush.bf16.msra.mxu0 0
      %1590 = vmatpush.bf16.msra.mxu0 0
      %1591 = vmatpush.bf16.msra.mxu0 0
      %1592 = vmatpush.bf16.msra.mxu0 0
      %1593 = vmatpush.bf16.msra.mxu0 0
      %1594 = vmatpush.bf16.msra.mxu0 %v1509
      %1595 = vmatpush.bf16.msra.mxu0 %v1505
      %1596 = vmatmul.bf16.gmra.mxu0 %v1526
      %v1597 = vpop.f32.mrf.mxu0
      %v1598 = vadd.f32 0.0, %v1597
      %v1599 = vpop.f32.mrf.mxu0
      %v1600 = vadd.f32 0.0, %v1599
      %1601 = vmatmul.bf16.gmra.mxu0 %v1529
      %v1602 = vpop.f32.mrf.mxu0
      %v1603 = vadd.f32 0.0, %v1602
      %v1604 = vpop.f32.mrf.mxu0
      %v1605 = vadd.f32 0.0, %v1604
      %1606 = vdwg.mxu0
      %v1607 = vadd.f32 %v1486, %v1541
      %v1608 = vadd.f32 %v1487, %v1560
      %v1609 = vadd.f32 %v1488, %v1579
      %v1610 = vadd.f32 %v1489, %v1598
      %v1611 = vadd.f32 %v1490, %v1543
      %v1612 = vadd.f32 %v1491, %v1562
      %v1613 = vadd.f32 %v1492, %v1581
      %v1614 = vadd.f32 %v1493, %v1600
      %v1615 = vadd.f32 %v1494, %v1546
      %v1616 = vadd.f32 %v1495, %v1565
      %v1617 = vadd.f32 %v1496, %v1584
      %v1618 = vadd.f32 %v1497, %v1603
      %v1619 = vadd.f32 %v1498, %v1548
      %v1620 = vadd.f32 %v1499, %v1567
      %v1621 = vadd.f32 %v1500, %v1586
      %v1622 = vadd.f32 %v1501, %v1605
      %1623 = vrot.lane.b32.xlu0 %v602, 127
      %v1624 = vpop.permute.xlu0 %1623
      %1625 = vrot.lane.b32.xlu0 %v606, 127
      %v1626 = vpop.permute.xlu0 %1625
      %1627 = vrot.lane.b32.xlu0 %v610, 127
      %v1628 = vpop.permute.xlu0 %1627
      %1629 = vrot.lane.b32.xlu0 %v614, 127
      %v1630 = vpop.permute.xlu0 %1629
      %1631 = vrot.lane.b32.xlu0 %v603, 127
      %v1632 = vpop.permute.xlu0 %1631
      %1633 = vrot.lane.b32.xlu0 %v607, 127
      %v1634 = vpop.permute.xlu0 %1633
      %1635 = vrot.lane.b32.xlu0 %v611, 127
      %v1636 = vpop.permute.xlu0 %1635
      %1637 = vrot.lane.b32.xlu0 %v615, 127
      %v1638 = vpop.permute.xlu0 %1637
      %1639 = vrot.lane.b32.xlu0 %v604, 127
      %v1640 = vpop.permute.xlu0 %1639
      %1641 = vrot.lane.b32.xlu0 %v608, 127
      %v1642 = vpop.permute.xlu0 %1641
      %1643 = vrot.lane.b32.xlu0 %v612, 127
      %v1644 = vpop.permute.xlu0 %1643
      %1645 = vrot.lane.b32.xlu0 %v616, 127
      %v1646 = vpop.permute.xlu0 %1645
      %1647 = vrot.lane.b32.xlu0 %v605, 127
      %v1648 = vpop.permute.xlu0 %1647
      %1649 = vrot.lane.b32.xlu0 %v609, 127
      %v1650 = vpop.permute.xlu0 %1649
      %1651 = vrot.lane.b32.xlu0 %v613, 127
      %v1652 = vpop.permute.xlu0 %1651
      %1653 = vrot.lane.b32.xlu0 %v617, 127
      %v1654 = vpop.permute.xlu0 %1653
      %v1655 = vsel %vm1154, %v1640, %v1648
      %v1656 = vsel %vm1154, %v1642, %v1650
      %v1657 = vsel %vm1154, %v1644, %v1652
      %v1658 = vsel %vm1154, %v1646, %v1654
      %v1659 = vsel %vm1154, %v1632, %v1640
      %v1660 = vsel %vm1154, %v1634, %v1642
      %v1661 = vsel %vm1154, %v1636, %v1644
      %v1662 = vsel %vm1154, %v1638, %v1646
      %v1663 = vsel %vm1154, %v1624, %v1632
      %v1664 = vsel %vm1154, %v1626, %v1634
      %v1665 = vsel %vm1154, %v1628, %v1636
      %v1666 = vsel %vm1154, %v1630, %v1638
      %v1667 = vsel %vm1154, %v1648, %v1624
      %v1668 = vsel %vm1154, %v1650, %v1626
      %v1669 = vsel %vm1154, %v1652, %v1628
      %v1670 = vsel %vm1154, %v1654, %v1630
      %v1671 = vmul.f32 %v1663, %v1172
      %v1672 = vmul.f32 %v1659, %v1173
      %v1673 = vmul.f32 %v1655, %v1174
      %v1674 = vmul.f32 %v1667, %v1175
      %v1675 = vmul.f32 %v1664, %v1172
      %v1676 = vmul.f32 %v1660, %v1173
      %v1677 = vmul.f32 %v1656, %v1174
      %v1678 = vmul.f32 %v1668, %v1175
      %v1679 = vmul.f32 %v1665, %v1172
      %v1680 = vmul.f32 %v1661, %v1173
      %v1681 = vmul.f32 %v1657, %v1174
      %v1682 = vmul.f32 %v1669, %v1175
      %v1683 = vmul.f32 %v1666, %v1172
      %v1684 = vmul.f32 %v1662, %v1173
      %v1685 = vmul.f32 %v1658, %v1174
      %v1686 = vmul.f32 %v1670, %v1175
      %v1687 = vpack.c.bf16 %v1675, %v1671
      %v1688 = vpack.c.bf16 %v1676, %v1672
      %v1689 = vpack.c.bf16 %v1677, %v1673
      %v1690 = vpack.c.bf16 %v1678, %v1674
      %v1691 = vpack.c.bf16 %v1683, %v1679
      %v1692 = vpack.c.bf16 %v1684, %v1680
      %v1693 = vpack.c.bf16 %v1685, %v1681
      %v1694 = vpack.c.bf16 %v1686, %v1682
      %s1695 = scalar_lea.vmem %s5, 80
      %v1696 = vld [vmem:[%s1695] sm:$0xf]
      %v1697 = vld [vmem:[%s1695 + $0x4] sm:$0xf]
      %v1698 = vld [vmem:[%s1695 + $0x8] sm:$0xf]
      %v1699 = vld [vmem:[%s1695 + $0xc] sm:$0xf]
      %v1704 = vunpack.c.l.b16 %v1696
      %v1705 = vunpack.c.l.b16 %v1697
      %v1706 = vunpack.c.l.b16 %v1698
      %v1707 = vunpack.c.l.b16 %v1699
      %v1708 = vpack.c.b16 %v1705, %v1704
      %v1709 = vpack.c.b16 %v1707, %v1706
      %v1711 = vsel %vm947, %v1708, 0
      %v1714 = vsel %vm947, %v1709, 0
      %1716 = vmatpush.bf16.msra.mxu0 0
      %1717 = vmatpush.bf16.msra.mxu0 0
      %1718 = vmatpush.bf16.msra.mxu0 0
      %1719 = vmatpush.bf16.msra.mxu0 0
      %1720 = vmatpush.bf16.msra.mxu0 0
      %1721 = vmatpush.bf16.msra.mxu0 0
      %1722 = vmatpush.bf16.msra.mxu0 %v1691
      %1723 = vmatpush.bf16.msra.mxu0 %v1687
      %1724 = vmatmul.bf16.gmra.mxu0 %v1711
      %v1725 = vpop.f32.mrf.mxu0
      %v1726 = vadd.f32 0.0, %v1725
      %v1727 = vpop.f32.mrf.mxu0
      %v1728 = vadd.f32 0.0, %v1727
      %1729 = vmatmul.bf16.gmra.mxu0 %v1714
      %v1730 = vpop.f32.mrf.mxu0
      %v1731 = vadd.f32 0.0, %v1730
      %v1732 = vpop.f32.mrf.mxu0
      %v1733 = vadd.f32 0.0, %v1732
      %1734 = vdwg.mxu0
      %1735 = vmatpush.bf16.msra.mxu0 0
      %1736 = vmatpush.bf16.msra.mxu0 0
      %1737 = vmatpush.bf16.msra.mxu0 0
      %1738 = vmatpush.bf16.msra.mxu0 0
      %1739 = vmatpush.bf16.msra.mxu0 0
      %1740 = vmatpush.bf16.msra.mxu0 0
      %1741 = vmatpush.bf16.msra.mxu0 %v1692
      %1742 = vmatpush.bf16.msra.mxu0 %v1688
      %1743 = vmatmul.bf16.gmra.mxu0 %v1711
      %v1744 = vpop.f32.mrf.mxu0
      %v1745 = vadd.f32 0.0, %v1744
      %v1746 = vpop.f32.mrf.mxu0
      %v1747 = vadd.f32 0.0, %v1746
      %1748 = vmatmul.bf16.gmra.mxu0 %v1714
      %v1749 = vpop.f32.mrf.mxu0
      %v1750 = vadd.f32 0.0, %v1749
      %v1751 = vpop.f32.mrf.mxu0
      %v1752 = vadd.f32 0.0, %v1751
      %1753 = vdwg.mxu0
      %1754 = vmatpush.bf16.msra.mxu0 0
      %1755 = vmatpush.bf16.msra.mxu0 0
      %1756 = vmatpush.bf16.msra.mxu0 0
      %1757 = vmatpush.bf16.msra.mxu0 0
      %1758 = vmatpush.bf16.msra.mxu0 0
      %1759 = vmatpush.bf16.msra.mxu0 0
      %1760 = vmatpush.bf16.msra.mxu0 %v1693
      %1761 = vmatpush.bf16.msra.mxu0 %v1689
      %1762 = vmatmul.bf16.gmra.mxu0 %v1711
      %v1763 = vpop.f32.mrf.mxu0
      %v1764 = vadd.f32 0.0, %v1763
      %v1765 = vpop.f32.mrf.mxu0
      %v1766 = vadd.f32 0.0, %v1765
      %1767 = vmatmul.bf16.gmra.mxu0 %v1714
      %v1768 = vpop.f32.mrf.mxu0
      %v1769 = vadd.f32 0.0, %v1768
      %v1770 = vpop.f32.mrf.mxu0
      %v1771 = vadd.f32 0.0, %v1770
      %1772 = vdwg.mxu0
      %1773 = vmatpush.bf16.msra.mxu0 0
      %1774 = vmatpush.bf16.msra.mxu0 0
      %1775 = vmatpush.bf16.msra.mxu0 0
      %1776 = vmatpush.bf16.msra.mxu0 0
      %1777 = vmatpush.bf16.msra.mxu0 0
      %1778 = vmatpush.bf16.msra.mxu0 0
      %1779 = vmatpush.bf16.msra.mxu0 %v1694
      %1780 = vmatpush.bf16.msra.mxu0 %v1690
      %1781 = vmatmul.bf16.gmra.mxu0 %v1711
      %v1782 = vpop.f32.mrf.mxu0
      %v1783 = vadd.f32 0.0, %v1782
      %v1784 = vpop.f32.mrf.mxu0
      %v1785 = vadd.f32 0.0, %v1784
      %1786 = vmatmul.bf16.gmra.mxu0 %v1714
      %v1787 = vpop.f32.mrf.mxu0
      %v1788 = vadd.f32 0.0, %v1787
      %v1789 = vpop.f32.mrf.mxu0
      %v1790 = vadd.f32 0.0, %v1789
      %1791 = vdwg.mxu0
      %v1792 = vadd.f32 %v1607, %v1726
      %v1793 = vadd.f32 %v1608, %v1745
      %v1794 = vadd.f32 %v1609, %v1764
      %v1795 = vadd.f32 %v1610, %v1783
      %v1796 = vadd.f32 %v1611, %v1728
      %v1797 = vadd.f32 %v1612, %v1747
      %v1798 = vadd.f32 %v1613, %v1766
      %v1799 = vadd.f32 %v1614, %v1785
      %v1800 = vadd.f32 %v1615, %v1731
      %v1801 = vadd.f32 %v1616, %v1750
      %v1802 = vadd.f32 %v1617, %v1769
      %v1803 = vadd.f32 %v1618, %v1788
      %v1804 = vadd.f32 %v1619, %v1733
      %v1805 = vadd.f32 %v1620, %v1752
      %v1806 = vadd.f32 %v1621, %v1771
      %v1807 = vadd.f32 %v1622, %v1790
      %1808 = vrot.lane.b32.xlu0 %v732, 1
      %v1809 = vpop.permute.xlu0 %1808
      %1810 = vrot.lane.b32.xlu0 %v736, 1
      %v1811 = vpop.permute.xlu0 %1810
      %1812 = vrot.lane.b32.xlu0 %v740, 1
      %v1813 = vpop.permute.xlu0 %1812
      %1814 = vrot.lane.b32.xlu0 %v744, 1
      %v1815 = vpop.permute.xlu0 %1814
      %1816 = vrot.lane.b32.xlu0 %v733, 1
      %v1817 = vpop.permute.xlu0 %1816
      %1818 = vrot.lane.b32.xlu0 %v737, 1
      %v1819 = vpop.permute.xlu0 %1818
      %1820 = vrot.lane.b32.xlu0 %v741, 1
      %v1821 = vpop.permute.xlu0 %1820
      %1822 = vrot.lane.b32.xlu0 %v745, 1
      %v1823 = vpop.permute.xlu0 %1822
      %1824 = vrot.lane.b32.xlu0 %v734, 1
      %v1825 = vpop.permute.xlu0 %1824
      %1826 = vrot.lane.b32.xlu0 %v738, 1
      %v1827 = vpop.permute.xlu0 %1826
      %1828 = vrot.lane.b32.xlu0 %v742, 1
      %v1829 = vpop.permute.xlu0 %1828
      %1830 = vrot.lane.b32.xlu0 %v746, 1
      %v1831 = vpop.permute.xlu0 %1830
      %1832 = vrot.lane.b32.xlu0 %v735, 1
      %v1833 = vpop.permute.xlu0 %1832
      %1834 = vrot.lane.b32.xlu0 %v739, 1
      %v1835 = vpop.permute.xlu0 %1834
      %1836 = vrot.lane.b32.xlu0 %v743, 1
      %v1837 = vpop.permute.xlu0 %1836
      %1838 = vrot.lane.b32.xlu0 %v747, 1
      %v1839 = vpop.permute.xlu0 %1838
      %v1840 = vsel %vm870, %v1825, %v1833
      %v1841 = vsel %vm870, %v1827, %v1835
      %v1842 = vsel %vm870, %v1829, %v1837
      %v1843 = vsel %vm870, %v1831, %v1839
      %v1844 = vsel %vm870, %v1817, %v1825
      %v1845 = vsel %vm870, %v1819, %v1827
      %v1846 = vsel %vm870, %v1821, %v1829
      %v1847 = vsel %vm870, %v1823, %v1831
      %v1848 = vsel %vm870, %v1809, %v1817
      %v1849 = vsel %vm870, %v1811, %v1819
      %v1850 = vsel %vm870, %v1813, %v1821
      %v1851 = vsel %vm870, %v1815, %v1823
      %v1852 = vsel %vm870, %v1833, %v1809
      %v1853 = vsel %vm870, %v1835, %v1811
      %v1854 = vsel %vm870, %v1837, %v1813
      %v1855 = vsel %vm870, %v1839, %v1815
      %v1856 = vmul.f32 %v1852, %v888
      %v1857 = vmul.f32 %v1848, %v889
      %v1858 = vmul.f32 %v1844, %v890
      %v1859 = vmul.f32 %v1840, %v891
      %v1860 = vmul.f32 %v1853, %v888
      %v1861 = vmul.f32 %v1849, %v889
      %v1862 = vmul.f32 %v1845, %v890
      %v1863 = vmul.f32 %v1841, %v891
      %v1864 = vmul.f32 %v1854, %v888
      %v1865 = vmul.f32 %v1850, %v889
      %v1866 = vmul.f32 %v1846, %v890
      %v1867 = vmul.f32 %v1842, %v891
      %v1868 = vmul.f32 %v1855, %v888
      %v1869 = vmul.f32 %v1851, %v889
      %v1870 = vmul.f32 %v1847, %v890
      %v1871 = vmul.f32 %v1843, %v891
      %v1872 = vpack.c.bf16 %v1860, %v1856
      %v1873 = vpack.c.bf16 %v1861, %v1857
      %v1874 = vpack.c.bf16 %v1862, %v1858
      %v1875 = vpack.c.bf16 %v1863, %v1859
      %v1876 = vpack.c.bf16 %v1868, %v1864
      %v1877 = vpack.c.bf16 %v1869, %v1865
      %v1878 = vpack.c.bf16 %v1870, %v1866
      %v1879 = vpack.c.bf16 %v1871, %v1867
      %s1880 = scalar_lea.vmem %s5, 96
      %v1881 = vld [vmem:[%s1880] sm:$0xf]
      %v1882 = vld [vmem:[%s1880 + $0x4] sm:$0xf]
      %v1883 = vld [vmem:[%s1880 + $0x8] sm:$0xf]
      %v1884 = vld [vmem:[%s1880 + $0xc] sm:$0xf]
      %v1889 = vunpack.c.l.b16 %v1881
      %v1890 = vunpack.c.l.b16 %v1882
      %v1891 = vunpack.c.l.b16 %v1883
      %v1892 = vunpack.c.l.b16 %v1884
      %v1893 = vpack.c.b16 %v1890, %v1889
      %v1894 = vpack.c.b16 %v1892, %v1891
      %v1896 = vsel %vm947, %v1893, 0
      %v1899 = vsel %vm947, %v1894, 0
      %1901 = vmatpush.bf16.msra.mxu0 0
      %1902 = vmatpush.bf16.msra.mxu0 0
      %1903 = vmatpush.bf16.msra.mxu0 0
      %1904 = vmatpush.bf16.msra.mxu0 0
      %1905 = vmatpush.bf16.msra.mxu0 0
      %1906 = vmatpush.bf16.msra.mxu0 0
      %1907 = vmatpush.bf16.msra.mxu0 %v1876
      %1908 = vmatpush.bf16.msra.mxu0 %v1872
      %1909 = vmatmul.bf16.gmra.mxu0 %v1896
      %v1910 = vpop.f32.mrf.mxu0
      %v1911 = vadd.f32 0.0, %v1910
      %v1912 = vpop.f32.mrf.mxu0
      %v1913 = vadd.f32 0.0, %v1912
      %1914 = vmatmul.bf16.gmra.mxu0 %v1899
      %v1915 = vpop.f32.mrf.mxu0
      %v1916 = vadd.f32 0.0, %v1915
      %v1917 = vpop.f32.mrf.mxu0
      %v1918 = vadd.f32 0.0, %v1917
      %1919 = vdwg.mxu0
      %1920 = vmatpush.bf16.msra.mxu0 0
      %1921 = vmatpush.bf16.msra.mxu0 0
      %1922 = vmatpush.bf16.msra.mxu0 0
      %1923 = vmatpush.bf16.msra.mxu0 0
      %1924 = vmatpush.bf16.msra.mxu0 0
      %1925 = vmatpush.bf16.msra.mxu0 0
      %1926 = vmatpush.bf16.msra.mxu0 %v1877
      %1927 = vmatpush.bf16.msra.mxu0 %v1873
      %1928 = vmatmul.bf16.gmra.mxu0 %v1896
      %v1929 = vpop.f32.mrf.mxu0
      %v1930 = vadd.f32 0.0, %v1929
      %v1931 = vpop.f32.mrf.mxu0
      %v1932 = vadd.f32 0.0, %v1931
      %1933 = vmatmul.bf16.gmra.mxu0 %v1899
      %v1934 = vpop.f32.mrf.mxu0
      %v1935 = vadd.f32 0.0, %v1934
      %v1936 = vpop.f32.mrf.mxu0
      %v1937 = vadd.f32 0.0, %v1936
      %1938 = vdwg.mxu0
      %1939 = vmatpush.bf16.msra.mxu0 0
      %1940 = vmatpush.bf16.msra.mxu0 0
      %1941 = vmatpush.bf16.msra.mxu0 0
      %1942 = vmatpush.bf16.msra.mxu0 0
      %1943 = vmatpush.bf16.msra.mxu0 0
      %1944 = vmatpush.bf16.msra.mxu0 0
      %1945 = vmatpush.bf16.msra.mxu0 %v1878
      %1946 = vmatpush.bf16.msra.mxu0 %v1874
      %1947 = vmatmul.bf16.gmra.mxu0 %v1896
      %v1948 = vpop.f32.mrf.mxu0
      %v1949 = vadd.f32 0.0, %v1948
      %v1950 = vpop.f32.mrf.mxu0
      %v1951 = vadd.f32 0.0, %v1950
      %1952 = vmatmul.bf16.gmra.mxu0 %v1899
      %v1953 = vpop.f32.mrf.mxu0
      %v1954 = vadd.f32 0.0, %v1953
      %v1955 = vpop.f32.mrf.mxu0
      %v1956 = vadd.f32 0.0, %v1955
      %1957 = vdwg.mxu0
      %1958 = vmatpush.bf16.msra.mxu0 0
      %1959 = vmatpush.bf16.msra.mxu0 0
      %1960 = vmatpush.bf16.msra.mxu0 0
      %1961 = vmatpush.bf16.msra.mxu0 0
      %1962 = vmatpush.bf16.msra.mxu0 0
      %1963 = vmatpush.bf16.msra.mxu0 0
      %1964 = vmatpush.bf16.msra.mxu0 %v1879
      %1965 = vmatpush.bf16.msra.mxu0 %v1875
      %1966 = vmatmul.bf16.gmra.mxu0 %v1896
      %v1967 = vpop.f32.mrf.mxu0
      %v1968 = vadd.f32 0.0, %v1967
      %v1969 = vpop.f32.mrf.mxu0
      %v1970 = vadd.f32 0.0, %v1969
      %1971 = vmatmul.bf16.gmra.mxu0 %v1899
      %v1972 = vpop.f32.mrf.mxu0
      %v1973 = vadd.f32 0.0, %v1972
      %v1974 = vpop.f32.mrf.mxu0
      %v1975 = vadd.f32 0.0, %v1974
      %1976 = vdwg.mxu0
      %v1977 = vadd.f32 %v1792, %v1911
      %v1978 = vadd.f32 %v1793, %v1930
      %v1979 = vadd.f32 %v1794, %v1949
      %v1980 = vadd.f32 %v1795, %v1968
      %v1981 = vadd.f32 %v1796, %v1913
      %v1982 = vadd.f32 %v1797, %v1932
      %v1983 = vadd.f32 %v1798, %v1951
      %v1984 = vadd.f32 %v1799, %v1970
      %v1985 = vadd.f32 %v1800, %v1916
      %v1986 = vadd.f32 %v1801, %v1935
      %v1987 = vadd.f32 %v1802, %v1954
      %v1988 = vadd.f32 %v1803, %v1973
      %v1989 = vadd.f32 %v1804, %v1918
      %v1990 = vadd.f32 %v1805, %v1937
      %v1991 = vadd.f32 %v1806, %v1956
      %v1992 = vadd.f32 %v1807, %v1975
      %v1993 = vpack.c.bf16 %v736, %v732
      %v1994 = vpack.c.bf16 %v737, %v733
      %v1995 = vpack.c.bf16 %v738, %v734
      %v1996 = vpack.c.bf16 %v739, %v735
      %v1997 = vpack.c.bf16 %v744, %v740
      %v1998 = vpack.c.bf16 %v745, %v741
      %v1999 = vpack.c.bf16 %v746, %v742
      %v2000 = vpack.c.bf16 %v747, %v743
      %s2001 = scalar_lea.vmem %s5, 112
      %v2002 = vld [vmem:[%s2001] sm:$0xf]
      %v2003 = vld [vmem:[%s2001 + $0x4] sm:$0xf]
      %v2004 = vld [vmem:[%s2001 + $0x8] sm:$0xf]
      %v2005 = vld [vmem:[%s2001 + $0xc] sm:$0xf]
      %v2010 = vunpack.c.l.b16 %v2002
      %v2011 = vunpack.c.l.b16 %v2003
      %v2012 = vunpack.c.l.b16 %v2004
      %v2013 = vunpack.c.l.b16 %v2005
      %v2014 = vpack.c.b16 %v2011, %v2010
      %v2015 = vpack.c.b16 %v2013, %v2012
      %v2017 = vsel %vm947, %v2014, 0
      %v2020 = vsel %vm947, %v2015, 0
      %2022 = vmatpush.bf16.msra.mxu0 0
      %2023 = vmatpush.bf16.msra.mxu0 0
      %2024 = vmatpush.bf16.msra.mxu0 0
      %2025 = vmatpush.bf16.msra.mxu0 0
      %2026 = vmatpush.bf16.msra.mxu0 0
      %2027 = vmatpush.bf16.msra.mxu0 0
      %2028 = vmatpush.bf16.msra.mxu0 %v1997
      %2029 = vmatpush.bf16.msra.mxu0 %v1993
      %2030 = vmatmul.bf16.gmra.mxu0 %v2017
      %v2031 = vpop.f32.mrf.mxu0
      %v2032 = vadd.f32 0.0, %v2031
      %v2033 = vpop.f32.mrf.mxu0
      %v2034 = vadd.f32 0.0, %v2033
      %2035 = vmatmul.bf16.gmra.mxu0 %v2020
      %v2036 = vpop.f32.mrf.mxu0
      %v2037 = vadd.f32 0.0, %v2036
      %v2038 = vpop.f32.mrf.mxu0
      %v2039 = vadd.f32 0.0, %v2038
      %2040 = vdwg.mxu0
      %2041 = vmatpush.bf16.msra.mxu0 0
      %2042 = vmatpush.bf16.msra.mxu0 0
      %2043 = vmatpush.bf16.msra.mxu0 0
      %2044 = vmatpush.bf16.msra.mxu0 0
      %2045 = vmatpush.bf16.msra.mxu0 0
      %2046 = vmatpush.bf16.msra.mxu0 0
      %2047 = vmatpush.bf16.msra.mxu0 %v1998
      %2048 = vmatpush.bf16.msra.mxu0 %v1994
      %2049 = vmatmul.bf16.gmra.mxu0 %v2017
      %v2050 = vpop.f32.mrf.mxu0
      %v2051 = vadd.f32 0.0, %v2050
      %v2052 = vpop.f32.mrf.mxu0
      %v2053 = vadd.f32 0.0, %v2052
      %2054 = vmatmul.bf16.gmra.mxu0 %v2020
      %v2055 = vpop.f32.mrf.mxu0
      %v2056 = vadd.f32 0.0, %v2055
      %v2057 = vpop.f32.mrf.mxu0
      %v2058 = vadd.f32 0.0, %v2057
      %2059 = vdwg.mxu0
      %2060 = vmatpush.bf16.msra.mxu0 0
      %2061 = vmatpush.bf16.msra.mxu0 0
      %2062 = vmatpush.bf16.msra.mxu0 0
      %2063 = vmatpush.bf16.msra.mxu0 0
      %2064 = vmatpush.bf16.msra.mxu0 0
      %2065 = vmatpush.bf16.msra.mxu0 0
      %2066 = vmatpush.bf16.msra.mxu0 %v1999
      %2067 = vmatpush.bf16.msra.mxu0 %v1995
      %2068 = vmatmul.bf16.gmra.mxu0 %v2017
      %v2069 = vpop.f32.mrf.mxu0
      %v2070 = vadd.f32 0.0, %v2069
      %v2071 = vpop.f32.mrf.mxu0
      %v2072 = vadd.f32 0.0, %v2071
      %2073 = vmatmul.bf16.gmra.mxu0 %v2020
      %v2074 = vpop.f32.mrf.mxu0
      %v2075 = vadd.f32 0.0, %v2074
      %v2076 = vpop.f32.mrf.mxu0
      %v2077 = vadd.f32 0.0, %v2076
      %2078 = vdwg.mxu0
      %2079 = vmatpush.bf16.msra.mxu0 0
      %2080 = vmatpush.bf16.msra.mxu0 0
      %2081 = vmatpush.bf16.msra.mxu0 0
      %2082 = vmatpush.bf16.msra.mxu0 0
      %2083 = vmatpush.bf16.msra.mxu0 0
      %2084 = vmatpush.bf16.msra.mxu0 0
      %2085 = vmatpush.bf16.msra.mxu0 %v2000
      %2086 = vmatpush.bf16.msra.mxu0 %v1996
      %2087 = vmatmul.bf16.gmra.mxu0 %v2017
      %v2088 = vpop.f32.mrf.mxu0
      %v2089 = vadd.f32 0.0, %v2088
      %v2090 = vpop.f32.mrf.mxu0
      %v2091 = vadd.f32 0.0, %v2090
      %2092 = vmatmul.bf16.gmra.mxu0 %v2020
      %v2093 = vpop.f32.mrf.mxu0
      %v2094 = vadd.f32 0.0, %v2093
      %v2095 = vpop.f32.mrf.mxu0
      %v2096 = vadd.f32 0.0, %v2095
      %2097 = vdwg.mxu0
      %v2098 = vadd.f32 %v1977, %v2032
      %v2099 = vadd.f32 %v1978, %v2051
      %v2100 = vadd.f32 %v1979, %v2070
      %v2101 = vadd.f32 %v1980, %v2089
      %v2102 = vadd.f32 %v1981, %v2034
      %v2103 = vadd.f32 %v1982, %v2053
      %v2104 = vadd.f32 %v1983, %v2072
      %v2105 = vadd.f32 %v1984, %v2091
      %v2106 = vadd.f32 %v1985, %v2037
      %v2107 = vadd.f32 %v1986, %v2056
      %v2108 = vadd.f32 %v1987, %v2075
      %v2109 = vadd.f32 %v1988, %v2094
      %v2110 = vadd.f32 %v1989, %v2039
      %v2111 = vadd.f32 %v1990, %v2058
      %v2112 = vadd.f32 %v1991, %v2077
      %v2113 = vadd.f32 %v1992, %v2096
      %2114 = vrot.lane.b32.xlu0 %v732, 127
      %v2115 = vpop.permute.xlu0 %2114
      %2116 = vrot.lane.b32.xlu0 %v736, 127
      %v2117 = vpop.permute.xlu0 %2116
      %2118 = vrot.lane.b32.xlu0 %v740, 127
      %v2119 = vpop.permute.xlu0 %2118
      %2120 = vrot.lane.b32.xlu0 %v744, 127
      %v2121 = vpop.permute.xlu0 %2120
      %2122 = vrot.lane.b32.xlu0 %v733, 127
      %v2123 = vpop.permute.xlu0 %2122
      %2124 = vrot.lane.b32.xlu0 %v737, 127
      %v2125 = vpop.permute.xlu0 %2124
      %2126 = vrot.lane.b32.xlu0 %v741, 127
      %v2127 = vpop.permute.xlu0 %2126
      %2128 = vrot.lane.b32.xlu0 %v745, 127
      %v2129 = vpop.permute.xlu0 %2128
      %2130 = vrot.lane.b32.xlu0 %v734, 127
      %v2131 = vpop.permute.xlu0 %2130
      %2132 = vrot.lane.b32.xlu0 %v738, 127
      %v2133 = vpop.permute.xlu0 %2132
      %2134 = vrot.lane.b32.xlu0 %v742, 127
      %v2135 = vpop.permute.xlu0 %2134
      %2136 = vrot.lane.b32.xlu0 %v746, 127
      %v2137 = vpop.permute.xlu0 %2136
      %2138 = vrot.lane.b32.xlu0 %v735, 127
      %v2139 = vpop.permute.xlu0 %2138
      %2140 = vrot.lane.b32.xlu0 %v739, 127
      %v2141 = vpop.permute.xlu0 %2140
      %2142 = vrot.lane.b32.xlu0 %v743, 127
      %v2143 = vpop.permute.xlu0 %2142
      %2144 = vrot.lane.b32.xlu0 %v747, 127
      %v2145 = vpop.permute.xlu0 %2144
      %v2146 = vsel %vm1154, %v2131, %v2139
      %v2147 = vsel %vm1154, %v2133, %v2141
      %v2148 = vsel %vm1154, %v2135, %v2143
      %v2149 = vsel %vm1154, %v2137, %v2145
      %v2150 = vsel %vm1154, %v2123, %v2131
      %v2151 = vsel %vm1154, %v2125, %v2133
      %v2152 = vsel %vm1154, %v2127, %v2135
      %v2153 = vsel %vm1154, %v2129, %v2137
      %v2154 = vsel %vm1154, %v2115, %v2123
      %v2155 = vsel %vm1154, %v2117, %v2125
      %v2156 = vsel %vm1154, %v2119, %v2127
      %v2157 = vsel %vm1154, %v2121, %v2129
      %v2158 = vsel %vm1154, %v2139, %v2115
      %v2159 = vsel %vm1154, %v2141, %v2117
      %v2160 = vsel %vm1154, %v2143, %v2119
      %v2161 = vsel %vm1154, %v2145, %v2121
      %v2162 = vmul.f32 %v2154, %v1172
      %v2163 = vmul.f32 %v2150, %v1173
      %v2164 = vmul.f32 %v2146, %v1174
      %v2165 = vmul.f32 %v2158, %v1175
      %v2166 = vmul.f32 %v2155, %v1172
      %v2167 = vmul.f32 %v2151, %v1173
      %v2168 = vmul.f32 %v2147, %v1174
      %v2169 = vmul.f32 %v2159, %v1175
      %v2170 = vmul.f32 %v2156, %v1172
      %v2171 = vmul.f32 %v2152, %v1173
      %v2172 = vmul.f32 %v2148, %v1174
      %v2173 = vmul.f32 %v2160, %v1175
      %v2174 = vmul.f32 %v2157, %v1172
      %v2175 = vmul.f32 %v2153, %v1173
      %v2176 = vmul.f32 %v2149, %v1174
      %v2177 = vmul.f32 %v2161, %v1175
      %v2178 = vpack.c.bf16 %v2166, %v2162
      %v2179 = vpack.c.bf16 %v2167, %v2163
      %v2180 = vpack.c.bf16 %v2168, %v2164
      %v2181 = vpack.c.bf16 %v2169, %v2165
      %v2182 = vpack.c.bf16 %v2174, %v2170
      %v2183 = vpack.c.bf16 %v2175, %v2171
      %v2184 = vpack.c.bf16 %v2176, %v2172
      %v2185 = vpack.c.bf16 %v2177, %v2173
      %s2186 = scalar_lea.vmem %s5, 128
      %v2187 = vld [vmem:[%s2186] sm:$0xf]
      %v2188 = vld [vmem:[%s2186 + $0x4] sm:$0xf]
      %v2189 = vld [vmem:[%s2186 + $0x8] sm:$0xf]
      %v2190 = vld [vmem:[%s2186 + $0xc] sm:$0xf]
      %v2195 = vunpack.c.l.b16 %v2187
      %v2196 = vunpack.c.l.b16 %v2188
      %v2197 = vunpack.c.l.b16 %v2189
      %v2198 = vunpack.c.l.b16 %v2190
      %v2199 = vpack.c.b16 %v2196, %v2195
      %v2200 = vpack.c.b16 %v2198, %v2197
      %v2202 = vsel %vm947, %v2199, 0
      %v2205 = vsel %vm947, %v2200, 0
      %2207 = vmatpush.bf16.msra.mxu0 0
      %2208 = vmatpush.bf16.msra.mxu0 0
      %2209 = vmatpush.bf16.msra.mxu0 0
      %2210 = vmatpush.bf16.msra.mxu0 0
      %2211 = vmatpush.bf16.msra.mxu0 0
      %2212 = vmatpush.bf16.msra.mxu0 0
      %2213 = vmatpush.bf16.msra.mxu0 %v2182
      %2214 = vmatpush.bf16.msra.mxu0 %v2178
      %2215 = vmatmul.bf16.gmra.mxu0 %v2202
      %v2216 = vpop.f32.mrf.mxu0
      %v2217 = vadd.f32 0.0, %v2216
      %v2218 = vpop.f32.mrf.mxu0
      %v2219 = vadd.f32 0.0, %v2218
      %2220 = vmatmul.bf16.gmra.mxu0 %v2205
      %v2221 = vpop.f32.mrf.mxu0
      %v2222 = vadd.f32 0.0, %v2221
      %v2223 = vpop.f32.mrf.mxu0
      %v2224 = vadd.f32 0.0, %v2223
      %2225 = vdwg.mxu0
      %2226 = vmatpush.bf16.msra.mxu0 0
      %2227 = vmatpush.bf16.msra.mxu0 0
      %2228 = vmatpush.bf16.msra.mxu0 0
      %2229 = vmatpush.bf16.msra.mxu0 0
      %2230 = vmatpush.bf16.msra.mxu0 0
      %2231 = vmatpush.bf16.msra.mxu0 0
      %2232 = vmatpush.bf16.msra.mxu0 %v2183
      %2233 = vmatpush.bf16.msra.mxu0 %v2179
      %2234 = vmatmul.bf16.gmra.mxu0 %v2202
      %v2235 = vpop.f32.mrf.mxu0
      %v2236 = vadd.f32 0.0, %v2235
      %v2237 = vpop.f32.mrf.mxu0
      %v2238 = vadd.f32 0.0, %v2237
      %2239 = vmatmul.bf16.gmra.mxu0 %v2205
      %v2240 = vpop.f32.mrf.mxu0
      %v2241 = vadd.f32 0.0, %v2240
      %v2242 = vpop.f32.mrf.mxu0
      %v2243 = vadd.f32 0.0, %v2242
      %2244 = vdwg.mxu0
      %2245 = vmatpush.bf16.msra.mxu0 0
      %2246 = vmatpush.bf16.msra.mxu0 0
      %2247 = vmatpush.bf16.msra.mxu0 0
      %2248 = vmatpush.bf16.msra.mxu0 0
      %2249 = vmatpush.bf16.msra.mxu0 0
      %2250 = vmatpush.bf16.msra.mxu0 0
      %2251 = vmatpush.bf16.msra.mxu0 %v2184
      %2252 = vmatpush.bf16.msra.mxu0 %v2180
      %2253 = vmatmul.bf16.gmra.mxu0 %v2202
      %v2254 = vpop.f32.mrf.mxu0
      %v2255 = vadd.f32 0.0, %v2254
      %v2256 = vpop.f32.mrf.mxu0
      %v2257 = vadd.f32 0.0, %v2256
      %2258 = vmatmul.bf16.gmra.mxu0 %v2205
      %v2259 = vpop.f32.mrf.mxu0
      %v2260 = vadd.f32 0.0, %v2259
      %v2261 = vpop.f32.mrf.mxu0
      %v2262 = vadd.f32 0.0, %v2261
      %2263 = vdwg.mxu0
      %2264 = vmatpush.bf16.msra.mxu0 0
      %2265 = vmatpush.bf16.msra.mxu0 0
      %2266 = vmatpush.bf16.msra.mxu0 0
      %2267 = vmatpush.bf16.msra.mxu0 0
      %2268 = vmatpush.bf16.msra.mxu0 0
      %2269 = vmatpush.bf16.msra.mxu0 0
      %2270 = vmatpush.bf16.msra.mxu0 %v2185
      %2271 = vmatpush.bf16.msra.mxu0 %v2181
      %2272 = vmatmul.bf16.gmra.mxu0 %v2202
      %v2273 = vpop.f32.mrf.mxu0
      %v2274 = vadd.f32 0.0, %v2273
      %v2275 = vpop.f32.mrf.mxu0
      %v2276 = vadd.f32 0.0, %v2275
      %2277 = vmatmul.bf16.gmra.mxu0 %v2205
      %v2278 = vpop.f32.mrf.mxu0
      %v2279 = vadd.f32 0.0, %v2278
      %v2280 = vpop.f32.mrf.mxu0
      %v2281 = vadd.f32 0.0, %v2280
      %2282 = vdwg.mxu0
      %v2283 = vadd.f32 %v2098, %v2217
      %v2284 = vadd.f32 %v2099, %v2236
      %v2285 = vadd.f32 %v2100, %v2255
      %v2286 = vadd.f32 %v2101, %v2274
      %v2287 = vadd.f32 %v2102, %v2219
      %v2288 = vadd.f32 %v2103, %v2238
      %v2289 = vadd.f32 %v2104, %v2257
      %v2290 = vadd.f32 %v2105, %v2276
      %v2291 = vadd.f32 %v2106, %v2222
      %v2292 = vadd.f32 %v2107, %v2241
      %v2293 = vadd.f32 %v2108, %v2260
      %v2294 = vadd.f32 %v2109, %v2279
      %v2295 = vadd.f32 %v2110, %v2224
      %v2296 = vadd.f32 %v2111, %v2243
      %v2297 = vadd.f32 %v2112, %v2262
      %v2298 = vadd.f32 %v2113, %v2281
      %vm2299 = vcmp.gt.f32.partialorder %v2283, 0.0
      %vm2300 = vcmp.gt.f32.partialorder %v2284, 0.0
      %vm2301 = vcmp.gt.f32.partialorder %v2285, 0.0
      %vm2302 = vcmp.gt.f32.partialorder %v2286, 0.0
      %vm2303 = vcmp.gt.f32.partialorder %v2287, 0.0
      %vm2304 = vcmp.gt.f32.partialorder %v2288, 0.0
      %vm2305 = vcmp.gt.f32.partialorder %v2289, 0.0
      %vm2306 = vcmp.gt.f32.partialorder %v2290, 0.0
      %vm2307 = vcmp.gt.f32.partialorder %v2291, 0.0
      %vm2308 = vcmp.gt.f32.partialorder %v2292, 0.0
      %vm2309 = vcmp.gt.f32.partialorder %v2293, 0.0
      %vm2310 = vcmp.gt.f32.partialorder %v2294, 0.0
      %vm2311 = vcmp.gt.f32.partialorder %v2295, 0.0
      %vm2312 = vcmp.gt.f32.partialorder %v2296, 0.0
      %vm2313 = vcmp.gt.f32.partialorder %v2297, 0.0
      %vm2314 = vcmp.gt.f32.partialorder %v2298, 0.0
      %v2315 = vmul.f32 %v2283, 0.01
      %v2316 = vmul.f32 %v2284, 0.01
      %v2317 = vmul.f32 %v2285, 0.01
      %v2318 = vmul.f32 %v2286, 0.01
      %v2319 = vmul.f32 %v2287, 0.01
      %v2320 = vmul.f32 %v2288, 0.01
      %v2321 = vmul.f32 %v2289, 0.01
      %v2322 = vmul.f32 %v2290, 0.01
      %v2323 = vmul.f32 %v2291, 0.01
      %v2324 = vmul.f32 %v2292, 0.01
      %v2325 = vmul.f32 %v2293, 0.01
      %v2326 = vmul.f32 %v2294, 0.01
      %v2327 = vmul.f32 %v2295, 0.01
      %v2328 = vmul.f32 %v2296, 0.01
      %v2329 = vmul.f32 %v2297, 0.01
      %v2330 = vmul.f32 %v2298, 0.01
      %v2331 = vsel %vm2299, %v2283, %v2315
      %v2332 = vsel %vm2300, %v2284, %v2316
      %v2333 = vsel %vm2301, %v2285, %v2317
      %v2334 = vsel %vm2302, %v2286, %v2318
      %v2335 = vsel %vm2303, %v2287, %v2319
      %v2336 = vsel %vm2304, %v2288, %v2320
      %v2337 = vsel %vm2305, %v2289, %v2321
      %v2338 = vsel %vm2306, %v2290, %v2322
      %v2339 = vsel %vm2307, %v2291, %v2323
      %v2340 = vsel %vm2308, %v2292, %v2324
      %v2341 = vsel %vm2309, %v2293, %v2325
      %v2342 = vsel %vm2310, %v2294, %v2326
      %v2343 = vsel %vm2311, %v2295, %v2327
      %v2344 = vsel %vm2312, %v2296, %v2328
      %v2345 = vsel %vm2313, %v2297, %v2329
      %v2346 = vsel %vm2314, %v2298, %v2330
      %2347 = vrot.lane.b32.xlu0 %v820, 33
      %v2348 = vpop.permute.xlu0 %2347
      %2349 = vrot.lane.b32.xlu0 %v824, 33
      %v2350 = vpop.permute.xlu0 %2349
      %2351 = vrot.lane.b32.xlu0 %v828, 33
      %v2352 = vpop.permute.xlu0 %2351
      %2353 = vrot.lane.b32.xlu0 %v832, 33
      %v2354 = vpop.permute.xlu0 %2353
      %2355 = vrot.lane.b32.xlu0 %v821, 33
      %v2356 = vpop.permute.xlu0 %2355
      %2357 = vrot.lane.b32.xlu0 %v825, 33
      %v2358 = vpop.permute.xlu0 %2357
      %2359 = vrot.lane.b32.xlu0 %v829, 33
      %v2360 = vpop.permute.xlu0 %2359
      %2361 = vrot.lane.b32.xlu0 %v833, 33
      %v2362 = vpop.permute.xlu0 %2361
      %2363 = vrot.lane.b32.xlu0 %v822, 33
      %v2364 = vpop.permute.xlu0 %2363
      %2365 = vrot.lane.b32.xlu0 %v826, 33
      %v2366 = vpop.permute.xlu0 %2365
      %2367 = vrot.lane.b32.xlu0 %v830, 33
      %v2368 = vpop.permute.xlu0 %2367
      %2369 = vrot.lane.b32.xlu0 %v834, 33
      %v2370 = vpop.permute.xlu0 %2369
      %2371 = vrot.lane.b32.xlu0 %v823, 33
      %v2372 = vpop.permute.xlu0 %2371
      %2373 = vrot.lane.b32.xlu0 %v827, 33
      %v2374 = vpop.permute.xlu0 %2373
      %2375 = vrot.lane.b32.xlu0 %v831, 33
      %v2376 = vpop.permute.xlu0 %2375
      %2377 = vrot.lane.b32.xlu0 %v835, 33
      %v2378 = vpop.permute.xlu0 %2377
      %vm2379 = vcmp.lt.s32.totalorder %v869, 33
      %v2380 = vsel %vm2379, %v2364, %v2372
      %v2381 = vsel %vm2379, %v2366, %v2374
      %v2382 = vsel %vm2379, %v2368, %v2376
      %v2383 = vsel %vm2379, %v2370, %v2378
      %v2384 = vsel %vm2379, %v2356, %v2364
      %v2385 = vsel %vm2379, %v2358, %v2366
      %v2386 = vsel %vm2379, %v2360, %v2368
      %v2387 = vsel %vm2379, %v2362, %v2370
      %v2388 = vsel %vm2379, %v2348, %v2356
      %v2389 = vsel %vm2379, %v2350, %v2358
      %v2390 = vsel %vm2379, %v2352, %v2360
      %v2391 = vsel %vm2379, %v2354, %v2362
      %v2392 = vsel %vm2379, %v2372, %v2348
      %v2393 = vsel %vm2379, %v2374, %v2350
      %v2394 = vsel %vm2379, %v2376, %v2352
      %v2395 = vsel %vm2379, %v2378, %v2354
      %v2396 = vmul.f32 %v490, %v486
      %v2398 = vperm.slane %v2396, 0
      %v2399 = vperm.slane %v2396, 1
      %v2400 = vperm.slane %v2396, 2
      %v2401 = vperm.slane %v2396, 3
      %v2406 = vmul.f32 %v2392, %v2398
      %v2407 = vmul.f32 %v2388, %v2399
      %v2408 = vmul.f32 %v2384, %v2400
      %v2409 = vmul.f32 %v2380, %v2401
      %v2410 = vmul.f32 %v2393, %v2398
      %v2411 = vmul.f32 %v2389, %v2399
      %v2412 = vmul.f32 %v2385, %v2400
      %v2413 = vmul.f32 %v2381, %v2401
      %v2414 = vmul.f32 %v2394, %v2398
      %v2415 = vmul.f32 %v2390, %v2399
      %v2416 = vmul.f32 %v2386, %v2400
      %v2417 = vmul.f32 %v2382, %v2401
      %v2418 = vmul.f32 %v2395, %v2398
      %v2419 = vmul.f32 %v2391, %v2399
      %v2420 = vmul.f32 %v2387, %v2400
      %v2421 = vmul.f32 %v2383, %v2401
      %v2422 = vpack.c.bf16 %v2410, %v2406
      %v2423 = vpack.c.bf16 %v2411, %v2407
      %v2424 = vpack.c.bf16 %v2412, %v2408
      %v2425 = vpack.c.bf16 %v2413, %v2409
      %v2426 = vpack.c.bf16 %v2418, %v2414
      %v2427 = vpack.c.bf16 %v2419, %v2415
      %v2428 = vpack.c.bf16 %v2420, %v2416
      %v2429 = vpack.c.bf16 %v2421, %v2417
      %v2430 = vld [vmem:[%s6] sm:$0xf]
      %v2431 = vld [vmem:[%s6 + $0x4] sm:$0xf]
      %v2432 = vld [vmem:[%s6 + $0x8] sm:$0xf]
      %v2433 = vld [vmem:[%s6 + $0xc] sm:$0xf]
      %2434 = vrot.lane.b32.xlu0 %v820, 32
      %v2435 = vpop.permute.xlu0 %2434
      %2436 = vrot.lane.b32.xlu0 %v824, 32
      %v2437 = vpop.permute.xlu0 %2436
      %2438 = vrot.lane.b32.xlu0 %v828, 32
      %v2439 = vpop.permute.xlu0 %2438
      %2440 = vrot.lane.b32.xlu0 %v832, 32
      %v2441 = vpop.permute.xlu0 %2440
      %2442 = vrot.lane.b32.xlu0 %v821, 32
      %v2443 = vpop.permute.xlu0 %2442
      %2444 = vrot.lane.b32.xlu0 %v825, 32
      %v2445 = vpop.permute.xlu0 %2444
      %2446 = vrot.lane.b32.xlu0 %v829, 32
      %v2447 = vpop.permute.xlu0 %2446
      %2448 = vrot.lane.b32.xlu0 %v833, 32
      %v2449 = vpop.permute.xlu0 %2448
      %2450 = vrot.lane.b32.xlu0 %v822, 32
      %v2451 = vpop.permute.xlu0 %2450
      %2452 = vrot.lane.b32.xlu0 %v826, 32
      %v2453 = vpop.permute.xlu0 %2452
      %2454 = vrot.lane.b32.xlu0 %v830, 32
      %v2455 = vpop.permute.xlu0 %2454
      %2456 = vrot.lane.b32.xlu0 %v834, 32
      %v2457 = vpop.permute.xlu0 %2456
      %2458 = vrot.lane.b32.xlu0 %v823, 32
      %v2459 = vpop.permute.xlu0 %2458
      %2460 = vrot.lane.b32.xlu0 %v827, 32
      %v2461 = vpop.permute.xlu0 %2460
      %2462 = vrot.lane.b32.xlu0 %v831, 32
      %v2463 = vpop.permute.xlu0 %2462
      %2464 = vrot.lane.b32.xlu0 %v835, 32
      %v2465 = vpop.permute.xlu0 %2464
      %vm2466 = vcmp.lt.s32.totalorder %v869, 32
      %v2467 = vsel %vm2466, %v2451, %v2459
      %v2468 = vsel %vm2466, %v2453, %v2461
      %v2469 = vsel %vm2466, %v2455, %v2463
      %v2470 = vsel %vm2466, %v2457, %v2465
      %v2471 = vsel %vm2466, %v2443, %v2451
      %v2472 = vsel %vm2466, %v2445, %v2453
      %v2473 = vsel %vm2466, %v2447, %v2455
      %v2474 = vsel %vm2466, %v2449, %v2457
      %v2475 = vsel %vm2466, %v2435, %v2443
      %v2476 = vsel %vm2466, %v2437, %v2445
      %v2477 = vsel %vm2466, %v2439, %v2447
      %v2478 = vsel %vm2466, %v2441, %v2449
      %v2479 = vsel %vm2466, %v2459, %v2435
      %v2480 = vsel %vm2466, %v2461, %v2437
      %v2481 = vsel %vm2466, %v2463, %v2439
      %v2482 = vsel %vm2466, %v2465, %v2441
      %v2484 = vperm.slane %v490, 0
      %v2485 = vperm.slane %v490, 1
      %v2486 = vperm.slane %v490, 2
      %v2487 = vperm.slane %v490, 3
      %v2492 = vmul.f32 %v2479, %v2484
      %v2493 = vmul.f32 %v2475, %v2485
      %v2494 = vmul.f32 %v2471, %v2486
      %v2495 = vmul.f32 %v2467, %v2487
      %v2496 = vmul.f32 %v2480, %v2484
      %v2497 = vmul.f32 %v2476, %v2485
      %v2498 = vmul.f32 %v2472, %v2486
      %v2499 = vmul.f32 %v2468, %v2487
      %v2500 = vmul.f32 %v2481, %v2484
      %v2501 = vmul.f32 %v2477, %v2485
      %v2502 = vmul.f32 %v2473, %v2486
      %v2503 = vmul.f32 %v2469, %v2487
      %v2504 = vmul.f32 %v2482, %v2484
      %v2505 = vmul.f32 %v2478, %v2485
      %v2506 = vmul.f32 %v2474, %v2486
      %v2507 = vmul.f32 %v2470, %v2487
      %v2508 = vpack.c.bf16 %v2496, %v2492
      %v2509 = vpack.c.bf16 %v2497, %v2493
      %v2510 = vpack.c.bf16 %v2498, %v2494
      %v2511 = vpack.c.bf16 %v2499, %v2495
      %v2512 = vpack.c.bf16 %v2504, %v2500
      %v2513 = vpack.c.bf16 %v2505, %v2501
      %v2514 = vpack.c.bf16 %v2506, %v2502
      %v2515 = vpack.c.bf16 %v2507, %v2503
      %s2516 = scalar_lea.vmem %s6, 16
      %v2517 = vld [vmem:[%s2516] sm:$0xf]
      %v2518 = vld [vmem:[%s2516 + $0x4] sm:$0xf]
      %v2519 = vld [vmem:[%s2516 + $0x8] sm:$0xf]
      %v2520 = vld [vmem:[%s2516 + $0xc] sm:$0xf]
      %v2525 = vunpack.c.l.b16 %v2517
      %v2526 = vunpack.c.l.b16 %v2518
      %v2527 = vunpack.c.l.b16 %v2519
      %v2528 = vunpack.c.l.b16 %v2520
      %v2529 = vpack.c.b16 %v2526, %v2525
      %v2530 = vpack.c.b16 %v2528, %v2527
      %v2532 = vsel %vm947, %v2529, 0
      %v2535 = vsel %vm947, %v2530, 0
      %2537 = vmatpush.bf16.msra.mxu0 0
      %2538 = vmatpush.bf16.msra.mxu0 0
      %2539 = vmatpush.bf16.msra.mxu0 0
      %2540 = vmatpush.bf16.msra.mxu0 0
      %2541 = vmatpush.bf16.msra.mxu0 0
      %2542 = vmatpush.bf16.msra.mxu0 0
      %2543 = vmatpush.bf16.msra.mxu0 %v2512
      %2544 = vmatpush.bf16.msra.mxu0 %v2508
      %2545 = vmatmul.bf16.gmra.mxu0 %v2532
      %v2546 = vpop.f32.mrf.mxu0
      %v2547 = vadd.f32 0.0, %v2546
      %v2548 = vpop.f32.mrf.mxu0
      %v2549 = vadd.f32 0.0, %v2548
      %2550 = vmatmul.bf16.gmra.mxu0 %v2535
      %v2551 = vpop.f32.mrf.mxu0
      %v2552 = vadd.f32 0.0, %v2551
      %v2553 = vpop.f32.mrf.mxu0
      %v2554 = vadd.f32 0.0, %v2553
      %2555 = vdwg.mxu0
      %2556 = vmatpush.bf16.msra.mxu0 0
      %2557 = vmatpush.bf16.msra.mxu0 0
      %2558 = vmatpush.bf16.msra.mxu0 0
      %2559 = vmatpush.bf16.msra.mxu0 0
      %2560 = vmatpush.bf16.msra.mxu0 0
      %2561 = vmatpush.bf16.msra.mxu0 0
      %2562 = vmatpush.bf16.msra.mxu0 %v2513
      %2563 = vmatpush.bf16.msra.mxu0 %v2509
      %2564 = vmatmul.bf16.gmra.mxu0 %v2532
      %v2565 = vpop.f32.mrf.mxu0
      %v2566 = vadd.f32 0.0, %v2565
      %v2567 = vpop.f32.mrf.mxu0
      %v2568 = vadd.f32 0.0, %v2567
      %2569 = vmatmul.bf16.gmra.mxu0 %v2535
      %v2570 = vpop.f32.mrf.mxu0
      %v2571 = vadd.f32 0.0, %v2570
      %v2572 = vpop.f32.mrf.mxu0
      %v2573 = vadd.f32 0.0, %v2572
      %2574 = vdwg.mxu0
      %2575 = vmatpush.bf16.msra.mxu0 0
      %2576 = vmatpush.bf16.msra.mxu0 0
      %2577 = vmatpush.bf16.msra.mxu0 0
      %2578 = vmatpush.bf16.msra.mxu0 0
      %2579 = vmatpush.bf16.msra.mxu0 0
      %2580 = vmatpush.bf16.msra.mxu0 0
      %2581 = vmatpush.bf16.msra.mxu0 %v2514
      %2582 = vmatpush.bf16.msra.mxu0 %v2510
      %2583 = vmatmul.bf16.gmra.mxu0 %v2532
      %v2584 = vpop.f32.mrf.mxu0
      %v2585 = vadd.f32 0.0, %v2584
      %v2586 = vpop.f32.mrf.mxu0
      %v2587 = vadd.f32 0.0, %v2586
      %2588 = vmatmul.bf16.gmra.mxu0 %v2535
      %v2589 = vpop.f32.mrf.mxu0
      %v2590 = vadd.f32 0.0, %v2589
      %v2591 = vpop.f32.mrf.mxu0
      %v2592 = vadd.f32 0.0, %v2591
      %2593 = vdwg.mxu0
      %2594 = vmatpush.bf16.msra.mxu0 0
      %2595 = vmatpush.bf16.msra.mxu0 0
      %2596 = vmatpush.bf16.msra.mxu0 0
      %2597 = vmatpush.bf16.msra.mxu0 0
      %2598 = vmatpush.bf16.msra.mxu0 0
      %2599 = vmatpush.bf16.msra.mxu0 0
      %2600 = vmatpush.bf16.msra.mxu0 %v2515
      %2601 = vmatpush.bf16.msra.mxu0 %v2511
      %2602 = vmatmul.bf16.gmra.mxu0 %v2532
      %v2603 = vpop.f32.mrf.mxu0
      %v2604 = vadd.f32 0.0, %v2603
      %v2605 = vpop.f32.mrf.mxu0
      %v2606 = vadd.f32 0.0, %v2605
      %2607 = vmatmul.bf16.gmra.mxu0 %v2535
      %v2608 = vpop.f32.mrf.mxu0
      %v2609 = vadd.f32 0.0, %v2608
      %v2610 = vpop.f32.mrf.mxu0
      %v2611 = vadd.f32 0.0, %v2610
      %2612 = vdwg.mxu0
      %v2617 = vunpack.c.l.b16 %v2430
      %v2618 = vunpack.c.l.b16 %v2431
      %v2619 = vunpack.c.l.b16 %v2432
      %v2620 = vunpack.c.l.b16 %v2433
      %v2621 = vpack.c.b16 %v2618, %v2617
      %v2622 = vpack.c.b16 %v2620, %v2619
      %v2624 = vsel %vm947, %v2621, 0
      %v2627 = vsel %vm947, %v2622, 0
      %2629 = vmatpush.bf16.msra.mxu0 0
      %2630 = vmatpush.bf16.msra.mxu0 0
      %2631 = vmatpush.bf16.msra.mxu0 0
      %2632 = vmatpush.bf16.msra.mxu0 0
      %2633 = vmatpush.bf16.msra.mxu0 0
      %2634 = vmatpush.bf16.msra.mxu0 0
      %2635 = vmatpush.bf16.msra.mxu0 %v2426
      %2636 = vmatpush.bf16.msra.mxu0 %v2422
      %2637 = vmatmul.bf16.gmra.mxu0 %v2624
      %v2638 = vpop.f32.mrf.mxu0
      %v2639 = vadd.f32 %v2547, %v2638
      %v2640 = vpop.f32.mrf.mxu0
      %v2641 = vadd.f32 %v2549, %v2640
      %2642 = vmatmul.bf16.gmra.mxu0 %v2627
      %v2643 = vpop.f32.mrf.mxu0
      %v2644 = vadd.f32 %v2552, %v2643
      %v2645 = vpop.f32.mrf.mxu0
      %v2646 = vadd.f32 %v2554, %v2645
      %2647 = vdwg.mxu0
      %2648 = vmatpush.bf16.msra.mxu0 0
      %2649 = vmatpush.bf16.msra.mxu0 0
      %2650 = vmatpush.bf16.msra.mxu0 0
      %2651 = vmatpush.bf16.msra.mxu0 0
      %2652 = vmatpush.bf16.msra.mxu0 0
      %2653 = vmatpush.bf16.msra.mxu0 0
      %2654 = vmatpush.bf16.msra.mxu0 %v2427
      %2655 = vmatpush.bf16.msra.mxu0 %v2423
      %2656 = vmatmul.bf16.gmra.mxu0 %v2624
      %v2657 = vpop.f32.mrf.mxu0
      %v2658 = vadd.f32 %v2566, %v2657
      %v2659 = vpop.f32.mrf.mxu0
      %v2660 = vadd.f32 %v2568, %v2659
      %2661 = vmatmul.bf16.gmra.mxu0 %v2627
      %v2662 = vpop.f32.mrf.mxu0
      %v2663 = vadd.f32 %v2571, %v2662
      %v2664 = vpop.f32.mrf.mxu0
      %v2665 = vadd.f32 %v2573, %v2664
      %2666 = vdwg.mxu0
      %2667 = vmatpush.bf16.msra.mxu0 0
      %2668 = vmatpush.bf16.msra.mxu0 0
      %2669 = vmatpush.bf16.msra.mxu0 0
      %2670 = vmatpush.bf16.msra.mxu0 0
      %2671 = vmatpush.bf16.msra.mxu0 0
      %2672 = vmatpush.bf16.msra.mxu0 0
      %2673 = vmatpush.bf16.msra.mxu0 %v2428
      %2674 = vmatpush.bf16.msra.mxu0 %v2424
      %2675 = vmatmul.bf16.gmra.mxu0 %v2624
      %v2676 = vpop.f32.mrf.mxu0
      %v2677 = vadd.f32 %v2585, %v2676
      %v2678 = vpop.f32.mrf.mxu0
      %v2679 = vadd.f32 %v2587, %v2678
      %2680 = vmatmul.bf16.gmra.mxu0 %v2627
      %v2681 = vpop.f32.mrf.mxu0
      %v2682 = vadd.f32 %v2590, %v2681
      %v2683 = vpop.f32.mrf.mxu0
      %v2684 = vadd.f32 %v2592, %v2683
      %2685 = vdwg.mxu0
      %2686 = vmatpush.bf16.msra.mxu0 0
      %2687 = vmatpush.bf16.msra.mxu0 0
      %2688 = vmatpush.bf16.msra.mxu0 0
      %2689 = vmatpush.bf16.msra.mxu0 0
      %2690 = vmatpush.bf16.msra.mxu0 0
      %2691 = vmatpush.bf16.msra.mxu0 0
      %2692 = vmatpush.bf16.msra.mxu0 %v2429
      %2693 = vmatpush.bf16.msra.mxu0 %v2425
      %2694 = vmatmul.bf16.gmra.mxu0 %v2624
      %v2695 = vpop.f32.mrf.mxu0
      %v2696 = vadd.f32 %v2604, %v2695
      %v2697 = vpop.f32.mrf.mxu0
      %v2698 = vadd.f32 %v2606, %v2697
      %2699 = vmatmul.bf16.gmra.mxu0 %v2627
      %v2700 = vpop.f32.mrf.mxu0
      %v2701 = vadd.f32 %v2609, %v2700
      %v2702 = vpop.f32.mrf.mxu0
      %v2703 = vadd.f32 %v2611, %v2702
      %2704 = vdwg.mxu0
      %2705 = vrot.lane.b32.xlu0 %v820, 31
      %v2706 = vpop.permute.xlu0 %2705
      %2707 = vrot.lane.b32.xlu0 %v824, 31
      %v2708 = vpop.permute.xlu0 %2707
      %2709 = vrot.lane.b32.xlu0 %v828, 31
      %v2710 = vpop.permute.xlu0 %2709
      %2711 = vrot.lane.b32.xlu0 %v832, 31
      %v2712 = vpop.permute.xlu0 %2711
      %2713 = vrot.lane.b32.xlu0 %v821, 31
      %v2714 = vpop.permute.xlu0 %2713
      %2715 = vrot.lane.b32.xlu0 %v825, 31
      %v2716 = vpop.permute.xlu0 %2715
      %2717 = vrot.lane.b32.xlu0 %v829, 31
      %v2718 = vpop.permute.xlu0 %2717
      %2719 = vrot.lane.b32.xlu0 %v833, 31
      %v2720 = vpop.permute.xlu0 %2719
      %2721 = vrot.lane.b32.xlu0 %v822, 31
      %v2722 = vpop.permute.xlu0 %2721
      %2723 = vrot.lane.b32.xlu0 %v826, 31
      %v2724 = vpop.permute.xlu0 %2723
      %2725 = vrot.lane.b32.xlu0 %v830, 31
      %v2726 = vpop.permute.xlu0 %2725
      %2727 = vrot.lane.b32.xlu0 %v834, 31
      %v2728 = vpop.permute.xlu0 %2727
      %2729 = vrot.lane.b32.xlu0 %v823, 31
      %v2730 = vpop.permute.xlu0 %2729
      %2731 = vrot.lane.b32.xlu0 %v827, 31
      %v2732 = vpop.permute.xlu0 %2731
      %2733 = vrot.lane.b32.xlu0 %v831, 31
      %v2734 = vpop.permute.xlu0 %2733
      %2735 = vrot.lane.b32.xlu0 %v835, 31
      %v2736 = vpop.permute.xlu0 %2735
      %vm2737 = vcmp.lt.s32.totalorder %v869, 31
      %v2738 = vsel %vm2737, %v2722, %v2730
      %v2739 = vsel %vm2737, %v2724, %v2732
      %v2740 = vsel %vm2737, %v2726, %v2734
      %v2741 = vsel %vm2737, %v2728, %v2736
      %v2742 = vsel %vm2737, %v2714, %v2722
      %v2743 = vsel %vm2737, %v2716, %v2724
      %v2744 = vsel %vm2737, %v2718, %v2726
      %v2745 = vsel %vm2737, %v2720, %v2728
      %v2746 = vsel %vm2737, %v2706, %v2714
      %v2747 = vsel %vm2737, %v2708, %v2716
      %v2748 = vsel %vm2737, %v2710, %v2718
      %v2749 = vsel %vm2737, %v2712, %v2720
      %v2750 = vsel %vm2737, %v2730, %v2706
      %v2751 = vsel %vm2737, %v2732, %v2708
      %v2752 = vsel %vm2737, %v2734, %v2710
      %v2753 = vsel %vm2737, %v2736, %v2712
      %v2754 = vmul.f32 %v490, %v488
      %v2756 = vperm.slane %v2754, 0
      %v2757 = vperm.slane %v2754, 1
      %v2758 = vperm.slane %v2754, 2
      %v2759 = vperm.slane %v2754, 3
      %v2764 = vmul.f32 %v2750, %v2756
      %v2765 = vmul.f32 %v2746, %v2757
      %v2766 = vmul.f32 %v2742, %v2758
      %v2767 = vmul.f32 %v2738, %v2759
      %v2768 = vmul.f32 %v2751, %v2756
      %v2769 = vmul.f32 %v2747, %v2757
      %v2770 = vmul.f32 %v2743, %v2758
      %v2771 = vmul.f32 %v2739, %v2759
      %v2772 = vmul.f32 %v2752, %v2756
      %v2773 = vmul.f32 %v2748, %v2757
      %v2774 = vmul.f32 %v2744, %v2758
      %v2775 = vmul.f32 %v2740, %v2759
      %v2776 = vmul.f32 %v2753, %v2756
      %v2777 = vmul.f32 %v2749, %v2757
      %v2778 = vmul.f32 %v2745, %v2758
      %v2779 = vmul.f32 %v2741, %v2759
      %v2780 = vpack.c.bf16 %v2768, %v2764
      %v2781 = vpack.c.bf16 %v2769, %v2765
      %v2782 = vpack.c.bf16 %v2770, %v2766
      %v2783 = vpack.c.bf16 %v2771, %v2767
      %v2784 = vpack.c.bf16 %v2776, %v2772
      %v2785 = vpack.c.bf16 %v2777, %v2773
      %v2786 = vpack.c.bf16 %v2778, %v2774
      %v2787 = vpack.c.bf16 %v2779, %v2775
      %s2788 = scalar_lea.vmem %s6, 32
      %v2789 = vld [vmem:[%s2788] sm:$0xf]
      %v2790 = vld [vmem:[%s2788 + $0x4] sm:$0xf]
      %v2791 = vld [vmem:[%s2788 + $0x8] sm:$0xf]
      %v2792 = vld [vmem:[%s2788 + $0xc] sm:$0xf]
      %v2797 = vunpack.c.l.b16 %v2789
      %v2798 = vunpack.c.l.b16 %v2790
      %v2799 = vunpack.c.l.b16 %v2791
      %v2800 = vunpack.c.l.b16 %v2792
      %v2801 = vpack.c.b16 %v2798, %v2797
      %v2802 = vpack.c.b16 %v2800, %v2799
      %v2804 = vsel %vm947, %v2801, 0
      %v2807 = vsel %vm947, %v2802, 0
      %2809 = vmatpush.bf16.msra.mxu0 0
      %2810 = vmatpush.bf16.msra.mxu0 0
      %2811 = vmatpush.bf16.msra.mxu0 0
      %2812 = vmatpush.bf16.msra.mxu0 0
      %2813 = vmatpush.bf16.msra.mxu0 0
      %2814 = vmatpush.bf16.msra.mxu0 0
      %2815 = vmatpush.bf16.msra.mxu0 %v2784
      %2816 = vmatpush.bf16.msra.mxu0 %v2780
      %2817 = vmatmul.bf16.gmra.mxu0 %v2804
      %v2818 = vpop.f32.mrf.mxu0
      %v2819 = vadd.f32 0.0, %v2818
      %v2820 = vpop.f32.mrf.mxu0
      %v2821 = vadd.f32 0.0, %v2820
      %2822 = vmatmul.bf16.gmra.mxu0 %v2807
      %v2823 = vpop.f32.mrf.mxu0
      %v2824 = vadd.f32 0.0, %v2823
      %v2825 = vpop.f32.mrf.mxu0
      %v2826 = vadd.f32 0.0, %v2825
      %2827 = vdwg.mxu0
      %2828 = vmatpush.bf16.msra.mxu0 0
      %2829 = vmatpush.bf16.msra.mxu0 0
      %2830 = vmatpush.bf16.msra.mxu0 0
      %2831 = vmatpush.bf16.msra.mxu0 0
      %2832 = vmatpush.bf16.msra.mxu0 0
      %2833 = vmatpush.bf16.msra.mxu0 0
      %2834 = vmatpush.bf16.msra.mxu0 %v2785
      %2835 = vmatpush.bf16.msra.mxu0 %v2781
      %2836 = vmatmul.bf16.gmra.mxu0 %v2804
      %v2837 = vpop.f32.mrf.mxu0
      %v2838 = vadd.f32 0.0, %v2837
      %v2839 = vpop.f32.mrf.mxu0
      %v2840 = vadd.f32 0.0, %v2839
      %2841 = vmatmul.bf16.gmra.mxu0 %v2807
      %v2842 = vpop.f32.mrf.mxu0
      %v2843 = vadd.f32 0.0, %v2842
      %v2844 = vpop.f32.mrf.mxu0
      %v2845 = vadd.f32 0.0, %v2844
      %2846 = vdwg.mxu0
      %2847 = vmatpush.bf16.msra.mxu0 0
      %2848 = vmatpush.bf16.msra.mxu0 0
      %2849 = vmatpush.bf16.msra.mxu0 0
      %2850 = vmatpush.bf16.msra.mxu0 0
      %2851 = vmatpush.bf16.msra.mxu0 0
      %2852 = vmatpush.bf16.msra.mxu0 0
      %2853 = vmatpush.bf16.msra.mxu0 %v2786
      %2854 = vmatpush.bf16.msra.mxu0 %v2782
      %2855 = vmatmul.bf16.gmra.mxu0 %v2804
      %v2856 = vpop.f32.mrf.mxu0
      %v2857 = vadd.f32 0.0, %v2856
      %v2858 = vpop.f32.mrf.mxu0
      %v2859 = vadd.f32 0.0, %v2858
      %2860 = vmatmul.bf16.gmra.mxu0 %v2807
      %v2861 = vpop.f32.mrf.mxu0
      %v2862 = vadd.f32 0.0, %v2861
      %v2863 = vpop.f32.mrf.mxu0
      %v2864 = vadd.f32 0.0, %v2863
      %2865 = vdwg.mxu0
      %2866 = vmatpush.bf16.msra.mxu0 0
      %2867 = vmatpush.bf16.msra.mxu0 0
      %2868 = vmatpush.bf16.msra.mxu0 0
      %2869 = vmatpush.bf16.msra.mxu0 0
      %2870 = vmatpush.bf16.msra.mxu0 0
      %2871 = vmatpush.bf16.msra.mxu0 0
      %2872 = vmatpush.bf16.msra.mxu0 %v2787
      %2873 = vmatpush.bf16.msra.mxu0 %v2783
      %2874 = vmatmul.bf16.gmra.mxu0 %v2804
      %v2875 = vpop.f32.mrf.mxu0
      %v2876 = vadd.f32 0.0, %v2875
      %v2877 = vpop.f32.mrf.mxu0
      %v2878 = vadd.f32 0.0, %v2877
      %2879 = vmatmul.bf16.gmra.mxu0 %v2807
      %v2880 = vpop.f32.mrf.mxu0
      %v2881 = vadd.f32 0.0, %v2880
      %v2882 = vpop.f32.mrf.mxu0
      %v2883 = vadd.f32 0.0, %v2882
      %2884 = vdwg.mxu0
      %v2885 = vadd.f32 %v2639, %v2819
      %v2886 = vadd.f32 %v2658, %v2838
      %v2887 = vadd.f32 %v2677, %v2857
      %v2888 = vadd.f32 %v2696, %v2876
      %v2889 = vadd.f32 %v2641, %v2821
      %v2890 = vadd.f32 %v2660, %v2840
      %v2891 = vadd.f32 %v2679, %v2859
      %v2892 = vadd.f32 %v2698, %v2878
      %v2893 = vadd.f32 %v2644, %v2824
      %v2894 = vadd.f32 %v2663, %v2843
      %v2895 = vadd.f32 %v2682, %v2862
      %v2896 = vadd.f32 %v2701, %v2881
      %v2897 = vadd.f32 %v2646, %v2826
      %v2898 = vadd.f32 %v2665, %v2845
      %v2899 = vadd.f32 %v2684, %v2864
      %v2900 = vadd.f32 %v2703, %v2883
      %2901 = vrot.lane.b32.xlu0 %v820, 1
      %v2902 = vpop.permute.xlu0 %2901
      %2903 = vrot.lane.b32.xlu0 %v824, 1
      %v2904 = vpop.permute.xlu0 %2903
      %2905 = vrot.lane.b32.xlu0 %v828, 1
      %v2906 = vpop.permute.xlu0 %2905
      %2907 = vrot.lane.b32.xlu0 %v832, 1
      %v2908 = vpop.permute.xlu0 %2907
      %2909 = vrot.lane.b32.xlu0 %v821, 1
      %v2910 = vpop.permute.xlu0 %2909
      %2911 = vrot.lane.b32.xlu0 %v825, 1
      %v2912 = vpop.permute.xlu0 %2911
      %2913 = vrot.lane.b32.xlu0 %v829, 1
      %v2914 = vpop.permute.xlu0 %2913
      %2915 = vrot.lane.b32.xlu0 %v833, 1
      %v2916 = vpop.permute.xlu0 %2915
      %2917 = vrot.lane.b32.xlu0 %v822, 1
      %v2918 = vpop.permute.xlu0 %2917
      %2919 = vrot.lane.b32.xlu0 %v826, 1
      %v2920 = vpop.permute.xlu0 %2919
      %2921 = vrot.lane.b32.xlu0 %v830, 1
      %v2922 = vpop.permute.xlu0 %2921
      %2923 = vrot.lane.b32.xlu0 %v834, 1
      %v2924 = vpop.permute.xlu0 %2923
      %2925 = vrot.lane.b32.xlu0 %v823, 1
      %v2926 = vpop.permute.xlu0 %2925
      %2927 = vrot.lane.b32.xlu0 %v827, 1
      %v2928 = vpop.permute.xlu0 %2927
      %2929 = vrot.lane.b32.xlu0 %v831, 1
      %v2930 = vpop.permute.xlu0 %2929
      %2931 = vrot.lane.b32.xlu0 %v835, 1
      %v2932 = vpop.permute.xlu0 %2931
      %v2933 = vsel %vm870, %v2918, %v2926
      %v2934 = vsel %vm870, %v2920, %v2928
      %v2935 = vsel %vm870, %v2922, %v2930
      %v2936 = vsel %vm870, %v2924, %v2932
      %v2937 = vsel %vm870, %v2910, %v2918
      %v2938 = vsel %vm870, %v2912, %v2920
      %v2939 = vsel %vm870, %v2914, %v2922
      %v2940 = vsel %vm870, %v2916, %v2924
      %v2941 = vsel %vm870, %v2902, %v2910
      %v2942 = vsel %vm870, %v2904, %v2912
      %v2943 = vsel %vm870, %v2906, %v2914
      %v2944 = vsel %vm870, %v2908, %v2916
      %v2945 = vsel %vm870, %v2926, %v2902
      %v2946 = vsel %vm870, %v2928, %v2904
      %v2947 = vsel %vm870, %v2930, %v2906
      %v2948 = vsel %vm870, %v2932, %v2908
      %v2949 = vmul.f32 %v2945, %v888
      %v2950 = vmul.f32 %v2941, %v889
      %v2951 = vmul.f32 %v2937, %v890
      %v2952 = vmul.f32 %v2933, %v891
      %v2953 = vmul.f32 %v2946, %v888
      %v2954 = vmul.f32 %v2942, %v889
      %v2955 = vmul.f32 %v2938, %v890
      %v2956 = vmul.f32 %v2934, %v891
      %v2957 = vmul.f32 %v2947, %v888
      %v2958 = vmul.f32 %v2943, %v889
      %v2959 = vmul.f32 %v2939, %v890
      %v2960 = vmul.f32 %v2935, %v891
      %v2961 = vmul.f32 %v2948, %v888
      %v2962 = vmul.f32 %v2944, %v889
      %v2963 = vmul.f32 %v2940, %v890
      %v2964 = vmul.f32 %v2936, %v891
      %v2965 = vpack.c.bf16 %v2953, %v2949
      %v2966 = vpack.c.bf16 %v2954, %v2950
      %v2967 = vpack.c.bf16 %v2955, %v2951
      %v2968 = vpack.c.bf16 %v2956, %v2952
      %v2969 = vpack.c.bf16 %v2961, %v2957
      %v2970 = vpack.c.bf16 %v2962, %v2958
      %v2971 = vpack.c.bf16 %v2963, %v2959
      %v2972 = vpack.c.bf16 %v2964, %v2960
      %s2973 = scalar_lea.vmem %s6, 48
      %v2974 = vld [vmem:[%s2973] sm:$0xf]
      %v2975 = vld [vmem:[%s2973 + $0x4] sm:$0xf]
      %v2976 = vld [vmem:[%s2973 + $0x8] sm:$0xf]
      %v2977 = vld [vmem:[%s2973 + $0xc] sm:$0xf]
      %v2982 = vunpack.c.l.b16 %v2974
      %v2983 = vunpack.c.l.b16 %v2975
      %v2984 = vunpack.c.l.b16 %v2976
      %v2985 = vunpack.c.l.b16 %v2977
      %v2986 = vpack.c.b16 %v2983, %v2982
      %v2987 = vpack.c.b16 %v2985, %v2984
      %v2989 = vsel %vm947, %v2986, 0
      %v2992 = vsel %vm947, %v2987, 0
      %2994 = vmatpush.bf16.msra.mxu0 0
      %2995 = vmatpush.bf16.msra.mxu0 0
      %2996 = vmatpush.bf16.msra.mxu0 0
      %2997 = vmatpush.bf16.msra.mxu0 0
      %2998 = vmatpush.bf16.msra.mxu0 0
      %2999 = vmatpush.bf16.msra.mxu0 0
      %3000 = vmatpush.bf16.msra.mxu0 %v2969
      %3001 = vmatpush.bf16.msra.mxu0 %v2965
      %3002 = vmatmul.bf16.gmra.mxu0 %v2989
      %v3003 = vpop.f32.mrf.mxu0
      %v3004 = vadd.f32 0.0, %v3003
      %v3005 = vpop.f32.mrf.mxu0
      %v3006 = vadd.f32 0.0, %v3005
      %3007 = vmatmul.bf16.gmra.mxu0 %v2992
      %v3008 = vpop.f32.mrf.mxu0
      %v3009 = vadd.f32 0.0, %v3008
      %v3010 = vpop.f32.mrf.mxu0
      %v3011 = vadd.f32 0.0, %v3010
      %3012 = vdwg.mxu0
      %3013 = vmatpush.bf16.msra.mxu0 0
      %3014 = vmatpush.bf16.msra.mxu0 0
      %3015 = vmatpush.bf16.msra.mxu0 0
      %3016 = vmatpush.bf16.msra.mxu0 0
      %3017 = vmatpush.bf16.msra.mxu0 0
      %3018 = vmatpush.bf16.msra.mxu0 0
      %3019 = vmatpush.bf16.msra.mxu0 %v2970
      %3020 = vmatpush.bf16.msra.mxu0 %v2966
      %3021 = vmatmul.bf16.gmra.mxu0 %v2989
      %v3022 = vpop.f32.mrf.mxu0
      %v3023 = vadd.f32 0.0, %v3022
      %v3024 = vpop.f32.mrf.mxu0
      %v3025 = vadd.f32 0.0, %v3024
      %3026 = vmatmul.bf16.gmra.mxu0 %v2992
      %v3027 = vpop.f32.mrf.mxu0
      %v3028 = vadd.f32 0.0, %v3027
      %v3029 = vpop.f32.mrf.mxu0
      %v3030 = vadd.f32 0.0, %v3029
      %3031 = vdwg.mxu0
      %3032 = vmatpush.bf16.msra.mxu0 0
      %3033 = vmatpush.bf16.msra.mxu0 0
      %3034 = vmatpush.bf16.msra.mxu0 0
      %3035 = vmatpush.bf16.msra.mxu0 0
      %3036 = vmatpush.bf16.msra.mxu0 0
      %3037 = vmatpush.bf16.msra.mxu0 0
      %3038 = vmatpush.bf16.msra.mxu0 %v2971
      %3039 = vmatpush.bf16.msra.mxu0 %v2967
      %3040 = vmatmul.bf16.gmra.mxu0 %v2989
      %v3041 = vpop.f32.mrf.mxu0
      %v3042 = vadd.f32 0.0, %v3041
      %v3043 = vpop.f32.mrf.mxu0
      %v3044 = vadd.f32 0.0, %v3043
      %3045 = vmatmul.bf16.gmra.mxu0 %v2992
      %v3046 = vpop.f32.mrf.mxu0
      %v3047 = vadd.f32 0.0, %v3046
      %v3048 = vpop.f32.mrf.mxu0
      %v3049 = vadd.f32 0.0, %v3048
      %3050 = vdwg.mxu0
      %3051 = vmatpush.bf16.msra.mxu0 0
      %3052 = vmatpush.bf16.msra.mxu0 0
      %3053 = vmatpush.bf16.msra.mxu0 0
      %3054 = vmatpush.bf16.msra.mxu0 0
      %3055 = vmatpush.bf16.msra.mxu0 0
      %3056 = vmatpush.bf16.msra.mxu0 0
      %3057 = vmatpush.bf16.msra.mxu0 %v2972
      %3058 = vmatpush.bf16.msra.mxu0 %v2968
      %3059 = vmatmul.bf16.gmra.mxu0 %v2989
      %v3060 = vpop.f32.mrf.mxu0
      %v3061 = vadd.f32 0.0, %v3060
      %v3062 = vpop.f32.mrf.mxu0
      %v3063 = vadd.f32 0.0, %v3062
      %3064 = vmatmul.bf16.gmra.mxu0 %v2992
      %v3065 = vpop.f32.mrf.mxu0
      %v3066 = vadd.f32 0.0, %v3065
      %v3067 = vpop.f32.mrf.mxu0
      %v3068 = vadd.f32 0.0, %v3067
      %3069 = vdwg.mxu0
      %v3070 = vadd.f32 %v2885, %v3004
      %v3071 = vadd.f32 %v2886, %v3023
      %v3072 = vadd.f32 %v2887, %v3042
      %v3073 = vadd.f32 %v2888, %v3061
      %v3074 = vadd.f32 %v2889, %v3006
      %v3075 = vadd.f32 %v2890, %v3025
      %v3076 = vadd.f32 %v2891, %v3044
      %v3077 = vadd.f32 %v2892, %v3063
      %v3078 = vadd.f32 %v2893, %v3009
      %v3079 = vadd.f32 %v2894, %v3028
      %v3080 = vadd.f32 %v2895, %v3047
      %v3081 = vadd.f32 %v2896, %v3066
      %v3082 = vadd.f32 %v2897, %v3011
      %v3083 = vadd.f32 %v2898, %v3030
      %v3084 = vadd.f32 %v2899, %v3049
      %v3085 = vadd.f32 %v2900, %v3068
      %v3086 = vpack.c.bf16 %v824, %v820
      %v3087 = vpack.c.bf16 %v825, %v821
      %v3088 = vpack.c.bf16 %v826, %v822
      %v3089 = vpack.c.bf16 %v827, %v823
      %v3090 = vpack.c.bf16 %v832, %v828
      %v3091 = vpack.c.bf16 %v833, %v829
      %v3092 = vpack.c.bf16 %v834, %v830
      %v3093 = vpack.c.bf16 %v835, %v831
      %s3094 = scalar_lea.vmem %s6, 64
      %v3095 = vld [vmem:[%s3094] sm:$0xf]
      %v3096 = vld [vmem:[%s3094 + $0x4] sm:$0xf]
      %v3097 = vld [vmem:[%s3094 + $0x8] sm:$0xf]
      %v3098 = vld [vmem:[%s3094 + $0xc] sm:$0xf]
      %v3103 = vunpack.c.l.b16 %v3095
      %v3104 = vunpack.c.l.b16 %v3096
      %v3105 = vunpack.c.l.b16 %v3097
      %v3106 = vunpack.c.l.b16 %v3098
      %v3107 = vpack.c.b16 %v3104, %v3103
      %v3108 = vpack.c.b16 %v3106, %v3105
      %v3110 = vsel %vm947, %v3107, 0
      %v3113 = vsel %vm947, %v3108, 0
      %3115 = vmatpush.bf16.msra.mxu0 0
      %3116 = vmatpush.bf16.msra.mxu0 0
      %3117 = vmatpush.bf16.msra.mxu0 0
      %3118 = vmatpush.bf16.msra.mxu0 0
      %3119 = vmatpush.bf16.msra.mxu0 0
      %3120 = vmatpush.bf16.msra.mxu0 0
      %3121 = vmatpush.bf16.msra.mxu0 %v3090
      %3122 = vmatpush.bf16.msra.mxu0 %v3086
      %3123 = vmatmul.bf16.gmra.mxu0 %v3110
      %v3124 = vpop.f32.mrf.mxu0
      %v3125 = vadd.f32 0.0, %v3124
      %v3126 = vpop.f32.mrf.mxu0
      %v3127 = vadd.f32 0.0, %v3126
      %3128 = vmatmul.bf16.gmra.mxu0 %v3113
      %v3129 = vpop.f32.mrf.mxu0
      %v3130 = vadd.f32 0.0, %v3129
      %v3131 = vpop.f32.mrf.mxu0
      %v3132 = vadd.f32 0.0, %v3131
      %3133 = vdwg.mxu0
      %3134 = vmatpush.bf16.msra.mxu0 0
      %3135 = vmatpush.bf16.msra.mxu0 0
      %3136 = vmatpush.bf16.msra.mxu0 0
      %3137 = vmatpush.bf16.msra.mxu0 0
      %3138 = vmatpush.bf16.msra.mxu0 0
      %3139 = vmatpush.bf16.msra.mxu0 0
      %3140 = vmatpush.bf16.msra.mxu0 %v3091
      %3141 = vmatpush.bf16.msra.mxu0 %v3087
      %3142 = vmatmul.bf16.gmra.mxu0 %v3110
      %v3143 = vpop.f32.mrf.mxu0
      %v3144 = vadd.f32 0.0, %v3143
      %v3145 = vpop.f32.mrf.mxu0
      %v3146 = vadd.f32 0.0, %v3145
      %3147 = vmatmul.bf16.gmra.mxu0 %v3113
      %v3148 = vpop.f32.mrf.mxu0
      %v3149 = vadd.f32 0.0, %v3148
      %v3150 = vpop.f32.mrf.mxu0
      %v3151 = vadd.f32 0.0, %v3150
      %3152 = vdwg.mxu0
      %3153 = vmatpush.bf16.msra.mxu0 0
      %3154 = vmatpush.bf16.msra.mxu0 0
      %3155 = vmatpush.bf16.msra.mxu0 0
      %3156 = vmatpush.bf16.msra.mxu0 0
      %3157 = vmatpush.bf16.msra.mxu0 0
      %3158 = vmatpush.bf16.msra.mxu0 0
      %3159 = vmatpush.bf16.msra.mxu0 %v3092
      %3160 = vmatpush.bf16.msra.mxu0 %v3088
      %3161 = vmatmul.bf16.gmra.mxu0 %v3110
      %v3162 = vpop.f32.mrf.mxu0
      %v3163 = vadd.f32 0.0, %v3162
      %v3164 = vpop.f32.mrf.mxu0
      %v3165 = vadd.f32 0.0, %v3164
      %3166 = vmatmul.bf16.gmra.mxu0 %v3113
      %v3167 = vpop.f32.mrf.mxu0
      %v3168 = vadd.f32 0.0, %v3167
      %v3169 = vpop.f32.mrf.mxu0
      %v3170 = vadd.f32 0.0, %v3169
      %3171 = vdwg.mxu0
      %3172 = vmatpush.bf16.msra.mxu0 0
      %3173 = vmatpush.bf16.msra.mxu0 0
      %3174 = vmatpush.bf16.msra.mxu0 0
      %3175 = vmatpush.bf16.msra.mxu0 0
      %3176 = vmatpush.bf16.msra.mxu0 0
      %3177 = vmatpush.bf16.msra.mxu0 0
      %3178 = vmatpush.bf16.msra.mxu0 %v3093
      %3179 = vmatpush.bf16.msra.mxu0 %v3089
      %3180 = vmatmul.bf16.gmra.mxu0 %v3110
      %v3181 = vpop.f32.mrf.mxu0
      %v3182 = vadd.f32 0.0, %v3181
      %v3183 = vpop.f32.mrf.mxu0
      %v3184 = vadd.f32 0.0, %v3183
      %3185 = vmatmul.bf16.gmra.mxu0 %v3113
      %v3186 = vpop.f32.mrf.mxu0
      %v3187 = vadd.f32 0.0, %v3186
      %v3188 = vpop.f32.mrf.mxu0
      %v3189 = vadd.f32 0.0, %v3188
      %3190 = vdwg.mxu0
      %v3191 = vadd.f32 %v3070, %v3125
      %v3192 = vadd.f32 %v3071, %v3144
      %v3193 = vadd.f32 %v3072, %v3163
      %v3194 = vadd.f32 %v3073, %v3182
      %v3195 = vadd.f32 %v3074, %v3127
      %v3196 = vadd.f32 %v3075, %v3146
      %v3197 = vadd.f32 %v3076, %v3165
      %v3198 = vadd.f32 %v3077, %v3184
      %v3199 = vadd.f32 %v3078, %v3130
      %v3200 = vadd.f32 %v3079, %v3149
      %v3201 = vadd.f32 %v3080, %v3168
      %v3202 = vadd.f32 %v3081, %v3187
      %v3203 = vadd.f32 %v3082, %v3132
      %v3204 = vadd.f32 %v3083, %v3151
      %v3205 = vadd.f32 %v3084, %v3170
      %v3206 = vadd.f32 %v3085, %v3189
      %3207 = vrot.lane.b32.xlu0 %v820, 127
      %v3208 = vpop.permute.xlu0 %3207
      %3209 = vrot.lane.b32.xlu0 %v824, 127
      %v3210 = vpop.permute.xlu0 %3209
      %3211 = vrot.lane.b32.xlu0 %v828, 127
      %v3212 = vpop.permute.xlu0 %3211
      %3213 = vrot.lane.b32.xlu0 %v832, 127
      %v3214 = vpop.permute.xlu0 %3213
      %3215 = vrot.lane.b32.xlu0 %v821, 127
      %v3216 = vpop.permute.xlu0 %3215
      %3217 = vrot.lane.b32.xlu0 %v825, 127
      %v3218 = vpop.permute.xlu0 %3217
      %3219 = vrot.lane.b32.xlu0 %v829, 127
      %v3220 = vpop.permute.xlu0 %3219
      %3221 = vrot.lane.b32.xlu0 %v833, 127
      %v3222 = vpop.permute.xlu0 %3221
      %3223 = vrot.lane.b32.xlu0 %v822, 127
      %v3224 = vpop.permute.xlu0 %3223
      %3225 = vrot.lane.b32.xlu0 %v826, 127
      %v3226 = vpop.permute.xlu0 %3225
      %3227 = vrot.lane.b32.xlu0 %v830, 127
      %v3228 = vpop.permute.xlu0 %3227
      %3229 = vrot.lane.b32.xlu0 %v834, 127
      %v3230 = vpop.permute.xlu0 %3229
      %3231 = vrot.lane.b32.xlu0 %v823, 127
      %v3232 = vpop.permute.xlu0 %3231
      %3233 = vrot.lane.b32.xlu0 %v827, 127
      %v3234 = vpop.permute.xlu0 %3233
      %3235 = vrot.lane.b32.xlu0 %v831, 127
      %v3236 = vpop.permute.xlu0 %3235
      %3237 = vrot.lane.b32.xlu0 %v835, 127
      %v3238 = vpop.permute.xlu0 %3237
      %v3239 = vsel %vm1154, %v3224, %v3232
      %v3240 = vsel %vm1154, %v3226, %v3234
      %v3241 = vsel %vm1154, %v3228, %v3236
      %v3242 = vsel %vm1154, %v3230, %v3238
      %v3243 = vsel %vm1154, %v3216, %v3224
      %v3244 = vsel %vm1154, %v3218, %v3226
      %v3245 = vsel %vm1154, %v3220, %v3228
      %v3246 = vsel %vm1154, %v3222, %v3230
      %v3247 = vsel %vm1154, %v3208, %v3216
      %v3248 = vsel %vm1154, %v3210, %v3218
      %v3249 = vsel %vm1154, %v3212, %v3220
      %v3250 = vsel %vm1154, %v3214, %v3222
      %v3251 = vsel %vm1154, %v3232, %v3208
      %v3252 = vsel %vm1154, %v3234, %v3210
      %v3253 = vsel %vm1154, %v3236, %v3212
      %v3254 = vsel %vm1154, %v3238, %v3214
      %v3255 = vmul.f32 %v3247, %v1172
      %v3256 = vmul.f32 %v3243, %v1173
      %v3257 = vmul.f32 %v3239, %v1174
      %v3258 = vmul.f32 %v3251, %v1175
      %v3259 = vmul.f32 %v3248, %v1172
      %v3260 = vmul.f32 %v3244, %v1173
      %v3261 = vmul.f32 %v3240, %v1174
      %v3262 = vmul.f32 %v3252, %v1175
      %v3263 = vmul.f32 %v3249, %v1172
      %v3264 = vmul.f32 %v3245, %v1173
      %v3265 = vmul.f32 %v3241, %v1174
      %v3266 = vmul.f32 %v3253, %v1175
      %v3267 = vmul.f32 %v3250, %v1172
      %v3268 = vmul.f32 %v3246, %v1173
      %v3269 = vmul.f32 %v3242, %v1174
      %v3270 = vmul.f32 %v3254, %v1175
      %v3271 = vpack.c.bf16 %v3259, %v3255
      %v3272 = vpack.c.bf16 %v3260, %v3256
      %v3273 = vpack.c.bf16 %v3261, %v3257
      %v3274 = vpack.c.bf16 %v3262, %v3258
      %v3275 = vpack.c.bf16 %v3267, %v3263
      %v3276 = vpack.c.bf16 %v3268, %v3264
      %v3277 = vpack.c.bf16 %v3269, %v3265
      %v3278 = vpack.c.bf16 %v3270, %v3266
      %s3279 = scalar_lea.vmem %s6, 80
      %v3280 = vld [vmem:[%s3279] sm:$0xf]
      %v3281 = vld [vmem:[%s3279 + $0x4] sm:$0xf]
      %v3282 = vld [vmem:[%s3279 + $0x8] sm:$0xf]
      %v3283 = vld [vmem:[%s3279 + $0xc] sm:$0xf]
      %v3288 = vunpack.c.l.b16 %v3280
      %v3289 = vunpack.c.l.b16 %v3281
      %v3290 = vunpack.c.l.b16 %v3282
      %v3291 = vunpack.c.l.b16 %v3283
      %v3292 = vpack.c.b16 %v3289, %v3288
      %v3293 = vpack.c.b16 %v3291, %v3290
      %v3295 = vsel %vm947, %v3292, 0
      %v3298 = vsel %vm947, %v3293, 0
      %3300 = vmatpush.bf16.msra.mxu0 0
      %3301 = vmatpush.bf16.msra.mxu0 0
      %3302 = vmatpush.bf16.msra.mxu0 0
      %3303 = vmatpush.bf16.msra.mxu0 0
      %3304 = vmatpush.bf16.msra.mxu0 0
      %3305 = vmatpush.bf16.msra.mxu0 0
      %3306 = vmatpush.bf16.msra.mxu0 %v3275
      %3307 = vmatpush.bf16.msra.mxu0 %v3271
      %3308 = vmatmul.bf16.gmra.mxu0 %v3295
      %v3309 = vpop.f32.mrf.mxu0
      %v3310 = vadd.f32 0.0, %v3309
      %v3311 = vpop.f32.mrf.mxu0
      %v3312 = vadd.f32 0.0, %v3311
      %3313 = vmatmul.bf16.gmra.mxu0 %v3298
      %v3314 = vpop.f32.mrf.mxu0
      %v3315 = vadd.f32 0.0, %v3314
      %v3316 = vpop.f32.mrf.mxu0
      %v3317 = vadd.f32 0.0, %v3316
      %3318 = vdwg.mxu0
      %3319 = vmatpush.bf16.msra.mxu0 0
      %3320 = vmatpush.bf16.msra.mxu0 0
      %3321 = vmatpush.bf16.msra.mxu0 0
      %3322 = vmatpush.bf16.msra.mxu0 0
      %3323 = vmatpush.bf16.msra.mxu0 0
      %3324 = vmatpush.bf16.msra.mxu0 0
      %3325 = vmatpush.bf16.msra.mxu0 %v3276
      %3326 = vmatpush.bf16.msra.mxu0 %v3272
      %3327 = vmatmul.bf16.gmra.mxu0 %v3295
      %v3328 = vpop.f32.mrf.mxu0
      %v3329 = vadd.f32 0.0, %v3328
      %v3330 = vpop.f32.mrf.mxu0
      %v3331 = vadd.f32 0.0, %v3330
      %3332 = vmatmul.bf16.gmra.mxu0 %v3298
      %v3333 = vpop.f32.mrf.mxu0
      %v3334 = vadd.f32 0.0, %v3333
      %v3335 = vpop.f32.mrf.mxu0
      %v3336 = vadd.f32 0.0, %v3335
      %3337 = vdwg.mxu0
      %3338 = vmatpush.bf16.msra.mxu0 0
      %3339 = vmatpush.bf16.msra.mxu0 0
      %3340 = vmatpush.bf16.msra.mxu0 0
      %3341 = vmatpush.bf16.msra.mxu0 0
      %3342 = vmatpush.bf16.msra.mxu0 0
      %3343 = vmatpush.bf16.msra.mxu0 0
      %3344 = vmatpush.bf16.msra.mxu0 %v3277
      %3345 = vmatpush.bf16.msra.mxu0 %v3273
      %3346 = vmatmul.bf16.gmra.mxu0 %v3295
      %v3347 = vpop.f32.mrf.mxu0
      %v3348 = vadd.f32 0.0, %v3347
      %v3349 = vpop.f32.mrf.mxu0
      %v3350 = vadd.f32 0.0, %v3349
      %3351 = vmatmul.bf16.gmra.mxu0 %v3298
      %v3352 = vpop.f32.mrf.mxu0
      %v3353 = vadd.f32 0.0, %v3352
      %v3354 = vpop.f32.mrf.mxu0
      %v3355 = vadd.f32 0.0, %v3354
      %3356 = vdwg.mxu0
      %3357 = vmatpush.bf16.msra.mxu0 0
      %3358 = vmatpush.bf16.msra.mxu0 0
      %3359 = vmatpush.bf16.msra.mxu0 0
      %3360 = vmatpush.bf16.msra.mxu0 0
      %3361 = vmatpush.bf16.msra.mxu0 0
      %3362 = vmatpush.bf16.msra.mxu0 0
      %3363 = vmatpush.bf16.msra.mxu0 %v3278
      %3364 = vmatpush.bf16.msra.mxu0 %v3274
      %3365 = vmatmul.bf16.gmra.mxu0 %v3295
      %v3366 = vpop.f32.mrf.mxu0
      %v3367 = vadd.f32 0.0, %v3366
      %v3368 = vpop.f32.mrf.mxu0
      %v3369 = vadd.f32 0.0, %v3368
      %3370 = vmatmul.bf16.gmra.mxu0 %v3298
      %v3371 = vpop.f32.mrf.mxu0
      %v3372 = vadd.f32 0.0, %v3371
      %v3373 = vpop.f32.mrf.mxu0
      %v3374 = vadd.f32 0.0, %v3373
      %3375 = vdwg.mxu0
      %v3376 = vadd.f32 %v3191, %v3310
      %v3377 = vadd.f32 %v3192, %v3329
      %v3378 = vadd.f32 %v3193, %v3348
      %v3379 = vadd.f32 %v3194, %v3367
      %v3380 = vadd.f32 %v3195, %v3312
      %v3381 = vadd.f32 %v3196, %v3331
      %v3382 = vadd.f32 %v3197, %v3350
      %v3383 = vadd.f32 %v3198, %v3369
      %v3384 = vadd.f32 %v3199, %v3315
      %v3385 = vadd.f32 %v3200, %v3334
      %v3386 = vadd.f32 %v3201, %v3353
      %v3387 = vadd.f32 %v3202, %v3372
      %v3388 = vadd.f32 %v3203, %v3317
      %v3389 = vadd.f32 %v3204, %v3336
      %v3390 = vadd.f32 %v3205, %v3355
      %v3391 = vadd.f32 %v3206, %v3374
      %3392 = vrot.lane.b32.xlu0 %v820, 97
      %v3393 = vpop.permute.xlu0 %3392
      %3394 = vrot.lane.b32.xlu0 %v824, 97
      %v3395 = vpop.permute.xlu0 %3394
      %3396 = vrot.lane.b32.xlu0 %v828, 97
      %v3397 = vpop.permute.xlu0 %3396
      %3398 = vrot.lane.b32.xlu0 %v832, 97
      %v3399 = vpop.permute.xlu0 %3398
      %3400 = vrot.lane.b32.xlu0 %v821, 97
      %v3401 = vpop.permute.xlu0 %3400
      %3402 = vrot.lane.b32.xlu0 %v825, 97
      %v3403 = vpop.permute.xlu0 %3402
      %3404 = vrot.lane.b32.xlu0 %v829, 97
      %v3405 = vpop.permute.xlu0 %3404
      %3406 = vrot.lane.b32.xlu0 %v833, 97
      %v3407 = vpop.permute.xlu0 %3406
      %3408 = vrot.lane.b32.xlu0 %v822, 97
      %v3409 = vpop.permute.xlu0 %3408
      %3410 = vrot.lane.b32.xlu0 %v826, 97
      %v3411 = vpop.permute.xlu0 %3410
      %3412 = vrot.lane.b32.xlu0 %v830, 97
      %v3413 = vpop.permute.xlu0 %3412
      %3414 = vrot.lane.b32.xlu0 %v834, 97
      %v3415 = vpop.permute.xlu0 %3414
      %3416 = vrot.lane.b32.xlu0 %v823, 97
      %v3417 = vpop.permute.xlu0 %3416
      %3418 = vrot.lane.b32.xlu0 %v827, 97
      %v3419 = vpop.permute.xlu0 %3418
      %3420 = vrot.lane.b32.xlu0 %v831, 97
      %v3421 = vpop.permute.xlu0 %3420
      %3422 = vrot.lane.b32.xlu0 %v835, 97
      %v3423 = vpop.permute.xlu0 %3422
      %vm3424 = vcmp.lt.s32.totalorder %v869, 97
      %v3425 = vsel %vm3424, %v3409, %v3417
      %v3426 = vsel %vm3424, %v3411, %v3419
      %v3427 = vsel %vm3424, %v3413, %v3421
      %v3428 = vsel %vm3424, %v3415, %v3423
      %v3429 = vsel %vm3424, %v3401, %v3409
      %v3430 = vsel %vm3424, %v3403, %v3411
      %v3431 = vsel %vm3424, %v3405, %v3413
      %v3432 = vsel %vm3424, %v3407, %v3415
      %v3433 = vsel %vm3424, %v3393, %v3401
      %v3434 = vsel %vm3424, %v3395, %v3403
      %v3435 = vsel %vm3424, %v3397, %v3405
      %v3436 = vsel %vm3424, %v3399, %v3407
      %v3437 = vsel %vm3424, %v3417, %v3393
      %v3438 = vsel %vm3424, %v3419, %v3395
      %v3439 = vsel %vm3424, %v3421, %v3397
      %v3440 = vsel %vm3424, %v3423, %v3399
      %v3441 = vmul.f32 %v492, %v486
      %v3443 = vperm.slane %v3441, 0
      %v3444 = vperm.slane %v3441, 1
      %v3445 = vperm.slane %v3441, 2
      %v3446 = vperm.slane %v3441, 3
      %v3451 = vmul.f32 %v3433, %v3443
      %v3452 = vmul.f32 %v3429, %v3444
      %v3453 = vmul.f32 %v3425, %v3445
      %v3454 = vmul.f32 %v3437, %v3446
      %v3455 = vmul.f32 %v3434, %v3443
      %v3456 = vmul.f32 %v3430, %v3444
      %v3457 = vmul.f32 %v3426, %v3445
      %v3458 = vmul.f32 %v3438, %v3446
      %v3459 = vmul.f32 %v3435, %v3443
      %v3460 = vmul.f32 %v3431, %v3444
      %v3461 = vmul.f32 %v3427, %v3445
      %v3462 = vmul.f32 %v3439, %v3446
      %v3463 = vmul.f32 %v3436, %v3443
      %v3464 = vmul.f32 %v3432, %v3444
      %v3465 = vmul.f32 %v3428, %v3445
      %v3466 = vmul.f32 %v3440, %v3446
      %v3467 = vpack.c.bf16 %v3455, %v3451
      %v3468 = vpack.c.bf16 %v3456, %v3452
      %v3469 = vpack.c.bf16 %v3457, %v3453
      %v3470 = vpack.c.bf16 %v3458, %v3454
      %v3471 = vpack.c.bf16 %v3463, %v3459
      %v3472 = vpack.c.bf16 %v3464, %v3460
      %v3473 = vpack.c.bf16 %v3465, %v3461
      %v3474 = vpack.c.bf16 %v3466, %v3462
      %s3475 = scalar_lea.vmem %s6, 96
      %v3476 = vld [vmem:[%s3475] sm:$0xf]
      %v3477 = vld [vmem:[%s3475 + $0x4] sm:$0xf]
      %v3478 = vld [vmem:[%s3475 + $0x8] sm:$0xf]
      %v3479 = vld [vmem:[%s3475 + $0xc] sm:$0xf]
      %v3484 = vunpack.c.l.b16 %v3476
      %v3485 = vunpack.c.l.b16 %v3477
      %v3486 = vunpack.c.l.b16 %v3478
      %v3487 = vunpack.c.l.b16 %v3479
      %v3488 = vpack.c.b16 %v3485, %v3484
      %v3489 = vpack.c.b16 %v3487, %v3486
      %v3491 = vsel %vm947, %v3488, 0
      %v3494 = vsel %vm947, %v3489, 0
      %3496 = vmatpush.bf16.msra.mxu0 0
      %3497 = vmatpush.bf16.msra.mxu0 0
      %3498 = vmatpush.bf16.msra.mxu0 0
      %3499 = vmatpush.bf16.msra.mxu0 0
      %3500 = vmatpush.bf16.msra.mxu0 0
      %3501 = vmatpush.bf16.msra.mxu0 0
      %3502 = vmatpush.bf16.msra.mxu0 %v3471
      %3503 = vmatpush.bf16.msra.mxu0 %v3467
      %3504 = vmatmul.bf16.gmra.mxu0 %v3491
      %v3505 = vpop.f32.mrf.mxu0
      %v3506 = vadd.f32 0.0, %v3505
      %v3507 = vpop.f32.mrf.mxu0
      %v3508 = vadd.f32 0.0, %v3507
      %3509 = vmatmul.bf16.gmra.mxu0 %v3494
      %v3510 = vpop.f32.mrf.mxu0
      %v3511 = vadd.f32 0.0, %v3510
      %v3512 = vpop.f32.mrf.mxu0
      %v3513 = vadd.f32 0.0, %v3512
      %3514 = vdwg.mxu0
      %3515 = vmatpush.bf16.msra.mxu0 0
      %3516 = vmatpush.bf16.msra.mxu0 0
      %3517 = vmatpush.bf16.msra.mxu0 0
      %3518 = vmatpush.bf16.msra.mxu0 0
      %3519 = vmatpush.bf16.msra.mxu0 0
      %3520 = vmatpush.bf16.msra.mxu0 0
      %3521 = vmatpush.bf16.msra.mxu0 %v3472
      %3522 = vmatpush.bf16.msra.mxu0 %v3468
      %3523 = vmatmul.bf16.gmra.mxu0 %v3491
      %v3524 = vpop.f32.mrf.mxu0
      %v3525 = vadd.f32 0.0, %v3524
      %v3526 = vpop.f32.mrf.mxu0
      %v3527 = vadd.f32 0.0, %v3526
      %3528 = vmatmul.bf16.gmra.mxu0 %v3494
      %v3529 = vpop.f32.mrf.mxu0
      %v3530 = vadd.f32 0.0, %v3529
      %v3531 = vpop.f32.mrf.mxu0
      %v3532 = vadd.f32 0.0, %v3531
      %3533 = vdwg.mxu0
      %3534 = vmatpush.bf16.msra.mxu0 0
      %3535 = vmatpush.bf16.msra.mxu0 0
      %3536 = vmatpush.bf16.msra.mxu0 0
      %3537 = vmatpush.bf16.msra.mxu0 0
      %3538 = vmatpush.bf16.msra.mxu0 0
      %3539 = vmatpush.bf16.msra.mxu0 0
      %3540 = vmatpush.bf16.msra.mxu0 %v3473
      %3541 = vmatpush.bf16.msra.mxu0 %v3469
      %3542 = vmatmul.bf16.gmra.mxu0 %v3491
      %v3543 = vpop.f32.mrf.mxu0
      %v3544 = vadd.f32 0.0, %v3543
      %v3545 = vpop.f32.mrf.mxu0
      %v3546 = vadd.f32 0.0, %v3545
      %3547 = vmatmul.bf16.gmra.mxu0 %v3494
      %v3548 = vpop.f32.mrf.mxu0
      %v3549 = vadd.f32 0.0, %v3548
      %v3550 = vpop.f32.mrf.mxu0
      %v3551 = vadd.f32 0.0, %v3550
      %3552 = vdwg.mxu0
      %3553 = vmatpush.bf16.msra.mxu0 0
      %3554 = vmatpush.bf16.msra.mxu0 0
      %3555 = vmatpush.bf16.msra.mxu0 0
      %3556 = vmatpush.bf16.msra.mxu0 0
      %3557 = vmatpush.bf16.msra.mxu0 0
      %3558 = vmatpush.bf16.msra.mxu0 0
      %3559 = vmatpush.bf16.msra.mxu0 %v3474
      %3560 = vmatpush.bf16.msra.mxu0 %v3470
      %3561 = vmatmul.bf16.gmra.mxu0 %v3491
      %v3562 = vpop.f32.mrf.mxu0
      %v3563 = vadd.f32 0.0, %v3562
      %v3564 = vpop.f32.mrf.mxu0
      %v3565 = vadd.f32 0.0, %v3564
      %3566 = vmatmul.bf16.gmra.mxu0 %v3494
      %v3567 = vpop.f32.mrf.mxu0
      %v3568 = vadd.f32 0.0, %v3567
      %v3569 = vpop.f32.mrf.mxu0
      %v3570 = vadd.f32 0.0, %v3569
      %3571 = vdwg.mxu0
      %v3572 = vadd.f32 %v3376, %v3506
      %v3573 = vadd.f32 %v3377, %v3525
      %v3574 = vadd.f32 %v3378, %v3544
      %v3575 = vadd.f32 %v3379, %v3563
      %v3576 = vadd.f32 %v3380, %v3508
      %v3577 = vadd.f32 %v3381, %v3527
      %v3578 = vadd.f32 %v3382, %v3546
      %v3579 = vadd.f32 %v3383, %v3565
      %v3580 = vadd.f32 %v3384, %v3511
      %v3581 = vadd.f32 %v3385, %v3530
      %v3582 = vadd.f32 %v3386, %v3549
      %v3583 = vadd.f32 %v3387, %v3568
      %v3584 = vadd.f32 %v3388, %v3513
      %v3585 = vadd.f32 %v3389, %v3532
      %v3586 = vadd.f32 %v3390, %v3551
      %v3587 = vadd.f32 %v3391, %v3570
      %3588 = vrot.lane.b32.xlu0 %v820, 96
      %v3589 = vpop.permute.xlu0 %3588
      %3590 = vrot.lane.b32.xlu0 %v824, 96
      %v3591 = vpop.permute.xlu0 %3590
      %3592 = vrot.lane.b32.xlu0 %v828, 96
      %v3593 = vpop.permute.xlu0 %3592
      %3594 = vrot.lane.b32.xlu0 %v832, 96
      %v3595 = vpop.permute.xlu0 %3594
      %3596 = vrot.lane.b32.xlu0 %v821, 96
      %v3597 = vpop.permute.xlu0 %3596
      %3598 = vrot.lane.b32.xlu0 %v825, 96
      %v3599 = vpop.permute.xlu0 %3598
      %3600 = vrot.lane.b32.xlu0 %v829, 96
      %v3601 = vpop.permute.xlu0 %3600
      %3602 = vrot.lane.b32.xlu0 %v833, 96
      %v3603 = vpop.permute.xlu0 %3602
      %3604 = vrot.lane.b32.xlu0 %v822, 96
      %v3605 = vpop.permute.xlu0 %3604
      %3606 = vrot.lane.b32.xlu0 %v826, 96
      %v3607 = vpop.permute.xlu0 %3606
      %3608 = vrot.lane.b32.xlu0 %v830, 96
      %v3609 = vpop.permute.xlu0 %3608
      %3610 = vrot.lane.b32.xlu0 %v834, 96
      %v3611 = vpop.permute.xlu0 %3610
      %3612 = vrot.lane.b32.xlu0 %v823, 96
      %v3613 = vpop.permute.xlu0 %3612
      %3614 = vrot.lane.b32.xlu0 %v827, 96
      %v3615 = vpop.permute.xlu0 %3614
      %3616 = vrot.lane.b32.xlu0 %v831, 96
      %v3617 = vpop.permute.xlu0 %3616
      %3618 = vrot.lane.b32.xlu0 %v835, 96
      %v3619 = vpop.permute.xlu0 %3618
      %vm3620 = vcmp.lt.s32.totalorder %v869, 96
      %v3621 = vsel %vm3620, %v3605, %v3613
      %v3622 = vsel %vm3620, %v3607, %v3615
      %v3623 = vsel %vm3620, %v3609, %v3617
      %v3624 = vsel %vm3620, %v3611, %v3619
      %v3625 = vsel %vm3620, %v3597, %v3605
      %v3626 = vsel %vm3620, %v3599, %v3607
      %v3627 = vsel %vm3620, %v3601, %v3609
      %v3628 = vsel %vm3620, %v3603, %v3611
      %v3629 = vsel %vm3620, %v3589, %v3597
      %v3630 = vsel %vm3620, %v3591, %v3599
      %v3631 = vsel %vm3620, %v3593, %v3601
      %v3632 = vsel %vm3620, %v3595, %v3603
      %v3633 = vsel %vm3620, %v3613, %v3589
      %v3634 = vsel %vm3620, %v3615, %v3591
      %v3635 = vsel %vm3620, %v3617, %v3593
      %v3636 = vsel %vm3620, %v3619, %v3595
      %v3638 = vperm.slane %v492, 0
      %v3639 = vperm.slane %v492, 1
      %v3640 = vperm.slane %v492, 2
      %v3641 = vperm.slane %v492, 3
      %v3646 = vmul.f32 %v3629, %v3638
      %v3647 = vmul.f32 %v3625, %v3639
      %v3648 = vmul.f32 %v3621, %v3640
      %v3649 = vmul.f32 %v3633, %v3641
      %v3650 = vmul.f32 %v3630, %v3638
      %v3651 = vmul.f32 %v3626, %v3639
      %v3652 = vmul.f32 %v3622, %v3640
      %v3653 = vmul.f32 %v3634, %v3641
      %v3654 = vmul.f32 %v3631, %v3638
      %v3655 = vmul.f32 %v3627, %v3639
      %v3656 = vmul.f32 %v3623, %v3640
      %v3657 = vmul.f32 %v3635, %v3641
      %v3658 = vmul.f32 %v3632, %v3638
      %v3659 = vmul.f32 %v3628, %v3639
      %v3660 = vmul.f32 %v3624, %v3640
      %v3661 = vmul.f32 %v3636, %v3641
      %v3662 = vpack.c.bf16 %v3650, %v3646
      %v3663 = vpack.c.bf16 %v3651, %v3647
      %v3664 = vpack.c.bf16 %v3652, %v3648
      %v3665 = vpack.c.bf16 %v3653, %v3649
      %v3666 = vpack.c.bf16 %v3658, %v3654
      %v3667 = vpack.c.bf16 %v3659, %v3655
      %v3668 = vpack.c.bf16 %v3660, %v3656
      %v3669 = vpack.c.bf16 %v3661, %v3657
      %s3670 = scalar_lea.vmem %s6, 112
      %v3671 = vld [vmem:[%s3670] sm:$0xf]
      %v3672 = vld [vmem:[%s3670 + $0x4] sm:$0xf]
      %v3673 = vld [vmem:[%s3670 + $0x8] sm:$0xf]
      %v3674 = vld [vmem:[%s3670 + $0xc] sm:$0xf]
      %v3679 = vunpack.c.l.b16 %v3671
      %v3680 = vunpack.c.l.b16 %v3672
      %v3681 = vunpack.c.l.b16 %v3673
      %v3682 = vunpack.c.l.b16 %v3674
      %v3683 = vpack.c.b16 %v3680, %v3679
      %v3684 = vpack.c.b16 %v3682, %v3681
      %v3686 = vsel %vm947, %v3683, 0
      %v3689 = vsel %vm947, %v3684, 0
      %3691 = vmatpush.bf16.msra.mxu0 0
      %3692 = vmatpush.bf16.msra.mxu0 0
      %3693 = vmatpush.bf16.msra.mxu0 0
      %3694 = vmatpush.bf16.msra.mxu0 0
      %3695 = vmatpush.bf16.msra.mxu0 0
      %3696 = vmatpush.bf16.msra.mxu0 0
      %3697 = vmatpush.bf16.msra.mxu0 %v3666
      %3698 = vmatpush.bf16.msra.mxu0 %v3662
      %3699 = vmatmul.bf16.gmra.mxu0 %v3686
      %v3700 = vpop.f32.mrf.mxu0
      %v3701 = vadd.f32 0.0, %v3700
      %v3702 = vpop.f32.mrf.mxu0
      %v3703 = vadd.f32 0.0, %v3702
      %3704 = vmatmul.bf16.gmra.mxu0 %v3689
      %v3705 = vpop.f32.mrf.mxu0
      %v3706 = vadd.f32 0.0, %v3705
      %v3707 = vpop.f32.mrf.mxu0
      %v3708 = vadd.f32 0.0, %v3707
      %3709 = vdwg.mxu0
      %3710 = vmatpush.bf16.msra.mxu0 0
      %3711 = vmatpush.bf16.msra.mxu0 0
      %3712 = vmatpush.bf16.msra.mxu0 0
      %3713 = vmatpush.bf16.msra.mxu0 0
      %3714 = vmatpush.bf16.msra.mxu0 0
      %3715 = vmatpush.bf16.msra.mxu0 0
      %3716 = vmatpush.bf16.msra.mxu0 %v3667
      %3717 = vmatpush.bf16.msra.mxu0 %v3663
      %3718 = vmatmul.bf16.gmra.mxu0 %v3686
      %v3719 = vpop.f32.mrf.mxu0
      %v3720 = vadd.f32 0.0, %v3719
      %v3721 = vpop.f32.mrf.mxu0
      %v3722 = vadd.f32 0.0, %v3721
      %3723 = vmatmul.bf16.gmra.mxu0 %v3689
      %v3724 = vpop.f32.mrf.mxu0
      %v3725 = vadd.f32 0.0, %v3724
      %v3726 = vpop.f32.mrf.mxu0
      %v3727 = vadd.f32 0.0, %v3726
      %3728 = vdwg.mxu0
      %3729 = vmatpush.bf16.msra.mxu0 0
      %3730 = vmatpush.bf16.msra.mxu0 0
      %3731 = vmatpush.bf16.msra.mxu0 0
      %3732 = vmatpush.bf16.msra.mxu0 0
      %3733 = vmatpush.bf16.msra.mxu0 0
      %3734 = vmatpush.bf16.msra.mxu0 0
      %3735 = vmatpush.bf16.msra.mxu0 %v3668
      %3736 = vmatpush.bf16.msra.mxu0 %v3664
      %3737 = vmatmul.bf16.gmra.mxu0 %v3686
      %v3738 = vpop.f32.mrf.mxu0
      %v3739 = vadd.f32 0.0, %v3738
      %v3740 = vpop.f32.mrf.mxu0
      %v3741 = vadd.f32 0.0, %v3740
      %3742 = vmatmul.bf16.gmra.mxu0 %v3689
      %v3743 = vpop.f32.mrf.mxu0
      %v3744 = vadd.f32 0.0, %v3743
      %v3745 = vpop.f32.mrf.mxu0
      %v3746 = vadd.f32 0.0, %v3745
      %3747 = vdwg.mxu0
      %3748 = vmatpush.bf16.msra.mxu0 0
      %3749 = vmatpush.bf16.msra.mxu0 0
      %3750 = vmatpush.bf16.msra.mxu0 0
      %3751 = vmatpush.bf16.msra.mxu0 0
      %3752 = vmatpush.bf16.msra.mxu0 0
      %3753 = vmatpush.bf16.msra.mxu0 0
      %3754 = vmatpush.bf16.msra.mxu0 %v3669
      %3755 = vmatpush.bf16.msra.mxu0 %v3665
      %3756 = vmatmul.bf16.gmra.mxu0 %v3686
      %v3757 = vpop.f32.mrf.mxu0
      %v3758 = vadd.f32 0.0, %v3757
      %v3759 = vpop.f32.mrf.mxu0
      %v3760 = vadd.f32 0.0, %v3759
      %3761 = vmatmul.bf16.gmra.mxu0 %v3689
      %v3762 = vpop.f32.mrf.mxu0
      %v3763 = vadd.f32 0.0, %v3762
      %v3764 = vpop.f32.mrf.mxu0
      %v3765 = vadd.f32 0.0, %v3764
      %3766 = vdwg.mxu0
      %v3767 = vadd.f32 %v3572, %v3701
      %v3768 = vadd.f32 %v3573, %v3720
      %v3769 = vadd.f32 %v3574, %v3739
      %v3770 = vadd.f32 %v3575, %v3758
      %v3771 = vadd.f32 %v3576, %v3703
      %v3772 = vadd.f32 %v3577, %v3722
      %v3773 = vadd.f32 %v3578, %v3741
      %v3774 = vadd.f32 %v3579, %v3760
      %v3775 = vadd.f32 %v3580, %v3706
      %v3776 = vadd.f32 %v3581, %v3725
      %v3777 = vadd.f32 %v3582, %v3744
      %v3778 = vadd.f32 %v3583, %v3763
      %v3779 = vadd.f32 %v3584, %v3708
      %v3780 = vadd.f32 %v3585, %v3727
      %v3781 = vadd.f32 %v3586, %v3746
      %v3782 = vadd.f32 %v3587, %v3765
      %3783 = vrot.lane.b32.xlu0 %v820, 95
      %v3784 = vpop.permute.xlu0 %3783
      %3785 = vrot.lane.b32.xlu0 %v824, 95
      %v3786 = vpop.permute.xlu0 %3785
      %3787 = vrot.lane.b32.xlu0 %v828, 95
      %v3788 = vpop.permute.xlu0 %3787
      %3789 = vrot.lane.b32.xlu0 %v832, 95
      %v3790 = vpop.permute.xlu0 %3789
      %3791 = vrot.lane.b32.xlu0 %v821, 95
      %v3792 = vpop.permute.xlu0 %3791
      %3793 = vrot.lane.b32.xlu0 %v825, 95
      %v3794 = vpop.permute.xlu0 %3793
      %3795 = vrot.lane.b32.xlu0 %v829, 95
      %v3796 = vpop.permute.xlu0 %3795
      %3797 = vrot.lane.b32.xlu0 %v833, 95
      %v3798 = vpop.permute.xlu0 %3797
      %3799 = vrot.lane.b32.xlu0 %v822, 95
      %v3800 = vpop.permute.xlu0 %3799
      %3801 = vrot.lane.b32.xlu0 %v826, 95
      %v3802 = vpop.permute.xlu0 %3801
      %3803 = vrot.lane.b32.xlu0 %v830, 95
      %v3804 = vpop.permute.xlu0 %3803
      %3805 = vrot.lane.b32.xlu0 %v834, 95
      %v3806 = vpop.permute.xlu0 %3805
      %3807 = vrot.lane.b32.xlu0 %v823, 95
      %v3808 = vpop.permute.xlu0 %3807
      %3809 = vrot.lane.b32.xlu0 %v827, 95
      %v3810 = vpop.permute.xlu0 %3809
      %3811 = vrot.lane.b32.xlu0 %v831, 95
      %v3812 = vpop.permute.xlu0 %3811
      %3813 = vrot.lane.b32.xlu0 %v835, 95
      %v3814 = vpop.permute.xlu0 %3813
      %vm3815 = vcmp.lt.s32.totalorder %v869, 95
      %v3816 = vsel %vm3815, %v3800, %v3808
      %v3817 = vsel %vm3815, %v3802, %v3810
      %v3818 = vsel %vm3815, %v3804, %v3812
      %v3819 = vsel %vm3815, %v3806, %v3814
      %v3820 = vsel %vm3815, %v3792, %v3800
      %v3821 = vsel %vm3815, %v3794, %v3802
      %v3822 = vsel %vm3815, %v3796, %v3804
      %v3823 = vsel %vm3815, %v3798, %v3806
      %v3824 = vsel %vm3815, %v3784, %v3792
      %v3825 = vsel %vm3815, %v3786, %v3794
      %v3826 = vsel %vm3815, %v3788, %v3796
      %v3827 = vsel %vm3815, %v3790, %v3798
      %v3828 = vsel %vm3815, %v3808, %v3784
      %v3829 = vsel %vm3815, %v3810, %v3786
      %v3830 = vsel %vm3815, %v3812, %v3788
      %v3831 = vsel %vm3815, %v3814, %v3790
      %v3832 = vmul.f32 %v492, %v488
      %v3834 = vperm.slane %v3832, 0
      %v3835 = vperm.slane %v3832, 1
      %v3836 = vperm.slane %v3832, 2
      %v3837 = vperm.slane %v3832, 3
      %v3842 = vmul.f32 %v3824, %v3834
      %v3843 = vmul.f32 %v3820, %v3835
      %v3844 = vmul.f32 %v3816, %v3836
      %v3845 = vmul.f32 %v3828, %v3837
      %v3846 = vmul.f32 %v3825, %v3834
      %v3847 = vmul.f32 %v3821, %v3835
      %v3848 = vmul.f32 %v3817, %v3836
      %v3849 = vmul.f32 %v3829, %v3837
      %v3850 = vmul.f32 %v3826, %v3834
      %v3851 = vmul.f32 %v3822, %v3835
      %v3852 = vmul.f32 %v3818, %v3836
      %v3853 = vmul.f32 %v3830, %v3837
      %v3854 = vmul.f32 %v3827, %v3834
      %v3855 = vmul.f32 %v3823, %v3835
      %v3856 = vmul.f32 %v3819, %v3836
      %v3857 = vmul.f32 %v3831, %v3837
      %v3858 = vpack.c.bf16 %v3846, %v3842
      %v3859 = vpack.c.bf16 %v3847, %v3843
      %v3860 = vpack.c.bf16 %v3848, %v3844
      %v3861 = vpack.c.bf16 %v3849, %v3845
      %v3862 = vpack.c.bf16 %v3854, %v3850
      %v3863 = vpack.c.bf16 %v3855, %v3851
      %v3864 = vpack.c.bf16 %v3856, %v3852
      %v3865 = vpack.c.bf16 %v3857, %v3853
      %s3866 = scalar_lea.vmem %s6, 128
      %v3867 = vld [vmem:[%s3866] sm:$0xf]
      %v3868 = vld [vmem:[%s3866 + $0x4] sm:$0xf]
      %v3869 = vld [vmem:[%s3866 + $0x8] sm:$0xf]
      %v3870 = vld [vmem:[%s3866 + $0xc] sm:$0xf]
      %v3875 = vunpack.c.l.b16 %v3867
      %v3876 = vunpack.c.l.b16 %v3868
      %v3877 = vunpack.c.l.b16 %v3869
      %v3878 = vunpack.c.l.b16 %v3870
      %v3879 = vpack.c.b16 %v3876, %v3875
      %v3880 = vpack.c.b16 %v3878, %v3877
      %v3882 = vsel %vm947, %v3879, 0
      %v3885 = vsel %vm947, %v3880, 0
      %3887 = vmatpush.bf16.msra.mxu0 0
      %3888 = vmatpush.bf16.msra.mxu0 0
      %3889 = vmatpush.bf16.msra.mxu0 0
      %3890 = vmatpush.bf16.msra.mxu0 0
      %3891 = vmatpush.bf16.msra.mxu0 0
      %3892 = vmatpush.bf16.msra.mxu0 0
      %3893 = vmatpush.bf16.msra.mxu0 %v3862
      %3894 = vmatpush.bf16.msra.mxu0 %v3858
      %3895 = vmatmul.bf16.gmra.mxu0 %v3882
      %v3896 = vpop.f32.mrf.mxu0
      %v3897 = vadd.f32 0.0, %v3896
      %v3898 = vpop.f32.mrf.mxu0
      %v3899 = vadd.f32 0.0, %v3898
      %3900 = vmatmul.bf16.gmra.mxu0 %v3885
      %v3901 = vpop.f32.mrf.mxu0
      %v3902 = vadd.f32 0.0, %v3901
      %v3903 = vpop.f32.mrf.mxu0
      %v3904 = vadd.f32 0.0, %v3903
      %3905 = vdwg.mxu0
      %3906 = vmatpush.bf16.msra.mxu0 0
      %3907 = vmatpush.bf16.msra.mxu0 0
      %3908 = vmatpush.bf16.msra.mxu0 0
      %3909 = vmatpush.bf16.msra.mxu0 0
      %3910 = vmatpush.bf16.msra.mxu0 0
      %3911 = vmatpush.bf16.msra.mxu0 0
      %3912 = vmatpush.bf16.msra.mxu0 %v3863
      %3913 = vmatpush.bf16.msra.mxu0 %v3859
      %3914 = vmatmul.bf16.gmra.mxu0 %v3882
      %v3915 = vpop.f32.mrf.mxu0
      %v3916 = vadd.f32 0.0, %v3915
      %v3917 = vpop.f32.mrf.mxu0
      %v3918 = vadd.f32 0.0, %v3917
      %3919 = vmatmul.bf16.gmra.mxu0 %v3885
      %v3920 = vpop.f32.mrf.mxu0
      %v3921 = vadd.f32 0.0, %v3920
      %v3922 = vpop.f32.mrf.mxu0
      %v3923 = vadd.f32 0.0, %v3922
      %3924 = vdwg.mxu0
      %3925 = vmatpush.bf16.msra.mxu0 0
      %3926 = vmatpush.bf16.msra.mxu0 0
      %3927 = vmatpush.bf16.msra.mxu0 0
      %3928 = vmatpush.bf16.msra.mxu0 0
      %3929 = vmatpush.bf16.msra.mxu0 0
      %3930 = vmatpush.bf16.msra.mxu0 0
      %3931 = vmatpush.bf16.msra.mxu0 %v3864
      %3932 = vmatpush.bf16.msra.mxu0 %v3860
      %3933 = vmatmul.bf16.gmra.mxu0 %v3882
      %v3934 = vpop.f32.mrf.mxu0
      %v3935 = vadd.f32 0.0, %v3934
      %v3936 = vpop.f32.mrf.mxu0
      %v3937 = vadd.f32 0.0, %v3936
      %3938 = vmatmul.bf16.gmra.mxu0 %v3885
      %v3939 = vpop.f32.mrf.mxu0
      %v3940 = vadd.f32 0.0, %v3939
      %v3941 = vpop.f32.mrf.mxu0
      %v3942 = vadd.f32 0.0, %v3941
      %3943 = vdwg.mxu0
      %3944 = vmatpush.bf16.msra.mxu0 0
      %3945 = vmatpush.bf16.msra.mxu0 0
      %3946 = vmatpush.bf16.msra.mxu0 0
      %3947 = vmatpush.bf16.msra.mxu0 0
      %3948 = vmatpush.bf16.msra.mxu0 0
      %3949 = vmatpush.bf16.msra.mxu0 0
      %3950 = vmatpush.bf16.msra.mxu0 %v3865
      %3951 = vmatpush.bf16.msra.mxu0 %v3861
      %3952 = vmatmul.bf16.gmra.mxu0 %v3882
      %v3953 = vpop.f32.mrf.mxu0
      %v3954 = vadd.f32 0.0, %v3953
      %v3955 = vpop.f32.mrf.mxu0
      %v3956 = vadd.f32 0.0, %v3955
      %3957 = vmatmul.bf16.gmra.mxu0 %v3885
      %v3958 = vpop.f32.mrf.mxu0
      %v3959 = vadd.f32 0.0, %v3958
      %v3960 = vpop.f32.mrf.mxu0
      %v3961 = vadd.f32 0.0, %v3960
      %3962 = vdwg.mxu0
      %v3963 = vadd.f32 %v3767, %v3897
      %v3964 = vadd.f32 %v3768, %v3916
      %v3965 = vadd.f32 %v3769, %v3935
      %v3966 = vadd.f32 %v3770, %v3954
      %v3967 = vadd.f32 %v3771, %v3899
      %v3968 = vadd.f32 %v3772, %v3918
      %v3969 = vadd.f32 %v3773, %v3937
      %v3970 = vadd.f32 %v3774, %v3956
      %v3971 = vadd.f32 %v3775, %v3902
      %v3972 = vadd.f32 %v3776, %v3921
      %v3973 = vadd.f32 %v3777, %v3940
      %v3974 = vadd.f32 %v3778, %v3959
      %v3975 = vadd.f32 %v3779, %v3904
      %v3976 = vadd.f32 %v3780, %v3923
      %v3977 = vadd.f32 %v3781, %v3942
      %v3978 = vadd.f32 %v3782, %v3961
      %vm3979 = vcmp.gt.f32.partialorder %v3963, 0.0
      %vm3980 = vcmp.gt.f32.partialorder %v3964, 0.0
      %vm3981 = vcmp.gt.f32.partialorder %v3965, 0.0
      %vm3982 = vcmp.gt.f32.partialorder %v3966, 0.0
      %vm3983 = vcmp.gt.f32.partialorder %v3967, 0.0
      %vm3984 = vcmp.gt.f32.partialorder %v3968, 0.0
      %vm3985 = vcmp.gt.f32.partialorder %v3969, 0.0
      %vm3986 = vcmp.gt.f32.partialorder %v3970, 0.0
      %vm3987 = vcmp.gt.f32.partialorder %v3971, 0.0
      %vm3988 = vcmp.gt.f32.partialorder %v3972, 0.0
      %vm3989 = vcmp.gt.f32.partialorder %v3973, 0.0
      %vm3990 = vcmp.gt.f32.partialorder %v3974, 0.0
      %vm3991 = vcmp.gt.f32.partialorder %v3975, 0.0
      %vm3992 = vcmp.gt.f32.partialorder %v3976, 0.0
      %vm3993 = vcmp.gt.f32.partialorder %v3977, 0.0
      %vm3994 = vcmp.gt.f32.partialorder %v3978, 0.0
      %v3995 = vmul.f32 %v3963, 0.01
      %v3996 = vmul.f32 %v3964, 0.01
      %v3997 = vmul.f32 %v3965, 0.01
      %v3998 = vmul.f32 %v3966, 0.01
      %v3999 = vmul.f32 %v3967, 0.01
      %v4000 = vmul.f32 %v3968, 0.01
      %v4001 = vmul.f32 %v3969, 0.01
      %v4002 = vmul.f32 %v3970, 0.01
      %v4003 = vmul.f32 %v3971, 0.01
      %v4004 = vmul.f32 %v3972, 0.01
      %v4005 = vmul.f32 %v3973, 0.01
      %v4006 = vmul.f32 %v3974, 0.01
      %v4007 = vmul.f32 %v3975, 0.01
      %v4008 = vmul.f32 %v3976, 0.01
      %v4009 = vmul.f32 %v3977, 0.01
      %v4010 = vmul.f32 %v3978, 0.01
      %v4011 = vsel %vm3979, %v3963, %v3995
      %v4012 = vsel %vm3980, %v3964, %v3996
      %v4013 = vsel %vm3981, %v3965, %v3997
      %v4014 = vsel %vm3982, %v3966, %v3998
      %v4015 = vsel %vm3983, %v3967, %v3999
      %v4016 = vsel %vm3984, %v3968, %v4000
      %v4017 = vsel %vm3985, %v3969, %v4001
      %v4018 = vsel %vm3986, %v3970, %v4002
      %v4019 = vsel %vm3987, %v3971, %v4003
      %v4020 = vsel %vm3988, %v3972, %v4004
      %v4021 = vsel %vm3989, %v3973, %v4005
      %v4022 = vsel %vm3990, %v3974, %v4006
      %v4023 = vsel %vm3991, %v3975, %v4007
      %v4024 = vsel %vm3992, %v3976, %v4008
      %v4025 = vsel %vm3993, %v3977, %v4009
      %v4026 = vsel %vm3994, %v3978, %v4010
      %4027 = vst [vmem:[%s475] sm:$0xff] %v2331
      %4028 = vst [vmem:[%s475 + $0x8] sm:$0xff] %v2332
      %4029 = vst [vmem:[%s475 + $0x10] sm:$0xff] %v2333
      %4030 = vst [vmem:[%s475 + $0x18] sm:$0xff] %v2334
      %4031 = vst [vmem:[%s475 + $0x20] sm:$0xff] %v2335
      %4032 = vst [vmem:[%s475 + $0x28] sm:$0xff] %v2336
      %4033 = vst [vmem:[%s475 + $0x30] sm:$0xff] %v2337
      %4034 = vst [vmem:[%s475 + $0x38] sm:$0xff] %v2338
      %4035 = vst [vmem:[%s475 + $0x40] sm:$0xff] %v2339
      %4036 = vst [vmem:[%s475 + $0x48] sm:$0xff] %v2340
      %4037 = vst [vmem:[%s475 + $0x50] sm:$0xff] %v2341
      %4038 = vst [vmem:[%s475 + $0x58] sm:$0xff] %v2342
      %4039 = vst [vmem:[%s475 + $0x60] sm:$0xff] %v2343
      %4040 = vst [vmem:[%s475 + $0x68] sm:$0xff] %v2344
      %4041 = vst [vmem:[%s475 + $0x70] sm:$0xff] %v2345
      %4042 = vst [vmem:[%s475 + $0x78] sm:$0xff] %v2346
      %4043 = vst [vmem:[%s480] sm:$0xff] %v4011
      %4044 = vst [vmem:[%s480 + $0x8] sm:$0xff] %v4012
      %4045 = vst [vmem:[%s480 + $0x10] sm:$0xff] %v4013
      %4046 = vst [vmem:[%s480 + $0x18] sm:$0xff] %v4014
      %4047 = vst [vmem:[%s480 + $0x20] sm:$0xff] %v4015
      %4048 = vst [vmem:[%s480 + $0x28] sm:$0xff] %v4016
      %4049 = vst [vmem:[%s480 + $0x30] sm:$0xff] %v4017
      %4050 = vst [vmem:[%s480 + $0x38] sm:$0xff] %v4018
      %4051 = vst [vmem:[%s480 + $0x40] sm:$0xff] %v4019
      %4052 = vst [vmem:[%s480 + $0x48] sm:$0xff] %v4020
      %4053 = vst [vmem:[%s480 + $0x50] sm:$0xff] %v4021
      %4054 = vst [vmem:[%s480 + $0x58] sm:$0xff] %v4022
      %4055 = vst [vmem:[%s480 + $0x60] sm:$0xff] %v4023
      %4056 = vst [vmem:[%s480 + $0x68] sm:$0xff] %v4024
      %4057 = vst [vmem:[%s480 + $0x70] sm:$0xff] %v4025
      %4058 = vst [vmem:[%s480 + $0x78] sm:$0xff] %v4026
      %v4059 = vadd.f32 %v2331, %v2332
      %v4060 = vadd.f32 %v4059, %v2333
      %v4061 = vadd.f32 %v4060, %v2334
      %4062 = vadd.xlane.f32.xlu0 %v4061
      %v4063 = vpop.xlane.xlu0 %4062
      %v4064 = vadd.f32 %v2335, %v2336
      %v4065 = vadd.f32 %v4064, %v2337
      %v4066 = vadd.f32 %v4065, %v2338
      %4067 = vadd.xlane.f32.xlu0 %v4066
      %v4068 = vpop.xlane.xlu0 %4067
      %v4069 = vadd.f32 %v2339, %v2340
      %v4070 = vadd.f32 %v4069, %v2341
      %v4071 = vadd.f32 %v4070, %v2342
      %4072 = vadd.xlane.f32.xlu0 %v4071
      %v4073 = vpop.xlane.xlu0 %4072
      %v4074 = vadd.f32 %v2343, %v2344
      %v4075 = vadd.f32 %v4074, %v2345
      %v4076 = vadd.f32 %v4075, %v2346
      %4077 = vadd.xlane.f32.xlu0 %v4076
      %v4078 = vpop.xlane.xlu0 %4077
      %v4083 = vperm.slane %v4063, %v869
      %v4084 = vadd.s32 %v869, 4294967288
      %v4085 = vperm.slane %v4068, %v4084
      %vm4086 = vcmask 130112
      %v4087 = vsel %vm4086, %v4085, %v4083
      %v4088 = vadd.s32 %v869, 4294967280
      %v4089 = vperm.slane %v4073, %v4088
      %vm4090 = vcmask 195712
      %v4091 = vsel %vm4090, %v4089, %v4087
      %v4092 = vadd.s32 %v869, 4294967272
      %v4093 = vperm.slane %v4078, %v4092
      %vm4094 = vcmask 261312
      %v4095 = vsel %vm4094, %v4093, %v4091
      %vm4097 = vcmask 253952
      %4098 = vst.msk [vmem:[%s484] sm:$0x1] %vm4097, %v4095
      %v4099 = vmul.f32 %v2331, %v2331
      %v4100 = vmul.f32 %v2332, %v2332
      %v4101 = vmul.f32 %v2333, %v2333
      %v4102 = vmul.f32 %v2334, %v2334
      %v4103 = vmul.f32 %v2335, %v2335
      %v4104 = vmul.f32 %v2336, %v2336
      %v4105 = vmul.f32 %v2337, %v2337
      %v4106 = vmul.f32 %v2338, %v2338
      %v4107 = vmul.f32 %v2339, %v2339
      %v4108 = vmul.f32 %v2340, %v2340
      %v4109 = vmul.f32 %v2341, %v2341
      %v4110 = vmul.f32 %v2342, %v2342
      %v4111 = vmul.f32 %v2343, %v2343
      %v4112 = vmul.f32 %v2344, %v2344
      %v4113 = vmul.f32 %v2345, %v2345
      %v4114 = vmul.f32 %v2346, %v2346
      %v4115 = vadd.f32 %v4099, %v4100
      %v4116 = vadd.f32 %v4115, %v4101
      %v4117 = vadd.f32 %v4116, %v4102
      %4118 = vadd.xlane.f32.xlu0 %v4117
      %v4119 = vpop.xlane.xlu0 %4118
      %v4120 = vadd.f32 %v4103, %v4104
      %v4121 = vadd.f32 %v4120, %v4105
      %v4122 = vadd.f32 %v4121, %v4106
      %4123 = vadd.xlane.f32.xlu0 %v4122
      %v4124 = vpop.xlane.xlu0 %4123
      %v4125 = vadd.f32 %v4107, %v4108
      %v4126 = vadd.f32 %v4125, %v4109
      %v4127 = vadd.f32 %v4126, %v4110
      %4128 = vadd.xlane.f32.xlu0 %v4127
      %v4129 = vpop.xlane.xlu0 %4128
      %v4130 = vadd.f32 %v4111, %v4112
      %v4131 = vadd.f32 %v4130, %v4113
      %v4132 = vadd.f32 %v4131, %v4114
      %4133 = vadd.xlane.f32.xlu0 %v4132
      %v4134 = vpop.xlane.xlu0 %4133
      %v4139 = vperm.slane %v4119, %v869
      %v4140 = vperm.slane %v4124, %v4084
      %v4141 = vsel %vm4086, %v4140, %v4139
      %v4142 = vperm.slane %v4129, %v4088
      %v4143 = vsel %vm4090, %v4142, %v4141
      %v4144 = vperm.slane %v4134, %v4092
      %v4145 = vsel %vm4094, %v4144, %v4143
      %4147 = vst.msk [vmem:[%s484 + $0x1] sm:$0x1] %vm4097, %v4145
      %v4148 = vadd.f32 %v4011, %v4012
      %v4149 = vadd.f32 %v4148, %v4013
      %v4150 = vadd.f32 %v4149, %v4014
      %4151 = vadd.xlane.f32.xlu0 %v4150
      %v4152 = vpop.xlane.xlu0 %4151
      %v4153 = vadd.f32 %v4015, %v4016
      %v4154 = vadd.f32 %v4153, %v4017
      %v4155 = vadd.f32 %v4154, %v4018
      %4156 = vadd.xlane.f32.xlu0 %v4155
      %v4157 = vpop.xlane.xlu0 %4156
      %v4158 = vadd.f32 %v4019, %v4020
      %v4159 = vadd.f32 %v4158, %v4021
      %v4160 = vadd.f32 %v4159, %v4022
      %4161 = vadd.xlane.f32.xlu0 %v4160
      %v4162 = vpop.xlane.xlu0 %4161
      %v4163 = vadd.f32 %v4023, %v4024
      %v4164 = vadd.f32 %v4163, %v4025
      %v4165 = vadd.f32 %v4164, %v4026
      %4166 = vadd.xlane.f32.xlu0 %v4165
      %v4167 = vpop.xlane.xlu0 %4166
      %v4172 = vperm.slane %v4152, %v869
      %v4173 = vperm.slane %v4157, %v4084
      %v4174 = vsel %vm4086, %v4173, %v4172
      %v4175 = vperm.slane %v4162, %v4088
      %v4176 = vsel %vm4090, %v4175, %v4174
      %v4177 = vperm.slane %v4167, %v4092
      %v4178 = vsel %vm4094, %v4177, %v4176
      %4180 = vst.msk [vmem:[%s484 + $0x2] sm:$0x1] %vm4097, %v4178
      %v4181 = vmul.f32 %v4011, %v4011
      %v4182 = vmul.f32 %v4012, %v4012
      %v4183 = vmul.f32 %v4013, %v4013
      %v4184 = vmul.f32 %v4014, %v4014
      %v4185 = vmul.f32 %v4015, %v4015
      %v4186 = vmul.f32 %v4016, %v4016
      %v4187 = vmul.f32 %v4017, %v4017
      %v4188 = vmul.f32 %v4018, %v4018
      %v4189 = vmul.f32 %v4019, %v4019
      %v4190 = vmul.f32 %v4020, %v4020
      %v4191 = vmul.f32 %v4021, %v4021
      %v4192 = vmul.f32 %v4022, %v4022
      %v4193 = vmul.f32 %v4023, %v4023
      %v4194 = vmul.f32 %v4024, %v4024
      %v4195 = vmul.f32 %v4025, %v4025
      %v4196 = vmul.f32 %v4026, %v4026
      %v4197 = vadd.f32 %v4181, %v4182
      %v4198 = vadd.f32 %v4197, %v4183
      %v4199 = vadd.f32 %v4198, %v4184
      %4200 = vadd.xlane.f32.xlu0 %v4199
      %v4201 = vpop.xlane.xlu0 %4200
      %v4202 = vadd.f32 %v4185, %v4186
      %v4203 = vadd.f32 %v4202, %v4187
      %v4204 = vadd.f32 %v4203, %v4188
      %4205 = vadd.xlane.f32.xlu0 %v4204
      %v4206 = vpop.xlane.xlu0 %4205
      %v4207 = vadd.f32 %v4189, %v4190
      %v4208 = vadd.f32 %v4207, %v4191
      %v4209 = vadd.f32 %v4208, %v4192
      %4210 = vadd.xlane.f32.xlu0 %v4209
      %v4211 = vpop.xlane.xlu0 %4210
      %v4212 = vadd.f32 %v4193, %v4194
      %v4213 = vadd.f32 %v4212, %v4195
      %v4214 = vadd.f32 %v4213, %v4196
      %4215 = vadd.xlane.f32.xlu0 %v4214
      %v4216 = vpop.xlane.xlu0 %4215
      %v4221 = vperm.slane %v4201, %v869
      %v4222 = vperm.slane %v4206, %v4084
      %v4223 = vsel %vm4086, %v4222, %v4221
      %v4224 = vperm.slane %v4211, %v4088
      %v4225 = vsel %vm4090, %v4224, %v4223
      %v4226 = vperm.slane %v4216, %v4092
      %v4227 = vsel %vm4094, %v4226, %v4225
      %4229 = vst.msk [vmem:[%s484 + $0x3] sm:$0x1] %vm4097, %v4227
      %p4230 = scmp.lt.s32.totalorder %s22, 7
      %s4231 = scalar_select %p4230, %s22, 7
      %s4232 = smul.addr %s4231, 16
      %s4233 = smul.addr %s4232, 8
      %s4234 = scalar_lea.vmem %s8, %s4233
      %p4235 = scmp.lt.s32.totalorder %s22, 7
      %s4236 = scalar_select %p4235, %s22, 7
      %s4237 = smul.addr %s4236, 16
      %s4238 = smul.addr %s4237, 8
      %s4239 = scalar_lea.vmem %s9, %s4238
      %p4240 = scmp.lt.s32.totalorder %s22, 7
      %s4241 = scalar_select %p4240, %s22, 7
      %s4242 = smul.addr %s4241, 4
      %s4243 = scalar_lea.vmem %s10, %s4242
      // Predicated region
      $region53: #{res_context_block_forward.4} parent=51 // pred_check
        %p4244 = pneg %p240
      $region54: #{res_context_block_forward.4} parent=51 // pred_check_branch
        %4246 = sbr.rel (%p4244) target = $region56
      $region55: #{res_context_block_forward.4} parent=51 // pred_region
        _
      $region56: #{res_context_block_forward.4} parent=51 // pred_fallthru
        _
      // Predicated region
      $region57: #{res_context_block_forward.4} parent=51 // pred_check
        %p4247 = pneg %p266
      $region58: #{res_context_block_forward.4} parent=51 // pred_check_branch
        %4249 = sbr.rel (%p4247) target = $region60
      $region59: #{res_context_block_forward.4} parent=51 // pred_region
        _
      $region60: #{res_context_block_forward.4} parent=51 // pred_fallthru
        _
      // Predicated region
      $region61: #{res_context_block_forward.4} parent=51 // pred_check
        %p4250 = pneg %p292
      $region62: #{res_context_block_forward.4} parent=51 // pred_check_branch
        %4252 = sbr.rel (%p4250) target = $region64
      $region63: #{res_context_block_forward.4} parent=51 // pred_region
        _
      $region64: #{res_context_block_forward.4} parent=51 // pred_fallthru
        _
    $region52: #{res_context_block_forward.4} parent=5 // pred_fallthru
      _
    %p4253 = scmp.le.s32.totalorder 2, %s17
    // Predicated region
    $region65: #{res_context_block_forward.4} parent=5 // pred_check
      %p4254 = pneg %p4253
    $region66: #{res_context_block_forward.4} parent=5 // pred_check_branch
      %4256 = sbr.rel (%p4254) target = $region68
    $region67: #{res_context_block_forward.4} parent=5 // pred_region
      %s4257 = ssub.s32 %s17, 2
      // Predicated region
      $region69: #{res_context_block_forward.4} parent=67 // pred_check
        %p4258 = pneg %p246
      $region70: #{res_context_block_forward.4} parent=67 // pred_check_branch
        %4260 = sbr.rel (%p4258) target = $region72
      $region71: #{res_context_block_forward.4} parent=67 // pred_region
        %p4261 = scmp.lt.s32.totalorder %s23, 7
        %s4262 = scalar_select %p4261, %s23, 7
        %s4263 = smul.addr %s4262, 16
        %s4264 = smul.addr %s4263, 8
        %s4265 = scalar_lea.vmem %s8, %s4264
      $region72: #{res_context_block_forward.4} parent=67 // pred_fallthru
        _
      // Predicated region
      $region73: #{res_context_block_forward.4} parent=67 // pred_check
        %p4266 = pneg %p272
      $region74: #{res_context_block_forward.4} parent=67 // pred_check_branch
        %4268 = sbr.rel (%p4266) target = $region76
      $region75: #{res_context_block_forward.4} parent=67 // pred_region
        %p4269 = scmp.lt.s32.totalorder %s23, 7
        %s4270 = scalar_select %p4269, %s23, 7
        %s4271 = smul.addr %s4270, 16
        %s4272 = smul.addr %s4271, 8
        %s4273 = scalar_lea.vmem %s9, %s4272
      $region76: #{res_context_block_forward.4} parent=67 // pred_fallthru
        _
      // Predicated region
      $region77: #{res_context_block_forward.4} parent=67 // pred_check
        %p4274 = pneg %p298
      $region78: #{res_context_block_forward.4} parent=67 // pred_check_branch
        %4276 = sbr.rel (%p4274) target = $region80
      $region79: #{res_context_block_forward.4} parent=67 // pred_region
        %p4277 = scmp.lt.s32.totalorder %s23, 7
        %s4278 = scalar_select %p4277, %s23, 7
        %s4279 = smul.addr %s4278, 4
        %s4280 = scalar_lea.vmem %s10, %s4279
      $region80: #{res_context_block_forward.4} parent=67 // pred_fallthru
        _
    $region68: #{res_context_block_forward.4} parent=5 // pred_fallthru
      _
  $region6: #{res_context_block_forward.4} parent=0 // loop_footer
    %s21 = sadd.s32 1, %s17
  $region7: #{res_context_block_forward.4} parent=0 // loop_footer_branch
    %16 = sbr.rel target = $region3
  $region8: #{res_context_block_forward.4} parent=0 // loop_exit
    _

</llo_original>
